<compile_context>
chip_gen: v5e
topology: v5e:2x2
jax: 0.10.0
libtpu: 0.0.40
codegen_flags: <defaults>
</compile_context>

<pallas_src>
import math
import functools

import jax
import jax.numpy as jnp
from jax.experimental import pallas as pl
from jax.experimental.pallas import tpu as pltpu

VMEM_SPEC = pl.BlockSpec(memory_space=pltpu.MemorySpace.VMEM)


def _cparams(sems):
    # 48 MiB scoped VMEM: above the 32 MiB default, safe on v7x (64 MiB phys).
    return pltpu.CompilerParams(dimension_semantics=sems,
                                vmem_limit_bytes=48 * 1024 * 1024)


def _choose_h_tile(H, W, C, budget_bytes=4 << 20):
    """Largest divisor of H whose (th, W, C) f32 tile fits a small VMEM budget."""
    for th in range(H, 0, -1):
        if H % th == 0 and th * W * C * 4 <= budget_bytes:
            return th
    return 1


# ------------------------ K1: all branch convolutions ----------------------- #

def _branch_conv_kernel(xp_ref, w0_ref, wd_ref, y_ref, stats_ref, gpmax_ref,
                        *, H, W, Cin, mid_c, dilations, dmax):
    HW = H * W
    # Center window == the original (un-padded) image of this sample.
    xc = xp_ref[0, dmax:dmax + H, dmax:dmax + W, :].reshape(HW, Cin)
    gpmax_ref[...] = jnp.max(xc, axis=0, keepdims=True).reshape(1, 1, Cin)

    # 1x1 branch.
    outs = [jnp.dot(xc, w0_ref[...], preferred_element_type=jnp.float32)]

    # Dilated branches: stack the 9 taps along K -> one matmul per branch.
    for bi, d in enumerate(dilations):
        taps = []
        for kh in range(3):
            oh = dmax + (kh - 1) * d
            for kw in range(3):
                ow = dmax + (kw - 1) * d
                taps.append(xp_ref[0, oh:oh + H, ow:ow + W, :].reshape(HW, Cin))
        xt = jnp.concatenate(taps, axis=-1)                      # (HW, 9*Cin)
        outs.append(jnp.dot(xt, wd_ref[bi], preferred_element_type=jnp.float32))

    y = jnp.concatenate(outs, axis=-1)                           # (HW, C_all)
    c_all = y.shape[-1]
    y_ref[...] = y.reshape(1, H, W, c_all)
    s = jnp.sum(y, axis=0, keepdims=True)
    s2 = jnp.sum(y * y, axis=0, keepdims=True)
    stats_ref[...] = jnp.concatenate([s, s2], axis=0).reshape(1, 2, c_all)


def _branch_convs_call(xp, w0, wdil, *, H, W, dilations):
    N, Hp, Wp, Cin = xp.shape
    mid_c = w0.shape[1]
    n_dil = wdil.shape[0]
    c_all = (1 + n_dil) * mid_c
    dmax = (Hp - H) // 2
    kernel = functools.partial(_branch_conv_kernel, H=H, W=W, Cin=Cin,
                               mid_c=mid_c, dilations=tuple(dilations), dmax=dmax)
    return pl.pallas_call(
        kernel,
        grid=(N,),
        in_specs=[
            pl.BlockSpec((1, Hp, Wp, Cin), lambda n: (n, 0, 0, 0)),
            pl.BlockSpec((Cin, mid_c), lambda n: (0, 0)),
            pl.BlockSpec((n_dil, 9 * Cin, mid_c), lambda n: (0, 0, 0)),
        ],
        out_specs=[
            pl.BlockSpec((1, H, W, c_all), lambda n: (n, 0, 0, 0)),
            pl.BlockSpec((1, 2, c_all), lambda n: (n, 0, 0)),
            pl.BlockSpec((1, 1, Cin), lambda n: (n, 0, 0)),
        ],
        out_shape=(
            jax.ShapeDtypeStruct((N, H, W, c_all), jnp.float32),
            jax.ShapeDtypeStruct((N, 2, c_all), jnp.float32),
            jax.ShapeDtypeStruct((N, 1, Cin), jnp.float32),
        ),
        compiler_params=_cparams(("parallel",)),
    )(xp, w0, wdil)


# --------------------- K2: global-pool branch (tiny) ------------------------ #

def _gp_kernel(pooled_ref, wgp_ref, g_ref, b_ref, wout_ref, o_ref, *, eps, count):
    p = pooled_ref[...]                                          # (N, Cin)
    h = jnp.dot(p, wgp_ref[...], preferred_element_type=jnp.float32)
    mean = jnp.sum(h, axis=0, keepdims=True) / count
    var = jnp.sum(h * h, axis=0, keepdims=True) / count - mean * mean
    scale = g_ref[...] * jax.lax.rsqrt(var + eps)
    act = jnp.maximum(h * scale + (b_ref[...] - mean * scale), 0.0)
    # Pre-multiply by the global-pool rows of the out_conv weight.
    o_ref[...] = jnp.dot(act, wout_ref[...], preferred_element_type=jnp.float32)


def _global_pool_branch_call(pooled, w_gp, gamma, beta, w_out_gp, *, eps):
    N, _ = pooled.shape
    mid_c = w_gp.shape[1]
    out_c = w_out_gp.shape[1]
    kernel = functools.partial(_gp_kernel, eps=eps, count=float(N))
    return pl.pallas_call(
        kernel,
        in_specs=[VMEM_SPEC] * 5,
        out_specs=VMEM_SPEC,
        out_shape=jax.ShapeDtypeStruct((N, out_c), jnp.float32),
    )(pooled, w_gp, gamma.reshape(1, mid_c), beta.reshape(1, mid_c), w_out_gp)


# ------------- K3: fused branch BN + ReLU + out_conv (no concat) ------------ #

def _fused_out_kernel(y_ref, scale_ref, bias_ref, wout_ref, gpc_ref,
                      o_ref, stats_ref, *, TH, W, C_all, Cout):
    R = TH * W
    y = y_ref[...].reshape(R, C_all)
    # Training-mode BN folded into one FMA, then ReLU.
    act = jnp.maximum(y * scale_ref[...] + bias_ref[...], 0.0)
    out = jnp.dot(act, wout_ref[...], preferred_element_type=jnp.float32)
    out = out + gpc_ref[...].reshape(1, Cout)                    # gp contribution
    o_ref[...] = out.reshape(1, TH, W, Cout)
    s = jnp.sum(out, axis=0, keepdims=True)
    s2 = jnp.sum(out * out, axis=0, keepdims=True)
    stats_ref[...] = jnp.concatenate([s, s2], axis=0).reshape(1, 1, 2, Cout)


def _fused_out_call(y_cat, scale_b, bias_b, w_out_br, gp_contrib, *, th):
    N, H, W, C_all = y_cat.shape
    Cout = w_out_br.shape[1]
    n_t = H // th
    kernel = functools.partial(_fused_out_kernel, TH=th, W=W, C_all=C_all, Cout=Cout)
    return pl.pallas_call(
        kernel,
        grid=(N, n_t),
        in_specs=[
            pl.BlockSpec((1, th, W, C_all), lambda n, t: (n, t, 0, 0)),
            pl.BlockSpec((1, C_all), lambda n, t: (0, 0)),
            pl.BlockSpec((1, C_all), lambda n, t: (0, 0)),
            pl.BlockSpec((C_all, Cout), lambda n, t: (0, 0)),
            pl.BlockSpec((1, 1, Cout), lambda n, t: (n, 0, 0)),
        ],
        out_specs=[
            pl.BlockSpec((1, th, W, Cout), lambda n, t: (n, t, 0, 0)),
            pl.BlockSpec((1, 1, 2, Cout), lambda n, t: (n, t, 0, 0)),
        ],
        out_shape=(
            jax.ShapeDtypeStruct((N, H, W, Cout), jnp.float32),
            jax.ShapeDtypeStruct((N, n_t, 2, Cout), jnp.float32),
        ),
        compiler_params=_cparams(("parallel", "parallel")),
    )(y_cat, scale_b, bias_b, w_out_br, gp_contrib)


# ----------------------- K4: final folded BN + ReLU ------------------------- #

def _affine_relu_kernel(x_ref, scale_ref, bias_ref, o_ref):
    o_ref[...] = jnp.maximum(x_ref[...] * scale_ref[...] + bias_ref[...], 0.0)


def _affine_relu_call(x, scale, bias, *, th):
    N, H, W, C = x.shape
    n_t = H // th
    return pl.pallas_call(
        _affine_relu_kernel,
        grid=(N, n_t),
        in_specs=[
            pl.BlockSpec((1, th, W, C), lambda n, t: (n, t, 0, 0)),
            pl.BlockSpec((1, 1, 1, C), lambda n, t: (0, 0, 0, 0)),
            pl.BlockSpec((1, 1, 1, C), lambda n, t: (0, 0, 0, 0)),
        ],
        out_specs=pl.BlockSpec((1, th, W, C), lambda n, t: (n, t, 0, 0)),
        out_shape=jax.ShapeDtypeStruct((N, H, W, C), jnp.float32),
        compiler_params=_cparams(("parallel", "parallel")),
    )(x, scale, bias)


# --------------------------- parameter construction ------------------------- #

def init_aspp_params(key, inplanes, mid_c, dilations, out_c=None, groups=4):
    out_c = mid_c if out_c is None else out_c
    n_dil = len(dilations)
    n_branches = 2 + n_dil
    keys = jax.random.split(key, 3 + n_dil)
    params = {}

    # aspps[0]: 1x1 conv, kaiming_normal fan_in = inplanes
    params["aspp0_w"] = math.sqrt(2.0 / inplanes) * jax.random.normal(
        keys[0], (inplanes, mid_c), jnp.float32)

    # aspps[1..]: grouped 3x3 dilated convs, fan_in = (inplanes/groups)*9.
    # Stored as a stacked block-diagonal dense (n_dil, 9*Cin, mid_c) weight so
    # each dilated conv is a single K=9*Cin matmul (row order: tap-major,
    # channel-minor, matching the in-kernel tap concatenation).
    cin_g, cout_g = inplanes // groups, mid_c // groups
    w_dense = []
    for i in range(n_dil):
        std = math.sqrt(2.0 / (cin_g * 9))
        wg = std * jax.random.normal(keys[1 + i], (9, groups, cin_g, cout_g),
                                     jnp.float32)
        wd = jnp.zeros((9, inplanes, mid_c), jnp.float32)
        for g in range(groups):
            wd = wd.at[:, g * cin_g:(g + 1) * cin_g,
                          g * cout_g:(g + 1) * cout_g].set(wg[:, g])
        w_dense.append(wd.reshape(9 * inplanes, mid_c))
    params["aspp_dil_w"] = jnp.stack(w_dense, axis=0)

    # global_pool 1x1 conv
    params["gp_w"] = math.sqrt(2.0 / inplanes) * jax.random.normal(
        keys[1 + n_dil], (inplanes, mid_c), jnp.float32)

    # out_conv 1x1; input-channel row order matches the concat [gp, b0, b1..].
    cat_c = mid_c * n_branches
    params["out_w"] = math.sqrt(2.0 / cat_c) * jax.random.normal(
        keys[2 + n_dil], (cat_c, out_c), jnp.float32)

    # BatchNorm affine params (weight=1, bias=0 per _init_weight)
    params["gamma_branch"] = jnp.ones(((1 + n_dil) * mid_c,), jnp.float32)
    params["beta_branch"] = jnp.zeros(((1 + n_dil) * mid_c,), jnp.float32)
    params["gamma_gp"] = jnp.ones((mid_c,), jnp.float32)
    params["beta_gp"] = jnp.zeros((mid_c,), jnp.float32)
    params["gamma_out"] = jnp.ones((out_c,), jnp.float32)
    params["beta_out"] = jnp.zeros((out_c,), jnp.float32)
    return params


# ---------------------------------- forward --------------------------------- #

def aspp_forward(params, x_nchw, dilations, eps=1e-5):
    dilations = tuple(int(d) for d in dilations)
    x = jnp.transpose(x_nchw, (0, 2, 3, 1)).astype(jnp.float32)   # NCHW -> NHWC
    N, H, W, Cin = x.shape
    mid_c = params["aspp0_w"].shape[1]
    out_c = params["out_w"].shape[1]
    n_dil = len(dilations)
    c_all = (1 + n_dil) * mid_c
    cnt = float(N * H * W)
    dmax = max(dilations)

    # Pad ONCE to the largest dilation; all dilated branches slice their taps
    # out of this single padded copy (no per-branch padded HBM copies).
    xp = jnp.pad(x, ((0, 0), (dmax, dmax), (dmax, dmax), (0, 0)))

    # K1: every branch conv (pre-BN) + per-sample BN partial stats + global max.
    y_cat, statsA, gpmax = _branch_convs_call(
        xp, params["aspp0_w"], params["aspp_dil_w"],
        H=H, W=W, dilations=dilations)

    # Fold branch BN (training-mode batch stats, biased var) into scale/bias.
    s = jnp.sum(statsA[:, 0, :], axis=0)
    s2 = jnp.sum(statsA[:, 1, :], axis=0)
    mean = s / cnt
    var = s2 / cnt - mean * mean
    scale_b = params["gamma_branch"] * jax.lax.rsqrt(var + eps)
    bias_b = params["beta_branch"] - mean * scale_b

    # K2: global-pool branch -> its (N, out_c) contribution to the out_conv.
    gp_contrib = _global_pool_branch_call(
        gpmax.reshape(N, Cin), params["gp_w"],
        params["gamma_gp"], params["beta_gp"],
        params["out_w"][:mid_c], eps=eps)

    # K3: fused branch-BN + ReLU + out_conv matmul (concat never materialized).
    th = _choose_h_tile(H, W, c_all)
    out_pre, statsO = _fused_out_call(
        y_cat, scale_b.reshape(1, c_all), bias_b.reshape(1, c_all),
        params["out_w"][mid_c:], gp_contrib.reshape(N, 1, out_c), th=th)

    # Fold the output BN into scale/bias.
    so = jnp.sum(statsO[:, :, 0, :], axis=(0, 1))
    so2 = jnp.sum(statsO[:, :, 1, :], axis=(0, 1))
    mean_o = so / cnt
    var_o = so2 / cnt - mean_o * mean_o
    scale_o = params["gamma_out"] * jax.lax.rsqrt(var_o + eps)
    bias_o = params["beta_out"] - mean_o * scale_o

    # K4: final BN (folded affine) + ReLU.
    out = _affine_relu_call(out_pre,
                            scale_o.reshape(1, 1, 1, out_c),
                            bias_o.reshape(1, 1, 1, out_c),
                            th=_choose_h_tile(H, W, out_c))
    return jnp.transpose(out, (0, 3, 1, 2))                       # NHWC -> NCHW


# ------------------------------------ main ----------------------------------- #

if __name__ == "__main__":
    key = jax.random.PRNGKey(0)
    kx, kp = jax.random.split(key)

    # Small shapes consistent with the module (groups=4 divides channels).
    N, inplanes, H, W = 2, 8, 16, 16
    mid_c = 8
    dilations = [6, 12, 18, 24]   # module defaults; 'same' padding keeps 16x16

    x = jax.random.normal(kx, (N, inplanes, H, W), dtype=jnp.float32)
    params = init_aspp_params(kp, inplanes, mid_c, dilations)

    aspp_apply = jax.jit(functools.partial(aspp_forward,
                                           dilations=tuple(dilations)))
    out = aspp_apply(params, x)
    out = jax.block_until_ready(out)
    assert out.shape == (N, mid_c, H, W)
    assert bool(jnp.all(jnp.isfinite(out)))
    print("KERNEL_OK")
</pallas_src>

<mosaic_0001>
module attributes {stable_mosaic.version = 11 : i64} {
  func.func @_branch_conv_kernel(%arg0: i32, %arg1: memref<1x64x64x8xf32, #tpu.memory_space<vmem>>, %arg2: memref<8x8xf32, #tpu.memory_space<vmem>>, %arg3: memref<4x72x8xf32, #tpu.memory_space<vmem>>, %arg4: memref<1x16x16x40xf32, #tpu.memory_space<vmem>>, %arg5: memref<1x2x40xf32, #tpu.memory_space<vmem>>, %arg6: memref<1x1x8xf32, #tpu.memory_space<vmem>>) attributes {dimension_semantics = [#tpu.dimension_semantics<parallel>], iteration_bounds = array<i64: 2>, scalar_prefetch = 0 : i64, scratch_operands = 0 : i64, tpu.core_type = #tpu.core_type<tc>, window_params = [{transform_indices = @transform_0, window_bounds = array<i64: 1, 64, 64, 8>}, {pipeline_mode = #tpu.pipeline_mode<synchronous>, transform_indices = @transform_1, window_bounds = array<i64: 8, 8>}, {pipeline_mode = #tpu.pipeline_mode<synchronous>, transform_indices = @transform_2, window_bounds = array<i64: 4, 72, 8>}, {transform_indices = @transform_3, window_bounds = array<i64: 1, 16, 16, 40>}, {transform_indices = @transform_4, window_bounds = array<i64: 1, 2, 40>}, {transform_indices = @transform_5, window_bounds = array<i64: 1, 1, 8>}]} {
    %c0 = arith.constant 0 : index
    %c24 = arith.constant 24 : index
    %c24_0 = arith.constant 24 : index
    %c0_1 = arith.constant 0 : index
    %0 = vector.load %arg1[%c0, %c24, %c24_0, %c0_1] : memref<1x64x64x8xf32, #tpu.memory_space<vmem>>, vector<1x16x16x8xf32>
    %1 = vector.shape_cast %0 : vector<1x16x16x8xf32> to vector<16x16x8xf32>
    %2 = vector.shape_cast %1 : vector<16x16x8xf32> to vector<256x8xf32>
    %cst = arith.constant dense<0xFF800000> : vector<8xf32>
    %3 = vector.multi_reduction <maximumf>, %2, %cst [0] : vector<256x8xf32> to vector<8xf32>
    %4 = vector.shape_cast %3 : vector<8xf32> to vector<1x8xf32>
    %5 = vector.shape_cast %4 : vector<1x8xf32> to vector<1x1x8xf32>
    %c0_2 = arith.constant 0 : index
    %c0_3 = arith.constant 0 : index
    %c0_4 = arith.constant 0 : index
    %6 = vector.load %arg6[%c0_2, %c0_3, %c0_4] : memref<1x1x8xf32, #tpu.memory_space<vmem>>, vector<1x1x8xf32>
    tpu.vector_store %arg6[%c0_2, %c0_3, %c0_4], %5 {strides = array<i32>} : memref<1x1x8xf32, #tpu.memory_space<vmem>>, vector<1x1x8xf32>,
    %c0_5 = arith.constant 0 : index
    %c0_6 = arith.constant 0 : index
    %7 = vector.load %arg2[%c0_5, %c0_6] : memref<8x8xf32, #tpu.memory_space<vmem>>, vector<8x8xf32>
    %cst_7 = arith.constant dense<0.000000e+00> : vector<256x8xf32>
    %8 = tpu.matmul %2, %7, %cst_7 {dimension_numbers = #tpu.dot_dimension_numbers<[1], [0], [0], [1], [0, 0, 1, 1], [], []>} : vector<256x8xf32>, vector<8x8xf32>, vector<256x8xf32> -> vector<256x8xf32>
    %c0_8 = arith.constant 0 : index
    %c18 = arith.constant 18 : index
    %c18_9 = arith.constant 18 : index
    %c0_10 = arith.constant 0 : index
    %9 = vector.load %arg1[%c0_8, %c18, %c18_9, %c0_10] : memref<1x64x64x8xf32, #tpu.memory_space<vmem>>, vector<1x16x16x8xf32>
    %10 = vector.shape_cast %9 : vector<1x16x16x8xf32> to vector<16x16x8xf32>
    %11 = vector.shape_cast %10 : vector<16x16x8xf32> to vector<256x8xf32>
    %c0_11 = arith.constant 0 : index
    %c18_12 = arith.constant 18 : index
    %c24_13 = arith.constant 24 : index
    %c0_14 = arith.constant 0 : index
    %12 = vector.load %arg1[%c0_11, %c18_12, %c24_13, %c0_14] : memref<1x64x64x8xf32, #tpu.memory_space<vmem>>, vector<1x16x16x8xf32>
    %13 = vector.shape_cast %12 : vector<1x16x16x8xf32> to vector<16x16x8xf32>
    %14 = vector.shape_cast %13 : vector<16x16x8xf32> to vector<256x8xf32>
    %c0_15 = arith.constant 0 : index
    %c18_16 = arith.constant 18 : index
    %c30 = arith.constant 30 : index
    %c0_17 = arith.constant 0 : index
    %15 = vector.load %arg1[%c0_15, %c18_16, %c30, %c0_17] : memref<1x64x64x8xf32, #tpu.memory_space<vmem>>, vector<1x16x16x8xf32>
    %16 = vector.shape_cast %15 : vector<1x16x16x8xf32> to vector<16x16x8xf32>
    %17 = vector.shape_cast %16 : vector<16x16x8xf32> to vector<256x8xf32>
    %c0_18 = arith.constant 0 : index
    %c24_19 = arith.constant 24 : index
    %c18_20 = arith.constant 18 : index
    %c0_21 = arith.constant 0 : index
    %18 = vector.load %arg1[%c0_18, %c24_19, %c18_20, %c0_21] : memref<1x64x64x8xf32, #tpu.memory_space<vmem>>, vector<1x16x16x8xf32>
    %19 = vector.shape_cast %18 : vector<1x16x16x8xf32> to vector<16x16x8xf32>
    %20 = vector.shape_cast %19 : vector<16x16x8xf32> to vector<256x8xf32>
    %c0_22 = arith.constant 0 : index
    %c24_23 = arith.constant 24 : index
    %c24_24 = arith.constant 24 : index
    %c0_25 = arith.constant 0 : index
    %21 = vector.load %arg1[%c0_22, %c24_23, %c24_24, %c0_25] : memref<1x64x64x8xf32, #tpu.memory_space<vmem>>, vector<1x16x16x8xf32>
    %22 = vector.shape_cast %21 : vector<1x16x16x8xf32> to vector<16x16x8xf32>
    %23 = vector.shape_cast %22 : vector<16x16x8xf32> to vector<256x8xf32>
    %c0_26 = arith.constant 0 : index
    %c24_27 = arith.constant 24 : index
    %c30_28 = arith.constant 30 : index
    %c0_29 = arith.constant 0 : index
    %24 = vector.load %arg1[%c0_26, %c24_27, %c30_28, %c0_29] : memref<1x64x64x8xf32, #tpu.memory_space<vmem>>, vector<1x16x16x8xf32>
    %25 = vector.shape_cast %24 : vector<1x16x16x8xf32> to vector<16x16x8xf32>
    %26 = vector.shape_cast %25 : vector<16x16x8xf32> to vector<256x8xf32>
    %c0_30 = arith.constant 0 : index
    %c30_31 = arith.constant 30 : index
    %c18_32 = arith.constant 18 : index
    %c0_33 = arith.constant 0 : index
    %27 = vector.load %arg1[%c0_30, %c30_31, %c18_32, %c0_33] : memref<1x64x64x8xf32, #tpu.memory_space<vmem>>, vector<1x16x16x8xf32>
    %28 = vector.shape_cast %27 : vector<1x16x16x8xf32> to vector<16x16x8xf32>
    %29 = vector.shape_cast %28 : vector<16x16x8xf32> to vector<256x8xf32>
    %c0_34 = arith.constant 0 : index
    %c30_35 = arith.constant 30 : index
    %c24_36 = arith.constant 24 : index
    %c0_37 = arith.constant 0 : index
    %30 = vector.load %arg1[%c0_34, %c30_35, %c24_36, %c0_37] : memref<1x64x64x8xf32, #tpu.memory_space<vmem>>, vector<1x16x16x8xf32>
    %31 = vector.shape_cast %30 : vector<1x16x16x8xf32> to vector<16x16x8xf32>
    %32 = vector.shape_cast %31 : vector<16x16x8xf32> to vector<256x8xf32>
    %c0_38 = arith.constant 0 : index
    %c30_39 = arith.constant 30 : index
    %c30_40 = arith.constant 30 : index
    %c0_41 = arith.constant 0 : index
    %33 = vector.load %arg1[%c0_38, %c30_39, %c30_40, %c0_41] : memref<1x64x64x8xf32, #tpu.memory_space<vmem>>, vector<1x16x16x8xf32>
    %34 = vector.shape_cast %33 : vector<1x16x16x8xf32> to vector<16x16x8xf32>
    %35 = vector.shape_cast %34 : vector<16x16x8xf32> to vector<256x8xf32>
    %36 = tpu.concatenate %11, %14, %17, %20, %23, %26, %29, %32, %35 in 1 : vector<256x8xf32>, vector<256x8xf32>, vector<256x8xf32>, vector<256x8xf32>, vector<256x8xf32>, vector<256x8xf32>, vector<256x8xf32>, vector<256x8xf32>, vector<256x8xf32> -> vector<256x72xf32>
    %c0_42 = arith.constant 0 : index
    %c0_43 = arith.constant 0 : index
    %c0_44 = arith.constant 0 : index
    %37 = vector.load %arg3[%c0_42, %c0_43, %c0_44] : memref<4x72x8xf32, #tpu.memory_space<vmem>>, vector<1x72x8xf32>
    %38 = vector.shape_cast %37 : vector<1x72x8xf32> to vector<72x8xf32>
    %cst_45 = arith.constant dense<0.000000e+00> : vector<256x8xf32>
    %39 = tpu.matmul %36, %38, %cst_45 {dimension_numbers = #tpu.dot_dimension_numbers<[1], [0], [0], [1], [0, 0, 1, 1], [], []>} : vector<256x72xf32>, vector<72x8xf32>, vector<256x8xf32> -> vector<256x8xf32>
    %c0_46 = arith.constant 0 : index
    %c12 = arith.constant 12 : index
    %c12_47 = arith.constant 12 : index
    %c0_48 = arith.constant 0 : index
    %40 = vector.load %arg1[%c0_46, %c12, %c12_47, %c0_48] : memref<1x64x64x8xf32, #tpu.memory_space<vmem>>, vector<1x16x16x8xf32>
    %41 = vector.shape_cast %40 : vector<1x16x16x8xf32> to vector<16x16x8xf32>
    %42 = vector.shape_cast %41 : vector<16x16x8xf32> to vector<256x8xf32>
    %c0_49 = arith.constant 0 : index
    %c12_50 = arith.constant 12 : index
    %c24_51 = arith.constant 24 : index
    %c0_52 = arith.constant 0 : index
    %43 = vector.load %arg1[%c0_49, %c12_50, %c24_51, %c0_52] : memref<1x64x64x8xf32, #tpu.memory_space<vmem>>, vector<1x16x16x8xf32>
    %44 = vector.shape_cast %43 : vector<1x16x16x8xf32> to vector<16x16x8xf32>
    %45 = vector.shape_cast %44 : vector<16x16x8xf32> to vector<256x8xf32>
    %c0_53 = arith.constant 0 : index
    %c12_54 = arith.constant 12 : index
    %c36 = arith.constant 36 : index
    %c0_55 = arith.constant 0 : index
    %46 = vector.load %arg1[%c0_53, %c12_54, %c36, %c0_55] : memref<1x64x64x8xf32, #tpu.memory_space<vmem>>, vector<1x16x16x8xf32>
    %47 = vector.shape_cast %46 : vector<1x16x16x8xf32> to vector<16x16x8xf32>
    %48 = vector.shape_cast %47 : vector<16x16x8xf32> to vector<256x8xf32>
    %c0_56 = arith.constant 0 : index
    %c24_57 = arith.constant 24 : index
    %c12_58 = arith.constant 12 : index
    %c0_59 = arith.constant 0 : index
    %49 = vector.load %arg1[%c0_56, %c24_57, %c12_58, %c0_59] : memref<1x64x64x8xf32, #tpu.memory_space<vmem>>, vector<1x16x16x8xf32>
    %50 = vector.shape_cast %49 : vector<1x16x16x8xf32> to vector<16x16x8xf32>
    %51 = vector.shape_cast %50 : vector<16x16x8xf32> to vector<256x8xf32>
    %c0_60 = arith.constant 0 : index
    %c24_61 = arith.constant 24 : index
    %c24_62 = arith.constant 24 : index
    %c0_63 = arith.constant 0 : index
    %52 = vector.load %arg1[%c0_60, %c24_61, %c24_62, %c0_63] : memref<1x64x64x8xf32, #tpu.memory_space<vmem>>, vector<1x16x16x8xf32>
    %53 = vector.shape_cast %52 : vector<1x16x16x8xf32> to vector<16x16x8xf32>
    %54 = vector.shape_cast %53 : vector<16x16x8xf32> to vector<256x8xf32>
    %c0_64 = arith.constant 0 : index
    %c24_65 = arith.constant 24 : index
    %c36_66 = arith.constant 36 : index
    %c0_67 = arith.constant 0 : index
    %55 = vector.load %arg1[%c0_64, %c24_65, %c36_66, %c0_67] : memref<1x64x64x8xf32, #tpu.memory_space<vmem>>, vector<1x16x16x8xf32>
    %56 = vector.shape_cast %55 : vector<1x16x16x8xf32> to vector<16x16x8xf32>
    %57 = vector.shape_cast %56 : vector<16x16x8xf32> to vector<256x8xf32>
    %c0_68 = arith.constant 0 : index
    %c36_69 = arith.constant 36 : index
    %c12_70 = arith.constant 12 : index
    %c0_71 = arith.constant 0 : index
    %58 = vector.load %arg1[%c0_68, %c36_69, %c12_70, %c0_71] : memref<1x64x64x8xf32, #tpu.memory_space<vmem>>, vector<1x16x16x8xf32>
    %59 = vector.shape_cast %58 : vector<1x16x16x8xf32> to vector<16x16x8xf32>
    %60 = vector.shape_cast %59 : vector<16x16x8xf32> to vector<256x8xf32>
    %c0_72 = arith.constant 0 : index
    %c36_73 = arith.constant 36 : index
    %c24_74 = arith.constant 24 : index
    %c0_75 = arith.constant 0 : index
    %61 = vector.load %arg1[%c0_72, %c36_73, %c24_74, %c0_75] : memref<1x64x64x8xf32, #tpu.memory_space<vmem>>, vector<1x16x16x8xf32>
    %62 = vector.shape_cast %61 : vector<1x16x16x8xf32> to vector<16x16x8xf32>
    %63 = vector.shape_cast %62 : vector<16x16x8xf32> to vector<256x8xf32>
    %c0_76 = arith.constant 0 : index
    %c36_77 = arith.constant 36 : index
    %c36_78 = arith.constant 36 : index
    %c0_79 = arith.constant 0 : index
    %64 = vector.load %arg1[%c0_76, %c36_77, %c36_78, %c0_79] : memref<1x64x64x8xf32, #tpu.memory_space<vmem>>, vector<1x16x16x8xf32>
    %65 = vector.shape_cast %64 : vector<1x16x16x8xf32> to vector<16x16x8xf32>
    %66 = vector.shape_cast %65 : vector<16x16x8xf32> to vector<256x8xf32>
    %67 = tpu.concatenate %42, %45, %48, %51, %54, %57, %60, %63, %66 in 1 : vector<256x8xf32>, vector<256x8xf32>, vector<256x8xf32>, vector<256x8xf32>, vector<256x8xf32>, vector<256x8xf32>, vector<256x8xf32>, vector<256x8xf32>, vector<256x8xf32> -> vector<256x72xf32>
    %c1 = arith.constant 1 : index
    %c0_80 = arith.constant 0 : index
    %c0_81 = arith.constant 0 : index
    %68 = vector.load %arg3[%c1, %c0_80, %c0_81] : memref<4x72x8xf32, #tpu.memory_space<vmem>>, vector<1x72x8xf32>
    %69 = vector.shape_cast %68 : vector<1x72x8xf32> to vector<72x8xf32>
    %cst_82 = arith.constant dense<0.000000e+00> : vector<256x8xf32>
    %70 = tpu.matmul %67, %69, %cst_82 {dimension_numbers = #tpu.dot_dimension_numbers<[1], [0], [0], [1], [0, 0, 1, 1], [], []>} : vector<256x72xf32>, vector<72x8xf32>, vector<256x8xf32> -> vector<256x8xf32>
    %c0_83 = arith.constant 0 : index
    %c6 = arith.constant 6 : index
    %c6_84 = arith.constant 6 : index
    %c0_85 = arith.constant 0 : index
    %71 = vector.load %arg1[%c0_83, %c6, %c6_84, %c0_85] : memref<1x64x64x8xf32, #tpu.memory_space<vmem>>, vector<1x16x16x8xf32>
    %72 = vector.shape_cast %71 : vector<1x16x16x8xf32> to vector<16x16x8xf32>
    %73 = vector.shape_cast %72 : vector<16x16x8xf32> to vector<256x8xf32>
    %c0_86 = arith.constant 0 : index
    %c6_87 = arith.constant 6 : index
    %c24_88 = arith.constant 24 : index
    %c0_89 = arith.constant 0 : index
    %74 = vector.load %arg1[%c0_86, %c6_87, %c24_88, %c0_89] : memref<1x64x64x8xf32, #tpu.memory_space<vmem>>, vector<1x16x16x8xf32>
    %75 = vector.shape_cast %74 : vector<1x16x16x8xf32> to vector<16x16x8xf32>
    %76 = vector.shape_cast %75 : vector<16x16x8xf32> to vector<256x8xf32>
    %c0_90 = arith.constant 0 : index
    %c6_91 = arith.constant 6 : index
    %c42 = arith.constant 42 : index
    %c0_92 = arith.constant 0 : index
    %77 = vector.load %arg1[%c0_90, %c6_91, %c42, %c0_92] : memref<1x64x64x8xf32, #tpu.memory_space<vmem>>, vector<1x16x16x8xf32>
    %78 = vector.shape_cast %77 : vector<1x16x16x8xf32> to vector<16x16x8xf32>
    %79 = vector.shape_cast %78 : vector<16x16x8xf32> to vector<256x8xf32>
    %c0_93 = arith.constant 0 : index
    %c24_94 = arith.constant 24 : index
    %c6_95 = arith.constant 6 : index
    %c0_96 = arith.constant 0 : index
    %80 = vector.load %arg1[%c0_93, %c24_94, %c6_95, %c0_96] : memref<1x64x64x8xf32, #tpu.memory_space<vmem>>, vector<1x16x16x8xf32>
    %81 = vector.shape_cast %80 : vector<1x16x16x8xf32> to vector<16x16x8xf32>
    %82 = vector.shape_cast %81 : vector<16x16x8xf32> to vector<256x8xf32>
    %c0_97 = arith.constant 0 : index
    %c24_98 = arith.constant 24 : index
    %c24_99 = arith.constant 24 : index
    %c0_100 = arith.constant 0 : index
    %83 = vector.load %arg1[%c0_97, %c24_98, %c24_99, %c0_100] : memref<1x64x64x8xf32, #tpu.memory_space<vmem>>, vector<1x16x16x8xf32>
    %84 = vector.shape_cast %83 : vector<1x16x16x8xf32> to vector<16x16x8xf32>
    %85 = vector.shape_cast %84 : vector<16x16x8xf32> to vector<256x8xf32>
    %c0_101 = arith.constant 0 : index
    %c24_102 = arith.constant 24 : index
    %c42_103 = arith.constant 42 : index
    %c0_104 = arith.constant 0 : index
    %86 = vector.load %arg1[%c0_101, %c24_102, %c42_103, %c0_104] : memref<1x64x64x8xf32, #tpu.memory_space<vmem>>, vector<1x16x16x8xf32>
    %87 = vector.shape_cast %86 : vector<1x16x16x8xf32> to vector<16x16x8xf32>
    %88 = vector.shape_cast %87 : vector<16x16x8xf32> to vector<256x8xf32>
    %c0_105 = arith.constant 0 : index
    %c42_106 = arith.constant 42 : index
    %c6_107 = arith.constant 6 : index
    %c0_108 = arith.constant 0 : index
    %89 = vector.load %arg1[%c0_105, %c42_106, %c6_107, %c0_108] : memref<1x64x64x8xf32, #tpu.memory_space<vmem>>, vector<1x16x16x8xf32>
    %90 = vector.shape_cast %89 : vector<1x16x16x8xf32> to vector<16x16x8xf32>
    %91 = vector.shape_cast %90 : vector<16x16x8xf32> to vector<256x8xf32>
    %c0_109 = arith.constant 0 : index
    %c42_110 = arith.constant 42 : index
    %c24_111 = arith.constant 24 : index
    %c0_112 = arith.constant 0 : index
    %92 = vector.load %arg1[%c0_109, %c42_110, %c24_111, %c0_112] : memref<1x64x64x8xf32, #tpu.memory_space<vmem>>, vector<1x16x16x8xf32>
    %93 = vector.shape_cast %92 : vector<1x16x16x8xf32> to vector<16x16x8xf32>
    %94 = vector.shape_cast %93 : vector<16x16x8xf32> to vector<256x8xf32>
    %c0_113 = arith.constant 0 : index
    %c42_114 = arith.constant 42 : index
    %c42_115 = arith.constant 42 : index
    %c0_116 = arith.constant 0 : index
    %95 = vector.load %arg1[%c0_113, %c42_114, %c42_115, %c0_116] : memref<1x64x64x8xf32, #tpu.memory_space<vmem>>, vector<1x16x16x8xf32>
    %96 = vector.shape_cast %95 : vector<1x16x16x8xf32> to vector<16x16x8xf32>
    %97 = vector.shape_cast %96 : vector<16x16x8xf32> to vector<256x8xf32>
    %98 = tpu.concatenate %73, %76, %79, %82, %85, %88, %91, %94, %97 in 1 : vector<256x8xf32>, vector<256x8xf32>, vector<256x8xf32>, vector<256x8xf32>, vector<256x8xf32>, vector<256x8xf32>, vector<256x8xf32>, vector<256x8xf32>, vector<256x8xf32> -> vector<256x72xf32>
    %c2 = arith.constant 2 : index
    %c0_117 = arith.constant 0 : index
    %c0_118 = arith.constant 0 : index
    %99 = vector.load %arg3[%c2, %c0_117, %c0_118] : memref<4x72x8xf32, #tpu.memory_space<vmem>>, vector<1x72x8xf32>
    %100 = vector.shape_cast %99 : vector<1x72x8xf32> to vector<72x8xf32>
    %cst_119 = arith.constant dense<0.000000e+00> : vector<256x8xf32>
    %101 = tpu.matmul %98, %100, %cst_119 {dimension_numbers = #tpu.dot_dimension_numbers<[1], [0], [0], [1], [0, 0, 1, 1], [], []>} : vector<256x72xf32>, vector<72x8xf32>, vector<256x8xf32> -> vector<256x8xf32>
    %c0_120 = arith.constant 0 : index
    %c0_121 = arith.constant 0 : index
    %c0_122 = arith.constant 0 : index
    %c0_123 = arith.constant 0 : index
    %102 = vector.load %arg1[%c0_120, %c0_121, %c0_122, %c0_123] : memref<1x64x64x8xf32, #tpu.memory_space<vmem>>, vector<1x16x16x8xf32>
    %103 = vector.shape_cast %102 : vector<1x16x16x8xf32> to vector<16x16x8xf32>
    %104 = vector.shape_cast %103 : vector<16x16x8xf32> to vector<256x8xf32>
    %c0_124 = arith.constant 0 : index
    %c0_125 = arith.constant 0 : index
    %c24_126 = arith.constant 24 : index
    %c0_127 = arith.constant 0 : index
    %105 = vector.load %arg1[%c0_124, %c0_125, %c24_126, %c0_127] : memref<1x64x64x8xf32, #tpu.memory_space<vmem>>, vector<1x16x16x8xf32>
    %106 = vector.shape_cast %105 : vector<1x16x16x8xf32> to vector<16x16x8xf32>
    %107 = vector.shape_cast %106 : vector<16x16x8xf32> to vector<256x8xf32>
    %c0_128 = arith.constant 0 : index
    %c0_129 = arith.constant 0 : index
    %c48 = arith.constant 48 : index
    %c0_130 = arith.constant 0 : index
    %108 = vector.load %arg1[%c0_128, %c0_129, %c48, %c0_130] : memref<1x64x64x8xf32, #tpu.memory_space<vmem>>, vector<1x16x16x8xf32>
    %109 = vector.shape_cast %108 : vector<1x16x16x8xf32> to vector<16x16x8xf32>
    %110 = vector.shape_cast %109 : vector<16x16x8xf32> to vector<256x8xf32>
    %c0_131 = arith.constant 0 : index
    %c24_132 = arith.constant 24 : index
    %c0_133 = arith.constant 0 : index
    %c0_134 = arith.constant 0 : index
    %111 = vector.load %arg1[%c0_131, %c24_132, %c0_133, %c0_134] : memref<1x64x64x8xf32, #tpu.memory_space<vmem>>, vector<1x16x16x8xf32>
    %112 = vector.shape_cast %111 : vector<1x16x16x8xf32> to vector<16x16x8xf32>
    %113 = vector.shape_cast %112 : vector<16x16x8xf32> to vector<256x8xf32>
    %c0_135 = arith.constant 0 : index
    %c24_136 = arith.constant 24 : index
    %c24_137 = arith.constant 24 : index
    %c0_138 = arith.constant 0 : index
    %114 = vector.load %arg1[%c0_135, %c24_136, %c24_137, %c0_138] : memref<1x64x64x8xf32, #tpu.memory_space<vmem>>, vector<1x16x16x8xf32>
    %115 = vector.shape_cast %114 : vector<1x16x16x8xf32> to vector<16x16x8xf32>
    %116 = vector.shape_cast %115 : vector<16x16x8xf32> to vector<256x8xf32>
    %c0_139 = arith.constant 0 : index
    %c24_140 = arith.constant 24 : index
    %c48_141 = arith.constant 48 : index
    %c0_142 = arith.constant 0 : index
    %117 = vector.load %arg1[%c0_139, %c24_140, %c48_141, %c0_142] : memref<1x64x64x8xf32, #tpu.memory_space<vmem>>, vector<1x16x16x8xf32>
    %118 = vector.shape_cast %117 : vector<1x16x16x8xf32> to vector<16x16x8xf32>
    %119 = vector.shape_cast %118 : vector<16x16x8xf32> to vector<256x8xf32>
    %c0_143 = arith.constant 0 : index
    %c48_144 = arith.constant 48 : index
    %c0_145 = arith.constant 0 : index
    %c0_146 = arith.constant 0 : index
    %120 = vector.load %arg1[%c0_143, %c48_144, %c0_145, %c0_146] : memref<1x64x64x8xf32, #tpu.memory_space<vmem>>, vector<1x16x16x8xf32>
    %121 = vector.shape_cast %120 : vector<1x16x16x8xf32> to vector<16x16x8xf32>
    %122 = vector.shape_cast %121 : vector<16x16x8xf32> to vector<256x8xf32>
    %c0_147 = arith.constant 0 : index
    %c48_148 = arith.constant 48 : index
    %c24_149 = arith.constant 24 : index
    %c0_150 = arith.constant 0 : index
    %123 = vector.load %arg1[%c0_147, %c48_148, %c24_149, %c0_150] : memref<1x64x64x8xf32, #tpu.memory_space<vmem>>, vector<1x16x16x8xf32>
    %124 = vector.shape_cast %123 : vector<1x16x16x8xf32> to vector<16x16x8xf32>
    %125 = vector.shape_cast %124 : vector<16x16x8xf32> to vector<256x8xf32>
    %c0_151 = arith.constant 0 : index
    %c48_152 = arith.constant 48 : index
    %c48_153 = arith.constant 48 : index
    %c0_154 = arith.constant 0 : index
    %126 = vector.load %arg1[%c0_151, %c48_152, %c48_153, %c0_154] : memref<1x64x64x8xf32, #tpu.memory_space<vmem>>, vector<1x16x16x8xf32>
    %127 = vector.shape_cast %126 : vector<1x16x16x8xf32> to vector<16x16x8xf32>
    %128 = vector.shape_cast %127 : vector<16x16x8xf32> to vector<256x8xf32>
    %129 = tpu.concatenate %104, %107, %110, %113, %116, %119, %122, %125, %128 in 1 : vector<256x8xf32>, vector<256x8xf32>, vector<256x8xf32>, vector<256x8xf32>, vector<256x8xf32>, vector<256x8xf32>, vector<256x8xf32>, vector<256x8xf32>, vector<256x8xf32> -> vector<256x72xf32>
    %c3 = arith.constant 3 : index
    %c0_155 = arith.constant 0 : index
    %c0_156 = arith.constant 0 : index
    %130 = vector.load %arg3[%c3, %c0_155, %c0_156] : memref<4x72x8xf32, #tpu.memory_space<vmem>>, vector<1x72x8xf32>
    %131 = vector.shape_cast %130 : vector<1x72x8xf32> to vector<72x8xf32>
    %cst_157 = arith.constant dense<0.000000e+00> : vector<256x8xf32>
    %132 = tpu.matmul %129, %131, %cst_157 {dimension_numbers = #tpu.dot_dimension_numbers<[1], [0], [0], [1], [0, 0, 1, 1], [], []>} : vector<256x72xf32>, vector<72x8xf32>, vector<256x8xf32> -> vector<256x8xf32>
    %133 = tpu.concatenate %8, %39, %70, %101, %132 in 1 : vector<256x8xf32>, vector<256x8xf32>, vector<256x8xf32>, vector<256x8xf32>, vector<256x8xf32> -> vector<256x40xf32>
    %134 = vector.shape_cast %133 : vector<256x40xf32> to vector<1x16x16x40xf32>
    %c0_158 = arith.constant 0 : index
    %c0_159 = arith.constant 0 : index
    %c0_160 = arith.constant 0 : index
    %c0_161 = arith.constant 0 : index
    %135 = vector.load %arg4[%c0_158, %c0_159, %c0_160, %c0_161] : memref<1x16x16x40xf32, #tpu.memory_space<vmem>>, vector<1x16x16x40xf32>
    tpu.vector_store %arg4[%c0_158, %c0_159, %c0_160, %c0_161], %134 {strides = array<i32>} : memref<1x16x16x40xf32, #tpu.memory_space<vmem>>, vector<1x16x16x40xf32>,
    %cst_162 = arith.constant dense<0.000000e+00> : vector<40xf32>
    %136 = vector.multi_reduction <add>, %133, %cst_162 [0] : vector<256x40xf32> to vector<40xf32>
    %137 = vector.shape_cast %136 : vector<40xf32> to vector<1x40xf32>
    %138 = arith.mulf %133, %133 : vector<256x40xf32>
    %cst_163 = arith.constant dense<0.000000e+00> : vector<40xf32>
    %139 = vector.multi_reduction <add>, %138, %cst_163 [0] : vector<256x40xf32> to vector<40xf32>
    %140 = vector.shape_cast %139 : vector<40xf32> to vector<1x40xf32>
    %141 = tpu.concatenate %137, %140 in 0 : vector<1x40xf32>, vector<1x40xf32> -> vector<2x40xf32>
    %142 = vector.shape_cast %141 : vector<2x40xf32> to vector<1x2x40xf32>
    %c0_164 = arith.constant 0 : index
    %c0_165 = arith.constant 0 : index
    %c0_166 = arith.constant 0 : index
    %143 = vector.load %arg5[%c0_164, %c0_165, %c0_166] : memref<1x2x40xf32, #tpu.memory_space<vmem>>, vector<1x2x40xf32>
    tpu.vector_store %arg5[%c0_164, %c0_165, %c0_166], %142 {strides = array<i32>} : memref<1x2x40xf32, #tpu.memory_space<vmem>>, vector<1x2x40xf32>,
    return
  }
  func.func @transform_0(%arg0: i32) -> (i32, i32, i32, i32) {
    %c0_i32 = arith.constant 0 : i32
    %c0_i32_0 = arith.constant 0 : i32
    %c0_i32_1 = arith.constant 0 : i32
    %c0_i32_2 = arith.constant 0 : i32
    return %arg0, %c0_i32, %c0_i32_0, %c0_i32_1 : i32, i32, i32, i32
  }
  func.func @transform_1(%arg0: i32) -> (i32, i32) {
    %c0_i32 = arith.constant 0 : i32
    %c0_i32_0 = arith.constant 0 : i32
    %c0_i32_1 = arith.constant 0 : i32
    return %c0_i32, %c0_i32_0 : i32, i32
  }
  func.func @transform_2(%arg0: i32) -> (i32, i32, i32) {
    %c0_i32 = arith.constant 0 : i32
    %c0_i32_0 = arith.constant 0 : i32
    %c0_i32_1 = arith.constant 0 : i32
    %c0_i32_2 = arith.constant 0 : i32
    return %c0_i32, %c0_i32_0, %c0_i32_1 : i32, i32, i32
  }
  func.func @transform_3(%arg0: i32) -> (i32, i32, i32, i32) {
    %c0_i32 = arith.constant 0 : i32
    %c0_i32_0 = arith.constant 0 : i32
    %c0_i32_1 = arith.constant 0 : i32
    %c0_i32_2 = arith.constant 0 : i32
    return %arg0, %c0_i32, %c0_i32_0, %c0_i32_1 : i32, i32, i32, i32
  }
  func.func @transform_4(%arg0: i32) -> (i32, i32, i32) {
    %c0_i32 = arith.constant 0 : i32
    %c0_i32_0 = arith.constant 0 : i32
    %c0_i32_1 = arith.constant 0 : i32
    return %arg0, %c0_i32, %c0_i32_0 : i32, i32, i32
  }
  func.func @transform_5(%arg0: i32) -> (i32, i32, i32) {
    %c0_i32 = arith.constant 0 : i32
    %c0_i32_0 = arith.constant 0 : i32
    %c0_i32_1 = arith.constant 0 : i32
    return %arg0, %c0_i32, %c0_i32_0 : i32, i32, i32
  }
}

module attributes {stable_mosaic.version = 11 : i64} {
  func.func @_gp_kernel(%arg0: memref<2x8xf32, #tpu.memory_space<vmem>>, %arg1: memref<8x8xf32, #tpu.memory_space<vmem>>, %arg2: memref<1x8xf32, #tpu.memory_space<vmem>>, %arg3: memref<1x8xf32, #tpu.memory_space<vmem>>, %arg4: memref<8x8xf32, #tpu.memory_space<vmem>>, %arg5: memref<2x8xf32, #tpu.memory_space<vmem>>) attributes {dimension_semantics = [], scalar_prefetch = 0 : i64, scratch_operands = 0 : i64, tpu.core_type = #tpu.core_type<tc>} {
    %c0 = arith.constant 0 : index
    %c0_0 = arith.constant 0 : index
    %0 = vector.load %arg0[%c0, %c0_0] : memref<2x8xf32, #tpu.memory_space<vmem>>, vector<2x8xf32>
    %c0_1 = arith.constant 0 : index
    %c0_2 = arith.constant 0 : index
    %1 = vector.load %arg1[%c0_1, %c0_2] : memref<8x8xf32, #tpu.memory_space<vmem>>, vector<8x8xf32>
    %cst = arith.constant dense<0.000000e+00> : vector<2x8xf32>
    %2 = tpu.matmul %0, %1, %cst {dimension_numbers = #tpu.dot_dimension_numbers<[1], [0], [0], [1], [0, 0, 1, 1], [], []>} : vector<2x8xf32>, vector<8x8xf32>, vector<2x8xf32> -> vector<2x8xf32>
    %cst_3 = arith.constant dense<0.000000e+00> : vector<8xf32>
    %3 = vector.multi_reduction <add>, %2, %cst_3 [0] : vector<2x8xf32> to vector<8xf32>
    %4 = vector.shape_cast %3 : vector<8xf32> to vector<1x8xf32>
    %cst_4 = arith.constant 2.000000e+00 : f32
    %5 = vector.broadcast %cst_4 : f32 to vector<1x8xf32>
    %6 = arith.divf %4, %5 : vector<1x8xf32>
    %7 = arith.mulf %2, %2 : vector<2x8xf32>
    %cst_5 = arith.constant dense<0.000000e+00> : vector<8xf32>
    %8 = vector.multi_reduction <add>, %7, %cst_5 [0] : vector<2x8xf32> to vector<8xf32>
    %9 = vector.shape_cast %8 : vector<8xf32> to vector<1x8xf32>
    %cst_6 = arith.constant 2.000000e+00 : f32
    %10 = vector.broadcast %cst_6 : f32 to vector<1x8xf32>
    %11 = arith.divf %9, %10 : vector<1x8xf32>
    %12 = arith.mulf %6, %6 : vector<1x8xf32>
    %13 = arith.subf %11, %12 : vector<1x8xf32>
    %c0_7 = arith.constant 0 : index
    %c0_8 = arith.constant 0 : index
    %14 = vector.load %arg2[%c0_7, %c0_8] : memref<1x8xf32, #tpu.memory_space<vmem>>, vector<1x8xf32>
    %cst_9 = arith.constant 9.99999974E-6 : f32
    %15 = vector.broadcast %cst_9 : f32 to vector<1x8xf32>
    %16 = arith.addf %13, %15 : vector<1x8xf32>
    %17 = math.rsqrt %16 : vector<1x8xf32>
    %18 = arith.mulf %14, %17 : vector<1x8xf32>
    %19 = vector.broadcast %18 : vector<1x8xf32> to vector<2x8xf32>
    %20 = arith.mulf %2, %19 : vector<2x8xf32>
    %c0_10 = arith.constant 0 : index
    %c0_11 = arith.constant 0 : index
    %21 = vector.load %arg3[%c0_10, %c0_11] : memref<1x8xf32, #tpu.memory_space<vmem>>, vector<1x8xf32>
    %22 = arith.mulf %6, %18 : vector<1x8xf32>
    %23 = arith.subf %21, %22 : vector<1x8xf32>
    %24 = vector.broadcast %23 : vector<1x8xf32> to vector<2x8xf32>
    %25 = arith.addf %20, %24 : vector<2x8xf32>
    %cst_12 = arith.constant 0.000000e+00 : f32
    %26 = vector.broadcast %cst_12 : f32 to vector<2x8xf32>
    %27 = arith.maximumf %25, %26 : vector<2x8xf32>
    %c0_13 = arith.constant 0 : index
    %c0_14 = arith.constant 0 : index
    %28 = vector.load %arg4[%c0_13, %c0_14] : memref<8x8xf32, #tpu.memory_space<vmem>>, vector<8x8xf32>
    %cst_15 = arith.constant dense<0.000000e+00> : vector<2x8xf32>
    %29 = tpu.matmul %27, %28, %cst_15 {dimension_numbers = #tpu.dot_dimension_numbers<[1], [0], [0], [1], [0, 0, 1, 1], [], []>} : vector<2x8xf32>, vector<8x8xf32>, vector<2x8xf32> -> vector<2x8xf32>
    %c0_16 = arith.constant 0 : index
    %c0_17 = arith.constant 0 : index
    %30 = vector.load %arg5[%c0_16, %c0_17] : memref<2x8xf32, #tpu.memory_space<vmem>>, vector<2x8xf32>
    tpu.vector_store %arg5[%c0_16, %c0_17], %29 {strides = array<i32>} : memref<2x8xf32, #tpu.memory_space<vmem>>, vector<2x8xf32>,
    return
  }
}

module attributes {stable_mosaic.version = 11 : i64} {
  func.func @_fused_out_kernel(%arg0: i32, %arg1: i32, %arg2: memref<1x16x16x40xf32, #tpu.memory_space<vmem>>, %arg3: memref<1x40xf32, #tpu.memory_space<vmem>>, %arg4: memref<1x40xf32, #tpu.memory_space<vmem>>, %arg5: memref<40x8xf32, #tpu.memory_space<vmem>>, %arg6: memref<1x1x8xf32, #tpu.memory_space<vmem>>, %arg7: memref<1x16x16x8xf32, #tpu.memory_space<vmem>>, %arg8: memref<1x1x2x8xf32, #tpu.memory_space<vmem>>) attributes {dimension_semantics = [#tpu.dimension_semantics<parallel>, #tpu.dimension_semantics<parallel>], iteration_bounds = array<i64: 2, 1>, scalar_prefetch = 0 : i64, scratch_operands = 0 : i64, tpu.core_type = #tpu.core_type<tc>, window_params = [{transform_indices = @transform_0, window_bounds = array<i64: 1, 16, 16, 40>}, {pipeline_mode = #tpu.pipeline_mode<synchronous>, transform_indices = @transform_1, window_bounds = array<i64: 1, 40>}, {pipeline_mode = #tpu.pipeline_mode<synchronous>, transform_indices = @transform_2, window_bounds = array<i64: 1, 40>}, {pipeline_mode = #tpu.pipeline_mode<synchronous>, transform_indices = @transform_3, window_bounds = array<i64: 40, 8>}, {transform_indices = @transform_4, window_bounds = array<i64: 1, 1, 8>}, {transform_indices = @transform_5, window_bounds = array<i64: 1, 16, 16, 8>}, {transform_indices = @transform_6, window_bounds = array<i64: 1, 1, 2, 8>}]} {
    %c0 = arith.constant 0 : index
    %c0_0 = arith.constant 0 : index
    %c0_1 = arith.constant 0 : index
    %c0_2 = arith.constant 0 : index
    %0 = vector.load %arg2[%c0, %c0_0, %c0_1, %c0_2] : memref<1x16x16x40xf32, #tpu.memory_space<vmem>>, vector<1x16x16x40xf32>
    %1 = vector.shape_cast %0 : vector<1x16x16x40xf32> to vector<256x40xf32>
    %c0_3 = arith.constant 0 : index
    %c0_4 = arith.constant 0 : index
    %2 = vector.load %arg3[%c0_3, %c0_4] : memref<1x40xf32, #tpu.memory_space<vmem>>, vector<1x40xf32>
    %3 = vector.broadcast %2 : vector<1x40xf32> to vector<256x40xf32>
    %4 = arith.mulf %1, %3 : vector<256x40xf32>
    %c0_5 = arith.constant 0 : index
    %c0_6 = arith.constant 0 : index
    %5 = vector.load %arg4[%c0_5, %c0_6] : memref<1x40xf32, #tpu.memory_space<vmem>>, vector<1x40xf32>
    %6 = vector.broadcast %5 : vector<1x40xf32> to vector<256x40xf32>
    %7 = arith.addf %4, %6 : vector<256x40xf32>
    %cst = arith.constant 0.000000e+00 : f32
    %8 = vector.broadcast %cst : f32 to vector<256x40xf32>
    %9 = arith.maximumf %7, %8 : vector<256x40xf32>
    %c0_7 = arith.constant 0 : index
    %c0_8 = arith.constant 0 : index
    %10 = vector.load %arg5[%c0_7, %c0_8] : memref<40x8xf32, #tpu.memory_space<vmem>>, vector<40x8xf32>
    %cst_9 = arith.constant dense<0.000000e+00> : vector<256x8xf32>
    %11 = tpu.matmul %9, %10, %cst_9 {dimension_numbers = #tpu.dot_dimension_numbers<[1], [0], [0], [1], [0, 0, 1, 1], [], []>} : vector<256x40xf32>, vector<40x8xf32>, vector<256x8xf32> -> vector<256x8xf32>
    %c0_10 = arith.constant 0 : index
    %c0_11 = arith.constant 0 : index
    %c0_12 = arith.constant 0 : index
    %12 = vector.load %arg6[%c0_10, %c0_11, %c0_12] : memref<1x1x8xf32, #tpu.memory_space<vmem>>, vector<1x1x8xf32>
    %13 = vector.shape_cast %12 : vector<1x1x8xf32> to vector<1x8xf32>
    %14 = vector.broadcast %13 : vector<1x8xf32> to vector<256x8xf32>
    %15 = arith.addf %11, %14 : vector<256x8xf32>
    %16 = vector.shape_cast %15 : vector<256x8xf32> to vector<1x16x16x8xf32>
    %c0_13 = arith.constant 0 : index
    %c0_14 = arith.constant 0 : index
    %c0_15 = arith.constant 0 : index
    %c0_16 = arith.constant 0 : index
    %17 = vector.load %arg7[%c0_13, %c0_14, %c0_15, %c0_16] : memref<1x16x16x8xf32, #tpu.memory_space<vmem>>, vector<1x16x16x8xf32>
    tpu.vector_store %arg7[%c0_13, %c0_14, %c0_15, %c0_16], %16 {strides = array<i32>} : memref<1x16x16x8xf32, #tpu.memory_space<vmem>>, vector<1x16x16x8xf32>,
    %cst_17 = arith.constant dense<0.000000e+00> : vector<8xf32>
    %18 = vector.multi_reduction <add>, %15, %cst_17 [0] : vector<256x8xf32> to vector<8xf32>
    %19 = vector.shape_cast %18 : vector<8xf32> to vector<1x8xf32>
    %20 = arith.mulf %15, %15 : vector<256x8xf32>
    %cst_18 = arith.constant dense<0.000000e+00> : vector<8xf32>
    %21 = vector.multi_reduction <add>, %20, %cst_18 [0] : vector<256x8xf32> to vector<8xf32>
    %22 = vector.shape_cast %21 : vector<8xf32> to vector<1x8xf32>
    %23 = tpu.concatenate %19, %22 in 0 : vector<1x8xf32>, vector<1x8xf32> -> vector<2x8xf32>
    %24 = vector.shape_cast %23 : vector<2x8xf32> to vector<1x1x2x8xf32>
    %c0_19 = arith.constant 0 : index
    %c0_20 = arith.constant 0 : index
    %c0_21 = arith.constant 0 : index
    %c0_22 = arith.constant 0 : index
    %25 = vector.load %arg8[%c0_19, %c0_20, %c0_21, %c0_22] : memref<1x1x2x8xf32, #tpu.memory_space<vmem>>, vector<1x1x2x8xf32>
    tpu.vector_store %arg8[%c0_19, %c0_20, %c0_21, %c0_22], %24 {strides = array<i32>} : memref<1x1x2x8xf32, #tpu.memory_space<vmem>>, vector<1x1x2x8xf32>,
    return
  }
  func.func @transform_0(%arg0: i32, %arg1: i32) -> (i32, i32, i32, i32) {
    %c0_i32 = arith.constant 0 : i32
    %c0_i32_0 = arith.constant 0 : i32
    %c0_i32_1 = arith.constant 0 : i32
    return %arg0, %arg1, %c0_i32, %c0_i32_0 : i32, i32, i32, i32
  }
  func.func @transform_1(%arg0: i32, %arg1: i32) -> (i32, i32) {
    %c0_i32 = arith.constant 0 : i32
    %c0_i32_0 = arith.constant 0 : i32
    %c0_i32_1 = arith.constant 0 : i32
    return %c0_i32, %c0_i32_0 : i32, i32
  }
  func.func @transform_2(%arg0: i32, %arg1: i32) -> (i32, i32) {
    %c0_i32 = arith.constant 0 : i32
    %c0_i32_0 = arith.constant 0 : i32
    %c0_i32_1 = arith.constant 0 : i32
    return %c0_i32, %c0_i32_0 : i32, i32
  }
  func.func @transform_3(%arg0: i32, %arg1: i32) -> (i32, i32) {
    %c0_i32 = arith.constant 0 : i32
    %c0_i32_0 = arith.constant 0 : i32
    %c0_i32_1 = arith.constant 0 : i32
    return %c0_i32, %c0_i32_0 : i32, i32
  }
  func.func @transform_4(%arg0: i32, %arg1: i32) -> (i32, i32, i32) {
    %c0_i32 = arith.constant 0 : i32
    %c0_i32_0 = arith.constant 0 : i32
    %c0_i32_1 = arith.constant 0 : i32
    return %arg0, %c0_i32, %c0_i32_0 : i32, i32, i32
  }
  func.func @transform_5(%arg0: i32, %arg1: i32) -> (i32, i32, i32, i32) {
    %c0_i32 = arith.constant 0 : i32
    %c0_i32_0 = arith.constant 0 : i32
    %c0_i32_1 = arith.constant 0 : i32
    return %arg0, %arg1, %c0_i32, %c0_i32_0 : i32, i32, i32, i32
  }
  func.func @transform_6(%arg0: i32, %arg1: i32) -> (i32, i32, i32, i32) {
    %c0_i32 = arith.constant 0 : i32
    %c0_i32_0 = arith.constant 0 : i32
    %c0_i32_1 = arith.constant 0 : i32
    return %arg0, %arg1, %c0_i32, %c0_i32_0 : i32, i32, i32, i32
  }
}

module attributes {stable_mosaic.version = 11 : i64} {
  func.func @_affine_relu_kernel(%arg0: i32, %arg1: i32, %arg2: memref<1x16x16x8xf32, #tpu.memory_space<vmem>>, %arg3: memref<1x1x1x8xf32, #tpu.memory_space<vmem>>, %arg4: memref<1x1x1x8xf32, #tpu.memory_space<vmem>>, %arg5: memref<1x16x16x8xf32, #tpu.memory_space<vmem>>) attributes {dimension_semantics = [#tpu.dimension_semantics<parallel>, #tpu.dimension_semantics<parallel>], iteration_bounds = array<i64: 2, 1>, scalar_prefetch = 0 : i64, scratch_operands = 0 : i64, tpu.core_type = #tpu.core_type<tc>, window_params = [{transform_indices = @transform_0, window_bounds = array<i64: 1, 16, 16, 8>}, {pipeline_mode = #tpu.pipeline_mode<synchronous>, transform_indices = @transform_1, window_bounds = array<i64: 1, 1, 1, 8>}, {pipeline_mode = #tpu.pipeline_mode<synchronous>, transform_indices = @transform_2, window_bounds = array<i64: 1, 1, 1, 8>}, {transform_indices = @transform_3, window_bounds = array<i64: 1, 16, 16, 8>}]} {
    %c0 = arith.constant 0 : index
    %c0_0 = arith.constant 0 : index
    %c0_1 = arith.constant 0 : index
    %c0_2 = arith.constant 0 : index
    %0 = vector.load %arg2[%c0, %c0_0, %c0_1, %c0_2] : memref<1x16x16x8xf32, #tpu.memory_space<vmem>>, vector<1x16x16x8xf32>
    %c0_3 = arith.constant 0 : index
    %c0_4 = arith.constant 0 : index
    %c0_5 = arith.constant 0 : index
    %c0_6 = arith.constant 0 : index
    %1 = vector.load %arg3[%c0_3, %c0_4, %c0_5, %c0_6] : memref<1x1x1x8xf32, #tpu.memory_space<vmem>>, vector<1x1x1x8xf32>
    %2 = vector.broadcast %1 : vector<1x1x1x8xf32> to vector<1x16x16x8xf32>
    %3 = arith.mulf %0, %2 : vector<1x16x16x8xf32>
    %c0_7 = arith.constant 0 : index
    %c0_8 = arith.constant 0 : index
    %c0_9 = arith.constant 0 : index
    %c0_10 = arith.constant 0 : index
    %4 = vector.load %arg4[%c0_7, %c0_8, %c0_9, %c0_10] : memref<1x1x1x8xf32, #tpu.memory_space<vmem>>, vector<1x1x1x8xf32>
    %5 = vector.broadcast %4 : vector<1x1x1x8xf32> to vector<1x16x16x8xf32>
    %6 = arith.addf %3, %5 : vector<1x16x16x8xf32>
    %cst = arith.constant 0.000000e+00 : f32
    %7 = vector.broadcast %cst : f32 to vector<1x16x16x8xf32>
    %8 = arith.maximumf %6, %7 : vector<1x16x16x8xf32>
    %c0_11 = arith.constant 0 : index
    %c0_12 = arith.constant 0 : index
    %c0_13 = arith.constant 0 : index
    %c0_14 = arith.constant 0 : index
    %9 = vector.load %arg5[%c0_11, %c0_12, %c0_13, %c0_14] : memref<1x16x16x8xf32, #tpu.memory_space<vmem>>, vector<1x16x16x8xf32>
    tpu.vector_store %arg5[%c0_11, %c0_12, %c0_13, %c0_14], %8 {strides = array<i32>} : memref<1x16x16x8xf32, #tpu.memory_space<vmem>>, vector<1x16x16x8xf32>,
    return
  }
  func.func @transform_0(%arg0: i32, %arg1: i32) -> (i32, i32, i32, i32) {
    %c0_i32 = arith.constant 0 : i32
    %c0_i32_0 = arith.constant 0 : i32
    %c0_i32_1 = arith.constant 0 : i32
    return %arg0, %arg1, %c0_i32, %c0_i32_0 : i32, i32, i32, i32
  }
  func.func @transform_1(%arg0: i32, %arg1: i32) -> (i32, i32, i32, i32) {
    %c0_i32 = arith.constant 0 : i32
    %c0_i32_0 = arith.constant 0 : i32
    %c0_i32_1 = arith.constant 0 : i32
    %c0_i32_2 = arith.constant 0 : i32
    %c0_i32_3 = arith.constant 0 : i32
    return %c0_i32, %c0_i32_0, %c0_i32_1, %c0_i32_2 : i32, i32, i32, i32
  }
  func.func @transform_2(%arg0: i32, %arg1: i32) -> (i32, i32, i32, i32) {
    %c0_i32 = arith.constant 0 : i32
    %c0_i32_0 = arith.constant 0 : i32
    %c0_i32_1 = arith.constant 0 : i32
    %c0_i32_2 = arith.constant 0 : i32
    %c0_i32_3 = arith.constant 0 : i32
    return %c0_i32, %c0_i32_0, %c0_i32_1, %c0_i32_2 : i32, i32, i32, i32
  }
  func.func @transform_3(%arg0: i32, %arg1: i32) -> (i32, i32, i32, i32) {
    %c0_i32 = arith.constant 0 : i32
    %c0_i32_0 = arith.constant 0 : i32
    %c0_i32_1 = arith.constant 0 : i32
    return %arg0, %arg1, %c0_i32, %c0_i32_0 : i32, i32, i32, i32
  }
}

</mosaic_0001>

<llo_original>
// kernel: aspp_forward.5
$region0: #{aspp_forward.5}
  #allocation0 [shape = 'u32[]', space=smem, size = 0x4, offset = 0x4, fixed_abs, tag = 'smem constant byte address 0x4 - core index']
  #allocation1 [shape = 'u32[72,128]{1,0:T(1,128)}', space=vmem, size = 0x9000, scoped, tag = 'internal scratch']
  %s0 = inlined_call_operand.vmem [shape: f32[2,8], index: 0, kind: input, shape index: {}]
  %s1 = inlined_call_operand.vmem [shape: f32[8,8], index: 1, kind: input, shape index: {}]
  %s2 = inlined_call_operand.vmem [shape: f32[1,8], index: 2, kind: input, shape index: {}]
  %s3 = inlined_call_operand.vmem [shape: f32[1,8], index: 3, kind: input, shape index: {}]
  %s4 = inlined_call_operand.vmem [shape: f32[8,8], index: 4, kind: input, shape index: {}]
  %s5 = inlined_call_operand.vmem [shape: f32[2,8], index: 5, kind: output, shape index: {}]
  %s6 = sld [smem:[#allocation0]]
  $region30: #{aspp_forward.5} parent=0
    _
  %s8 = ssub.s32 1, %s6
  %s9 = scalar_select 0, %s8, %s6
  // Predicated region
  $region2: #{aspp_forward.5} parent=0 // pred_check
    _
  $region3: #{aspp_forward.5} parent=0 // pred_check_branch
    %11 = sbr.rel (0) target = $region5
  $region4: #{aspp_forward.5} parent=0 // pred_region
    _
  $region5: #{aspp_forward.5} parent=0 // pred_fallthru
    _
  // Predicated region
  $region6: #{aspp_forward.5} parent=0 // pred_check
    _
  $region7: #{aspp_forward.5} parent=0 // pred_check_branch
    %13 = sbr.rel (0) target = $region9
  $region8: #{aspp_forward.5} parent=0 // pred_region
    _
  $region9: #{aspp_forward.5} parent=0 // pred_fallthru
    _
  // Predicated region
  $region10: #{aspp_forward.5} parent=0 // pred_check
    _
  $region11: #{aspp_forward.5} parent=0 // pred_check_branch
    %15 = sbr.rel (0) target = $region13
  $region12: #{aspp_forward.5} parent=0 // pred_region
    _
  $region13: #{aspp_forward.5} parent=0 // pred_fallthru
    _
  // Predicated region
  $region14: #{aspp_forward.5} parent=0 // pred_check
    _
  $region15: #{aspp_forward.5} parent=0 // pred_check_branch
    %17 = sbr.rel (0) target = $region17
  $region16: #{aspp_forward.5} parent=0 // pred_region
    _
  $region17: #{aspp_forward.5} parent=0 // pred_fallthru
    _
  // Predicated region
  $region18: #{aspp_forward.5} parent=0 // pred_check
    _
  $region19: #{aspp_forward.5} parent=0 // pred_check_branch
    %19 = sbr.rel (0) target = $region21
  $region20: #{aspp_forward.5} parent=0 // pred_region
    _
  $region21: #{aspp_forward.5} parent=0 // pred_fallthru
    _
  %v20 = vld [vmem:[%s0] sm:$0x3]
  %v21 = vld [vmem:[%s1] sm:$0xff]
  %vm22 = vcmask 64512
  %v24 = vsel %vm22, %v20, 0
  %26 = vmatpush.msra.mxu0 0.0
  %27 = vmatpush.msra.mxu0 0.0
  %28 = vmatpush.msra.mxu0 0.0
  %29 = vmatpush.msra.mxu0 0.0
  %30 = vmatpush.msra.mxu0 0.0
  %31 = vmatpush.msra.mxu0 0.0
  %32 = vmatpush.msra.mxu0 0.0
  %33 = vmatpush.msra.mxu0 0.0
  %34 = vmatpush.msra.mxu0 0.0
  %35 = vmatpush.msra.mxu0 0.0
  %36 = vmatpush.msra.mxu0 0.0
  %37 = vmatpush.msra.mxu0 0.0
  %38 = vmatpush.msra.mxu0 0.0
  %39 = vmatpush.msra.mxu0 0.0
  %40 = vmatpush.msra.mxu0 0.0
  %41 = vmatpush.msra.mxu0 %v21
  %42 = vmatmul.f32.gmra.mxu0 %v24
  %v43 = vpop.f32.mrf.mxu0
  %v44 = vadd.f32 0.0, %v43
  %45 = vdwg.mxu0
  %vm46 = vcmask 58368
  %v47 = vsel %vm46, %v44, 0.0
  %v48 = vrot.slane %v47, 4
  %v49 = vadd.f32 %v47, %v48
  %v50 = vrot.slane %v49, 2
  %v51 = vadd.f32 %v49, %v50
  %v52 = vrot.slane %v51, 1
  %v53 = vadd.f32 %v51, %v52
  %v54 = vrcp.pop 2.0
  %v55 = vmul.f32 2.0, %v54
  %v56 = vsub.f32 1.0, %v55
  %v57 = vmul.f32 %v54, %v56
  %v58 = vadd.f32 %v54, %v57
  %vm59 = vweird.f32 %v54
  %v60 = vsel %vm59, %v54, %v58
  %v61 = vmul.f32 %v53, %v60
  %v62 = vmul.f32 %v44, %v44
  %v63 = vsel %vm46, %v62, 0.0
  %v64 = vrot.slane %v63, 4
  %v65 = vadd.f32 %v63, %v64
  %v66 = vrot.slane %v65, 2
  %v67 = vadd.f32 %v65, %v66
  %v68 = vrot.slane %v67, 1
  %v69 = vadd.f32 %v67, %v68
  %v70 = vmul.f32 %v69, %v60
  %v71 = vmul.f32 %v61, %v61
  %v72 = vsub.f32 %v70, %v71
  %v73 = vld [vmem:[%s2] sm:$0x1]
  %v74 = vadd.f32 %v72, 1e-05
  %v75 = vrsqrt.pop %v74
  %v76 = vmul.f32 %v75, %v74
  %v77 = vmul.f32 %v76, %v75
  %v78 = vmul.f32 0.5, %v77
  %v79 = vsub.f32 1.5, %v78
  %v80 = vmul.f32 %v75, %v79
  %vm81 = vweird.f32 %v74
  %vm82 = vweird.f32 %v75
  %vm83 = vmor %vm81, %vm82
  %v84 = vsel %vm83, %v75, %v80
  %v85 = vmul.f32 %v73, %v84
  %v87 = vperm.slane %v85, 0
  %v89 = vmul.f32 %v44, %v87
  %v90 = vld [vmem:[%s3] sm:$0x1]
  %v91 = vmul.f32 %v61, %v85
  %v92 = vsub.f32 %v90, %v91
  %v94 = vperm.slane %v92, 0
  %v96 = vadd.f32 %v89, %v94
  %v97 = vmax.f32 %v96, 0.0
  %v98 = vld [vmem:[%s4] sm:$0xff]
  %v100 = vsel %vm22, %v97, 0
  %102 = vmatpush.msra.mxu0 0.0
  %103 = vmatpush.msra.mxu0 0.0
  %104 = vmatpush.msra.mxu0 0.0
  %105 = vmatpush.msra.mxu0 0.0
  %106 = vmatpush.msra.mxu0 0.0
  %107 = vmatpush.msra.mxu0 0.0
  %108 = vmatpush.msra.mxu0 0.0
  %109 = vmatpush.msra.mxu0 0.0
  %110 = vmatpush.msra.mxu0 0.0
  %111 = vmatpush.msra.mxu0 0.0
  %112 = vmatpush.msra.mxu0 0.0
  %113 = vmatpush.msra.mxu0 0.0
  %114 = vmatpush.msra.mxu0 0.0
  %115 = vmatpush.msra.mxu0 0.0
  %116 = vmatpush.msra.mxu0 0.0
  %117 = vmatpush.msra.mxu0 %v98
  %118 = vmatmul.f32.gmra.mxu0 %v100
  %v119 = vpop.f32.mrf.mxu0
  %v120 = vadd.f32 0.0, %v119
  %121 = vdwg.mxu0
  %122 = vst.msk [vmem:[%s5] sm:$0x3] %vm46, %v120
  // Predicated region
  $region22: #{aspp_forward.5} parent=0 // pred_check
    _
  $region23: #{aspp_forward.5} parent=0 // pred_check_branch
    %124 = sbr.rel (0) target = $region25
  $region24: #{aspp_forward.5} parent=0 // pred_region
    _
  $region25: #{aspp_forward.5} parent=0 // pred_fallthru
    _
  // Predicated region
  $region26: #{aspp_forward.5} parent=0 // pred_check
    _
  $region27: #{aspp_forward.5} parent=0 // pred_check_branch
    %126 = sbr.rel (0) target = $region29
  $region28: #{aspp_forward.5} parent=0 // pred_region
    _
  $region29: #{aspp_forward.5} parent=0 // pred_fallthru
    _

// kernel: aspp_forward.6
$region0: #{aspp_forward.6}
  #allocation0 [shape = 'u32[]', space=smem, size = 0x4, offset = 0x4, fixed_abs, tag = 'smem constant byte address 0x4 - core index']
  #allocation1 [shape = 'u32[72,128]{1,0:T(1,128)}', space=vmem, size = 0x9000, scoped, tag = 'internal scratch']
  %s0 = inlined_call_operand.vmem [shape: f32[2,16,16,40], index: 0, kind: input, shape index: {}]
  %s1 = inlined_call_operand.vmem [shape: f32[1,40], index: 1, kind: input, shape index: {}]
  %s2 = inlined_call_operand.vmem [shape: f32[1,40], index: 2, kind: input, shape index: {}]
  %s3 = inlined_call_operand.vmem [shape: f32[40,8], index: 3, kind: input, shape index: {}]
  %s4 = inlined_call_operand.vmem [shape: f32[2,1,8], index: 4, kind: input, shape index: {}]
  %s5 = inlined_call_operand.vmem [shape: f32[2,16,16,8], index: 5, kind: output, shape index: {0}]
  %s6 = inlined_call_operand.vmem [shape: f32[2,1,2,8], index: 6, kind: output, shape index: {1}]
  %7 = xla_tuple %s5, %s6
  %s8 = sld [smem:[#allocation0]]
  $region61: #{aspp_forward.6} parent=0
    _
  %s10 = ssub.s32 1, %s8
  %s11 = scalar_select 0, %s10, %s8
  loop: start=0, step=1, limit=4
  $region2: #{aspp_forward.6} parent=0 // loop_pre_header
    _
  $region3: #{aspp_forward.6} parent=0 // loop_header
    %s13 = sphi 0, %s17
    %p14 = scmp.ge.s32.totalorder %s13, 4
    %s20 = sphi 0, %s32
    %s21 = sphi 0, %s28
    %s22 = sphi 0, %s20
    %s23 = sphi 0, %s21
    %s24 = sphi 0, %s22
    %s25 = sphi 0, %s23
    %s37 = sphi 0, %s39
    %s40 = sphi 0, %s37
    %s41 = sphi 0, %s40
    %s57 = sphi 0, %s41
    %s61 = sphi 0, %s61
    %s63 = sphi 0, %s61
    %s64 = sphi 0, %s63
    %s78 = sphi 0, %s64
    %s82 = sphi 0, %s82
    %s84 = sphi 0, %s82
    %s85 = sphi 0, %s84
    %s99 = sphi 0, %s85
    %s103 = sphi 0, %s103
    %s105 = sphi 0, %s103
    %s106 = sphi 0, %s105
    %s120 = sphi 0, %s106
    %s126 = sphi 0, %s128
    %s129 = sphi 0, %s126
    %s130 = sphi 0, %s129
    %s146 = sphi 0, %s130
    %s154 = sphi 0, %s156
    %s157 = sphi 0, %s154
    %s158 = sphi 0, %s157
    %s174 = sphi 0, %s158
    %s182 = sphi 0, %s184
    %s185 = sphi 0, %s182
    %s186 = sphi 0, %s185
    %s202 = sphi 0, %s186
  $region4: #{aspp_forward.6} parent=0 // loop_header_branch
    %16 = sbr.rel (%p14) target = $region8
  $region5: #{aspp_forward.6} parent=0 // loop_body
    %s18 = ssub.s32 %s13, 1
    %s19 = ssub.s32 %s13, 2
    %s26 = sadd.s32 1, %s21
    %p27 = scmp.ge.s32.totalorder %s26, 1
    %s28 = scalar_select %p27, 0, %s26
    %s29 = sadd.s32 1, %s20
    %s30 = scalar_select %p27, %s29, %s20
    %p31 = scmp.ge.s32.totalorder %s30, 2
    %s32 = scalar_select %p31, 0, %s30
    %s33 = ssub.s32 %s20, %s32
    %s34 = ssub.s32 %s21, %s28
    %s35 = sor.u32 %s33, %s34
    %p36 = scmp.eq.s32.totalorder %s35, 0
    %s38 = sadd.s32 %s37, 1
    %s39 = scalar_select %p36, %s37, %s38
    %p42 = pneg %p36
    %p43 = scmp.eq.s32.totalorder %s13, 1
    %p44 = por %p42, %p43
    %p45 = scmp.ne.s32.totalorder %s37, %s40
    %p46 = scmp.eq.s32.totalorder %s13, 0
    %p47 = por %p45, %p46
    %p48 = scmp.ne.s32.totalorder %s37, %s40
    %p49 = scmp.eq.s32.totalorder %s18, 1
    %p50 = por %p48, %p49
    %p51 = scmp.ne.s32.totalorder %s40, %s41
    %p52 = scmp.eq.s32.totalorder %s18, 0
    %p53 = por %p51, %p52
    %p54 = scmp.ne.s32.totalorder %s40, %s41
    %p55 = scmp.eq.s32.totalorder %s19, 1
    %p56 = por %p54, %p55
    %p58 = scmp.ne.s32.totalorder %s41, %s57
    %p59 = scmp.eq.s32.totalorder %s19, 0
    %p60 = por %p58, %p59
    %s62 = sadd.s32 %s61, 1
    %p65 = scmp.eq.s32.totalorder %s13, 1
    %p66 = scmp.ne.s32.totalorder %s61, %s63
    %p67 = scmp.eq.s32.totalorder %s13, 0
    %p68 = por %p66, %p67
    %p69 = scmp.ne.s32.totalorder %s61, %s63
    %p70 = scmp.eq.s32.totalorder %s18, 1
    %p71 = por %p69, %p70
    %p72 = scmp.ne.s32.totalorder %s63, %s64
    %p73 = scmp.eq.s32.totalorder %s18, 0
    %p74 = por %p72, %p73
    %p75 = scmp.ne.s32.totalorder %s63, %s64
    %p76 = scmp.eq.s32.totalorder %s19, 1
    %p77 = por %p75, %p76
    %p79 = scmp.ne.s32.totalorder %s64, %s78
    %p80 = scmp.eq.s32.totalorder %s19, 0
    %p81 = por %p79, %p80
    %s83 = sadd.s32 %s82, 1
    %p86 = scmp.eq.s32.totalorder %s13, 1
    %p87 = scmp.ne.s32.totalorder %s82, %s84
    %p88 = scmp.eq.s32.totalorder %s13, 0
    %p89 = por %p87, %p88
    %p90 = scmp.ne.s32.totalorder %s82, %s84
    %p91 = scmp.eq.s32.totalorder %s18, 1
    %p92 = por %p90, %p91
    %p93 = scmp.ne.s32.totalorder %s84, %s85
    %p94 = scmp.eq.s32.totalorder %s18, 0
    %p95 = por %p93, %p94
    %p96 = scmp.ne.s32.totalorder %s84, %s85
    %p97 = scmp.eq.s32.totalorder %s19, 1
    %p98 = por %p96, %p97
    %p100 = scmp.ne.s32.totalorder %s85, %s99
    %p101 = scmp.eq.s32.totalorder %s19, 0
    %p102 = por %p100, %p101
    %s104 = sadd.s32 %s103, 1
    %p107 = scmp.eq.s32.totalorder %s13, 1
    %p108 = scmp.ne.s32.totalorder %s103, %s105
    %p109 = scmp.eq.s32.totalorder %s13, 0
    %p110 = por %p108, %p109
    %p111 = scmp.ne.s32.totalorder %s103, %s105
    %p112 = scmp.eq.s32.totalorder %s18, 1
    %p113 = por %p111, %p112
    %p114 = scmp.ne.s32.totalorder %s105, %s106
    %p115 = scmp.eq.s32.totalorder %s18, 0
    %p116 = por %p114, %p115
    %p117 = scmp.ne.s32.totalorder %s105, %s106
    %p118 = scmp.eq.s32.totalorder %s19, 1
    %p119 = por %p117, %p118
    %p121 = scmp.ne.s32.totalorder %s106, %s120
    %p122 = scmp.eq.s32.totalorder %s19, 0
    %p123 = por %p121, %p122
    %s124 = ssub.s32 %s20, %s32
    %p125 = scmp.eq.s32.totalorder %s124, 0
    %s127 = sadd.s32 %s126, 1
    %s128 = scalar_select %p125, %s126, %s127
    %p131 = pneg %p125
    %p132 = scmp.eq.s32.totalorder %s13, 1
    %p133 = por %p131, %p132
    %p134 = scmp.ne.s32.totalorder %s126, %s129
    %p135 = scmp.eq.s32.totalorder %s13, 0
    %p136 = por %p134, %p135
    %p137 = scmp.ne.s32.totalorder %s126, %s129
    %p138 = scmp.eq.s32.totalorder %s18, 1
    %p139 = por %p137, %p138
    %p140 = scmp.ne.s32.totalorder %s129, %s130
    %p141 = scmp.eq.s32.totalorder %s18, 0
    %p142 = por %p140, %p141
    %p143 = scmp.ne.s32.totalorder %s129, %s130
    %p144 = scmp.eq.s32.totalorder %s19, 1
    %p145 = por %p143, %p144
    %p147 = scmp.ne.s32.totalorder %s130, %s146
    %p148 = scmp.eq.s32.totalorder %s19, 0
    %p149 = por %p147, %p148
    %s150 = ssub.s32 %s20, %s32
    %s151 = ssub.s32 %s21, %s28
    %s152 = sor.u32 %s150, %s151
    %p153 = scmp.eq.s32.totalorder %s152, 0
    %s155 = sadd.s32 %s154, 1
    %s156 = scalar_select %p153, %s154, %s155
    %p159 = pneg %p153
    %p160 = scmp.eq.s32.totalorder %s13, 1
    %p161 = por %p159, %p160
    %p162 = scmp.ne.s32.totalorder %s154, %s157
    %p163 = scmp.eq.s32.totalorder %s13, 0
    %p164 = por %p162, %p163
    %p165 = scmp.ne.s32.totalorder %s154, %s157
    %p166 = scmp.eq.s32.totalorder %s18, 1
    %p167 = por %p165, %p166
    %p168 = scmp.ne.s32.totalorder %s157, %s158
    %p169 = scmp.eq.s32.totalorder %s18, 0
    %p170 = por %p168, %p169
    %p171 = scmp.ne.s32.totalorder %s157, %s158
    %p172 = scmp.eq.s32.totalorder %s19, 1
    %p173 = por %p171, %p172
    %p175 = scmp.ne.s32.totalorder %s158, %s174
    %p176 = scmp.eq.s32.totalorder %s19, 0
    %p177 = por %p175, %p176
    %s178 = ssub.s32 %s20, %s32
    %s179 = ssub.s32 %s21, %s28
    %s180 = sor.u32 %s178, %s179
    %p181 = scmp.eq.s32.totalorder %s180, 0
    %s183 = sadd.s32 %s182, 1
    %s184 = scalar_select %p181, %s182, %s183
    %p187 = pneg %p181
    %p188 = scmp.eq.s32.totalorder %s13, 1
    %p189 = por %p187, %p188
    %p190 = scmp.ne.s32.totalorder %s182, %s185
    %p191 = scmp.eq.s32.totalorder %s13, 0
    %p192 = por %p190, %p191
    %p193 = scmp.ne.s32.totalorder %s182, %s185
    %p194 = scmp.eq.s32.totalorder %s18, 1
    %p195 = por %p193, %p194
    %p196 = scmp.ne.s32.totalorder %s185, %s186
    %p197 = scmp.eq.s32.totalorder %s18, 0
    %p198 = por %p196, %p197
    %p199 = scmp.ne.s32.totalorder %s185, %s186
    %p200 = scmp.eq.s32.totalorder %s19, 1
    %p201 = por %p199, %p200
    %p203 = scmp.ne.s32.totalorder %s186, %s202
    %p204 = scmp.eq.s32.totalorder %s19, 0
    %p205 = por %p203, %p204
    %p206 = scmp.le.s32.totalorder 1, %s13
    %p207 = scmp.lt.s32.totalorder %s13, 3
    %p208 = pnand %p206, %p207
    %p209 = pneg %p208
    // Predicated region
    $region9: #{aspp_forward.6} parent=5 // pred_check
      _
    $region10: #{aspp_forward.6} parent=5 // pred_check_branch
      %211 = sbr.rel (%p208) target = $region12
    $region11: #{aspp_forward.6} parent=5 // pred_region
      %s212 = ssub.s32 %s13, 1
      // Predicated region
      $region13: #{aspp_forward.6} parent=11 // pred_check
        %p213 = pneg %p74
      $region14: #{aspp_forward.6} parent=11 // pred_check_branch
        %215 = sbr.rel (%p213) target = $region16
      $region15: #{aspp_forward.6} parent=11 // pred_region
        _
      $region16: #{aspp_forward.6} parent=11 // pred_fallthru
        _
      // Predicated region
      $region17: #{aspp_forward.6} parent=11 // pred_check
        %p216 = pneg %p95
      $region18: #{aspp_forward.6} parent=11 // pred_check_branch
        %218 = sbr.rel (%p216) target = $region20
      $region19: #{aspp_forward.6} parent=11 // pred_region
        _
      $region20: #{aspp_forward.6} parent=11 // pred_fallthru
        _
      // Predicated region
      $region21: #{aspp_forward.6} parent=11 // pred_check
        %p219 = pneg %p116
      $region22: #{aspp_forward.6} parent=11 // pred_check_branch
        %221 = sbr.rel (%p219) target = $region24
      $region23: #{aspp_forward.6} parent=11 // pred_region
        _
      $region24: #{aspp_forward.6} parent=11 // pred_fallthru
        _
    $region12: #{aspp_forward.6} parent=5 // pred_fallthru
      _
    %p222 = scmp.lt.s32.totalorder %s13, 2
    // Predicated region
    $region25: #{aspp_forward.6} parent=5 // pred_check
      %p223 = pneg %p222
    $region26: #{aspp_forward.6} parent=5 // pred_check_branch
      %225 = sbr.rel (%p223) target = $region28
    $region27: #{aspp_forward.6} parent=5 // pred_region
      // Predicated region
      $region29: #{aspp_forward.6} parent=27 // pred_check
        %p226 = pneg %p47
      $region30: #{aspp_forward.6} parent=27 // pred_check_branch
        %228 = sbr.rel (%p226) target = $region32
      $region31: #{aspp_forward.6} parent=27 // pred_region
        %s229 = smul.u32 16, %s21
        %p230 = scmp.lt.s32.totalorder %s20, 1
        %s231 = scalar_select %p230, %s20, 1
        %p232 = scmp.lt.s32.totalorder %s229, 15
        %s233 = scalar_select %p232, %s229, 15
        %s234 = smul.addr %s233, 2
        %s235 = smul.addr %s231, 32
        %s236 = sadd.s32 %s234, %s235
        %s237 = smul.addr %s236, 8
        %s238 = scalar_lea.vmem %s0, %s237
        %s239 = smul.u32 16, %s21
      $region32: #{aspp_forward.6} parent=27 // pred_fallthru
        _
      // Predicated region
      $region33: #{aspp_forward.6} parent=27 // pred_check
        %p240 = pneg %p136
      $region34: #{aspp_forward.6} parent=27 // pred_check_branch
        %242 = sbr.rel (%p240) target = $region36
      $region35: #{aspp_forward.6} parent=27 // pred_region
        %p243 = scmp.lt.s32.totalorder %s20, 1
        %s244 = scalar_select %p243, %s20, 1
        %s245 = scalar_lea.vmem %s4, %s244
      $region36: #{aspp_forward.6} parent=27 // pred_fallthru
        _
    $region28: #{aspp_forward.6} parent=5 // pred_fallthru
      _
    %p246 = scmp.le.s32.totalorder 1, %s13
    %p247 = scmp.lt.s32.totalorder %s13, 3
    %p248 = pnand %p246, %p247
    %p249 = pneg %p248
    // Predicated region
    $region37: #{aspp_forward.6} parent=5 // pred_check
      _
    $region38: #{aspp_forward.6} parent=5 // pred_check_branch
      %251 = sbr.rel (%p248) target = $region40
    $region39: #{aspp_forward.6} parent=5 // pred_region
      %s252 = ssub.s32 %s13, 1
      %s253 = smul.u32 16, %s23
      %p254 = scmp.lt.s32.totalorder %s22, 1
      %s255 = scalar_select %p254, %s22, 1
      %p256 = scmp.lt.s32.totalorder %s253, 15
      %s257 = scalar_select %p256, %s253, 15
      %s258 = smul.addr %s257, 2
      %s259 = smul.addr %s255, 32
      %s260 = sadd.s32 %s258, %s259
      %s261 = smul.addr %s260, 8
      %s262 = scalar_lea.vmem %s0, %s261
      %p263 = pneg %p53
      %p264 = pneg %p50
      %p265 = pneg %p74
      %p266 = pneg %p71
      %p267 = pneg %p95
      %p268 = pneg %p92
      %p269 = pneg %p116
      %p270 = pneg %p113
      %p271 = scmp.lt.s32.totalorder %s22, 1
      %s272 = scalar_select %p271, %s22, 1
      %s273 = scalar_lea.vmem %s4, %s272
      %p274 = pneg %p142
      %p275 = pneg %p139
      %p276 = pneg %p170
      %p277 = pneg %p167
      %s278 = smul.u32 16, %s23
      %p279 = scmp.lt.s32.totalorder %s22, 1
      %s280 = scalar_select %p279, %s22, 1
      %p281 = scmp.lt.s32.totalorder %s278, 15
      %s282 = scalar_select %p281, %s278, 15
      %s283 = smul.addr %s282, 2
      %s284 = smul.addr %s280, 32
      %s285 = sadd.s32 %s283, %s284
      %s286 = smul.addr %s285, 8
      %s287 = scalar_lea.vmem %s5, %s286
      %p288 = pneg %p198
      %p289 = pneg %p195
      %p290 = scmp.lt.s32.totalorder %s22, 1
      %s291 = scalar_select %p290, %s22, 1
      %p292 = scmp.lt.s32.totalorder %s23, 0
      %s293 = scalar_select %p292, %s23, 0
      %s294 = sadd.s32 %s293, %s291
      %s295 = smul.addr %s294, 2
      %s296 = scalar_lea.vmem %s6, %s295
      %s297 = smul.u32 16, %s23
      %p298 = scmp.lt.s32.totalorder %s22, 1
      %s299 = scalar_select %p298, %s22, 1
      %p300 = scmp.lt.s32.totalorder %s297, 15
      %s301 = scalar_select %p300, %s297, 15
      %s302 = smul.addr %s301, 2
      %s303 = smul.addr %s299, 32
      %s304 = sadd.s32 %s302, %s303
      %s305 = smul.addr %s304, 8
      %s306 = scalar_lea.vmem %s0, %s305
      %s307 = smul.u32 16, %s23
      %p308 = scmp.lt.s32.totalorder %s22, 1
      %s309 = scalar_select %p308, %s22, 1
      %s310 = scalar_lea.vmem %s4, %s309
      %s311 = smul.u32 16, %s23
      %p312 = scmp.lt.s32.totalorder %s22, 1
      %s313 = scalar_select %p312, %s22, 1
      %p314 = scmp.lt.s32.totalorder %s311, 15
      %s315 = scalar_select %p314, %s311, 15
      %s316 = smul.addr %s315, 2
      %s317 = smul.addr %s313, 32
      %s318 = sadd.s32 %s316, %s317
      %s319 = smul.addr %s318, 8
      %s320 = scalar_lea.vmem %s5, %s319
      %s321 = smul.u32 16, %s23
      %p322 = scmp.lt.s32.totalorder %s22, 1
      %s323 = scalar_select %p322, %s22, 1
      %p324 = scmp.lt.s32.totalorder %s23, 0
      %s325 = scalar_select %p324, %s23, 0
      %s326 = sadd.s32 %s325, %s323
      %s327 = smul.addr %s326, 2
      %s328 = scalar_lea.vmem %s6, %s327
      %v329 = vld [vmem:[%s306] sm:$0xff]
      %v330 = vld [vmem:[%s306 + $0x8] sm:$0xff]
      %v331 = vld [vmem:[%s306 + $0x10] sm:$0xff]
      %v332 = vld [vmem:[%s306 + $0x18] sm:$0xff]
      %v333 = vld [vmem:[%s306 + $0x20] sm:$0xff]
      %v334 = vld [vmem:[%s306 + $0x28] sm:$0xff]
      %v335 = vld [vmem:[%s306 + $0x30] sm:$0xff]
      %v336 = vld [vmem:[%s306 + $0x38] sm:$0xff]
      %v337 = vld [vmem:[%s306 + $0x40] sm:$0xff]
      %v338 = vld [vmem:[%s306 + $0x48] sm:$0xff]
      %v339 = vld [vmem:[%s306 + $0x50] sm:$0xff]
      %v340 = vld [vmem:[%s306 + $0x58] sm:$0xff]
      %v341 = vld [vmem:[%s306 + $0x60] sm:$0xff]
      %v342 = vld [vmem:[%s306 + $0x68] sm:$0xff]
      %v343 = vld [vmem:[%s306 + $0x70] sm:$0xff]
      %v344 = vld [vmem:[%s306 + $0x78] sm:$0xff]
      %v345 = vld [vmem:[%s306 + $0x80] sm:$0xff]
      %v346 = vld [vmem:[%s306 + $0x88] sm:$0xff]
      %v347 = vld [vmem:[%s306 + $0x90] sm:$0xff]
      %v348 = vld [vmem:[%s306 + $0x98] sm:$0xff]
      %v349 = vld [vmem:[%s306 + $0xa0] sm:$0xff]
      %v350 = vld [vmem:[%s306 + $0xa8] sm:$0xff]
      %v351 = vld [vmem:[%s306 + $0xb0] sm:$0xff]
      %v352 = vld [vmem:[%s306 + $0xb8] sm:$0xff]
      %v353 = vld [vmem:[%s306 + $0xc0] sm:$0xff]
      %v354 = vld [vmem:[%s306 + $0xc8] sm:$0xff]
      %v355 = vld [vmem:[%s306 + $0xd0] sm:$0xff]
      %v356 = vld [vmem:[%s306 + $0xd8] sm:$0xff]
      %v357 = vld [vmem:[%s306 + $0xe0] sm:$0xff]
      %v358 = vld [vmem:[%s306 + $0xe8] sm:$0xff]
      %v359 = vld [vmem:[%s306 + $0xf0] sm:$0xff]
      %v360 = vld [vmem:[%s306 + $0xf8] sm:$0xff]
      %v361 = vld [vmem:[%s1] sm:$0x1]
      %v363 = vperm.slane %v361, 0
      %v365 = vmul.f32 %v329, %v363
      %v366 = vmul.f32 %v330, %v363
      %v367 = vmul.f32 %v331, %v363
      %v368 = vmul.f32 %v332, %v363
      %v369 = vmul.f32 %v333, %v363
      %v370 = vmul.f32 %v334, %v363
      %v371 = vmul.f32 %v335, %v363
      %v372 = vmul.f32 %v336, %v363
      %v373 = vmul.f32 %v337, %v363
      %v374 = vmul.f32 %v338, %v363
      %v375 = vmul.f32 %v339, %v363
      %v376 = vmul.f32 %v340, %v363
      %v377 = vmul.f32 %v341, %v363
      %v378 = vmul.f32 %v342, %v363
      %v379 = vmul.f32 %v343, %v363
      %v380 = vmul.f32 %v344, %v363
      %v381 = vmul.f32 %v345, %v363
      %v382 = vmul.f32 %v346, %v363
      %v383 = vmul.f32 %v347, %v363
      %v384 = vmul.f32 %v348, %v363
      %v385 = vmul.f32 %v349, %v363
      %v386 = vmul.f32 %v350, %v363
      %v387 = vmul.f32 %v351, %v363
      %v388 = vmul.f32 %v352, %v363
      %v389 = vmul.f32 %v353, %v363
      %v390 = vmul.f32 %v354, %v363
      %v391 = vmul.f32 %v355, %v363
      %v392 = vmul.f32 %v356, %v363
      %v393 = vmul.f32 %v357, %v363
      %v394 = vmul.f32 %v358, %v363
      %v395 = vmul.f32 %v359, %v363
      %v396 = vmul.f32 %v360, %v363
      %v397 = vld [vmem:[%s2] sm:$0x1]
      %v399 = vperm.slane %v397, 0
      %v401 = vadd.f32 %v365, %v399
      %v402 = vadd.f32 %v366, %v399
      %v403 = vadd.f32 %v367, %v399
      %v404 = vadd.f32 %v368, %v399
      %v405 = vadd.f32 %v369, %v399
      %v406 = vadd.f32 %v370, %v399
      %v407 = vadd.f32 %v371, %v399
      %v408 = vadd.f32 %v372, %v399
      %v409 = vadd.f32 %v373, %v399
      %v410 = vadd.f32 %v374, %v399
      %v411 = vadd.f32 %v375, %v399
      %v412 = vadd.f32 %v376, %v399
      %v413 = vadd.f32 %v377, %v399
      %v414 = vadd.f32 %v378, %v399
      %v415 = vadd.f32 %v379, %v399
      %v416 = vadd.f32 %v380, %v399
      %v417 = vadd.f32 %v381, %v399
      %v418 = vadd.f32 %v382, %v399
      %v419 = vadd.f32 %v383, %v399
      %v420 = vadd.f32 %v384, %v399
      %v421 = vadd.f32 %v385, %v399
      %v422 = vadd.f32 %v386, %v399
      %v423 = vadd.f32 %v387, %v399
      %v424 = vadd.f32 %v388, %v399
      %v425 = vadd.f32 %v389, %v399
      %v426 = vadd.f32 %v390, %v399
      %v427 = vadd.f32 %v391, %v399
      %v428 = vadd.f32 %v392, %v399
      %v429 = vadd.f32 %v393, %v399
      %v430 = vadd.f32 %v394, %v399
      %v431 = vadd.f32 %v395, %v399
      %v432 = vadd.f32 %v396, %v399
      %v433 = vmax.f32 %v401, 0.0
      %v434 = vmax.f32 %v402, 0.0
      %v435 = vmax.f32 %v403, 0.0
      %v436 = vmax.f32 %v404, 0.0
      %v437 = vmax.f32 %v405, 0.0
      %v438 = vmax.f32 %v406, 0.0
      %v439 = vmax.f32 %v407, 0.0
      %v440 = vmax.f32 %v408, 0.0
      %v441 = vmax.f32 %v409, 0.0
      %v442 = vmax.f32 %v410, 0.0
      %v443 = vmax.f32 %v411, 0.0
      %v444 = vmax.f32 %v412, 0.0
      %v445 = vmax.f32 %v413, 0.0
      %v446 = vmax.f32 %v414, 0.0
      %v447 = vmax.f32 %v415, 0.0
      %v448 = vmax.f32 %v416, 0.0
      %v449 = vmax.f32 %v417, 0.0
      %v450 = vmax.f32 %v418, 0.0
      %v451 = vmax.f32 %v419, 0.0
      %v452 = vmax.f32 %v420, 0.0
      %v453 = vmax.f32 %v421, 0.0
      %v454 = vmax.f32 %v422, 0.0
      %v455 = vmax.f32 %v423, 0.0
      %v456 = vmax.f32 %v424, 0.0
      %v457 = vmax.f32 %v425, 0.0
      %v458 = vmax.f32 %v426, 0.0
      %v459 = vmax.f32 %v427, 0.0
      %v460 = vmax.f32 %v428, 0.0
      %v461 = vmax.f32 %v429, 0.0
      %v462 = vmax.f32 %v430, 0.0
      %v463 = vmax.f32 %v431, 0.0
      %v464 = vmax.f32 %v432, 0.0
      %v465 = vld [vmem:[%s3] sm:$0xff]
      %v466 = vld [vmem:[%s3 + $0x8] sm:$0xff]
      %v467 = vld [vmem:[%s3 + $0x10] sm:$0xff]
      %v468 = vld [vmem:[%s3 + $0x18] sm:$0xff]
      %v469 = vld [vmem:[%s3 + $0x20] sm:$0xff]
      %v470 = vld [vmem:[%s310] sm:$0x1]
      %v472 = vperm.slane %v470, 0
      %vm474 = vcmask 326656
      %v476 = vsel %vm474, %v433, 0
      %v479 = vsel %vm474, %v434, 0
      %v482 = vsel %vm474, %v435, 0
      %v485 = vsel %vm474, %v436, 0
      %v488 = vsel %vm474, %v437, 0
      %v491 = vsel %vm474, %v438, 0
      %v494 = vsel %vm474, %v439, 0
      %v497 = vsel %vm474, %v440, 0
      %v500 = vsel %vm474, %v441, 0
      %v503 = vsel %vm474, %v442, 0
      %v506 = vsel %vm474, %v443, 0
      %v509 = vsel %vm474, %v444, 0
      %v512 = vsel %vm474, %v445, 0
      %v515 = vsel %vm474, %v446, 0
      %v518 = vsel %vm474, %v447, 0
      %v521 = vsel %vm474, %v448, 0
      %v524 = vsel %vm474, %v449, 0
      %v527 = vsel %vm474, %v450, 0
      %v530 = vsel %vm474, %v451, 0
      %v533 = vsel %vm474, %v452, 0
      %v536 = vsel %vm474, %v453, 0
      %v539 = vsel %vm474, %v454, 0
      %v542 = vsel %vm474, %v455, 0
      %v545 = vsel %vm474, %v456, 0
      %v548 = vsel %vm474, %v457, 0
      %v551 = vsel %vm474, %v458, 0
      %v554 = vsel %vm474, %v459, 0
      %v557 = vsel %vm474, %v460, 0
      %v560 = vsel %vm474, %v461, 0
      %v563 = vsel %vm474, %v462, 0
      %v566 = vsel %vm474, %v463, 0
      %v569 = vsel %vm474, %v464, 0
      %571 = vmatpush.msra.mxu0 0.0
      %572 = vmatpush.msra.mxu0 0.0
      %573 = vmatpush.msra.mxu0 0.0
      %574 = vmatpush.msra.mxu0 0.0
      %575 = vmatpush.msra.mxu0 0.0
      %576 = vmatpush.msra.mxu0 0.0
      %577 = vmatpush.msra.mxu0 0.0
      %578 = vmatpush.msra.mxu0 0.0
      %579 = vmatpush.msra.mxu0 0.0
      %580 = vmatpush.msra.mxu0 0.0
      %581 = vmatpush.msra.mxu0 0.0
      %582 = vmatpush.msra.mxu0 %v469
      %583 = vmatpush.msra.mxu0 %v468
      %584 = vmatpush.msra.mxu0 %v467
      %585 = vmatpush.msra.mxu0 %v466
      %586 = vmatpush.msra.mxu0 %v465
      %587 = vmatmul.f32.gmra.mxu0 %v476
      %v588 = vpop.f32.mrf.mxu0
      %v589 = vadd.f32 %v472, %v588
      %590 = vmatmul.f32.gmra.mxu0 %v479
      %v591 = vpop.f32.mrf.mxu0
      %v592 = vadd.f32 %v472, %v591
      %593 = vmatmul.f32.gmra.mxu0 %v482
      %v594 = vpop.f32.mrf.mxu0
      %v595 = vadd.f32 %v472, %v594
      %596 = vmatmul.f32.gmra.mxu0 %v485
      %v597 = vpop.f32.mrf.mxu0
      %v598 = vadd.f32 %v472, %v597
      %599 = vmatmul.f32.gmra.mxu0 %v488
      %v600 = vpop.f32.mrf.mxu0
      %v601 = vadd.f32 %v472, %v600
      %602 = vmatmul.f32.gmra.mxu0 %v491
      %v603 = vpop.f32.mrf.mxu0
      %v604 = vadd.f32 %v472, %v603
      %605 = vmatmul.f32.gmra.mxu0 %v494
      %v606 = vpop.f32.mrf.mxu0
      %v607 = vadd.f32 %v472, %v606
      %608 = vmatmul.f32.gmra.mxu0 %v497
      %v609 = vpop.f32.mrf.mxu0
      %v610 = vadd.f32 %v472, %v609
      %611 = vmatmul.f32.gmra.mxu0 %v500
      %v612 = vpop.f32.mrf.mxu0
      %v613 = vadd.f32 %v472, %v612
      %614 = vmatmul.f32.gmra.mxu0 %v503
      %v615 = vpop.f32.mrf.mxu0
      %v616 = vadd.f32 %v472, %v615
      %617 = vmatmul.f32.gmra.mxu0 %v506
      %v618 = vpop.f32.mrf.mxu0
      %v619 = vadd.f32 %v472, %v618
      %620 = vmatmul.f32.gmra.mxu0 %v509
      %v621 = vpop.f32.mrf.mxu0
      %v622 = vadd.f32 %v472, %v621
      %623 = vmatmul.f32.gmra.mxu0 %v512
      %v624 = vpop.f32.mrf.mxu0
      %v625 = vadd.f32 %v472, %v624
      %626 = vmatmul.f32.gmra.mxu0 %v515
      %v627 = vpop.f32.mrf.mxu0
      %v628 = vadd.f32 %v472, %v627
      %629 = vmatmul.f32.gmra.mxu0 %v518
      %v630 = vpop.f32.mrf.mxu0
      %v631 = vadd.f32 %v472, %v630
      %632 = vmatmul.f32.gmra.mxu0 %v521
      %v633 = vpop.f32.mrf.mxu0
      %v634 = vadd.f32 %v472, %v633
      %635 = vmatmul.f32.gmra.mxu0 %v524
      %v636 = vpop.f32.mrf.mxu0
      %v637 = vadd.f32 %v472, %v636
      %638 = vmatmul.f32.gmra.mxu0 %v527
      %v639 = vpop.f32.mrf.mxu0
      %v640 = vadd.f32 %v472, %v639
      %641 = vmatmul.f32.gmra.mxu0 %v530
      %v642 = vpop.f32.mrf.mxu0
      %v643 = vadd.f32 %v472, %v642
      %644 = vmatmul.f32.gmra.mxu0 %v533
      %v645 = vpop.f32.mrf.mxu0
      %v646 = vadd.f32 %v472, %v645
      %647 = vmatmul.f32.gmra.mxu0 %v536
      %v648 = vpop.f32.mrf.mxu0
      %v649 = vadd.f32 %v472, %v648
      %650 = vmatmul.f32.gmra.mxu0 %v539
      %v651 = vpop.f32.mrf.mxu0
      %v652 = vadd.f32 %v472, %v651
      %653 = vmatmul.f32.gmra.mxu0 %v542
      %v654 = vpop.f32.mrf.mxu0
      %v655 = vadd.f32 %v472, %v654
      %656 = vmatmul.f32.gmra.mxu0 %v545
      %v657 = vpop.f32.mrf.mxu0
      %v658 = vadd.f32 %v472, %v657
      %659 = vmatmul.f32.gmra.mxu0 %v548
      %v660 = vpop.f32.mrf.mxu0
      %v661 = vadd.f32 %v472, %v660
      %662 = vmatmul.f32.gmra.mxu0 %v551
      %v663 = vpop.f32.mrf.mxu0
      %v664 = vadd.f32 %v472, %v663
      %665 = vmatmul.f32.gmra.mxu0 %v554
      %v666 = vpop.f32.mrf.mxu0
      %v667 = vadd.f32 %v472, %v666
      %668 = vmatmul.f32.gmra.mxu0 %v557
      %v669 = vpop.f32.mrf.mxu0
      %v670 = vadd.f32 %v472, %v669
      %671 = vmatmul.f32.gmra.mxu0 %v560
      %v672 = vpop.f32.mrf.mxu0
      %v673 = vadd.f32 %v472, %v672
      %674 = vmatmul.f32.gmra.mxu0 %v563
      %v675 = vpop.f32.mrf.mxu0
      %v676 = vadd.f32 %v472, %v675
      %677 = vmatmul.f32.gmra.mxu0 %v566
      %v678 = vpop.f32.mrf.mxu0
      %v679 = vadd.f32 %v472, %v678
      %680 = vmatmul.f32.gmra.mxu0 %v569
      %v681 = vpop.f32.mrf.mxu0
      %v682 = vadd.f32 %v472, %v681
      %683 = vdwg.mxu0
      %vm684 = vcmask 64512
      %685 = vst.msk [vmem:[%s320] sm:$0xff] %vm684, %v589
      %686 = vst.msk [vmem:[%s320 + $0x8] sm:$0xff] %vm684, %v592
      %687 = vst.msk [vmem:[%s320 + $0x10] sm:$0xff] %vm684, %v595
      %688 = vst.msk [vmem:[%s320 + $0x18] sm:$0xff] %vm684, %v598
      %689 = vst.msk [vmem:[%s320 + $0x20] sm:$0xff] %vm684, %v601
      %690 = vst.msk [vmem:[%s320 + $0x28] sm:$0xff] %vm684, %v604
      %691 = vst.msk [vmem:[%s320 + $0x30] sm:$0xff] %vm684, %v607
      %692 = vst.msk [vmem:[%s320 + $0x38] sm:$0xff] %vm684, %v610
      %693 = vst.msk [vmem:[%s320 + $0x40] sm:$0xff] %vm684, %v613
      %694 = vst.msk [vmem:[%s320 + $0x48] sm:$0xff] %vm684, %v616
      %695 = vst.msk [vmem:[%s320 + $0x50] sm:$0xff] %vm684, %v619
      %696 = vst.msk [vmem:[%s320 + $0x58] sm:$0xff] %vm684, %v622
      %697 = vst.msk [vmem:[%s320 + $0x60] sm:$0xff] %vm684, %v625
      %698 = vst.msk [vmem:[%s320 + $0x68] sm:$0xff] %vm684, %v628
      %699 = vst.msk [vmem:[%s320 + $0x70] sm:$0xff] %vm684, %v631
      %700 = vst.msk [vmem:[%s320 + $0x78] sm:$0xff] %vm684, %v634
      %701 = vst.msk [vmem:[%s320 + $0x80] sm:$0xff] %vm684, %v637
      %702 = vst.msk [vmem:[%s320 + $0x88] sm:$0xff] %vm684, %v640
      %703 = vst.msk [vmem:[%s320 + $0x90] sm:$0xff] %vm684, %v643
      %704 = vst.msk [vmem:[%s320 + $0x98] sm:$0xff] %vm684, %v646
      %705 = vst.msk [vmem:[%s320 + $0xa0] sm:$0xff] %vm684, %v649
      %706 = vst.msk [vmem:[%s320 + $0xa8] sm:$0xff] %vm684, %v652
      %707 = vst.msk [vmem:[%s320 + $0xb0] sm:$0xff] %vm684, %v655
      %708 = vst.msk [vmem:[%s320 + $0xb8] sm:$0xff] %vm684, %v658
      %709 = vst.msk [vmem:[%s320 + $0xc0] sm:$0xff] %vm684, %v661
      %710 = vst.msk [vmem:[%s320 + $0xc8] sm:$0xff] %vm684, %v664
      %711 = vst.msk [vmem:[%s320 + $0xd0] sm:$0xff] %vm684, %v667
      %712 = vst.msk [vmem:[%s320 + $0xd8] sm:$0xff] %vm684, %v670
      %713 = vst.msk [vmem:[%s320 + $0xe0] sm:$0xff] %vm684, %v673
      %714 = vst.msk [vmem:[%s320 + $0xe8] sm:$0xff] %vm684, %v676
      %715 = vst.msk [vmem:[%s320 + $0xf0] sm:$0xff] %vm684, %v679
      %716 = vst.msk [vmem:[%s320 + $0xf8] sm:$0xff] %vm684, %v682
      %v717 = vsel %vm684, %v589, 0.0
      %v718 = vsel %vm684, %v592, 0.0
      %v719 = vadd.f32 %v717, %v718
      %v720 = vsel %vm684, %v595, 0.0
      %v721 = vadd.f32 %v719, %v720
      %v722 = vsel %vm684, %v598, 0.0
      %v723 = vadd.f32 %v721, %v722
      %v724 = vsel %vm684, %v601, 0.0
      %v725 = vadd.f32 %v723, %v724
      %v726 = vsel %vm684, %v604, 0.0
      %v727 = vadd.f32 %v725, %v726
      %v728 = vsel %vm684, %v607, 0.0
      %v729 = vadd.f32 %v727, %v728
      %v730 = vsel %vm684, %v610, 0.0
      %v731 = vadd.f32 %v729, %v730
      %v732 = vsel %vm684, %v613, 0.0
      %v733 = vadd.f32 %v731, %v732
      %v734 = vsel %vm684, %v616, 0.0
      %v735 = vadd.f32 %v733, %v734
      %v736 = vsel %vm684, %v619, 0.0
      %v737 = vadd.f32 %v735, %v736
      %v738 = vsel %vm684, %v622, 0.0
      %v739 = vadd.f32 %v737, %v738
      %v740 = vsel %vm684, %v625, 0.0
      %v741 = vadd.f32 %v739, %v740
      %v742 = vsel %vm684, %v628, 0.0
      %v743 = vadd.f32 %v741, %v742
      %v744 = vsel %vm684, %v631, 0.0
      %v745 = vadd.f32 %v743, %v744
      %v746 = vsel %vm684, %v634, 0.0
      %v747 = vadd.f32 %v745, %v746
      %v748 = vsel %vm684, %v637, 0.0
      %v749 = vadd.f32 %v747, %v748
      %v750 = vsel %vm684, %v640, 0.0
      %v751 = vadd.f32 %v749, %v750
      %v752 = vsel %vm684, %v643, 0.0
      %v753 = vadd.f32 %v751, %v752
      %v754 = vsel %vm684, %v646, 0.0
      %v755 = vadd.f32 %v753, %v754
      %v756 = vsel %vm684, %v649, 0.0
      %v757 = vadd.f32 %v755, %v756
      %v758 = vsel %vm684, %v652, 0.0
      %v759 = vadd.f32 %v757, %v758
      %v760 = vsel %vm684, %v655, 0.0
      %v761 = vadd.f32 %v759, %v760
      %v762 = vsel %vm684, %v658, 0.0
      %v763 = vadd.f32 %v761, %v762
      %v764 = vsel %vm684, %v661, 0.0
      %v765 = vadd.f32 %v763, %v764
      %v766 = vsel %vm684, %v664, 0.0
      %v767 = vadd.f32 %v765, %v766
      %v768 = vsel %vm684, %v667, 0.0
      %v769 = vadd.f32 %v767, %v768
      %v770 = vsel %vm684, %v670, 0.0
      %v771 = vadd.f32 %v769, %v770
      %v772 = vsel %vm684, %v673, 0.0
      %v773 = vadd.f32 %v771, %v772
      %v774 = vsel %vm684, %v676, 0.0
      %v775 = vadd.f32 %v773, %v774
      %v776 = vsel %vm684, %v679, 0.0
      %v777 = vadd.f32 %v775, %v776
      %v778 = vsel %vm684, %v682, 0.0
      %v779 = vadd.f32 %v777, %v778
      %v780 = vrot.slane %v779, 4
      %v781 = vadd.f32 %v779, %v780
      %v782 = vrot.slane %v781, 2
      %v783 = vadd.f32 %v781, %v782
      %v784 = vrot.slane %v783, 1
      %v785 = vadd.f32 %v783, %v784
      %v786 = vmul.f32 %v589, %v589
      %v787 = vmul.f32 %v592, %v592
      %v788 = vmul.f32 %v595, %v595
      %v789 = vmul.f32 %v598, %v598
      %v790 = vmul.f32 %v601, %v601
      %v791 = vmul.f32 %v604, %v604
      %v792 = vmul.f32 %v607, %v607
      %v793 = vmul.f32 %v610, %v610
      %v794 = vmul.f32 %v613, %v613
      %v795 = vmul.f32 %v616, %v616
      %v796 = vmul.f32 %v619, %v619
      %v797 = vmul.f32 %v622, %v622
      %v798 = vmul.f32 %v625, %v625
      %v799 = vmul.f32 %v628, %v628
      %v800 = vmul.f32 %v631, %v631
      %v801 = vmul.f32 %v634, %v634
      %v802 = vmul.f32 %v637, %v637
      %v803 = vmul.f32 %v640, %v640
      %v804 = vmul.f32 %v643, %v643
      %v805 = vmul.f32 %v646, %v646
      %v806 = vmul.f32 %v649, %v649
      %v807 = vmul.f32 %v652, %v652
      %v808 = vmul.f32 %v655, %v655
      %v809 = vmul.f32 %v658, %v658
      %v810 = vmul.f32 %v661, %v661
      %v811 = vmul.f32 %v664, %v664
      %v812 = vmul.f32 %v667, %v667
      %v813 = vmul.f32 %v670, %v670
      %v814 = vmul.f32 %v673, %v673
      %v815 = vmul.f32 %v676, %v676
      %v816 = vmul.f32 %v679, %v679
      %v817 = vmul.f32 %v682, %v682
      %v818 = vsel %vm684, %v786, 0.0
      %v819 = vsel %vm684, %v787, 0.0
      %v820 = vadd.f32 %v818, %v819
      %v821 = vsel %vm684, %v788, 0.0
      %v822 = vadd.f32 %v820, %v821
      %v823 = vsel %vm684, %v789, 0.0
      %v824 = vadd.f32 %v822, %v823
      %v825 = vsel %vm684, %v790, 0.0
      %v826 = vadd.f32 %v824, %v825
      %v827 = vsel %vm684, %v791, 0.0
      %v828 = vadd.f32 %v826, %v827
      %v829 = vsel %vm684, %v792, 0.0
      %v830 = vadd.f32 %v828, %v829
      %v831 = vsel %vm684, %v793, 0.0
      %v832 = vadd.f32 %v830, %v831
      %v833 = vsel %vm684, %v794, 0.0
      %v834 = vadd.f32 %v832, %v833
      %v835 = vsel %vm684, %v795, 0.0
      %v836 = vadd.f32 %v834, %v835
      %v837 = vsel %vm684, %v796, 0.0
      %v838 = vadd.f32 %v836, %v837
      %v839 = vsel %vm684, %v797, 0.0
      %v840 = vadd.f32 %v838, %v839
      %v841 = vsel %vm684, %v798, 0.0
      %v842 = vadd.f32 %v840, %v841
      %v843 = vsel %vm684, %v799, 0.0
      %v844 = vadd.f32 %v842, %v843
      %v845 = vsel %vm684, %v800, 0.0
      %v846 = vadd.f32 %v844, %v845
      %v847 = vsel %vm684, %v801, 0.0
      %v848 = vadd.f32 %v846, %v847
      %v849 = vsel %vm684, %v802, 0.0
      %v850 = vadd.f32 %v848, %v849
      %v851 = vsel %vm684, %v803, 0.0
      %v852 = vadd.f32 %v850, %v851
      %v853 = vsel %vm684, %v804, 0.0
      %v854 = vadd.f32 %v852, %v853
      %v855 = vsel %vm684, %v805, 0.0
      %v856 = vadd.f32 %v854, %v855
      %v857 = vsel %vm684, %v806, 0.0
      %v858 = vadd.f32 %v856, %v857
      %v859 = vsel %vm684, %v807, 0.0
      %v860 = vadd.f32 %v858, %v859
      %v861 = vsel %vm684, %v808, 0.0
      %v862 = vadd.f32 %v860, %v861
      %v863 = vsel %vm684, %v809, 0.0
      %v864 = vadd.f32 %v862, %v863
      %v865 = vsel %vm684, %v810, 0.0
      %v866 = vadd.f32 %v864, %v865
      %v867 = vsel %vm684, %v811, 0.0
      %v868 = vadd.f32 %v866, %v867
      %v869 = vsel %vm684, %v812, 0.0
      %v870 = vadd.f32 %v868, %v869
      %v871 = vsel %vm684, %v813, 0.0
      %v872 = vadd.f32 %v870, %v871
      %v873 = vsel %vm684, %v814, 0.0
      %v874 = vadd.f32 %v872, %v873
      %v875 = vsel %vm684, %v815, 0.0
      %v876 = vadd.f32 %v874, %v875
      %v877 = vsel %vm684, %v816, 0.0
      %v878 = vadd.f32 %v876, %v877
      %v879 = vsel %vm684, %v817, 0.0
      %v880 = vadd.f32 %v878, %v879
      %v881 = vrot.slane %v880, 4
      %v882 = vadd.f32 %v880, %v881
      %v883 = vrot.slane %v882, 2
      %v884 = vadd.f32 %v882, %v883
      %v885 = vrot.slane %v884, 1
      %v886 = vadd.f32 %v884, %v885
      %vm887 = vcmask 1040384
      %v888 = vsel %vm887, %v785, %v886
      %vm889 = vcmask 58368
      %890 = vst.msk [vmem:[%s328] sm:$0x3] %vm889, %v888
      %s891 = smul.u32 16, %s23
      %p892 = scmp.lt.s32.totalorder %s22, 1
      %s893 = scalar_select %p892, %s22, 1
      %p894 = scmp.lt.s32.totalorder %s891, 15
      %s895 = scalar_select %p894, %s891, 15
      %s896 = smul.addr %s895, 2
      %s897 = smul.addr %s893, 32
      %s898 = sadd.s32 %s896, %s897
      %s899 = smul.addr %s898, 8
      %s900 = scalar_lea.vmem %s5, %s899
      %p901 = scmp.lt.s32.totalorder %s22, 1
      %s902 = scalar_select %p901, %s22, 1
      %p903 = scmp.lt.s32.totalorder %s23, 0
      %s904 = scalar_select %p903, %s23, 0
      %s905 = sadd.s32 %s904, %s902
      %s906 = smul.addr %s905, 2
      %s907 = scalar_lea.vmem %s6, %s906
      // Predicated region
      $region41: #{aspp_forward.6} parent=39 // pred_check
        %p908 = pneg %p167
      $region42: #{aspp_forward.6} parent=39 // pred_check_branch
        %910 = sbr.rel (%p908) target = $region44
      $region43: #{aspp_forward.6} parent=39 // pred_region
        %s911 = smul.u32 16, %s23
      $region44: #{aspp_forward.6} parent=39 // pred_fallthru
        _
      // Predicated region
      $region45: #{aspp_forward.6} parent=39 // pred_check
        %p912 = pneg %p195
      $region46: #{aspp_forward.6} parent=39 // pred_check_branch
        %914 = sbr.rel (%p912) target = $region48
      $region47: #{aspp_forward.6} parent=39 // pred_region
        _
      $region48: #{aspp_forward.6} parent=39 // pred_fallthru
        _
    $region40: #{aspp_forward.6} parent=5 // pred_fallthru
      _
    %p915 = scmp.le.s32.totalorder 2, %s13
    // Predicated region
    $region49: #{aspp_forward.6} parent=5 // pred_check
      %p916 = pneg %p915
    $region50: #{aspp_forward.6} parent=5 // pred_check_branch
      %918 = sbr.rel (%p916) target = $region52
    $region51: #{aspp_forward.6} parent=5 // pred_region
      %s919 = ssub.s32 %s13, 2
      // Predicated region
      $region53: #{aspp_forward.6} parent=51 // pred_check
        %p920 = pneg %p173
      $region54: #{aspp_forward.6} parent=51 // pred_check_branch
        %922 = sbr.rel (%p920) target = $region56
      $region55: #{aspp_forward.6} parent=51 // pred_region
        %s923 = smul.u32 16, %s25
        %p924 = scmp.lt.s32.totalorder %s24, 1
        %s925 = scalar_select %p924, %s24, 1
        %p926 = scmp.lt.s32.totalorder %s923, 15
        %s927 = scalar_select %p926, %s923, 15
        %s928 = smul.addr %s927, 2
        %s929 = smul.addr %s925, 32
        %s930 = sadd.s32 %s928, %s929
        %s931 = smul.addr %s930, 8
        %s932 = scalar_lea.vmem %s5, %s931
      $region56: #{aspp_forward.6} parent=51 // pred_fallthru
        _
      // Predicated region
      $region57: #{aspp_forward.6} parent=51 // pred_check
        %p933 = pneg %p201
      $region58: #{aspp_forward.6} parent=51 // pred_check_branch
        %935 = sbr.rel (%p933) target = $region60
      $region59: #{aspp_forward.6} parent=51 // pred_region
        %p936 = scmp.lt.s32.totalorder %s24, 1
        %s937 = scalar_select %p936, %s24, 1
        %p938 = scmp.lt.s32.totalorder %s25, 0
        %s939 = scalar_select %p938, %s25, 0
        %s940 = sadd.s32 %s939, %s937
        %s941 = smul.addr %s940, 2
        %s942 = scalar_lea.vmem %s6, %s941
      $region60: #{aspp_forward.6} parent=51 // pred_fallthru
        _
    $region52: #{aspp_forward.6} parent=5 // pred_fallthru
      _
  $region6: #{aspp_forward.6} parent=0 // loop_footer
    %s17 = sadd.s32 1, %s13
  $region7: #{aspp_forward.6} parent=0 // loop_footer_branch
    %12 = sbr.rel target = $region3
  $region8: #{aspp_forward.6} parent=0 // loop_exit
    _

// kernel: aspp_forward.7
$region0: #{aspp_forward.7}
  #allocation0 [shape = 'u32[]', space=smem, size = 0x4, offset = 0x4, fixed_abs, tag = 'smem constant byte address 0x4 - core index']
  #allocation1 [shape = 'u32[72,128]{1,0:T(1,128)}', space=vmem, size = 0x9000, scoped, tag = 'internal scratch']
  %s0 = inlined_call_operand.vmem [shape: f32[2,16,16,8], index: 0, kind: input, shape index: {}]
  %s1 = inlined_call_operand.vmem [shape: f32[1,1,1,8], index: 1, kind: input, shape index: {}]
  %s2 = inlined_call_operand.vmem [shape: f32[1,1,1,8], index: 2, kind: input, shape index: {}]
  %s3 = inlined_call_operand.vmem [shape: f32[2,16,16,8], index: 3, kind: output, shape index: {}]
  %s4 = sld [smem:[#allocation0]]
  $region45: #{aspp_forward.7} parent=0
    _
  %s6 = ssub.s32 1, %s4
  %s7 = scalar_select 0, %s6, %s4
  loop: start=0, step=1, limit=4
  $region2: #{aspp_forward.7} parent=0 // loop_pre_header
    _
  $region3: #{aspp_forward.7} parent=0 // loop_header
    %s9 = sphi 0, %s13
    %p10 = scmp.ge.s32.totalorder %s9, 4
    %s16 = sphi 0, %s28
    %s17 = sphi 0, %s24
    %s18 = sphi 0, %s16
    %s19 = sphi 0, %s17
    %s20 = sphi 0, %s18
    %s21 = sphi 0, %s19
    %s33 = sphi 0, %s35
    %s36 = sphi 0, %s33
    %s37 = sphi 0, %s36
    %s53 = sphi 0, %s37
    %s57 = sphi 0, %s57
    %s59 = sphi 0, %s57
    %s60 = sphi 0, %s59
    %s74 = sphi 0, %s60
    %s78 = sphi 0, %s78
    %s80 = sphi 0, %s78
    %s81 = sphi 0, %s80
    %s95 = sphi 0, %s81
    %s103 = sphi 0, %s105
    %s106 = sphi 0, %s103
    %s107 = sphi 0, %s106
    %s123 = sphi 0, %s107
  $region4: #{aspp_forward.7} parent=0 // loop_header_branch
    %12 = sbr.rel (%p10) target = $region8
  $region5: #{aspp_forward.7} parent=0 // loop_body
    %s14 = ssub.s32 %s9, 1
    %s15 = ssub.s32 %s9, 2
    %s22 = sadd.s32 1, %s17
    %p23 = scmp.ge.s32.totalorder %s22, 1
    %s24 = scalar_select %p23, 0, %s22
    %s25 = sadd.s32 1, %s16
    %s26 = scalar_select %p23, %s25, %s16
    %p27 = scmp.ge.s32.totalorder %s26, 2
    %s28 = scalar_select %p27, 0, %s26
    %s29 = ssub.s32 %s16, %s28
    %s30 = ssub.s32 %s17, %s24
    %s31 = sor.u32 %s29, %s30
    %p32 = scmp.eq.s32.totalorder %s31, 0
    %s34 = sadd.s32 %s33, 1
    %s35 = scalar_select %p32, %s33, %s34
    %p38 = pneg %p32
    %p39 = scmp.eq.s32.totalorder %s9, 1
    %p40 = por %p38, %p39
    %p41 = scmp.ne.s32.totalorder %s33, %s36
    %p42 = scmp.eq.s32.totalorder %s9, 0
    %p43 = por %p41, %p42
    %p44 = scmp.ne.s32.totalorder %s33, %s36
    %p45 = scmp.eq.s32.totalorder %s14, 1
    %p46 = por %p44, %p45
    %p47 = scmp.ne.s32.totalorder %s36, %s37
    %p48 = scmp.eq.s32.totalorder %s14, 0
    %p49 = por %p47, %p48
    %p50 = scmp.ne.s32.totalorder %s36, %s37
    %p51 = scmp.eq.s32.totalorder %s15, 1
    %p52 = por %p50, %p51
    %p54 = scmp.ne.s32.totalorder %s37, %s53
    %p55 = scmp.eq.s32.totalorder %s15, 0
    %p56 = por %p54, %p55
    %s58 = sadd.s32 %s57, 1
    %p61 = scmp.eq.s32.totalorder %s9, 1
    %p62 = scmp.ne.s32.totalorder %s57, %s59
    %p63 = scmp.eq.s32.totalorder %s9, 0
    %p64 = por %p62, %p63
    %p65 = scmp.ne.s32.totalorder %s57, %s59
    %p66 = scmp.eq.s32.totalorder %s14, 1
    %p67 = por %p65, %p66
    %p68 = scmp.ne.s32.totalorder %s59, %s60
    %p69 = scmp.eq.s32.totalorder %s14, 0
    %p70 = por %p68, %p69
    %p71 = scmp.ne.s32.totalorder %s59, %s60
    %p72 = scmp.eq.s32.totalorder %s15, 1
    %p73 = por %p71, %p72
    %p75 = scmp.ne.s32.totalorder %s60, %s74
    %p76 = scmp.eq.s32.totalorder %s15, 0
    %p77 = por %p75, %p76
    %s79 = sadd.s32 %s78, 1
    %p82 = scmp.eq.s32.totalorder %s9, 1
    %p83 = scmp.ne.s32.totalorder %s78, %s80
    %p84 = scmp.eq.s32.totalorder %s9, 0
    %p85 = por %p83, %p84
    %p86 = scmp.ne.s32.totalorder %s78, %s80
    %p87 = scmp.eq.s32.totalorder %s14, 1
    %p88 = por %p86, %p87
    %p89 = scmp.ne.s32.totalorder %s80, %s81
    %p90 = scmp.eq.s32.totalorder %s14, 0
    %p91 = por %p89, %p90
    %p92 = scmp.ne.s32.totalorder %s80, %s81
    %p93 = scmp.eq.s32.totalorder %s15, 1
    %p94 = por %p92, %p93
    %p96 = scmp.ne.s32.totalorder %s81, %s95
    %p97 = scmp.eq.s32.totalorder %s15, 0
    %p98 = por %p96, %p97
    %s99 = ssub.s32 %s16, %s28
    %s100 = ssub.s32 %s17, %s24
    %s101 = sor.u32 %s99, %s100
    %p102 = scmp.eq.s32.totalorder %s101, 0
    %s104 = sadd.s32 %s103, 1
    %s105 = scalar_select %p102, %s103, %s104
    %p108 = pneg %p102
    %p109 = scmp.eq.s32.totalorder %s9, 1
    %p110 = por %p108, %p109
    %p111 = scmp.ne.s32.totalorder %s103, %s106
    %p112 = scmp.eq.s32.totalorder %s9, 0
    %p113 = por %p111, %p112
    %p114 = scmp.ne.s32.totalorder %s103, %s106
    %p115 = scmp.eq.s32.totalorder %s14, 1
    %p116 = por %p114, %p115
    %p117 = scmp.ne.s32.totalorder %s106, %s107
    %p118 = scmp.eq.s32.totalorder %s14, 0
    %p119 = por %p117, %p118
    %p120 = scmp.ne.s32.totalorder %s106, %s107
    %p121 = scmp.eq.s32.totalorder %s15, 1
    %p122 = por %p120, %p121
    %p124 = scmp.ne.s32.totalorder %s107, %s123
    %p125 = scmp.eq.s32.totalorder %s15, 0
    %p126 = por %p124, %p125
    %p127 = scmp.le.s32.totalorder 1, %s9
    %p128 = scmp.lt.s32.totalorder %s9, 3
    %p129 = pnand %p127, %p128
    %p130 = pneg %p129
    // Predicated region
    $region9: #{aspp_forward.7} parent=5 // pred_check
      _
    $region10: #{aspp_forward.7} parent=5 // pred_check_branch
      %132 = sbr.rel (%p129) target = $region12
    $region11: #{aspp_forward.7} parent=5 // pred_region
      %s133 = ssub.s32 %s9, 1
      // Predicated region
      $region13: #{aspp_forward.7} parent=11 // pred_check
        %p134 = pneg %p70
      $region14: #{aspp_forward.7} parent=11 // pred_check_branch
        %136 = sbr.rel (%p134) target = $region16
      $region15: #{aspp_forward.7} parent=11 // pred_region
        _
      $region16: #{aspp_forward.7} parent=11 // pred_fallthru
        _
      // Predicated region
      $region17: #{aspp_forward.7} parent=11 // pred_check
        %p137 = pneg %p91
      $region18: #{aspp_forward.7} parent=11 // pred_check_branch
        %139 = sbr.rel (%p137) target = $region20
      $region19: #{aspp_forward.7} parent=11 // pred_region
        _
      $region20: #{aspp_forward.7} parent=11 // pred_fallthru
        _
    $region12: #{aspp_forward.7} parent=5 // pred_fallthru
      _
    %p140 = scmp.lt.s32.totalorder %s9, 2
    // Predicated region
    $region21: #{aspp_forward.7} parent=5 // pred_check
      %p141 = pneg %p140
    $region22: #{aspp_forward.7} parent=5 // pred_check_branch
      %143 = sbr.rel (%p141) target = $region24
    $region23: #{aspp_forward.7} parent=5 // pred_region
      // Predicated region
      $region25: #{aspp_forward.7} parent=23 // pred_check
        %p144 = pneg %p43
      $region26: #{aspp_forward.7} parent=23 // pred_check_branch
        %146 = sbr.rel (%p144) target = $region28
      $region27: #{aspp_forward.7} parent=23 // pred_region
        %s147 = smul.u32 16, %s17
        %p148 = scmp.lt.s32.totalorder %s16, 1
        %s149 = scalar_select %p148, %s16, 1
        %p150 = scmp.lt.s32.totalorder %s147, 15
        %s151 = scalar_select %p150, %s147, 15
        %s152 = smul.addr %s151, 2
        %s153 = smul.addr %s149, 32
        %s154 = sadd.s32 %s152, %s153
        %s155 = smul.addr %s154, 8
        %s156 = scalar_lea.vmem %s0, %s155
        %s157 = smul.u32 16, %s17
      $region28: #{aspp_forward.7} parent=23 // pred_fallthru
        _
    $region24: #{aspp_forward.7} parent=5 // pred_fallthru
      _
    %p158 = scmp.le.s32.totalorder 1, %s9
    %p159 = scmp.lt.s32.totalorder %s9, 3
    %p160 = pnand %p158, %p159
    %p161 = pneg %p160
    // Predicated region
    $region29: #{aspp_forward.7} parent=5 // pred_check
      _
    $region30: #{aspp_forward.7} parent=5 // pred_check_branch
      %163 = sbr.rel (%p160) target = $region32
    $region31: #{aspp_forward.7} parent=5 // pred_region
      %s164 = ssub.s32 %s9, 1
      %s165 = smul.u32 16, %s19
      %p166 = scmp.lt.s32.totalorder %s18, 1
      %s167 = scalar_select %p166, %s18, 1
      %p168 = scmp.lt.s32.totalorder %s165, 15
      %s169 = scalar_select %p168, %s165, 15
      %s170 = smul.addr %s169, 2
      %s171 = smul.addr %s167, 32
      %s172 = sadd.s32 %s170, %s171
      %s173 = smul.addr %s172, 8
      %s174 = scalar_lea.vmem %s0, %s173
      %p175 = pneg %p49
      %p176 = pneg %p46
      %p177 = pneg %p70
      %p178 = pneg %p67
      %p179 = pneg %p91
      %p180 = pneg %p88
      %p181 = pneg %p119
      %p182 = pneg %p116
      %s183 = smul.u32 16, %s19
      %p184 = scmp.lt.s32.totalorder %s18, 1
      %s185 = scalar_select %p184, %s18, 1
      %p186 = scmp.lt.s32.totalorder %s183, 15
      %s187 = scalar_select %p186, %s183, 15
      %s188 = smul.addr %s187, 2
      %s189 = smul.addr %s185, 32
      %s190 = sadd.s32 %s188, %s189
      %s191 = smul.addr %s190, 8
      %s192 = scalar_lea.vmem %s3, %s191
      %s193 = smul.u32 16, %s19
      %p194 = scmp.lt.s32.totalorder %s18, 1
      %s195 = scalar_select %p194, %s18, 1
      %p196 = scmp.lt.s32.totalorder %s193, 15
      %s197 = scalar_select %p196, %s193, 15
      %s198 = smul.addr %s197, 2
      %s199 = smul.addr %s195, 32
      %s200 = sadd.s32 %s198, %s199
      %s201 = smul.addr %s200, 8
      %s202 = scalar_lea.vmem %s0, %s201
      %s203 = smul.u32 16, %s19
      %s204 = smul.u32 16, %s19
      %p205 = scmp.lt.s32.totalorder %s18, 1
      %s206 = scalar_select %p205, %s18, 1
      %p207 = scmp.lt.s32.totalorder %s204, 15
      %s208 = scalar_select %p207, %s204, 15
      %s209 = smul.addr %s208, 2
      %s210 = smul.addr %s206, 32
      %s211 = sadd.s32 %s209, %s210
      %s212 = smul.addr %s211, 8
      %s213 = scalar_lea.vmem %s3, %s212
      %s214 = smul.u32 16, %s19
      %v215 = vld [vmem:[%s202] sm:$0xff]
      %v216 = vld [vmem:[%s202 + $0x8] sm:$0xff]
      %v217 = vld [vmem:[%s202 + $0x10] sm:$0xff]
      %v218 = vld [vmem:[%s202 + $0x18] sm:$0xff]
      %v219 = vld [vmem:[%s202 + $0x20] sm:$0xff]
      %v220 = vld [vmem:[%s202 + $0x28] sm:$0xff]
      %v221 = vld [vmem:[%s202 + $0x30] sm:$0xff]
      %v222 = vld [vmem:[%s202 + $0x38] sm:$0xff]
      %v223 = vld [vmem:[%s202 + $0x40] sm:$0xff]
      %v224 = vld [vmem:[%s202 + $0x48] sm:$0xff]
      %v225 = vld [vmem:[%s202 + $0x50] sm:$0xff]
      %v226 = vld [vmem:[%s202 + $0x58] sm:$0xff]
      %v227 = vld [vmem:[%s202 + $0x60] sm:$0xff]
      %v228 = vld [vmem:[%s202 + $0x68] sm:$0xff]
      %v229 = vld [vmem:[%s202 + $0x70] sm:$0xff]
      %v230 = vld [vmem:[%s202 + $0x78] sm:$0xff]
      %v231 = vld [vmem:[%s202 + $0x80] sm:$0xff]
      %v232 = vld [vmem:[%s202 + $0x88] sm:$0xff]
      %v233 = vld [vmem:[%s202 + $0x90] sm:$0xff]
      %v234 = vld [vmem:[%s202 + $0x98] sm:$0xff]
      %v235 = vld [vmem:[%s202 + $0xa0] sm:$0xff]
      %v236 = vld [vmem:[%s202 + $0xa8] sm:$0xff]
      %v237 = vld [vmem:[%s202 + $0xb0] sm:$0xff]
      %v238 = vld [vmem:[%s202 + $0xb8] sm:$0xff]
      %v239 = vld [vmem:[%s202 + $0xc0] sm:$0xff]
      %v240 = vld [vmem:[%s202 + $0xc8] sm:$0xff]
      %v241 = vld [vmem:[%s202 + $0xd0] sm:$0xff]
      %v242 = vld [vmem:[%s202 + $0xd8] sm:$0xff]
      %v243 = vld [vmem:[%s202 + $0xe0] sm:$0xff]
      %v244 = vld [vmem:[%s202 + $0xe8] sm:$0xff]
      %v245 = vld [vmem:[%s202 + $0xf0] sm:$0xff]
      %v246 = vld [vmem:[%s202 + $0xf8] sm:$0xff]
      %v247 = vld [vmem:[%s1] sm:$0x1]
      %v249 = vperm.slane %v247, 0
      %v251 = vmul.f32 %v215, %v249
      %v252 = vmul.f32 %v216, %v249
      %v253 = vmul.f32 %v217, %v249
      %v254 = vmul.f32 %v218, %v249
      %v255 = vmul.f32 %v219, %v249
      %v256 = vmul.f32 %v220, %v249
      %v257 = vmul.f32 %v221, %v249
      %v258 = vmul.f32 %v222, %v249
      %v259 = vmul.f32 %v223, %v249
      %v260 = vmul.f32 %v224, %v249
      %v261 = vmul.f32 %v225, %v249
      %v262 = vmul.f32 %v226, %v249
      %v263 = vmul.f32 %v227, %v249
      %v264 = vmul.f32 %v228, %v249
      %v265 = vmul.f32 %v229, %v249
      %v266 = vmul.f32 %v230, %v249
      %v267 = vmul.f32 %v231, %v249
      %v268 = vmul.f32 %v232, %v249
      %v269 = vmul.f32 %v233, %v249
      %v270 = vmul.f32 %v234, %v249
      %v271 = vmul.f32 %v235, %v249
      %v272 = vmul.f32 %v236, %v249
      %v273 = vmul.f32 %v237, %v249
      %v274 = vmul.f32 %v238, %v249
      %v275 = vmul.f32 %v239, %v249
      %v276 = vmul.f32 %v240, %v249
      %v277 = vmul.f32 %v241, %v249
      %v278 = vmul.f32 %v242, %v249
      %v279 = vmul.f32 %v243, %v249
      %v280 = vmul.f32 %v244, %v249
      %v281 = vmul.f32 %v245, %v249
      %v282 = vmul.f32 %v246, %v249
      %v283 = vld [vmem:[%s2] sm:$0x1]
      %v285 = vperm.slane %v283, 0
      %v287 = vadd.f32 %v251, %v285
      %v288 = vadd.f32 %v252, %v285
      %v289 = vadd.f32 %v253, %v285
      %v290 = vadd.f32 %v254, %v285
      %v291 = vadd.f32 %v255, %v285
      %v292 = vadd.f32 %v256, %v285
      %v293 = vadd.f32 %v257, %v285
      %v294 = vadd.f32 %v258, %v285
      %v295 = vadd.f32 %v259, %v285
      %v296 = vadd.f32 %v260, %v285
      %v297 = vadd.f32 %v261, %v285
      %v298 = vadd.f32 %v262, %v285
      %v299 = vadd.f32 %v263, %v285
      %v300 = vadd.f32 %v264, %v285
      %v301 = vadd.f32 %v265, %v285
      %v302 = vadd.f32 %v266, %v285
      %v303 = vadd.f32 %v267, %v285
      %v304 = vadd.f32 %v268, %v285
      %v305 = vadd.f32 %v269, %v285
      %v306 = vadd.f32 %v270, %v285
      %v307 = vadd.f32 %v271, %v285
      %v308 = vadd.f32 %v272, %v285
      %v309 = vadd.f32 %v273, %v285
      %v310 = vadd.f32 %v274, %v285
      %v311 = vadd.f32 %v275, %v285
      %v312 = vadd.f32 %v276, %v285
      %v313 = vadd.f32 %v277, %v285
      %v314 = vadd.f32 %v278, %v285
      %v315 = vadd.f32 %v279, %v285
      %v316 = vadd.f32 %v280, %v285
      %v317 = vadd.f32 %v281, %v285
      %v318 = vadd.f32 %v282, %v285
      %v319 = vmax.f32 %v287, 0.0
      %v320 = vmax.f32 %v288, 0.0
      %v321 = vmax.f32 %v289, 0.0
      %v322 = vmax.f32 %v290, 0.0
      %v323 = vmax.f32 %v291, 0.0
      %v324 = vmax.f32 %v292, 0.0
      %v325 = vmax.f32 %v293, 0.0
      %v326 = vmax.f32 %v294, 0.0
      %v327 = vmax.f32 %v295, 0.0
      %v328 = vmax.f32 %v296, 0.0
      %v329 = vmax.f32 %v297, 0.0
      %v330 = vmax.f32 %v298, 0.0
      %v331 = vmax.f32 %v299, 0.0
      %v332 = vmax.f32 %v300, 0.0
      %v333 = vmax.f32 %v301, 0.0
      %v334 = vmax.f32 %v302, 0.0
      %v335 = vmax.f32 %v303, 0.0
      %v336 = vmax.f32 %v304, 0.0
      %v337 = vmax.f32 %v305, 0.0
      %v338 = vmax.f32 %v306, 0.0
      %v339 = vmax.f32 %v307, 0.0
      %v340 = vmax.f32 %v308, 0.0
      %v341 = vmax.f32 %v309, 0.0
      %v342 = vmax.f32 %v310, 0.0
      %v343 = vmax.f32 %v311, 0.0
      %v344 = vmax.f32 %v312, 0.0
      %v345 = vmax.f32 %v313, 0.0
      %v346 = vmax.f32 %v314, 0.0
      %v347 = vmax.f32 %v315, 0.0
      %v348 = vmax.f32 %v316, 0.0
      %v349 = vmax.f32 %v317, 0.0
      %v350 = vmax.f32 %v318, 0.0
      %vm351 = vcmask 64512
      %352 = vst.msk [vmem:[%s213] sm:$0xff] %vm351, %v319
      %353 = vst.msk [vmem:[%s213 + $0x8] sm:$0xff] %vm351, %v320
      %354 = vst.msk [vmem:[%s213 + $0x10] sm:$0xff] %vm351, %v321
      %355 = vst.msk [vmem:[%s213 + $0x18] sm:$0xff] %vm351, %v322
      %356 = vst.msk [vmem:[%s213 + $0x20] sm:$0xff] %vm351, %v323
      %357 = vst.msk [vmem:[%s213 + $0x28] sm:$0xff] %vm351, %v324
      %358 = vst.msk [vmem:[%s213 + $0x30] sm:$0xff] %vm351, %v325
      %359 = vst.msk [vmem:[%s213 + $0x38] sm:$0xff] %vm351, %v326
      %360 = vst.msk [vmem:[%s213 + $0x40] sm:$0xff] %vm351, %v327
      %361 = vst.msk [vmem:[%s213 + $0x48] sm:$0xff] %vm351, %v328
      %362 = vst.msk [vmem:[%s213 + $0x50] sm:$0xff] %vm351, %v329
      %363 = vst.msk [vmem:[%s213 + $0x58] sm:$0xff] %vm351, %v330
      %364 = vst.msk [vmem:[%s213 + $0x60] sm:$0xff] %vm351, %v331
      %365 = vst.msk [vmem:[%s213 + $0x68] sm:$0xff] %vm351, %v332
      %366 = vst.msk [vmem:[%s213 + $0x70] sm:$0xff] %vm351, %v333
      %367 = vst.msk [vmem:[%s213 + $0x78] sm:$0xff] %vm351, %v334
      %368 = vst.msk [vmem:[%s213 + $0x80] sm:$0xff] %vm351, %v335
      %369 = vst.msk [vmem:[%s213 + $0x88] sm:$0xff] %vm351, %v336
      %370 = vst.msk [vmem:[%s213 + $0x90] sm:$0xff] %vm351, %v337
      %371 = vst.msk [vmem:[%s213 + $0x98] sm:$0xff] %vm351, %v338
      %372 = vst.msk [vmem:[%s213 + $0xa0] sm:$0xff] %vm351, %v339
      %373 = vst.msk [vmem:[%s213 + $0xa8] sm:$0xff] %vm351, %v340
      %374 = vst.msk [vmem:[%s213 + $0xb0] sm:$0xff] %vm351, %v341
      %375 = vst.msk [vmem:[%s213 + $0xb8] sm:$0xff] %vm351, %v342
      %376 = vst.msk [vmem:[%s213 + $0xc0] sm:$0xff] %vm351, %v343
      %377 = vst.msk [vmem:[%s213 + $0xc8] sm:$0xff] %vm351, %v344
      %378 = vst.msk [vmem:[%s213 + $0xd0] sm:$0xff] %vm351, %v345
      %379 = vst.msk [vmem:[%s213 + $0xd8] sm:$0xff] %vm351, %v346
      %380 = vst.msk [vmem:[%s213 + $0xe0] sm:$0xff] %vm351, %v347
      %381 = vst.msk [vmem:[%s213 + $0xe8] sm:$0xff] %vm351, %v348
      %382 = vst.msk [vmem:[%s213 + $0xf0] sm:$0xff] %vm351, %v349
      %383 = vst.msk [vmem:[%s213 + $0xf8] sm:$0xff] %vm351, %v350
      %s384 = smul.u32 16, %s19
      %p385 = scmp.lt.s32.totalorder %s18, 1
      %s386 = scalar_select %p385, %s18, 1
      %p387 = scmp.lt.s32.totalorder %s384, 15
      %s388 = scalar_select %p387, %s384, 15
      %s389 = smul.addr %s388, 2
      %s390 = smul.addr %s386, 32
      %s391 = sadd.s32 %s389, %s390
      %s392 = smul.addr %s391, 8
      %s393 = scalar_lea.vmem %s3, %s392
      // Predicated region
      $region33: #{aspp_forward.7} parent=31 // pred_check
        %p394 = pneg %p116
      $region34: #{aspp_forward.7} parent=31 // pred_check_branch
        %396 = sbr.rel (%p394) target = $region36
      $region35: #{aspp_forward.7} parent=31 // pred_region
        %s397 = smul.u32 16, %s19
      $region36: #{aspp_forward.7} parent=31 // pred_fallthru
        _
    $region32: #{aspp_forward.7} parent=5 // pred_fallthru
      _
    %p398 = scmp.le.s32.totalorder 2, %s9
    // Predicated region
    $region37: #{aspp_forward.7} parent=5 // pred_check
      %p399 = pneg %p398
    $region38: #{aspp_forward.7} parent=5 // pred_check_branch
      %401 = sbr.rel (%p399) target = $region40
    $region39: #{aspp_forward.7} parent=5 // pred_region
      %s402 = ssub.s32 %s9, 2
      // Predicated region
      $region41: #{aspp_forward.7} parent=39 // pred_check
        %p403 = pneg %p122
      $region42: #{aspp_forward.7} parent=39 // pred_check_branch
        %405 = sbr.rel (%p403) target = $region44
      $region43: #{aspp_forward.7} parent=39 // pred_region
        %s406 = smul.u32 16, %s21
        %p407 = scmp.lt.s32.totalorder %s20, 1
        %s408 = scalar_select %p407, %s20, 1
        %p409 = scmp.lt.s32.totalorder %s406, 15
        %s410 = scalar_select %p409, %s406, 15
        %s411 = smul.addr %s410, 2
        %s412 = smul.addr %s408, 32
        %s413 = sadd.s32 %s411, %s412
        %s414 = smul.addr %s413, 8
        %s415 = scalar_lea.vmem %s3, %s414
      $region44: #{aspp_forward.7} parent=39 // pred_fallthru
        _
    $region40: #{aspp_forward.7} parent=5 // pred_fallthru
      _
  $region6: #{aspp_forward.7} parent=0 // loop_footer
    %s13 = sadd.s32 1, %s9
  $region7: #{aspp_forward.7} parent=0 // loop_footer_branch
    %8 = sbr.rel target = $region3
  $region8: #{aspp_forward.7} parent=0 // loop_exit
    _

// kernel: aspp_forward.4
$region0: #{aspp_forward.4}
  #allocation0 [shape = 'u32[]', space=smem, size = 0x4, offset = 0x4, fixed_abs, tag = 'smem constant byte address 0x4 - core index']
  #allocation1 [shape = 'u32[72,128]{1,0:T(1,128)}', space=vmem, size = 0x9000, scoped, tag = 'internal scratch']
  %s0 = inlined_call_operand.vmem [shape: f32[2,64,64,8], index: 0, kind: input, shape index: {}]
  %s1 = inlined_call_operand.vmem [shape: f32[8,8], index: 1, kind: input, shape index: {}]
  %s2 = inlined_call_operand.vmem [shape: f32[4,72,8], index: 2, kind: input, shape index: {}]
  %s3 = inlined_call_operand.vmem [shape: f32[2,16,16,40], index: 3, kind: output, shape index: {0}]
  %s4 = inlined_call_operand.vmem [shape: f32[2,2,40], index: 4, kind: output, shape index: {1}]
  %s5 = inlined_call_operand.vmem [shape: f32[2,1,8], index: 5, kind: output, shape index: {2}]
  %6 = xla_tuple %s3, %s4, %s5
  %s7 = sld [smem:[#allocation0]]
  $region61: #{aspp_forward.4} parent=0
    _
  %s9 = ssub.s32 1, %s7
  %s10 = scalar_select 0, %s9, %s7
  loop: start=0, step=1, limit=4
  $region2: #{aspp_forward.4} parent=0 // loop_pre_header
    _
  $region3: #{aspp_forward.4} parent=0 // loop_header
    %s12 = sphi 0, %s16
    %p13 = scmp.ge.s32.totalorder %s12, 4
    %s22 = sphi 0, %s24
    %s25 = sphi 0, %s22
    %s26 = sphi 0, %s25
    %s42 = sphi 0, %s26
    %s46 = sphi 0, %s46
    %s48 = sphi 0, %s46
    %s49 = sphi 0, %s48
    %s63 = sphi 0, %s49
    %s67 = sphi 0, %s67
    %s69 = sphi 0, %s67
    %s70 = sphi 0, %s69
    %s84 = sphi 0, %s70
    %s90 = sphi 0, %s92
    %s93 = sphi 0, %s90
    %s94 = sphi 0, %s93
    %s110 = sphi 0, %s94
    %s116 = sphi 0, %s118
    %s119 = sphi 0, %s116
    %s120 = sphi 0, %s119
    %s136 = sphi 0, %s120
    %s142 = sphi 0, %s144
    %s145 = sphi 0, %s142
    %s146 = sphi 0, %s145
    %s162 = sphi 0, %s146
  $region4: #{aspp_forward.4} parent=0 // loop_header_branch
    %15 = sbr.rel (%p13) target = $region8
  $region5: #{aspp_forward.4} parent=0 // loop_body
    %s17 = ssub.s32 %s12, 1
    %s18 = ssub.s32 %s12, 2
    %s19 = sadd.s32 %s12, 1
    %s20 = ssub.s32 %s12, %s19
    %p21 = scmp.eq.s32.totalorder %s20, 0
    %s23 = sadd.s32 %s22, 1
    %s24 = scalar_select %p21, %s22, %s23
    %p27 = pneg %p21
    %p28 = scmp.eq.s32.totalorder %s12, 1
    %p29 = por %p27, %p28
    %p30 = scmp.ne.s32.totalorder %s22, %s25
    %p31 = scmp.eq.s32.totalorder %s12, 0
    %p32 = por %p30, %p31
    %p33 = scmp.ne.s32.totalorder %s22, %s25
    %p34 = scmp.eq.s32.totalorder %s17, 1
    %p35 = por %p33, %p34
    %p36 = scmp.ne.s32.totalorder %s25, %s26
    %p37 = scmp.eq.s32.totalorder %s17, 0
    %p38 = por %p36, %p37
    %p39 = scmp.ne.s32.totalorder %s25, %s26
    %p40 = scmp.eq.s32.totalorder %s18, 1
    %p41 = por %p39, %p40
    %p43 = scmp.ne.s32.totalorder %s26, %s42
    %p44 = scmp.eq.s32.totalorder %s18, 0
    %p45 = por %p43, %p44
    %s47 = sadd.s32 %s46, 1
    %p50 = scmp.eq.s32.totalorder %s12, 1
    %p51 = scmp.ne.s32.totalorder %s46, %s48
    %p52 = scmp.eq.s32.totalorder %s12, 0
    %p53 = por %p51, %p52
    %p54 = scmp.ne.s32.totalorder %s46, %s48
    %p55 = scmp.eq.s32.totalorder %s17, 1
    %p56 = por %p54, %p55
    %p57 = scmp.ne.s32.totalorder %s48, %s49
    %p58 = scmp.eq.s32.totalorder %s17, 0
    %p59 = por %p57, %p58
    %p60 = scmp.ne.s32.totalorder %s48, %s49
    %p61 = scmp.eq.s32.totalorder %s18, 1
    %p62 = por %p60, %p61
    %p64 = scmp.ne.s32.totalorder %s49, %s63
    %p65 = scmp.eq.s32.totalorder %s18, 0
    %p66 = por %p64, %p65
    %s68 = sadd.s32 %s67, 1
    %p71 = scmp.eq.s32.totalorder %s12, 1
    %p72 = scmp.ne.s32.totalorder %s67, %s69
    %p73 = scmp.eq.s32.totalorder %s12, 0
    %p74 = por %p72, %p73
    %p75 = scmp.ne.s32.totalorder %s67, %s69
    %p76 = scmp.eq.s32.totalorder %s17, 1
    %p77 = por %p75, %p76
    %p78 = scmp.ne.s32.totalorder %s69, %s70
    %p79 = scmp.eq.s32.totalorder %s17, 0
    %p80 = por %p78, %p79
    %p81 = scmp.ne.s32.totalorder %s69, %s70
    %p82 = scmp.eq.s32.totalorder %s18, 1
    %p83 = por %p81, %p82
    %p85 = scmp.ne.s32.totalorder %s70, %s84
    %p86 = scmp.eq.s32.totalorder %s18, 0
    %p87 = por %p85, %p86
    %s88 = ssub.s32 %s12, %s19
    %p89 = scmp.eq.s32.totalorder %s88, 0
    %s91 = sadd.s32 %s90, 1
    %s92 = scalar_select %p89, %s90, %s91
    %p95 = pneg %p89
    %p96 = scmp.eq.s32.totalorder %s12, 1
    %p97 = por %p95, %p96
    %p98 = scmp.ne.s32.totalorder %s90, %s93
    %p99 = scmp.eq.s32.totalorder %s12, 0
    %p100 = por %p98, %p99
    %p101 = scmp.ne.s32.totalorder %s90, %s93
    %p102 = scmp.eq.s32.totalorder %s17, 1
    %p103 = por %p101, %p102
    %p104 = scmp.ne.s32.totalorder %s93, %s94
    %p105 = scmp.eq.s32.totalorder %s17, 0
    %p106 = por %p104, %p105
    %p107 = scmp.ne.s32.totalorder %s93, %s94
    %p108 = scmp.eq.s32.totalorder %s18, 1
    %p109 = por %p107, %p108
    %p111 = scmp.ne.s32.totalorder %s94, %s110
    %p112 = scmp.eq.s32.totalorder %s18, 0
    %p113 = por %p111, %p112
    %s114 = ssub.s32 %s12, %s19
    %p115 = scmp.eq.s32.totalorder %s114, 0
    %s117 = sadd.s32 %s116, 1
    %s118 = scalar_select %p115, %s116, %s117
    %p121 = pneg %p115
    %p122 = scmp.eq.s32.totalorder %s12, 1
    %p123 = por %p121, %p122
    %p124 = scmp.ne.s32.totalorder %s116, %s119
    %p125 = scmp.eq.s32.totalorder %s12, 0
    %p126 = por %p124, %p125
    %p127 = scmp.ne.s32.totalorder %s116, %s119
    %p128 = scmp.eq.s32.totalorder %s17, 1
    %p129 = por %p127, %p128
    %p130 = scmp.ne.s32.totalorder %s119, %s120
    %p131 = scmp.eq.s32.totalorder %s17, 0
    %p132 = por %p130, %p131
    %p133 = scmp.ne.s32.totalorder %s119, %s120
    %p134 = scmp.eq.s32.totalorder %s18, 1
    %p135 = por %p133, %p134
    %p137 = scmp.ne.s32.totalorder %s120, %s136
    %p138 = scmp.eq.s32.totalorder %s18, 0
    %p139 = por %p137, %p138
    %s140 = ssub.s32 %s12, %s19
    %p141 = scmp.eq.s32.totalorder %s140, 0
    %s143 = sadd.s32 %s142, 1
    %s144 = scalar_select %p141, %s142, %s143
    %p147 = pneg %p141
    %p148 = scmp.eq.s32.totalorder %s12, 1
    %p149 = por %p147, %p148
    %p150 = scmp.ne.s32.totalorder %s142, %s145
    %p151 = scmp.eq.s32.totalorder %s12, 0
    %p152 = por %p150, %p151
    %p153 = scmp.ne.s32.totalorder %s142, %s145
    %p154 = scmp.eq.s32.totalorder %s17, 1
    %p155 = por %p153, %p154
    %p156 = scmp.ne.s32.totalorder %s145, %s146
    %p157 = scmp.eq.s32.totalorder %s17, 0
    %p158 = por %p156, %p157
    %p159 = scmp.ne.s32.totalorder %s145, %s146
    %p160 = scmp.eq.s32.totalorder %s18, 1
    %p161 = por %p159, %p160
    %p163 = scmp.ne.s32.totalorder %s146, %s162
    %p164 = scmp.eq.s32.totalorder %s18, 0
    %p165 = por %p163, %p164
    %p166 = scmp.le.s32.totalorder 1, %s12
    %p167 = scmp.lt.s32.totalorder %s12, 3
    %p168 = pnand %p166, %p167
    %p169 = pneg %p168
    // Predicated region
    $region9: #{aspp_forward.4} parent=5 // pred_check
      _
    $region10: #{aspp_forward.4} parent=5 // pred_check_branch
      %171 = sbr.rel (%p168) target = $region12
    $region11: #{aspp_forward.4} parent=5 // pred_region
      %s172 = ssub.s32 %s12, 1
      // Predicated region
      $region13: #{aspp_forward.4} parent=11 // pred_check
        %p173 = pneg %p59
      $region14: #{aspp_forward.4} parent=11 // pred_check_branch
        %175 = sbr.rel (%p173) target = $region16
      $region15: #{aspp_forward.4} parent=11 // pred_region
        _
      $region16: #{aspp_forward.4} parent=11 // pred_fallthru
        _
      // Predicated region
      $region17: #{aspp_forward.4} parent=11 // pred_check
        %p176 = pneg %p80
      $region18: #{aspp_forward.4} parent=11 // pred_check_branch
        %178 = sbr.rel (%p176) target = $region20
      $region19: #{aspp_forward.4} parent=11 // pred_region
        _
      $region20: #{aspp_forward.4} parent=11 // pred_fallthru
        _
    $region12: #{aspp_forward.4} parent=5 // pred_fallthru
      _
    %p179 = scmp.lt.s32.totalorder %s12, 2
    // Predicated region
    $region21: #{aspp_forward.4} parent=5 // pred_check
      %p180 = pneg %p179
    $region22: #{aspp_forward.4} parent=5 // pred_check_branch
      %182 = sbr.rel (%p180) target = $region24
    $region23: #{aspp_forward.4} parent=5 // pred_region
      // Predicated region
      $region25: #{aspp_forward.4} parent=23 // pred_check
        %p183 = pneg %p32
      $region26: #{aspp_forward.4} parent=23 // pred_check_branch
        %185 = sbr.rel (%p183) target = $region28
      $region27: #{aspp_forward.4} parent=23 // pred_region
        %p186 = scmp.lt.s32.totalorder %s12, 1
        %s187 = scalar_select %p186, %s12, 1
        %s188 = smul.addr %s187, 512
        %s189 = smul.addr %s188, 8
        %s190 = scalar_lea.vmem %s0, %s189
      $region28: #{aspp_forward.4} parent=23 // pred_fallthru
        _
    $region24: #{aspp_forward.4} parent=5 // pred_fallthru
      _
    %p191 = scmp.le.s32.totalorder 1, %s12
    %p192 = scmp.lt.s32.totalorder %s12, 3
    %p193 = pnand %p191, %p192
    %p194 = pneg %p193
    // Predicated region
    $region29: #{aspp_forward.4} parent=5 // pred_check
      _
    $region30: #{aspp_forward.4} parent=5 // pred_check_branch
      %196 = sbr.rel (%p193) target = $region32
    $region31: #{aspp_forward.4} parent=5 // pred_region
      %s197 = ssub.s32 %s12, 1
      %p198 = scmp.lt.s32.totalorder %s17, 1
      %s199 = scalar_select %p198, %s17, 1
      %s200 = smul.addr %s199, 512
      %s201 = smul.addr %s200, 8
      %s202 = scalar_lea.vmem %s0, %s201
      %p203 = pneg %p38
      %p204 = pneg %p35
      %p205 = pneg %p59
      %p206 = pneg %p56
      %p207 = pneg %p80
      %p208 = pneg %p77
      %p209 = pneg %p106
      %p210 = pneg %p103
      %p211 = scmp.lt.s32.totalorder %s17, 1
      %s212 = scalar_select %p211, %s17, 1
      %s213 = smul.addr %s212, 32
      %s214 = smul.addr %s213, 8
      %s215 = scalar_lea.vmem %s3, %s214
      %p216 = pneg %p132
      %p217 = pneg %p129
      %p218 = scmp.lt.s32.totalorder %s17, 1
      %s219 = scalar_select %p218, %s17, 1
      %s220 = smul.addr %s219, 2
      %s221 = scalar_lea.vmem %s4, %s220
      %p222 = pneg %p158
      %p223 = pneg %p155
      %p224 = scmp.lt.s32.totalorder %s17, 1
      %s225 = scalar_select %p224, %s17, 1
      %s226 = scalar_lea.vmem %s5, %s225
      %p227 = scmp.lt.s32.totalorder %s17, 1
      %s228 = scalar_select %p227, %s17, 1
      %s229 = smul.addr %s228, 512
      %s230 = smul.addr %s229, 8
      %s231 = scalar_lea.vmem %s0, %s230
      %p232 = scmp.lt.s32.totalorder %s17, 1
      %s233 = scalar_select %p232, %s17, 1
      %s234 = smul.addr %s233, 32
      %s235 = smul.addr %s234, 8
      %s236 = scalar_lea.vmem %s3, %s235
      %p237 = scmp.lt.s32.totalorder %s17, 1
      %s238 = scalar_select %p237, %s17, 1
      %s239 = smul.addr %s238, 2
      %s240 = scalar_lea.vmem %s4, %s239
      %p241 = scmp.lt.s32.totalorder %s17, 1
      %s242 = scalar_select %p241, %s17, 1
      %s243 = scalar_lea.vmem %s5, %s242
      %s244 = scalar_lea.vmem %s231, 1536
      %v245 = vld [vmem:[%s244 + $0x18] sm:$0xff]
      %v246 = vld [vmem:[%s244 + $0x20] sm:$0xff]
      %v247 = vld [vmem:[%s244 + $0x58] sm:$0xff]
      %v248 = vld [vmem:[%s244 + $0x60] sm:$0xff]
      %v249 = vld [vmem:[%s244 + $0x98] sm:$0xff]
      %v250 = vld [vmem:[%s244 + $0xa0] sm:$0xff]
      %v251 = vld [vmem:[%s244 + $0xd8] sm:$0xff]
      %v252 = vld [vmem:[%s244 + $0xe0] sm:$0xff]
      %v253 = vld [vmem:[%s244 + $0x118] sm:$0xff]
      %v254 = vld [vmem:[%s244 + $0x120] sm:$0xff]
      %v255 = vld [vmem:[%s244 + $0x158] sm:$0xff]
      %v256 = vld [vmem:[%s244 + $0x160] sm:$0xff]
      %v257 = vld [vmem:[%s244 + $0x198] sm:$0xff]
      %v258 = vld [vmem:[%s244 + $0x1a0] sm:$0xff]
      %v259 = vld [vmem:[%s244 + $0x1d8] sm:$0xff]
      %v260 = vld [vmem:[%s244 + $0x1e0] sm:$0xff]
      %v261 = vld [vmem:[%s244 + $0x218] sm:$0xff]
      %v262 = vld [vmem:[%s244 + $0x220] sm:$0xff]
      %v263 = vld [vmem:[%s244 + $0x258] sm:$0xff]
      %v264 = vld [vmem:[%s244 + $0x260] sm:$0xff]
      %v265 = vld [vmem:[%s244 + $0x298] sm:$0xff]
      %v266 = vld [vmem:[%s244 + $0x2a0] sm:$0xff]
      %v267 = vld [vmem:[%s244 + $0x2d8] sm:$0xff]
      %v268 = vld [vmem:[%s244 + $0x2e0] sm:$0xff]
      %v269 = vld [vmem:[%s244 + $0x318] sm:$0xff]
      %v270 = vld [vmem:[%s244 + $0x320] sm:$0xff]
      %v271 = vld [vmem:[%s244 + $0x358] sm:$0xff]
      %v272 = vld [vmem:[%s244 + $0x360] sm:$0xff]
      %v273 = vld [vmem:[%s244 + $0x398] sm:$0xff]
      %v274 = vld [vmem:[%s244 + $0x3a0] sm:$0xff]
      %v275 = vld [vmem:[%s244 + $0x3d8] sm:$0xff]
      %v276 = vld [vmem:[%s244 + $0x3e0] sm:$0xff]
      %vm277 = vcmask 64512
      %v278 = vsel %vm277, %v245, -inf
      %v279 = vsel %vm277, %v246, -inf
      %v280 = vsel %vm277, %v247, -inf
      %v281 = vsel %vm277, %v248, -inf
      %v282 = vsel %vm277, %v249, -inf
      %v283 = vmax.f32 %v278, %v282
      %v284 = vsel %vm277, %v250, -inf
      %v285 = vmax.f32 %v279, %v284
      %v286 = vsel %vm277, %v251, -inf
      %v287 = vmax.f32 %v280, %v286
      %v288 = vsel %vm277, %v252, -inf
      %v289 = vmax.f32 %v281, %v288
      %v290 = vsel %vm277, %v253, -inf
      %v291 = vmax.f32 %v283, %v290
      %v292 = vsel %vm277, %v254, -inf
      %v293 = vmax.f32 %v285, %v292
      %v294 = vsel %vm277, %v255, -inf
      %v295 = vmax.f32 %v287, %v294
      %v296 = vsel %vm277, %v256, -inf
      %v297 = vmax.f32 %v289, %v296
      %v298 = vsel %vm277, %v257, -inf
      %v299 = vmax.f32 %v291, %v298
      %v300 = vsel %vm277, %v258, -inf
      %v301 = vmax.f32 %v293, %v300
      %v302 = vsel %vm277, %v259, -inf
      %v303 = vmax.f32 %v295, %v302
      %v304 = vsel %vm277, %v260, -inf
      %v305 = vmax.f32 %v297, %v304
      %v306 = vsel %vm277, %v261, -inf
      %v307 = vmax.f32 %v299, %v306
      %v308 = vsel %vm277, %v262, -inf
      %v309 = vmax.f32 %v301, %v308
      %v310 = vsel %vm277, %v263, -inf
      %v311 = vmax.f32 %v303, %v310
      %v312 = vsel %vm277, %v264, -inf
      %v313 = vmax.f32 %v305, %v312
      %v314 = vsel %vm277, %v265, -inf
      %v315 = vmax.f32 %v307, %v314
      %v316 = vsel %vm277, %v266, -inf
      %v317 = vmax.f32 %v309, %v316
      %v318 = vsel %vm277, %v267, -inf
      %v319 = vmax.f32 %v311, %v318
      %v320 = vsel %vm277, %v268, -inf
      %v321 = vmax.f32 %v313, %v320
      %v322 = vsel %vm277, %v269, -inf
      %v323 = vmax.f32 %v315, %v322
      %v324 = vsel %vm277, %v270, -inf
      %v325 = vmax.f32 %v317, %v324
      %v326 = vsel %vm277, %v271, -inf
      %v327 = vmax.f32 %v319, %v326
      %v328 = vsel %vm277, %v272, -inf
      %v329 = vmax.f32 %v321, %v328
      %v330 = vsel %vm277, %v273, -inf
      %v331 = vmax.f32 %v323, %v330
      %v332 = vsel %vm277, %v274, -inf
      %v333 = vmax.f32 %v325, %v332
      %v334 = vsel %vm277, %v275, -inf
      %v335 = vmax.f32 %v327, %v334
      %v336 = vsel %vm277, %v276, -inf
      %v337 = vmax.f32 %v329, %v336
      %v338 = vmax.f32 %v331, %v333
      %v339 = vmax.f32 %v335, %v337
      %v340 = vmax.f32 %v338, %v339
      %v341 = vrot.slane %v340, 4
      %v342 = vmax.f32 %v340, %v341
      %v343 = vrot.slane %v342, 2
      %v344 = vmax.f32 %v342, %v343
      %v345 = vrot.slane %v344, 1
      %v346 = vmax.f32 %v344, %v345
      %vm347 = vcmask 57344
      %348 = vst.msk [vmem:[%s243] sm:$0x1] %vm347, %v346
      %v349 = vld [vmem:[%s1] sm:$0xff]
      %v351 = vsel %vm277, %v245, 0
      %v354 = vsel %vm277, %v246, 0
      %v357 = vsel %vm277, %v247, 0
      %v360 = vsel %vm277, %v248, 0
      %v363 = vsel %vm277, %v249, 0
      %v366 = vsel %vm277, %v250, 0
      %v369 = vsel %vm277, %v251, 0
      %v372 = vsel %vm277, %v252, 0
      %v375 = vsel %vm277, %v253, 0
      %v378 = vsel %vm277, %v254, 0
      %v381 = vsel %vm277, %v255, 0
      %v384 = vsel %vm277, %v256, 0
      %v387 = vsel %vm277, %v257, 0
      %v390 = vsel %vm277, %v258, 0
      %v393 = vsel %vm277, %v259, 0
      %v396 = vsel %vm277, %v260, 0
      %v399 = vsel %vm277, %v261, 0
      %v402 = vsel %vm277, %v262, 0
      %v405 = vsel %vm277, %v263, 0
      %v408 = vsel %vm277, %v264, 0
      %v411 = vsel %vm277, %v265, 0
      %v414 = vsel %vm277, %v266, 0
      %v417 = vsel %vm277, %v267, 0
      %v420 = vsel %vm277, %v268, 0
      %v423 = vsel %vm277, %v269, 0
      %v426 = vsel %vm277, %v270, 0
      %v429 = vsel %vm277, %v271, 0
      %v432 = vsel %vm277, %v272, 0
      %v435 = vsel %vm277, %v273, 0
      %v438 = vsel %vm277, %v274, 0
      %v441 = vsel %vm277, %v275, 0
      %v444 = vsel %vm277, %v276, 0
      %446 = vmatpush.msra.mxu0 0.0
      %447 = vmatpush.msra.mxu0 0.0
      %448 = vmatpush.msra.mxu0 0.0
      %449 = vmatpush.msra.mxu0 0.0
      %450 = vmatpush.msra.mxu0 0.0
      %451 = vmatpush.msra.mxu0 0.0
      %452 = vmatpush.msra.mxu0 0.0
      %453 = vmatpush.msra.mxu0 0.0
      %454 = vmatpush.msra.mxu0 0.0
      %455 = vmatpush.msra.mxu0 0.0
      %456 = vmatpush.msra.mxu0 0.0
      %457 = vmatpush.msra.mxu0 0.0
      %458 = vmatpush.msra.mxu0 0.0
      %459 = vmatpush.msra.mxu0 0.0
      %460 = vmatpush.msra.mxu0 0.0
      %461 = vmatpush.msra.mxu0 %v349
      %462 = vmatmul.f32.gmra.mxu0 %v351
      %v463 = vpop.f32.mrf.mxu0
      %v464 = vadd.f32 0.0, %v463
      %465 = vmatmul.f32.gmra.mxu0 %v354
      %v466 = vpop.f32.mrf.mxu0
      %v467 = vadd.f32 0.0, %v466
      %468 = vmatmul.f32.gmra.mxu0 %v357
      %v469 = vpop.f32.mrf.mxu0
      %v470 = vadd.f32 0.0, %v469
      %471 = vmatmul.f32.gmra.mxu0 %v360
      %v472 = vpop.f32.mrf.mxu0
      %v473 = vadd.f32 0.0, %v472
      %474 = vmatmul.f32.gmra.mxu0 %v363
      %v475 = vpop.f32.mrf.mxu0
      %v476 = vadd.f32 0.0, %v475
      %477 = vmatmul.f32.gmra.mxu0 %v366
      %v478 = vpop.f32.mrf.mxu0
      %v479 = vadd.f32 0.0, %v478
      %480 = vmatmul.f32.gmra.mxu0 %v369
      %v481 = vpop.f32.mrf.mxu0
      %v482 = vadd.f32 0.0, %v481
      %483 = vmatmul.f32.gmra.mxu0 %v372
      %v484 = vpop.f32.mrf.mxu0
      %v485 = vadd.f32 0.0, %v484
      %486 = vmatmul.f32.gmra.mxu0 %v375
      %v487 = vpop.f32.mrf.mxu0
      %v488 = vadd.f32 0.0, %v487
      %489 = vmatmul.f32.gmra.mxu0 %v378
      %v490 = vpop.f32.mrf.mxu0
      %v491 = vadd.f32 0.0, %v490
      %492 = vmatmul.f32.gmra.mxu0 %v381
      %v493 = vpop.f32.mrf.mxu0
      %v494 = vadd.f32 0.0, %v493
      %495 = vmatmul.f32.gmra.mxu0 %v384
      %v496 = vpop.f32.mrf.mxu0
      %v497 = vadd.f32 0.0, %v496
      %498 = vmatmul.f32.gmra.mxu0 %v387
      %v499 = vpop.f32.mrf.mxu0
      %v500 = vadd.f32 0.0, %v499
      %501 = vmatmul.f32.gmra.mxu0 %v390
      %v502 = vpop.f32.mrf.mxu0
      %v503 = vadd.f32 0.0, %v502
      %504 = vmatmul.f32.gmra.mxu0 %v393
      %v505 = vpop.f32.mrf.mxu0
      %v506 = vadd.f32 0.0, %v505
      %507 = vmatmul.f32.gmra.mxu0 %v396
      %v508 = vpop.f32.mrf.mxu0
      %v509 = vadd.f32 0.0, %v508
      %510 = vmatmul.f32.gmra.mxu0 %v399
      %v511 = vpop.f32.mrf.mxu0
      %v512 = vadd.f32 0.0, %v511
      %513 = vmatmul.f32.gmra.mxu0 %v402
      %v514 = vpop.f32.mrf.mxu0
      %v515 = vadd.f32 0.0, %v514
      %516 = vmatmul.f32.gmra.mxu0 %v405
      %v517 = vpop.f32.mrf.mxu0
      %v518 = vadd.f32 0.0, %v517
      %519 = vmatmul.f32.gmra.mxu0 %v408
      %v520 = vpop.f32.mrf.mxu0
      %v521 = vadd.f32 0.0, %v520
      %522 = vmatmul.f32.gmra.mxu0 %v411
      %v523 = vpop.f32.mrf.mxu0
      %v524 = vadd.f32 0.0, %v523
      %525 = vmatmul.f32.gmra.mxu0 %v414
      %v526 = vpop.f32.mrf.mxu0
      %v527 = vadd.f32 0.0, %v526
      %528 = vmatmul.f32.gmra.mxu0 %v417
      %v529 = vpop.f32.mrf.mxu0
      %v530 = vadd.f32 0.0, %v529
      %531 = vmatmul.f32.gmra.mxu0 %v420
      %v532 = vpop.f32.mrf.mxu0
      %v533 = vadd.f32 0.0, %v532
      %534 = vmatmul.f32.gmra.mxu0 %v423
      %v535 = vpop.f32.mrf.mxu0
      %v536 = vadd.f32 0.0, %v535
      %537 = vmatmul.f32.gmra.mxu0 %v426
      %v538 = vpop.f32.mrf.mxu0
      %v539 = vadd.f32 0.0, %v538
      %540 = vmatmul.f32.gmra.mxu0 %v429
      %v541 = vpop.f32.mrf.mxu0
      %v542 = vadd.f32 0.0, %v541
      %543 = vmatmul.f32.gmra.mxu0 %v432
      %v544 = vpop.f32.mrf.mxu0
      %v545 = vadd.f32 0.0, %v544
      %546 = vmatmul.f32.gmra.mxu0 %v435
      %v547 = vpop.f32.mrf.mxu0
      %v548 = vadd.f32 0.0, %v547
      %549 = vmatmul.f32.gmra.mxu0 %v438
      %v550 = vpop.f32.mrf.mxu0
      %v551 = vadd.f32 0.0, %v550
      %552 = vmatmul.f32.gmra.mxu0 %v441
      %v553 = vpop.f32.mrf.mxu0
      %v554 = vadd.f32 0.0, %v553
      %555 = vmatmul.f32.gmra.mxu0 %v444
      %v556 = vpop.f32.mrf.mxu0
      %v557 = vadd.f32 0.0, %v556
      %558 = vdwg.mxu0
      %s559 = scalar_lea.vmem %s231, 1152
      %v560 = vld [vmem:[%s559 + $0x12] sm:$0xff]
      %v561 = vld [vmem:[%s559 + $0x1a] sm:$0xff]
      %v562 = vld [vmem:[%s559 + $0x52] sm:$0xff]
      %v563 = vld [vmem:[%s559 + $0x5a] sm:$0xff]
      %v564 = vld [vmem:[%s559 + $0x92] sm:$0xff]
      %v565 = vld [vmem:[%s559 + $0x9a] sm:$0xff]
      %v566 = vld [vmem:[%s559 + $0xd2] sm:$0xff]
      %v567 = vld [vmem:[%s559 + $0xda] sm:$0xff]
      %v568 = vld [vmem:[%s559 + $0x112] sm:$0xff]
      %v569 = vld [vmem:[%s559 + $0x11a] sm:$0xff]
      %v570 = vld [vmem:[%s559 + $0x152] sm:$0xff]
      %v571 = vld [vmem:[%s559 + $0x15a] sm:$0xff]
      %v572 = vld [vmem:[%s559 + $0x192] sm:$0xff]
      %v573 = vld [vmem:[%s559 + $0x19a] sm:$0xff]
      %v574 = vld [vmem:[%s559 + $0x1d2] sm:$0xff]
      %v575 = vld [vmem:[%s559 + $0x1da] sm:$0xff]
      %v576 = vld [vmem:[%s559 + $0x212] sm:$0xff]
      %v577 = vld [vmem:[%s559 + $0x21a] sm:$0xff]
      %v578 = vld [vmem:[%s559 + $0x252] sm:$0xff]
      %v579 = vld [vmem:[%s559 + $0x25a] sm:$0xff]
      %v580 = vld [vmem:[%s559 + $0x292] sm:$0xff]
      %v581 = vld [vmem:[%s559 + $0x29a] sm:$0xff]
      %v582 = vld [vmem:[%s559 + $0x2d2] sm:$0xff]
      %v583 = vld [vmem:[%s559 + $0x2da] sm:$0xff]
      %v584 = vld [vmem:[%s559 + $0x312] sm:$0xff]
      %v585 = vld [vmem:[%s559 + $0x31a] sm:$0xff]
      %v586 = vld [vmem:[%s559 + $0x352] sm:$0xff]
      %v587 = vld [vmem:[%s559 + $0x35a] sm:$0xff]
      %v588 = vld [vmem:[%s559 + $0x392] sm:$0xff]
      %v589 = vld [vmem:[%s559 + $0x39a] sm:$0xff]
      %v590 = vld [vmem:[%s559 + $0x3d2] sm:$0xff]
      %v591 = vld [vmem:[%s559 + $0x3da] sm:$0xff]
      %v592 = vld [vmem:[%s559 + $0x18] sm:$0xff]
      %v593 = vld [vmem:[%s559 + $0x20] sm:$0xff]
      %v594 = vld [vmem:[%s559 + $0x58] sm:$0xff]
      %v595 = vld [vmem:[%s559 + $0x60] sm:$0xff]
      %v596 = vld [vmem:[%s559 + $0x98] sm:$0xff]
      %v597 = vld [vmem:[%s559 + $0xa0] sm:$0xff]
      %v598 = vld [vmem:[%s559 + $0xd8] sm:$0xff]
      %v599 = vld [vmem:[%s559 + $0xe0] sm:$0xff]
      %v600 = vld [vmem:[%s559 + $0x118] sm:$0xff]
      %v601 = vld [vmem:[%s559 + $0x120] sm:$0xff]
      %v602 = vld [vmem:[%s559 + $0x158] sm:$0xff]
      %v603 = vld [vmem:[%s559 + $0x160] sm:$0xff]
      %v604 = vld [vmem:[%s559 + $0x198] sm:$0xff]
      %v605 = vld [vmem:[%s559 + $0x1a0] sm:$0xff]
      %v606 = vld [vmem:[%s559 + $0x1d8] sm:$0xff]
      %v607 = vld [vmem:[%s559 + $0x1e0] sm:$0xff]
      %v608 = vld [vmem:[%s559 + $0x218] sm:$0xff]
      %v609 = vld [vmem:[%s559 + $0x220] sm:$0xff]
      %v610 = vld [vmem:[%s559 + $0x258] sm:$0xff]
      %v611 = vld [vmem:[%s559 + $0x260] sm:$0xff]
      %v612 = vld [vmem:[%s559 + $0x298] sm:$0xff]
      %v613 = vld [vmem:[%s559 + $0x2a0] sm:$0xff]
      %v614 = vld [vmem:[%s559 + $0x2d8] sm:$0xff]
      %v615 = vld [vmem:[%s559 + $0x2e0] sm:$0xff]
      %v616 = vld [vmem:[%s559 + $0x318] sm:$0xff]
      %v617 = vld [vmem:[%s559 + $0x320] sm:$0xff]
      %v618 = vld [vmem:[%s559 + $0x358] sm:$0xff]
      %v619 = vld [vmem:[%s559 + $0x360] sm:$0xff]
      %v620 = vld [vmem:[%s559 + $0x398] sm:$0xff]
      %v621 = vld [vmem:[%s559 + $0x3a0] sm:$0xff]
      %v622 = vld [vmem:[%s559 + $0x3d8] sm:$0xff]
      %v623 = vld [vmem:[%s559 + $0x3e0] sm:$0xff]
      %v624 = vld [vmem:[%s559 + $0x1e] sm:$0xff]
      %v625 = vld [vmem:[%s559 + $0x26] sm:$0xff]
      %v626 = vld [vmem:[%s559 + $0x5e] sm:$0xff]
      %v627 = vld [vmem:[%s559 + $0x66] sm:$0xff]
      %v628 = vld [vmem:[%s559 + $0x9e] sm:$0xff]
      %v629 = vld [vmem:[%s559 + $0xa6] sm:$0xff]
      %v630 = vld [vmem:[%s559 + $0xde] sm:$0xff]
      %v631 = vld [vmem:[%s559 + $0xe6] sm:$0xff]
      %v632 = vld [vmem:[%s559 + $0x11e] sm:$0xff]
      %v633 = vld [vmem:[%s559 + $0x126] sm:$0xff]
      %v634 = vld [vmem:[%s559 + $0x15e] sm:$0xff]
      %v635 = vld [vmem:[%s559 + $0x166] sm:$0xff]
      %v636 = vld [vmem:[%s559 + $0x19e] sm:$0xff]
      %v637 = vld [vmem:[%s559 + $0x1a6] sm:$0xff]
      %v638 = vld [vmem:[%s559 + $0x1de] sm:$0xff]
      %v639 = vld [vmem:[%s559 + $0x1e6] sm:$0xff]
      %v640 = vld [vmem:[%s559 + $0x21e] sm:$0xff]
      %v641 = vld [vmem:[%s559 + $0x226] sm:$0xff]
      %v642 = vld [vmem:[%s559 + $0x25e] sm:$0xff]
      %v643 = vld [vmem:[%s559 + $0x266] sm:$0xff]
      %v644 = vld [vmem:[%s559 + $0x29e] sm:$0xff]
      %v645 = vld [vmem:[%s559 + $0x2a6] sm:$0xff]
      %v646 = vld [vmem:[%s559 + $0x2de] sm:$0xff]
      %v647 = vld [vmem:[%s559 + $0x2e6] sm:$0xff]
      %v648 = vld [vmem:[%s559 + $0x31e] sm:$0xff]
      %v649 = vld [vmem:[%s559 + $0x326] sm:$0xff]
      %v650 = vld [vmem:[%s559 + $0x35e] sm:$0xff]
      %v651 = vld [vmem:[%s559 + $0x366] sm:$0xff]
      %v652 = vld [vmem:[%s559 + $0x39e] sm:$0xff]
      %v653 = vld [vmem:[%s559 + $0x3a6] sm:$0xff]
      %v654 = vld [vmem:[%s559 + $0x3de] sm:$0xff]
      %v655 = vld [vmem:[%s559 + $0x3e6] sm:$0xff]
      %v656 = vld [vmem:[%s244 + $0x12] sm:$0xff]
      %v657 = vld [vmem:[%s244 + $0x1a] sm:$0xff]
      %v658 = vld [vmem:[%s244 + $0x52] sm:$0xff]
      %v659 = vld [vmem:[%s244 + $0x5a] sm:$0xff]
      %v660 = vld [vmem:[%s244 + $0x92] sm:$0xff]
      %v661 = vld [vmem:[%s244 + $0x9a] sm:$0xff]
      %v662 = vld [vmem:[%s244 + $0xd2] sm:$0xff]
      %v663 = vld [vmem:[%s244 + $0xda] sm:$0xff]
      %v664 = vld [vmem:[%s244 + $0x112] sm:$0xff]
      %v665 = vld [vmem:[%s244 + $0x11a] sm:$0xff]
      %v666 = vld [vmem:[%s244 + $0x152] sm:$0xff]
      %v667 = vld [vmem:[%s244 + $0x15a] sm:$0xff]
      %v668 = vld [vmem:[%s244 + $0x192] sm:$0xff]
      %v669 = vld [vmem:[%s244 + $0x19a] sm:$0xff]
      %v670 = vld [vmem:[%s244 + $0x1d2] sm:$0xff]
      %v671 = vld [vmem:[%s244 + $0x1da] sm:$0xff]
      %v672 = vld [vmem:[%s244 + $0x212] sm:$0xff]
      %v673 = vld [vmem:[%s244 + $0x21a] sm:$0xff]
      %v674 = vld [vmem:[%s244 + $0x252] sm:$0xff]
      %v675 = vld [vmem:[%s244 + $0x25a] sm:$0xff]
      %v676 = vld [vmem:[%s244 + $0x292] sm:$0xff]
      %v677 = vld [vmem:[%s244 + $0x29a] sm:$0xff]
      %v678 = vld [vmem:[%s244 + $0x2d2] sm:$0xff]
      %v679 = vld [vmem:[%s244 + $0x2da] sm:$0xff]
      %v680 = vld [vmem:[%s244 + $0x312] sm:$0xff]
      %v681 = vld [vmem:[%s244 + $0x31a] sm:$0xff]
      %v682 = vld [vmem:[%s244 + $0x352] sm:$0xff]
      %v683 = vld [vmem:[%s244 + $0x35a] sm:$0xff]
      %v684 = vld [vmem:[%s244 + $0x392] sm:$0xff]
      %v685 = vld [vmem:[%s244 + $0x39a] sm:$0xff]
      %v686 = vld [vmem:[%s244 + $0x3d2] sm:$0xff]
      %v687 = vld [vmem:[%s244 + $0x3da] sm:$0xff]
      %v688 = vld [vmem:[%s244 + $0x18] sm:$0xff]
      %v689 = vld [vmem:[%s244 + $0x20] sm:$0xff]
      %v690 = vld [vmem:[%s244 + $0x58] sm:$0xff]
      %v691 = vld [vmem:[%s244 + $0x60] sm:$0xff]
      %v692 = vld [vmem:[%s244 + $0x98] sm:$0xff]
      %v693 = vld [vmem:[%s244 + $0xa0] sm:$0xff]
      %v694 = vld [vmem:[%s244 + $0xd8] sm:$0xff]
      %v695 = vld [vmem:[%s244 + $0xe0] sm:$0xff]
      %v696 = vld [vmem:[%s244 + $0x118] sm:$0xff]
      %v697 = vld [vmem:[%s244 + $0x120] sm:$0xff]
      %v698 = vld [vmem:[%s244 + $0x158] sm:$0xff]
      %v699 = vld [vmem:[%s244 + $0x160] sm:$0xff]
      %v700 = vld [vmem:[%s244 + $0x198] sm:$0xff]
      %v701 = vld [vmem:[%s244 + $0x1a0] sm:$0xff]
      %v702 = vld [vmem:[%s244 + $0x1d8] sm:$0xff]
      %v703 = vld [vmem:[%s244 + $0x1e0] sm:$0xff]
      %v704 = vld [vmem:[%s244 + $0x218] sm:$0xff]
      %v705 = vld [vmem:[%s244 + $0x220] sm:$0xff]
      %v706 = vld [vmem:[%s244 + $0x258] sm:$0xff]
      %v707 = vld [vmem:[%s244 + $0x260] sm:$0xff]
      %v708 = vld [vmem:[%s244 + $0x298] sm:$0xff]
      %v709 = vld [vmem:[%s244 + $0x2a0] sm:$0xff]
      %v710 = vld [vmem:[%s244 + $0x2d8] sm:$0xff]
      %v711 = vld [vmem:[%s244 + $0x2e0] sm:$0xff]
      %v712 = vld [vmem:[%s244 + $0x318] sm:$0xff]
      %v713 = vld [vmem:[%s244 + $0x320] sm:$0xff]
      %v714 = vld [vmem:[%s244 + $0x358] sm:$0xff]
      %v715 = vld [vmem:[%s244 + $0x360] sm:$0xff]
      %v716 = vld [vmem:[%s244 + $0x398] sm:$0xff]
      %v717 = vld [vmem:[%s244 + $0x3a0] sm:$0xff]
      %v718 = vld [vmem:[%s244 + $0x3d8] sm:$0xff]
      %v719 = vld [vmem:[%s244 + $0x3e0] sm:$0xff]
      %v720 = vld [vmem:[%s244 + $0x1e] sm:$0xff]
      %v721 = vld [vmem:[%s244 + $0x26] sm:$0xff]
      %v722 = vld [vmem:[%s244 + $0x5e] sm:$0xff]
      %v723 = vld [vmem:[%s244 + $0x66] sm:$0xff]
      %v724 = vld [vmem:[%s244 + $0x9e] sm:$0xff]
      %v725 = vld [vmem:[%s244 + $0xa6] sm:$0xff]
      %v726 = vld [vmem:[%s244 + $0xde] sm:$0xff]
      %v727 = vld [vmem:[%s244 + $0xe6] sm:$0xff]
      %v728 = vld [vmem:[%s244 + $0x11e] sm:$0xff]
      %v729 = vld [vmem:[%s244 + $0x126] sm:$0xff]
      %v730 = vld [vmem:[%s244 + $0x15e] sm:$0xff]
      %v731 = vld [vmem:[%s244 + $0x166] sm:$0xff]
      %v732 = vld [vmem:[%s244 + $0x19e] sm:$0xff]
      %v733 = vld [vmem:[%s244 + $0x1a6] sm:$0xff]
      %v734 = vld [vmem:[%s244 + $0x1de] sm:$0xff]
      %v735 = vld [vmem:[%s244 + $0x1e6] sm:$0xff]
      %v736 = vld [vmem:[%s244 + $0x21e] sm:$0xff]
      %v737 = vld [vmem:[%s244 + $0x226] sm:$0xff]
      %v738 = vld [vmem:[%s244 + $0x25e] sm:$0xff]
      %v739 = vld [vmem:[%s244 + $0x266] sm:$0xff]
      %v740 = vld [vmem:[%s244 + $0x29e] sm:$0xff]
      %v741 = vld [vmem:[%s244 + $0x2a6] sm:$0xff]
      %v742 = vld [vmem:[%s244 + $0x2de] sm:$0xff]
      %v743 = vld [vmem:[%s244 + $0x2e6] sm:$0xff]
      %v744 = vld [vmem:[%s244 + $0x31e] sm:$0xff]
      %v745 = vld [vmem:[%s244 + $0x326] sm:$0xff]
      %v746 = vld [vmem:[%s244 + $0x35e] sm:$0xff]
      %v747 = vld [vmem:[%s244 + $0x366] sm:$0xff]
      %v748 = vld [vmem:[%s244 + $0x39e] sm:$0xff]
      %v749 = vld [vmem:[%s244 + $0x3a6] sm:$0xff]
      %v750 = vld [vmem:[%s244 + $0x3de] sm:$0xff]
      %v751 = vld [vmem:[%s244 + $0x3e6] sm:$0xff]
      %s752 = scalar_lea.vmem %s231, 1920
      %v753 = vld [vmem:[%s752 + $0x12] sm:$0xff]
      %v754 = vld [vmem:[%s752 + $0x1a] sm:$0xff]
      %v755 = vld [vmem:[%s752 + $0x52] sm:$0xff]
      %v756 = vld [vmem:[%s752 + $0x5a] sm:$0xff]
      %v757 = vld [vmem:[%s752 + $0x92] sm:$0xff]
      %v758 = vld [vmem:[%s752 + $0x9a] sm:$0xff]
      %v759 = vld [vmem:[%s752 + $0xd2] sm:$0xff]
      %v760 = vld [vmem:[%s752 + $0xda] sm:$0xff]
      %v761 = vld [vmem:[%s752 + $0x112] sm:$0xff]
      %v762 = vld [vmem:[%s752 + $0x11a] sm:$0xff]
      %v763 = vld [vmem:[%s752 + $0x152] sm:$0xff]
      %v764 = vld [vmem:[%s752 + $0x15a] sm:$0xff]
      %v765 = vld [vmem:[%s752 + $0x192] sm:$0xff]
      %v766 = vld [vmem:[%s752 + $0x19a] sm:$0xff]
      %v767 = vld [vmem:[%s752 + $0x1d2] sm:$0xff]
      %v768 = vld [vmem:[%s752 + $0x1da] sm:$0xff]
      %v769 = vld [vmem:[%s752 + $0x212] sm:$0xff]
      %v770 = vld [vmem:[%s752 + $0x21a] sm:$0xff]
      %v771 = vld [vmem:[%s752 + $0x252] sm:$0xff]
      %v772 = vld [vmem:[%s752 + $0x25a] sm:$0xff]
      %v773 = vld [vmem:[%s752 + $0x292] sm:$0xff]
      %v774 = vld [vmem:[%s752 + $0x29a] sm:$0xff]
      %v775 = vld [vmem:[%s752 + $0x2d2] sm:$0xff]
      %v776 = vld [vmem:[%s752 + $0x2da] sm:$0xff]
      %v777 = vld [vmem:[%s752 + $0x312] sm:$0xff]
      %v778 = vld [vmem:[%s752 + $0x31a] sm:$0xff]
      %v779 = vld [vmem:[%s752 + $0x352] sm:$0xff]
      %v780 = vld [vmem:[%s752 + $0x35a] sm:$0xff]
      %v781 = vld [vmem:[%s752 + $0x392] sm:$0xff]
      %v782 = vld [vmem:[%s752 + $0x39a] sm:$0xff]
      %v783 = vld [vmem:[%s752 + $0x3d2] sm:$0xff]
      %v784 = vld [vmem:[%s752 + $0x3da] sm:$0xff]
      %v785 = vld [vmem:[%s752 + $0x18] sm:$0xff]
      %v786 = vld [vmem:[%s752 + $0x20] sm:$0xff]
      %v787 = vld [vmem:[%s752 + $0x58] sm:$0xff]
      %v788 = vld [vmem:[%s752 + $0x60] sm:$0xff]
      %v789 = vld [vmem:[%s752 + $0x98] sm:$0xff]
      %v790 = vld [vmem:[%s752 + $0xa0] sm:$0xff]
      %v791 = vld [vmem:[%s752 + $0xd8] sm:$0xff]
      %v792 = vld [vmem:[%s752 + $0xe0] sm:$0xff]
      %v793 = vld [vmem:[%s752 + $0x118] sm:$0xff]
      %v794 = vld [vmem:[%s752 + $0x120] sm:$0xff]
      %v795 = vld [vmem:[%s752 + $0x158] sm:$0xff]
      %v796 = vld [vmem:[%s752 + $0x160] sm:$0xff]
      %v797 = vld [vmem:[%s752 + $0x198] sm:$0xff]
      %v798 = vld [vmem:[%s752 + $0x1a0] sm:$0xff]
      %v799 = vld [vmem:[%s752 + $0x1d8] sm:$0xff]
      %v800 = vld [vmem:[%s752 + $0x1e0] sm:$0xff]
      %v801 = vld [vmem:[%s752 + $0x218] sm:$0xff]
      %v802 = vld [vmem:[%s752 + $0x220] sm:$0xff]
      %v803 = vld [vmem:[%s752 + $0x258] sm:$0xff]
      %v804 = vld [vmem:[%s752 + $0x260] sm:$0xff]
      %v805 = vld [vmem:[%s752 + $0x298] sm:$0xff]
      %v806 = vld [vmem:[%s752 + $0x2a0] sm:$0xff]
      %v807 = vld [vmem:[%s752 + $0x2d8] sm:$0xff]
      %v808 = vld [vmem:[%s752 + $0x2e0] sm:$0xff]
      %v809 = vld [vmem:[%s752 + $0x318] sm:$0xff]
      %v810 = vld [vmem:[%s752 + $0x320] sm:$0xff]
      %v811 = vld [vmem:[%s752 + $0x358] sm:$0xff]
      %v812 = vld [vmem:[%s752 + $0x360] sm:$0xff]
      %v813 = vld [vmem:[%s752 + $0x398] sm:$0xff]
      %v814 = vld [vmem:[%s752 + $0x3a0] sm:$0xff]
      %v815 = vld [vmem:[%s752 + $0x3d8] sm:$0xff]
      %v816 = vld [vmem:[%s752 + $0x3e0] sm:$0xff]
      %v817 = vld [vmem:[%s752 + $0x1e] sm:$0xff]
      %v818 = vld [vmem:[%s752 + $0x26] sm:$0xff]
      %v819 = vld [vmem:[%s752 + $0x5e] sm:$0xff]
      %v820 = vld [vmem:[%s752 + $0x66] sm:$0xff]
      %v821 = vld [vmem:[%s752 + $0x9e] sm:$0xff]
      %v822 = vld [vmem:[%s752 + $0xa6] sm:$0xff]
      %v823 = vld [vmem:[%s752 + $0xde] sm:$0xff]
      %v824 = vld [vmem:[%s752 + $0xe6] sm:$0xff]
      %v825 = vld [vmem:[%s752 + $0x11e] sm:$0xff]
      %v826 = vld [vmem:[%s752 + $0x126] sm:$0xff]
      %v827 = vld [vmem:[%s752 + $0x15e] sm:$0xff]
      %v828 = vld [vmem:[%s752 + $0x166] sm:$0xff]
      %v829 = vld [vmem:[%s752 + $0x19e] sm:$0xff]
      %v830 = vld [vmem:[%s752 + $0x1a6] sm:$0xff]
      %v831 = vld [vmem:[%s752 + $0x1de] sm:$0xff]
      %v832 = vld [vmem:[%s752 + $0x1e6] sm:$0xff]
      %v833 = vld [vmem:[%s752 + $0x21e] sm:$0xff]
      %v834 = vld [vmem:[%s752 + $0x226] sm:$0xff]
      %v835 = vld [vmem:[%s752 + $0x25e] sm:$0xff]
      %v836 = vld [vmem:[%s752 + $0x266] sm:$0xff]
      %v837 = vld [vmem:[%s752 + $0x29e] sm:$0xff]
      %v838 = vld [vmem:[%s752 + $0x2a6] sm:$0xff]
      %v839 = vld [vmem:[%s752 + $0x2de] sm:$0xff]
      %v840 = vld [vmem:[%s752 + $0x2e6] sm:$0xff]
      %v841 = vld [vmem:[%s752 + $0x31e] sm:$0xff]
      %v842 = vld [vmem:[%s752 + $0x326] sm:$0xff]
      %v843 = vld [vmem:[%s752 + $0x35e] sm:$0xff]
      %v844 = vld [vmem:[%s752 + $0x366] sm:$0xff]
      %v845 = vld [vmem:[%s752 + $0x39e] sm:$0xff]
      %v846 = vld [vmem:[%s752 + $0x3a6] sm:$0xff]
      %v847 = vld [vmem:[%s752 + $0x3de] sm:$0xff]
      %v848 = vld [vmem:[%s752 + $0x3e6] sm:$0xff]
      %881 = vrot.lane.b32.xlu0 %v592, 8
      %v882 = vpop.permute.xlu0 %881
      %883 = vrot.lane.b32.xlu0 %v593, 8
      %v884 = vpop.permute.xlu0 %883
      %885 = vrot.lane.b32.xlu0 %v594, 8
      %v886 = vpop.permute.xlu0 %885
      %887 = vrot.lane.b32.xlu0 %v595, 8
      %v888 = vpop.permute.xlu0 %887
      %889 = vrot.lane.b32.xlu0 %v596, 8
      %v890 = vpop.permute.xlu0 %889
      %891 = vrot.lane.b32.xlu0 %v597, 8
      %v892 = vpop.permute.xlu0 %891
      %893 = vrot.lane.b32.xlu0 %v598, 8
      %v894 = vpop.permute.xlu0 %893
      %895 = vrot.lane.b32.xlu0 %v599, 8
      %v896 = vpop.permute.xlu0 %895
      %897 = vrot.lane.b32.xlu0 %v600, 8
      %v898 = vpop.permute.xlu0 %897
      %899 = vrot.lane.b32.xlu0 %v601, 8
      %v900 = vpop.permute.xlu0 %899
      %901 = vrot.lane.b32.xlu0 %v602, 8
      %v902 = vpop.permute.xlu0 %901
      %903 = vrot.lane.b32.xlu0 %v603, 8
      %v904 = vpop.permute.xlu0 %903
      %905 = vrot.lane.b32.xlu0 %v604, 8
      %v906 = vpop.permute.xlu0 %905
      %907 = vrot.lane.b32.xlu0 %v605, 8
      %v908 = vpop.permute.xlu0 %907
      %909 = vrot.lane.b32.xlu0 %v606, 8
      %v910 = vpop.permute.xlu0 %909
      %911 = vrot.lane.b32.xlu0 %v607, 8
      %v912 = vpop.permute.xlu0 %911
      %913 = vrot.lane.b32.xlu0 %v608, 8
      %v914 = vpop.permute.xlu0 %913
      %915 = vrot.lane.b32.xlu0 %v609, 8
      %v916 = vpop.permute.xlu0 %915
      %917 = vrot.lane.b32.xlu0 %v610, 8
      %v918 = vpop.permute.xlu0 %917
      %919 = vrot.lane.b32.xlu0 %v611, 8
      %v920 = vpop.permute.xlu0 %919
      %921 = vrot.lane.b32.xlu0 %v612, 8
      %v922 = vpop.permute.xlu0 %921
      %923 = vrot.lane.b32.xlu0 %v613, 8
      %v924 = vpop.permute.xlu0 %923
      %925 = vrot.lane.b32.xlu0 %v614, 8
      %v926 = vpop.permute.xlu0 %925
      %927 = vrot.lane.b32.xlu0 %v615, 8
      %v928 = vpop.permute.xlu0 %927
      %929 = vrot.lane.b32.xlu0 %v616, 8
      %v930 = vpop.permute.xlu0 %929
      %931 = vrot.lane.b32.xlu0 %v617, 8
      %v932 = vpop.permute.xlu0 %931
      %933 = vrot.lane.b32.xlu0 %v618, 8
      %v934 = vpop.permute.xlu0 %933
      %935 = vrot.lane.b32.xlu0 %v619, 8
      %v936 = vpop.permute.xlu0 %935
      %937 = vrot.lane.b32.xlu0 %v620, 8
      %v938 = vpop.permute.xlu0 %937
      %939 = vrot.lane.b32.xlu0 %v621, 8
      %v940 = vpop.permute.xlu0 %939
      %941 = vrot.lane.b32.xlu0 %v622, 8
      %v942 = vpop.permute.xlu0 %941
      %943 = vrot.lane.b32.xlu0 %v623, 8
      %v944 = vpop.permute.xlu0 %943
      %1009 = vrot.lane.b32.xlu0 %v624, 16
      %v1010 = vpop.permute.xlu0 %1009
      %1011 = vrot.lane.b32.xlu0 %v625, 16
      %v1012 = vpop.permute.xlu0 %1011
      %1013 = vrot.lane.b32.xlu0 %v626, 16
      %v1014 = vpop.permute.xlu0 %1013
      %1015 = vrot.lane.b32.xlu0 %v627, 16
      %v1016 = vpop.permute.xlu0 %1015
      %1017 = vrot.lane.b32.xlu0 %v628, 16
      %v1018 = vpop.permute.xlu0 %1017
      %1019 = vrot.lane.b32.xlu0 %v629, 16
      %v1020 = vpop.permute.xlu0 %1019
      %1021 = vrot.lane.b32.xlu0 %v630, 16
      %v1022 = vpop.permute.xlu0 %1021
      %1023 = vrot.lane.b32.xlu0 %v631, 16
      %v1024 = vpop.permute.xlu0 %1023
      %1025 = vrot.lane.b32.xlu0 %v632, 16
      %v1026 = vpop.permute.xlu0 %1025
      %1027 = vrot.lane.b32.xlu0 %v633, 16
      %v1028 = vpop.permute.xlu0 %1027
      %1029 = vrot.lane.b32.xlu0 %v634, 16
      %v1030 = vpop.permute.xlu0 %1029
      %1031 = vrot.lane.b32.xlu0 %v635, 16
      %v1032 = vpop.permute.xlu0 %1031
      %1033 = vrot.lane.b32.xlu0 %v636, 16
      %v1034 = vpop.permute.xlu0 %1033
      %1035 = vrot.lane.b32.xlu0 %v637, 16
      %v1036 = vpop.permute.xlu0 %1035
      %1037 = vrot.lane.b32.xlu0 %v638, 16
      %v1038 = vpop.permute.xlu0 %1037
      %1039 = vrot.lane.b32.xlu0 %v639, 16
      %v1040 = vpop.permute.xlu0 %1039
      %1041 = vrot.lane.b32.xlu0 %v640, 16
      %v1042 = vpop.permute.xlu0 %1041
      %1043 = vrot.lane.b32.xlu0 %v641, 16
      %v1044 = vpop.permute.xlu0 %1043
      %1045 = vrot.lane.b32.xlu0 %v642, 16
      %v1046 = vpop.permute.xlu0 %1045
      %1047 = vrot.lane.b32.xlu0 %v643, 16
      %v1048 = vpop.permute.xlu0 %1047
      %1049 = vrot.lane.b32.xlu0 %v644, 16
      %v1050 = vpop.permute.xlu0 %1049
      %1051 = vrot.lane.b32.xlu0 %v645, 16
      %v1052 = vpop.permute.xlu0 %1051
      %1053 = vrot.lane.b32.xlu0 %v646, 16
      %v1054 = vpop.permute.xlu0 %1053
      %1055 = vrot.lane.b32.xlu0 %v647, 16
      %v1056 = vpop.permute.xlu0 %1055
      %1057 = vrot.lane.b32.xlu0 %v648, 16
      %v1058 = vpop.permute.xlu0 %1057
      %1059 = vrot.lane.b32.xlu0 %v649, 16
      %v1060 = vpop.permute.xlu0 %1059
      %1061 = vrot.lane.b32.xlu0 %v650, 16
      %v1062 = vpop.permute.xlu0 %1061
      %1063 = vrot.lane.b32.xlu0 %v651, 16
      %v1064 = vpop.permute.xlu0 %1063
      %1065 = vrot.lane.b32.xlu0 %v652, 16
      %v1066 = vpop.permute.xlu0 %1065
      %1067 = vrot.lane.b32.xlu0 %v653, 16
      %v1068 = vpop.permute.xlu0 %1067
      %1069 = vrot.lane.b32.xlu0 %v654, 16
      %v1070 = vpop.permute.xlu0 %1069
      %1071 = vrot.lane.b32.xlu0 %v655, 16
      %v1072 = vpop.permute.xlu0 %1071
      %1137 = vrot.lane.b32.xlu0 %v656, 24
      %v1138 = vpop.permute.xlu0 %1137
      %1139 = vrot.lane.b32.xlu0 %v657, 24
      %v1140 = vpop.permute.xlu0 %1139
      %1141 = vrot.lane.b32.xlu0 %v658, 24
      %v1142 = vpop.permute.xlu0 %1141
      %1143 = vrot.lane.b32.xlu0 %v659, 24
      %v1144 = vpop.permute.xlu0 %1143
      %1145 = vrot.lane.b32.xlu0 %v660, 24
      %v1146 = vpop.permute.xlu0 %1145
      %1147 = vrot.lane.b32.xlu0 %v661, 24
      %v1148 = vpop.permute.xlu0 %1147
      %1149 = vrot.lane.b32.xlu0 %v662, 24
      %v1150 = vpop.permute.xlu0 %1149
      %1151 = vrot.lane.b32.xlu0 %v663, 24
      %v1152 = vpop.permute.xlu0 %1151
      %1153 = vrot.lane.b32.xlu0 %v664, 24
      %v1154 = vpop.permute.xlu0 %1153
      %1155 = vrot.lane.b32.xlu0 %v665, 24
      %v1156 = vpop.permute.xlu0 %1155
      %1157 = vrot.lane.b32.xlu0 %v666, 24
      %v1158 = vpop.permute.xlu0 %1157
      %1159 = vrot.lane.b32.xlu0 %v667, 24
      %v1160 = vpop.permute.xlu0 %1159
      %1161 = vrot.lane.b32.xlu0 %v668, 24
      %v1162 = vpop.permute.xlu0 %1161
      %1163 = vrot.lane.b32.xlu0 %v669, 24
      %v1164 = vpop.permute.xlu0 %1163
      %1165 = vrot.lane.b32.xlu0 %v670, 24
      %v1166 = vpop.permute.xlu0 %1165
      %1167 = vrot.lane.b32.xlu0 %v671, 24
      %v1168 = vpop.permute.xlu0 %1167
      %1169 = vrot.lane.b32.xlu0 %v672, 24
      %v1170 = vpop.permute.xlu0 %1169
      %1171 = vrot.lane.b32.xlu0 %v673, 24
      %v1172 = vpop.permute.xlu0 %1171
      %1173 = vrot.lane.b32.xlu0 %v674, 24
      %v1174 = vpop.permute.xlu0 %1173
      %1175 = vrot.lane.b32.xlu0 %v675, 24
      %v1176 = vpop.permute.xlu0 %1175
      %1177 = vrot.lane.b32.xlu0 %v676, 24
      %v1178 = vpop.permute.xlu0 %1177
      %1179 = vrot.lane.b32.xlu0 %v677, 24
      %v1180 = vpop.permute.xlu0 %1179
      %1181 = vrot.lane.b32.xlu0 %v678, 24
      %v1182 = vpop.permute.xlu0 %1181
      %1183 = vrot.lane.b32.xlu0 %v679, 24
      %v1184 = vpop.permute.xlu0 %1183
      %1185 = vrot.lane.b32.xlu0 %v680, 24
      %v1186 = vpop.permute.xlu0 %1185
      %1187 = vrot.lane.b32.xlu0 %v681, 24
      %v1188 = vpop.permute.xlu0 %1187
      %1189 = vrot.lane.b32.xlu0 %v682, 24
      %v1190 = vpop.permute.xlu0 %1189
      %1191 = vrot.lane.b32.xlu0 %v683, 24
      %v1192 = vpop.permute.xlu0 %1191
      %1193 = vrot.lane.b32.xlu0 %v684, 24
      %v1194 = vpop.permute.xlu0 %1193
      %1195 = vrot.lane.b32.xlu0 %v685, 24
      %v1196 = vpop.permute.xlu0 %1195
      %1197 = vrot.lane.b32.xlu0 %v686, 24
      %v1198 = vpop.permute.xlu0 %1197
      %1199 = vrot.lane.b32.xlu0 %v687, 24
      %v1200 = vpop.permute.xlu0 %1199
      %1265 = vrot.lane.b32.xlu0 %v688, 32
      %v1266 = vpop.permute.xlu0 %1265
      %1267 = vrot.lane.b32.xlu0 %v689, 32
      %v1268 = vpop.permute.xlu0 %1267
      %1269 = vrot.lane.b32.xlu0 %v690, 32
      %v1270 = vpop.permute.xlu0 %1269
      %1271 = vrot.lane.b32.xlu0 %v691, 32
      %v1272 = vpop.permute.xlu0 %1271
      %1273 = vrot.lane.b32.xlu0 %v692, 32
      %v1274 = vpop.permute.xlu0 %1273
      %1275 = vrot.lane.b32.xlu0 %v693, 32
      %v1276 = vpop.permute.xlu0 %1275
      %1277 = vrot.lane.b32.xlu0 %v694, 32
      %v1278 = vpop.permute.xlu0 %1277
      %1279 = vrot.lane.b32.xlu0 %v695, 32
      %v1280 = vpop.permute.xlu0 %1279
      %1281 = vrot.lane.b32.xlu0 %v696, 32
      %v1282 = vpop.permute.xlu0 %1281
      %1283 = vrot.lane.b32.xlu0 %v697, 32
      %v1284 = vpop.permute.xlu0 %1283
      %1285 = vrot.lane.b32.xlu0 %v698, 32
      %v1286 = vpop.permute.xlu0 %1285
      %1287 = vrot.lane.b32.xlu0 %v699, 32
      %v1288 = vpop.permute.xlu0 %1287
      %1289 = vrot.lane.b32.xlu0 %v700, 32
      %v1290 = vpop.permute.xlu0 %1289
      %1291 = vrot.lane.b32.xlu0 %v701, 32
      %v1292 = vpop.permute.xlu0 %1291
      %1293 = vrot.lane.b32.xlu0 %v702, 32
      %v1294 = vpop.permute.xlu0 %1293
      %1295 = vrot.lane.b32.xlu0 %v703, 32
      %v1296 = vpop.permute.xlu0 %1295
      %1297 = vrot.lane.b32.xlu0 %v704, 32
      %v1298 = vpop.permute.xlu0 %1297
      %1299 = vrot.lane.b32.xlu0 %v705, 32
      %v1300 = vpop.permute.xlu0 %1299
      %1301 = vrot.lane.b32.xlu0 %v706, 32
      %v1302 = vpop.permute.xlu0 %1301
      %1303 = vrot.lane.b32.xlu0 %v707, 32
      %v1304 = vpop.permute.xlu0 %1303
      %1305 = vrot.lane.b32.xlu0 %v708, 32
      %v1306 = vpop.permute.xlu0 %1305
      %1307 = vrot.lane.b32.xlu0 %v709, 32
      %v1308 = vpop.permute.xlu0 %1307
      %1309 = vrot.lane.b32.xlu0 %v710, 32
      %v1310 = vpop.permute.xlu0 %1309
      %1311 = vrot.lane.b32.xlu0 %v711, 32
      %v1312 = vpop.permute.xlu0 %1311
      %1313 = vrot.lane.b32.xlu0 %v712, 32
      %v1314 = vpop.permute.xlu0 %1313
      %1315 = vrot.lane.b32.xlu0 %v713, 32
      %v1316 = vpop.permute.xlu0 %1315
      %1317 = vrot.lane.b32.xlu0 %v714, 32
      %v1318 = vpop.permute.xlu0 %1317
      %1319 = vrot.lane.b32.xlu0 %v715, 32
      %v1320 = vpop.permute.xlu0 %1319
      %1321 = vrot.lane.b32.xlu0 %v716, 32
      %v1322 = vpop.permute.xlu0 %1321
      %1323 = vrot.lane.b32.xlu0 %v717, 32
      %v1324 = vpop.permute.xlu0 %1323
      %1325 = vrot.lane.b32.xlu0 %v718, 32
      %v1326 = vpop.permute.xlu0 %1325
      %1327 = vrot.lane.b32.xlu0 %v719, 32
      %v1328 = vpop.permute.xlu0 %1327
      %1393 = vrot.lane.b32.xlu0 %v720, 40
      %v1394 = vpop.permute.xlu0 %1393
      %1395 = vrot.lane.b32.xlu0 %v721, 40
      %v1396 = vpop.permute.xlu0 %1395
      %1397 = vrot.lane.b32.xlu0 %v722, 40
      %v1398 = vpop.permute.xlu0 %1397
      %1399 = vrot.lane.b32.xlu0 %v723, 40
      %v1400 = vpop.permute.xlu0 %1399
      %1401 = vrot.lane.b32.xlu0 %v724, 40
      %v1402 = vpop.permute.xlu0 %1401
      %1403 = vrot.lane.b32.xlu0 %v725, 40
      %v1404 = vpop.permute.xlu0 %1403
      %1405 = vrot.lane.b32.xlu0 %v726, 40
      %v1406 = vpop.permute.xlu0 %1405
      %1407 = vrot.lane.b32.xlu0 %v727, 40
      %v1408 = vpop.permute.xlu0 %1407
      %1409 = vrot.lane.b32.xlu0 %v728, 40
      %v1410 = vpop.permute.xlu0 %1409
      %1411 = vrot.lane.b32.xlu0 %v729, 40
      %v1412 = vpop.permute.xlu0 %1411
      %1413 = vrot.lane.b32.xlu0 %v730, 40
      %v1414 = vpop.permute.xlu0 %1413
      %1415 = vrot.lane.b32.xlu0 %v731, 40
      %v1416 = vpop.permute.xlu0 %1415
      %1417 = vrot.lane.b32.xlu0 %v732, 40
      %v1418 = vpop.permute.xlu0 %1417
      %1419 = vrot.lane.b32.xlu0 %v733, 40
      %v1420 = vpop.permute.xlu0 %1419
      %1421 = vrot.lane.b32.xlu0 %v734, 40
      %v1422 = vpop.permute.xlu0 %1421
      %1423 = vrot.lane.b32.xlu0 %v735, 40
      %v1424 = vpop.permute.xlu0 %1423
      %1425 = vrot.lane.b32.xlu0 %v736, 40
      %v1426 = vpop.permute.xlu0 %1425
      %1427 = vrot.lane.b32.xlu0 %v737, 40
      %v1428 = vpop.permute.xlu0 %1427
      %1429 = vrot.lane.b32.xlu0 %v738, 40
      %v1430 = vpop.permute.xlu0 %1429
      %1431 = vrot.lane.b32.xlu0 %v739, 40
      %v1432 = vpop.permute.xlu0 %1431
      %1433 = vrot.lane.b32.xlu0 %v740, 40
      %v1434 = vpop.permute.xlu0 %1433
      %1435 = vrot.lane.b32.xlu0 %v741, 40
      %v1436 = vpop.permute.xlu0 %1435
      %1437 = vrot.lane.b32.xlu0 %v742, 40
      %v1438 = vpop.permute.xlu0 %1437
      %1439 = vrot.lane.b32.xlu0 %v743, 40
      %v1440 = vpop.permute.xlu0 %1439
      %1441 = vrot.lane.b32.xlu0 %v744, 40
      %v1442 = vpop.permute.xlu0 %1441
      %1443 = vrot.lane.b32.xlu0 %v745, 40
      %v1444 = vpop.permute.xlu0 %1443
      %1445 = vrot.lane.b32.xlu0 %v746, 40
      %v1446 = vpop.permute.xlu0 %1445
      %1447 = vrot.lane.b32.xlu0 %v747, 40
      %v1448 = vpop.permute.xlu0 %1447
      %1449 = vrot.lane.b32.xlu0 %v748, 40
      %v1450 = vpop.permute.xlu0 %1449
      %1451 = vrot.lane.b32.xlu0 %v749, 40
      %v1452 = vpop.permute.xlu0 %1451
      %1453 = vrot.lane.b32.xlu0 %v750, 40
      %v1454 = vpop.permute.xlu0 %1453
      %1455 = vrot.lane.b32.xlu0 %v751, 40
      %v1456 = vpop.permute.xlu0 %1455
      %1521 = vrot.lane.b32.xlu0 %v753, 48
      %v1522 = vpop.permute.xlu0 %1521
      %1523 = vrot.lane.b32.xlu0 %v754, 48
      %v1524 = vpop.permute.xlu0 %1523
      %1525 = vrot.lane.b32.xlu0 %v755, 48
      %v1526 = vpop.permute.xlu0 %1525
      %1527 = vrot.lane.b32.xlu0 %v756, 48
      %v1528 = vpop.permute.xlu0 %1527
      %1529 = vrot.lane.b32.xlu0 %v757, 48
      %v1530 = vpop.permute.xlu0 %1529
      %1531 = vrot.lane.b32.xlu0 %v758, 48
      %v1532 = vpop.permute.xlu0 %1531
      %1533 = vrot.lane.b32.xlu0 %v759, 48
      %v1534 = vpop.permute.xlu0 %1533
      %1535 = vrot.lane.b32.xlu0 %v760, 48
      %v1536 = vpop.permute.xlu0 %1535
      %1537 = vrot.lane.b32.xlu0 %v761, 48
      %v1538 = vpop.permute.xlu0 %1537
      %1539 = vrot.lane.b32.xlu0 %v762, 48
      %v1540 = vpop.permute.xlu0 %1539
      %1541 = vrot.lane.b32.xlu0 %v763, 48
      %v1542 = vpop.permute.xlu0 %1541
      %1543 = vrot.lane.b32.xlu0 %v764, 48
      %v1544 = vpop.permute.xlu0 %1543
      %1545 = vrot.lane.b32.xlu0 %v765, 48
      %v1546 = vpop.permute.xlu0 %1545
      %1547 = vrot.lane.b32.xlu0 %v766, 48
      %v1548 = vpop.permute.xlu0 %1547
      %1549 = vrot.lane.b32.xlu0 %v767, 48
      %v1550 = vpop.permute.xlu0 %1549
      %1551 = vrot.lane.b32.xlu0 %v768, 48
      %v1552 = vpop.permute.xlu0 %1551
      %1553 = vrot.lane.b32.xlu0 %v769, 48
      %v1554 = vpop.permute.xlu0 %1553
      %1555 = vrot.lane.b32.xlu0 %v770, 48
      %v1556 = vpop.permute.xlu0 %1555
      %1557 = vrot.lane.b32.xlu0 %v771, 48
      %v1558 = vpop.permute.xlu0 %1557
      %1559 = vrot.lane.b32.xlu0 %v772, 48
      %v1560 = vpop.permute.xlu0 %1559
      %1561 = vrot.lane.b32.xlu0 %v773, 48
      %v1562 = vpop.permute.xlu0 %1561
      %1563 = vrot.lane.b32.xlu0 %v774, 48
      %v1564 = vpop.permute.xlu0 %1563
      %1565 = vrot.lane.b32.xlu0 %v775, 48
      %v1566 = vpop.permute.xlu0 %1565
      %1567 = vrot.lane.b32.xlu0 %v776, 48
      %v1568 = vpop.permute.xlu0 %1567
      %1569 = vrot.lane.b32.xlu0 %v777, 48
      %v1570 = vpop.permute.xlu0 %1569
      %1571 = vrot.lane.b32.xlu0 %v778, 48
      %v1572 = vpop.permute.xlu0 %1571
      %1573 = vrot.lane.b32.xlu0 %v779, 48
      %v1574 = vpop.permute.xlu0 %1573
      %1575 = vrot.lane.b32.xlu0 %v780, 48
      %v1576 = vpop.permute.xlu0 %1575
      %1577 = vrot.lane.b32.xlu0 %v781, 48
      %v1578 = vpop.permute.xlu0 %1577
      %1579 = vrot.lane.b32.xlu0 %v782, 48
      %v1580 = vpop.permute.xlu0 %1579
      %1581 = vrot.lane.b32.xlu0 %v783, 48
      %v1582 = vpop.permute.xlu0 %1581
      %1583 = vrot.lane.b32.xlu0 %v784, 48
      %v1584 = vpop.permute.xlu0 %1583
      %1649 = vrot.lane.b32.xlu0 %v785, 56
      %v1650 = vpop.permute.xlu0 %1649
      %1651 = vrot.lane.b32.xlu0 %v786, 56
      %v1652 = vpop.permute.xlu0 %1651
      %1653 = vrot.lane.b32.xlu0 %v787, 56
      %v1654 = vpop.permute.xlu0 %1653
      %1655 = vrot.lane.b32.xlu0 %v788, 56
      %v1656 = vpop.permute.xlu0 %1655
      %1657 = vrot.lane.b32.xlu0 %v789, 56
      %v1658 = vpop.permute.xlu0 %1657
      %1659 = vrot.lane.b32.xlu0 %v790, 56
      %v1660 = vpop.permute.xlu0 %1659
      %1661 = vrot.lane.b32.xlu0 %v791, 56
      %v1662 = vpop.permute.xlu0 %1661
      %1663 = vrot.lane.b32.xlu0 %v792, 56
      %v1664 = vpop.permute.xlu0 %1663
      %1665 = vrot.lane.b32.xlu0 %v793, 56
      %v1666 = vpop.permute.xlu0 %1665
      %1667 = vrot.lane.b32.xlu0 %v794, 56
      %v1668 = vpop.permute.xlu0 %1667
      %1669 = vrot.lane.b32.xlu0 %v795, 56
      %v1670 = vpop.permute.xlu0 %1669
      %1671 = vrot.lane.b32.xlu0 %v796, 56
      %v1672 = vpop.permute.xlu0 %1671
      %1673 = vrot.lane.b32.xlu0 %v797, 56
      %v1674 = vpop.permute.xlu0 %1673
      %1675 = vrot.lane.b32.xlu0 %v798, 56
      %v1676 = vpop.permute.xlu0 %1675
      %1677 = vrot.lane.b32.xlu0 %v799, 56
      %v1678 = vpop.permute.xlu0 %1677
      %1679 = vrot.lane.b32.xlu0 %v800, 56
      %v1680 = vpop.permute.xlu0 %1679
      %1681 = vrot.lane.b32.xlu0 %v801, 56
      %v1682 = vpop.permute.xlu0 %1681
      %1683 = vrot.lane.b32.xlu0 %v802, 56
      %v1684 = vpop.permute.xlu0 %1683
      %1685 = vrot.lane.b32.xlu0 %v803, 56
      %v1686 = vpop.permute.xlu0 %1685
      %1687 = vrot.lane.b32.xlu0 %v804, 56
      %v1688 = vpop.permute.xlu0 %1687
      %1689 = vrot.lane.b32.xlu0 %v805, 56
      %v1690 = vpop.permute.xlu0 %1689
      %1691 = vrot.lane.b32.xlu0 %v806, 56
      %v1692 = vpop.permute.xlu0 %1691
      %1693 = vrot.lane.b32.xlu0 %v807, 56
      %v1694 = vpop.permute.xlu0 %1693
      %1695 = vrot.lane.b32.xlu0 %v808, 56
      %v1696 = vpop.permute.xlu0 %1695
      %1697 = vrot.lane.b32.xlu0 %v809, 56
      %v1698 = vpop.permute.xlu0 %1697
      %1699 = vrot.lane.b32.xlu0 %v810, 56
      %v1700 = vpop.permute.xlu0 %1699
      %1701 = vrot.lane.b32.xlu0 %v811, 56
      %v1702 = vpop.permute.xlu0 %1701
      %1703 = vrot.lane.b32.xlu0 %v812, 56
      %v1704 = vpop.permute.xlu0 %1703
      %1705 = vrot.lane.b32.xlu0 %v813, 56
      %v1706 = vpop.permute.xlu0 %1705
      %1707 = vrot.lane.b32.xlu0 %v814, 56
      %v1708 = vpop.permute.xlu0 %1707
      %1709 = vrot.lane.b32.xlu0 %v815, 56
      %v1710 = vpop.permute.xlu0 %1709
      %1711 = vrot.lane.b32.xlu0 %v816, 56
      %v1712 = vpop.permute.xlu0 %1711
      %1777 = vrot.lane.b32.xlu0 %v817, 64
      %v1778 = vpop.permute.xlu0 %1777
      %1779 = vrot.lane.b32.xlu0 %v818, 64
      %v1780 = vpop.permute.xlu0 %1779
      %1781 = vrot.lane.b32.xlu0 %v819, 64
      %v1782 = vpop.permute.xlu0 %1781
      %1783 = vrot.lane.b32.xlu0 %v820, 64
      %v1784 = vpop.permute.xlu0 %1783
      %1785 = vrot.lane.b32.xlu0 %v821, 64
      %v1786 = vpop.permute.xlu0 %1785
      %1787 = vrot.lane.b32.xlu0 %v822, 64
      %v1788 = vpop.permute.xlu0 %1787
      %1789 = vrot.lane.b32.xlu0 %v823, 64
      %v1790 = vpop.permute.xlu0 %1789
      %1791 = vrot.lane.b32.xlu0 %v824, 64
      %v1792 = vpop.permute.xlu0 %1791
      %1793 = vrot.lane.b32.xlu0 %v825, 64
      %v1794 = vpop.permute.xlu0 %1793
      %1795 = vrot.lane.b32.xlu0 %v826, 64
      %v1796 = vpop.permute.xlu0 %1795
      %1797 = vrot.lane.b32.xlu0 %v827, 64
      %v1798 = vpop.permute.xlu0 %1797
      %1799 = vrot.lane.b32.xlu0 %v828, 64
      %v1800 = vpop.permute.xlu0 %1799
      %1801 = vrot.lane.b32.xlu0 %v829, 64
      %v1802 = vpop.permute.xlu0 %1801
      %1803 = vrot.lane.b32.xlu0 %v830, 64
      %v1804 = vpop.permute.xlu0 %1803
      %1805 = vrot.lane.b32.xlu0 %v831, 64
      %v1806 = vpop.permute.xlu0 %1805
      %1807 = vrot.lane.b32.xlu0 %v832, 64
      %v1808 = vpop.permute.xlu0 %1807
      %1809 = vrot.lane.b32.xlu0 %v833, 64
      %v1810 = vpop.permute.xlu0 %1809
      %1811 = vrot.lane.b32.xlu0 %v834, 64
      %v1812 = vpop.permute.xlu0 %1811
      %1813 = vrot.lane.b32.xlu0 %v835, 64
      %v1814 = vpop.permute.xlu0 %1813
      %1815 = vrot.lane.b32.xlu0 %v836, 64
      %v1816 = vpop.permute.xlu0 %1815
      %1817 = vrot.lane.b32.xlu0 %v837, 64
      %v1818 = vpop.permute.xlu0 %1817
      %1819 = vrot.lane.b32.xlu0 %v838, 64
      %v1820 = vpop.permute.xlu0 %1819
      %1821 = vrot.lane.b32.xlu0 %v839, 64
      %v1822 = vpop.permute.xlu0 %1821
      %1823 = vrot.lane.b32.xlu0 %v840, 64
      %v1824 = vpop.permute.xlu0 %1823
      %1825 = vrot.lane.b32.xlu0 %v841, 64
      %v1826 = vpop.permute.xlu0 %1825
      %1827 = vrot.lane.b32.xlu0 %v842, 64
      %v1828 = vpop.permute.xlu0 %1827
      %1829 = vrot.lane.b32.xlu0 %v843, 64
      %v1830 = vpop.permute.xlu0 %1829
      %1831 = vrot.lane.b32.xlu0 %v844, 64
      %v1832 = vpop.permute.xlu0 %1831
      %1833 = vrot.lane.b32.xlu0 %v845, 64
      %v1834 = vpop.permute.xlu0 %1833
      %1835 = vrot.lane.b32.xlu0 %v846, 64
      %v1836 = vpop.permute.xlu0 %1835
      %1837 = vrot.lane.b32.xlu0 %v847, 64
      %v1838 = vpop.permute.xlu0 %1837
      %1839 = vrot.lane.b32.xlu0 %v848, 64
      %v1840 = vpop.permute.xlu0 %1839
      %v1873 = vsel %vm277, %v560, %v882
      %v1874 = vsel %vm277, %v561, %v884
      %v1875 = vsel %vm277, %v562, %v886
      %v1876 = vsel %vm277, %v563, %v888
      %v1877 = vsel %vm277, %v564, %v890
      %v1878 = vsel %vm277, %v565, %v892
      %v1879 = vsel %vm277, %v566, %v894
      %v1880 = vsel %vm277, %v567, %v896
      %v1881 = vsel %vm277, %v568, %v898
      %v1882 = vsel %vm277, %v569, %v900
      %v1883 = vsel %vm277, %v570, %v902
      %v1884 = vsel %vm277, %v571, %v904
      %v1885 = vsel %vm277, %v572, %v906
      %v1886 = vsel %vm277, %v573, %v908
      %v1887 = vsel %vm277, %v574, %v910
      %v1888 = vsel %vm277, %v575, %v912
      %v1889 = vsel %vm277, %v576, %v914
      %v1890 = vsel %vm277, %v577, %v916
      %v1891 = vsel %vm277, %v578, %v918
      %v1892 = vsel %vm277, %v579, %v920
      %v1893 = vsel %vm277, %v580, %v922
      %v1894 = vsel %vm277, %v581, %v924
      %v1895 = vsel %vm277, %v582, %v926
      %v1896 = vsel %vm277, %v583, %v928
      %v1897 = vsel %vm277, %v584, %v930
      %v1898 = vsel %vm277, %v585, %v932
      %v1899 = vsel %vm277, %v586, %v934
      %v1900 = vsel %vm277, %v587, %v936
      %v1901 = vsel %vm277, %v588, %v938
      %v1902 = vsel %vm277, %v589, %v940
      %v1903 = vsel %vm277, %v590, %v942
      %v1904 = vsel %vm277, %v591, %v944
      %vm1905 = vcmask 130048
      %v1906 = vsel %vm1905, %v1873, %v1010
      %v1907 = vsel %vm1905, %v1874, %v1012
      %v1908 = vsel %vm1905, %v1875, %v1014
      %v1909 = vsel %vm1905, %v1876, %v1016
      %v1910 = vsel %vm1905, %v1877, %v1018
      %v1911 = vsel %vm1905, %v1878, %v1020
      %v1912 = vsel %vm1905, %v1879, %v1022
      %v1913 = vsel %vm1905, %v1880, %v1024
      %v1914 = vsel %vm1905, %v1881, %v1026
      %v1915 = vsel %vm1905, %v1882, %v1028
      %v1916 = vsel %vm1905, %v1883, %v1030
      %v1917 = vsel %vm1905, %v1884, %v1032
      %v1918 = vsel %vm1905, %v1885, %v1034
      %v1919 = vsel %vm1905, %v1886, %v1036
      %v1920 = vsel %vm1905, %v1887, %v1038
      %v1921 = vsel %vm1905, %v1888, %v1040
      %v1922 = vsel %vm1905, %v1889, %v1042
      %v1923 = vsel %vm1905, %v1890, %v1044
      %v1924 = vsel %vm1905, %v1891, %v1046
      %v1925 = vsel %vm1905, %v1892, %v1048
      %v1926 = vsel %vm1905, %v1893, %v1050
      %v1927 = vsel %vm1905, %v1894, %v1052
      %v1928 = vsel %vm1905, %v1895, %v1054
      %v1929 = vsel %vm1905, %v1896, %v1056
      %v1930 = vsel %vm1905, %v1897, %v1058
      %v1931 = vsel %vm1905, %v1898, %v1060
      %v1932 = vsel %vm1905, %v1899, %v1062
      %v1933 = vsel %vm1905, %v1900, %v1064
      %v1934 = vsel %vm1905, %v1901, %v1066
      %v1935 = vsel %vm1905, %v1902, %v1068
      %v1936 = vsel %vm1905, %v1903, %v1070
      %v1937 = vsel %vm1905, %v1904, %v1072
      %vm1938 = vcmask 195584
      %v1939 = vsel %vm1938, %v1906, %v1138
      %v1940 = vsel %vm1938, %v1907, %v1140
      %v1941 = vsel %vm1938, %v1908, %v1142
      %v1942 = vsel %vm1938, %v1909, %v1144
      %v1943 = vsel %vm1938, %v1910, %v1146
      %v1944 = vsel %vm1938, %v1911, %v1148
      %v1945 = vsel %vm1938, %v1912, %v1150
      %v1946 = vsel %vm1938, %v1913, %v1152
      %v1947 = vsel %vm1938, %v1914, %v1154
      %v1948 = vsel %vm1938, %v1915, %v1156
      %v1949 = vsel %vm1938, %v1916, %v1158
      %v1950 = vsel %vm1938, %v1917, %v1160
      %v1951 = vsel %vm1938, %v1918, %v1162
      %v1952 = vsel %vm1938, %v1919, %v1164
      %v1953 = vsel %vm1938, %v1920, %v1166
      %v1954 = vsel %vm1938, %v1921, %v1168
      %v1955 = vsel %vm1938, %v1922, %v1170
      %v1956 = vsel %vm1938, %v1923, %v1172
      %v1957 = vsel %vm1938, %v1924, %v1174
      %v1958 = vsel %vm1938, %v1925, %v1176
      %v1959 = vsel %vm1938, %v1926, %v1178
      %v1960 = vsel %vm1938, %v1927, %v1180
      %v1961 = vsel %vm1938, %v1928, %v1182
      %v1962 = vsel %vm1938, %v1929, %v1184
      %v1963 = vsel %vm1938, %v1930, %v1186
      %v1964 = vsel %vm1938, %v1931, %v1188
      %v1965 = vsel %vm1938, %v1932, %v1190
      %v1966 = vsel %vm1938, %v1933, %v1192
      %v1967 = vsel %vm1938, %v1934, %v1194
      %v1968 = vsel %vm1938, %v1935, %v1196
      %v1969 = vsel %vm1938, %v1936, %v1198
      %v1970 = vsel %vm1938, %v1937, %v1200
      %vm1971 = vcmask 261120
      %v1972 = vsel %vm1971, %v1939, %v1266
      %v1973 = vsel %vm1971, %v1940, %v1268
      %v1974 = vsel %vm1971, %v1941, %v1270
      %v1975 = vsel %vm1971, %v1942, %v1272
      %v1976 = vsel %vm1971, %v1943, %v1274
      %v1977 = vsel %vm1971, %v1944, %v1276
      %v1978 = vsel %vm1971, %v1945, %v1278
      %v1979 = vsel %vm1971, %v1946, %v1280
      %v1980 = vsel %vm1971, %v1947, %v1282
      %v1981 = vsel %vm1971, %v1948, %v1284
      %v1982 = vsel %vm1971, %v1949, %v1286
      %v1983 = vsel %vm1971, %v1950, %v1288
      %v1984 = vsel %vm1971, %v1951, %v1290
      %v1985 = vsel %vm1971, %v1952, %v1292
      %v1986 = vsel %vm1971, %v1953, %v1294
      %v1987 = vsel %vm1971, %v1954, %v1296
      %v1988 = vsel %vm1971, %v1955, %v1298
      %v1989 = vsel %vm1971, %v1956, %v1300
      %v1990 = vsel %vm1971, %v1957, %v1302
      %v1991 = vsel %vm1971, %v1958, %v1304
      %v1992 = vsel %vm1971, %v1959, %v1306
      %v1993 = vsel %vm1971, %v1960, %v1308
      %v1994 = vsel %vm1971, %v1961, %v1310
      %v1995 = vsel %vm1971, %v1962, %v1312
      %v1996 = vsel %vm1971, %v1963, %v1314
      %v1997 = vsel %vm1971, %v1964, %v1316
      %v1998 = vsel %vm1971, %v1965, %v1318
      %v1999 = vsel %vm1971, %v1966, %v1320
      %v2000 = vsel %vm1971, %v1967, %v1322
      %v2001 = vsel %vm1971, %v1968, %v1324
      %v2002 = vsel %vm1971, %v1969, %v1326
      %v2003 = vsel %vm1971, %v1970, %v1328
      %vm2004 = vcmask 326656
      %v2005 = vsel %vm2004, %v1972, %v1394
      %v2006 = vsel %vm2004, %v1973, %v1396
      %v2007 = vsel %vm2004, %v1974, %v1398
      %v2008 = vsel %vm2004, %v1975, %v1400
      %v2009 = vsel %vm2004, %v1976, %v1402
      %v2010 = vsel %vm2004, %v1977, %v1404
      %v2011 = vsel %vm2004, %v1978, %v1406
      %v2012 = vsel %vm2004, %v1979, %v1408
      %v2013 = vsel %vm2004, %v1980, %v1410
      %v2014 = vsel %vm2004, %v1981, %v1412
      %v2015 = vsel %vm2004, %v1982, %v1414
      %v2016 = vsel %vm2004, %v1983, %v1416
      %v2017 = vsel %vm2004, %v1984, %v1418
      %v2018 = vsel %vm2004, %v1985, %v1420
      %v2019 = vsel %vm2004, %v1986, %v1422
      %v2020 = vsel %vm2004, %v1987, %v1424
      %v2021 = vsel %vm2004, %v1988, %v1426
      %v2022 = vsel %vm2004, %v1989, %v1428
      %v2023 = vsel %vm2004, %v1990, %v1430
      %v2024 = vsel %vm2004, %v1991, %v1432
      %v2025 = vsel %vm2004, %v1992, %v1434
      %v2026 = vsel %vm2004, %v1993, %v1436
      %v2027 = vsel %vm2004, %v1994, %v1438
      %v2028 = vsel %vm2004, %v1995, %v1440
      %v2029 = vsel %vm2004, %v1996, %v1442
      %v2030 = vsel %vm2004, %v1997, %v1444
      %v2031 = vsel %vm2004, %v1998, %v1446
      %v2032 = vsel %vm2004, %v1999, %v1448
      %v2033 = vsel %vm2004, %v2000, %v1450
      %v2034 = vsel %vm2004, %v2001, %v1452
      %v2035 = vsel %vm2004, %v2002, %v1454
      %v2036 = vsel %vm2004, %v2003, %v1456
      %vm2037 = vcmask 392192
      %v2038 = vsel %vm2037, %v2005, %v1522
      %v2039 = vsel %vm2037, %v2006, %v1524
      %v2040 = vsel %vm2037, %v2007, %v1526
      %v2041 = vsel %vm2037, %v2008, %v1528
      %v2042 = vsel %vm2037, %v2009, %v1530
      %v2043 = vsel %vm2037, %v2010, %v1532
      %v2044 = vsel %vm2037, %v2011, %v1534
      %v2045 = vsel %vm2037, %v2012, %v1536
      %v2046 = vsel %vm2037, %v2013, %v1538
      %v2047 = vsel %vm2037, %v2014, %v1540
      %v2048 = vsel %vm2037, %v2015, %v1542
      %v2049 = vsel %vm2037, %v2016, %v1544
      %v2050 = vsel %vm2037, %v2017, %v1546
      %v2051 = vsel %vm2037, %v2018, %v1548
      %v2052 = vsel %vm2037, %v2019, %v1550
      %v2053 = vsel %vm2037, %v2020, %v1552
      %v2054 = vsel %vm2037, %v2021, %v1554
      %v2055 = vsel %vm2037, %v2022, %v1556
      %v2056 = vsel %vm2037, %v2023, %v1558
      %v2057 = vsel %vm2037, %v2024, %v1560
      %v2058 = vsel %vm2037, %v2025, %v1562
      %v2059 = vsel %vm2037, %v2026, %v1564
      %v2060 = vsel %vm2037, %v2027, %v1566
      %v2061 = vsel %vm2037, %v2028, %v1568
      %v2062 = vsel %vm2037, %v2029, %v1570
      %v2063 = vsel %vm2037, %v2030, %v1572
      %v2064 = vsel %vm2037, %v2031, %v1574
      %v2065 = vsel %vm2037, %v2032, %v1576
      %v2066 = vsel %vm2037, %v2033, %v1578
      %v2067 = vsel %vm2037, %v2034, %v1580
      %v2068 = vsel %vm2037, %v2035, %v1582
      %v2069 = vsel %vm2037, %v2036, %v1584
      %vm2070 = vcmask 457728
      %v2071 = vsel %vm2070, %v2038, %v1650
      %v2072 = vsel %vm2070, %v2039, %v1652
      %v2073 = vsel %vm2070, %v2040, %v1654
      %v2074 = vsel %vm2070, %v2041, %v1656
      %v2075 = vsel %vm2070, %v2042, %v1658
      %v2076 = vsel %vm2070, %v2043, %v1660
      %v2077 = vsel %vm2070, %v2044, %v1662
      %v2078 = vsel %vm2070, %v2045, %v1664
      %v2079 = vsel %vm2070, %v2046, %v1666
      %v2080 = vsel %vm2070, %v2047, %v1668
      %v2081 = vsel %vm2070, %v2048, %v1670
      %v2082 = vsel %vm2070, %v2049, %v1672
      %v2083 = vsel %vm2070, %v2050, %v1674
      %v2084 = vsel %vm2070, %v2051, %v1676
      %v2085 = vsel %vm2070, %v2052, %v1678
      %v2086 = vsel %vm2070, %v2053, %v1680
      %v2087 = vsel %vm2070, %v2054, %v1682
      %v2088 = vsel %vm2070, %v2055, %v1684
      %v2089 = vsel %vm2070, %v2056, %v1686
      %v2090 = vsel %vm2070, %v2057, %v1688
      %v2091 = vsel %vm2070, %v2058, %v1690
      %v2092 = vsel %vm2070, %v2059, %v1692
      %v2093 = vsel %vm2070, %v2060, %v1694
      %v2094 = vsel %vm2070, %v2061, %v1696
      %v2095 = vsel %vm2070, %v2062, %v1698
      %v2096 = vsel %vm2070, %v2063, %v1700
      %v2097 = vsel %vm2070, %v2064, %v1702
      %v2098 = vsel %vm2070, %v2065, %v1704
      %v2099 = vsel %vm2070, %v2066, %v1706
      %v2100 = vsel %vm2070, %v2067, %v1708
      %v2101 = vsel %vm2070, %v2068, %v1710
      %v2102 = vsel %vm2070, %v2069, %v1712
      %vm2103 = vcmask 523264
      %v2104 = vsel %vm2103, %v2071, %v1778
      %v2105 = vsel %vm2103, %v2072, %v1780
      %v2106 = vsel %vm2103, %v2073, %v1782
      %v2107 = vsel %vm2103, %v2074, %v1784
      %v2108 = vsel %vm2103, %v2075, %v1786
      %v2109 = vsel %vm2103, %v2076, %v1788
      %v2110 = vsel %vm2103, %v2077, %v1790
      %v2111 = vsel %vm2103, %v2078, %v1792
      %v2112 = vsel %vm2103, %v2079, %v1794
      %v2113 = vsel %vm2103, %v2080, %v1796
      %v2114 = vsel %vm2103, %v2081, %v1798
      %v2115 = vsel %vm2103, %v2082, %v1800
      %v2116 = vsel %vm2103, %v2083, %v1802
      %v2117 = vsel %vm2103, %v2084, %v1804
      %v2118 = vsel %vm2103, %v2085, %v1806
      %v2119 = vsel %vm2103, %v2086, %v1808
      %v2120 = vsel %vm2103, %v2087, %v1810
      %v2121 = vsel %vm2103, %v2088, %v1812
      %v2122 = vsel %vm2103, %v2089, %v1814
      %v2123 = vsel %vm2103, %v2090, %v1816
      %v2124 = vsel %vm2103, %v2091, %v1818
      %v2125 = vsel %vm2103, %v2092, %v1820
      %v2126 = vsel %vm2103, %v2093, %v1822
      %v2127 = vsel %vm2103, %v2094, %v1824
      %v2128 = vsel %vm2103, %v2095, %v1826
      %v2129 = vsel %vm2103, %v2096, %v1828
      %v2130 = vsel %vm2103, %v2097, %v1830
      %v2131 = vsel %vm2103, %v2098, %v1832
      %v2132 = vsel %vm2103, %v2099, %v1834
      %v2133 = vsel %vm2103, %v2100, %v1836
      %v2134 = vsel %vm2103, %v2101, %v1838
      %v2135 = vsel %vm2103, %v2102, %v1840
      %v2136 = vld [vmem:[%s2] sm:$0xff]
      %v2137 = vld [vmem:[%s2 + $0x8] sm:$0xff]
      %v2138 = vld [vmem:[%s2 + $0x10] sm:$0xff]
      %v2139 = vld [vmem:[%s2 + $0x18] sm:$0xff]
      %v2140 = vld [vmem:[%s2 + $0x20] sm:$0xff]
      %v2141 = vld [vmem:[%s2 + $0x28] sm:$0xff]
      %v2142 = vld [vmem:[%s2 + $0x30] sm:$0xff]
      %v2143 = vld [vmem:[%s2 + $0x38] sm:$0xff]
      %v2144 = vld [vmem:[%s2 + $0x40] sm:$0xff]
      %vm2145 = vcmask 588800
      %v2147 = vsel %vm2145, %v2104, 0
      %v2150 = vsel %vm2145, %v2105, 0
      %v2153 = vsel %vm2145, %v2106, 0
      %v2156 = vsel %vm2145, %v2107, 0
      %v2159 = vsel %vm2145, %v2108, 0
      %v2162 = vsel %vm2145, %v2109, 0
      %v2165 = vsel %vm2145, %v2110, 0
      %v2168 = vsel %vm2145, %v2111, 0
      %v2171 = vsel %vm2145, %v2112, 0
      %v2174 = vsel %vm2145, %v2113, 0
      %v2177 = vsel %vm2145, %v2114, 0
      %v2180 = vsel %vm2145, %v2115, 0
      %v2183 = vsel %vm2145, %v2116, 0
      %v2186 = vsel %vm2145, %v2117, 0
      %v2189 = vsel %vm2145, %v2118, 0
      %v2192 = vsel %vm2145, %v2119, 0
      %v2195 = vsel %vm2145, %v2120, 0
      %v2198 = vsel %vm2145, %v2121, 0
      %v2201 = vsel %vm2145, %v2122, 0
      %v2204 = vsel %vm2145, %v2123, 0
      %v2207 = vsel %vm2145, %v2124, 0
      %v2210 = vsel %vm2145, %v2125, 0
      %v2213 = vsel %vm2145, %v2126, 0
      %v2216 = vsel %vm2145, %v2127, 0
      %v2219 = vsel %vm2145, %v2128, 0
      %v2222 = vsel %vm2145, %v2129, 0
      %v2225 = vsel %vm2145, %v2130, 0
      %v2228 = vsel %vm2145, %v2131, 0
      %v2231 = vsel %vm2145, %v2132, 0
      %v2234 = vsel %vm2145, %v2133, 0
      %v2237 = vsel %vm2145, %v2134, 0
      %v2240 = vsel %vm2145, %v2135, 0
      %2242 = vmatpush.msra.mxu0 0.0
      %2243 = vmatpush.msra.mxu0 0.0
      %2244 = vmatpush.msra.mxu0 0.0
      %2245 = vmatpush.msra.mxu0 0.0
      %2246 = vmatpush.msra.mxu0 0.0
      %2247 = vmatpush.msra.mxu0 0.0
      %2248 = vmatpush.msra.mxu0 0.0
      %2249 = vmatpush.msra.mxu0 %v2144
      %2250 = vmatpush.msra.mxu0 %v2143
      %2251 = vmatpush.msra.mxu0 %v2142
      %2252 = vmatpush.msra.mxu0 %v2141
      %2253 = vmatpush.msra.mxu0 %v2140
      %2254 = vmatpush.msra.mxu0 %v2139
      %2255 = vmatpush.msra.mxu0 %v2138
      %2256 = vmatpush.msra.mxu0 %v2137
      %2257 = vmatpush.msra.mxu0 %v2136
      %2258 = vmatmul.f32.gmra.mxu0 %v2147
      %v2259 = vpop.f32.mrf.mxu0
      %v2260 = vadd.f32 0.0, %v2259
      %2261 = vmatmul.f32.gmra.mxu0 %v2150
      %v2262 = vpop.f32.mrf.mxu0
      %v2263 = vadd.f32 0.0, %v2262
      %2264 = vmatmul.f32.gmra.mxu0 %v2153
      %v2265 = vpop.f32.mrf.mxu0
      %v2266 = vadd.f32 0.0, %v2265
      %2267 = vmatmul.f32.gmra.mxu0 %v2156
      %v2268 = vpop.f32.mrf.mxu0
      %v2269 = vadd.f32 0.0, %v2268
      %2270 = vmatmul.f32.gmra.mxu0 %v2159
      %v2271 = vpop.f32.mrf.mxu0
      %v2272 = vadd.f32 0.0, %v2271
      %2273 = vmatmul.f32.gmra.mxu0 %v2162
      %v2274 = vpop.f32.mrf.mxu0
      %v2275 = vadd.f32 0.0, %v2274
      %2276 = vmatmul.f32.gmra.mxu0 %v2165
      %v2277 = vpop.f32.mrf.mxu0
      %v2278 = vadd.f32 0.0, %v2277
      %2279 = vmatmul.f32.gmra.mxu0 %v2168
      %v2280 = vpop.f32.mrf.mxu0
      %v2281 = vadd.f32 0.0, %v2280
      %2282 = vmatmul.f32.gmra.mxu0 %v2171
      %v2283 = vpop.f32.mrf.mxu0
      %v2284 = vadd.f32 0.0, %v2283
      %2285 = vmatmul.f32.gmra.mxu0 %v2174
      %v2286 = vpop.f32.mrf.mxu0
      %v2287 = vadd.f32 0.0, %v2286
      %2288 = vmatmul.f32.gmra.mxu0 %v2177
      %v2289 = vpop.f32.mrf.mxu0
      %v2290 = vadd.f32 0.0, %v2289
      %2291 = vmatmul.f32.gmra.mxu0 %v2180
      %v2292 = vpop.f32.mrf.mxu0
      %v2293 = vadd.f32 0.0, %v2292
      %2294 = vmatmul.f32.gmra.mxu0 %v2183
      %v2295 = vpop.f32.mrf.mxu0
      %v2296 = vadd.f32 0.0, %v2295
      %2297 = vmatmul.f32.gmra.mxu0 %v2186
      %v2298 = vpop.f32.mrf.mxu0
      %v2299 = vadd.f32 0.0, %v2298
      %2300 = vmatmul.f32.gmra.mxu0 %v2189
      %v2301 = vpop.f32.mrf.mxu0
      %v2302 = vadd.f32 0.0, %v2301
      %2303 = vmatmul.f32.gmra.mxu0 %v2192
      %v2304 = vpop.f32.mrf.mxu0
      %v2305 = vadd.f32 0.0, %v2304
      %2306 = vmatmul.f32.gmra.mxu0 %v2195
      %v2307 = vpop.f32.mrf.mxu0
      %v2308 = vadd.f32 0.0, %v2307
      %2309 = vmatmul.f32.gmra.mxu0 %v2198
      %v2310 = vpop.f32.mrf.mxu0
      %v2311 = vadd.f32 0.0, %v2310
      %2312 = vmatmul.f32.gmra.mxu0 %v2201
      %v2313 = vpop.f32.mrf.mxu0
      %v2314 = vadd.f32 0.0, %v2313
      %2315 = vmatmul.f32.gmra.mxu0 %v2204
      %v2316 = vpop.f32.mrf.mxu0
      %v2317 = vadd.f32 0.0, %v2316
      %2318 = vmatmul.f32.gmra.mxu0 %v2207
      %v2319 = vpop.f32.mrf.mxu0
      %v2320 = vadd.f32 0.0, %v2319
      %2321 = vmatmul.f32.gmra.mxu0 %v2210
      %v2322 = vpop.f32.mrf.mxu0
      %v2323 = vadd.f32 0.0, %v2322
      %2324 = vmatmul.f32.gmra.mxu0 %v2213
      %v2325 = vpop.f32.mrf.mxu0
      %v2326 = vadd.f32 0.0, %v2325
      %2327 = vmatmul.f32.gmra.mxu0 %v2216
      %v2328 = vpop.f32.mrf.mxu0
      %v2329 = vadd.f32 0.0, %v2328
      %2330 = vmatmul.f32.gmra.mxu0 %v2219
      %v2331 = vpop.f32.mrf.mxu0
      %v2332 = vadd.f32 0.0, %v2331
      %2333 = vmatmul.f32.gmra.mxu0 %v2222
      %v2334 = vpop.f32.mrf.mxu0
      %v2335 = vadd.f32 0.0, %v2334
      %2336 = vmatmul.f32.gmra.mxu0 %v2225
      %v2337 = vpop.f32.mrf.mxu0
      %v2338 = vadd.f32 0.0, %v2337
      %2339 = vmatmul.f32.gmra.mxu0 %v2228
      %v2340 = vpop.f32.mrf.mxu0
      %v2341 = vadd.f32 0.0, %v2340
      %2342 = vmatmul.f32.gmra.mxu0 %v2231
      %v2343 = vpop.f32.mrf.mxu0
      %v2344 = vadd.f32 0.0, %v2343
      %2345 = vmatmul.f32.gmra.mxu0 %v2234
      %v2346 = vpop.f32.mrf.mxu0
      %v2347 = vadd.f32 0.0, %v2346
      %2348 = vmatmul.f32.gmra.mxu0 %v2237
      %v2349 = vpop.f32.mrf.mxu0
      %v2350 = vadd.f32 0.0, %v2349
      %2351 = vmatmul.f32.gmra.mxu0 %v2240
      %v2352 = vpop.f32.mrf.mxu0
      %v2353 = vadd.f32 0.0, %v2352
      %2354 = vdwg.mxu0
      %s2355 = scalar_lea.vmem %s231, 768
      %v2356 = vld [vmem:[%s2355 + $0xc] sm:$0xff]
      %v2357 = vld [vmem:[%s2355 + $0x14] sm:$0xff]
      %v2358 = vld [vmem:[%s2355 + $0x4c] sm:$0xff]
      %v2359 = vld [vmem:[%s2355 + $0x54] sm:$0xff]
      %v2360 = vld [vmem:[%s2355 + $0x8c] sm:$0xff]
      %v2361 = vld [vmem:[%s2355 + $0x94] sm:$0xff]
      %v2362 = vld [vmem:[%s2355 + $0xcc] sm:$0xff]
      %v2363 = vld [vmem:[%s2355 + $0xd4] sm:$0xff]
      %v2364 = vld [vmem:[%s2355 + $0x10c] sm:$0xff]
      %v2365 = vld [vmem:[%s2355 + $0x114] sm:$0xff]
      %v2366 = vld [vmem:[%s2355 + $0x14c] sm:$0xff]
      %v2367 = vld [vmem:[%s2355 + $0x154] sm:$0xff]
      %v2368 = vld [vmem:[%s2355 + $0x18c] sm:$0xff]
      %v2369 = vld [vmem:[%s2355 + $0x194] sm:$0xff]
      %v2370 = vld [vmem:[%s2355 + $0x1cc] sm:$0xff]
      %v2371 = vld [vmem:[%s2355 + $0x1d4] sm:$0xff]
      %v2372 = vld [vmem:[%s2355 + $0x20c] sm:$0xff]
      %v2373 = vld [vmem:[%s2355 + $0x214] sm:$0xff]
      %v2374 = vld [vmem:[%s2355 + $0x24c] sm:$0xff]
      %v2375 = vld [vmem:[%s2355 + $0x254] sm:$0xff]
      %v2376 = vld [vmem:[%s2355 + $0x28c] sm:$0xff]
      %v2377 = vld [vmem:[%s2355 + $0x294] sm:$0xff]
      %v2378 = vld [vmem:[%s2355 + $0x2cc] sm:$0xff]
      %v2379 = vld [vmem:[%s2355 + $0x2d4] sm:$0xff]
      %v2380 = vld [vmem:[%s2355 + $0x30c] sm:$0xff]
      %v2381 = vld [vmem:[%s2355 + $0x314] sm:$0xff]
      %v2382 = vld [vmem:[%s2355 + $0x34c] sm:$0xff]
      %v2383 = vld [vmem:[%s2355 + $0x354] sm:$0xff]
      %v2384 = vld [vmem:[%s2355 + $0x38c] sm:$0xff]
      %v2385 = vld [vmem:[%s2355 + $0x394] sm:$0xff]
      %v2386 = vld [vmem:[%s2355 + $0x3cc] sm:$0xff]
      %v2387 = vld [vmem:[%s2355 + $0x3d4] sm:$0xff]
      %v2388 = vld [vmem:[%s2355 + $0x18] sm:$0xff]
      %v2389 = vld [vmem:[%s2355 + $0x20] sm:$0xff]
      %v2390 = vld [vmem:[%s2355 + $0x58] sm:$0xff]
      %v2391 = vld [vmem:[%s2355 + $0x60] sm:$0xff]
      %v2392 = vld [vmem:[%s2355 + $0x98] sm:$0xff]
      %v2393 = vld [vmem:[%s2355 + $0xa0] sm:$0xff]
      %v2394 = vld [vmem:[%s2355 + $0xd8] sm:$0xff]
      %v2395 = vld [vmem:[%s2355 + $0xe0] sm:$0xff]
      %v2396 = vld [vmem:[%s2355 + $0x118] sm:$0xff]
      %v2397 = vld [vmem:[%s2355 + $0x120] sm:$0xff]
      %v2398 = vld [vmem:[%s2355 + $0x158] sm:$0xff]
      %v2399 = vld [vmem:[%s2355 + $0x160] sm:$0xff]
      %v2400 = vld [vmem:[%s2355 + $0x198] sm:$0xff]
      %v2401 = vld [vmem:[%s2355 + $0x1a0] sm:$0xff]
      %v2402 = vld [vmem:[%s2355 + $0x1d8] sm:$0xff]
      %v2403 = vld [vmem:[%s2355 + $0x1e0] sm:$0xff]
      %v2404 = vld [vmem:[%s2355 + $0x218] sm:$0xff]
      %v2405 = vld [vmem:[%s2355 + $0x220] sm:$0xff]
      %v2406 = vld [vmem:[%s2355 + $0x258] sm:$0xff]
      %v2407 = vld [vmem:[%s2355 + $0x260] sm:$0xff]
      %v2408 = vld [vmem:[%s2355 + $0x298] sm:$0xff]
      %v2409 = vld [vmem:[%s2355 + $0x2a0] sm:$0xff]
      %v2410 = vld [vmem:[%s2355 + $0x2d8] sm:$0xff]
      %v2411 = vld [vmem:[%s2355 + $0x2e0] sm:$0xff]
      %v2412 = vld [vmem:[%s2355 + $0x318] sm:$0xff]
      %v2413 = vld [vmem:[%s2355 + $0x320] sm:$0xff]
      %v2414 = vld [vmem:[%s2355 + $0x358] sm:$0xff]
      %v2415 = vld [vmem:[%s2355 + $0x360] sm:$0xff]
      %v2416 = vld [vmem:[%s2355 + $0x398] sm:$0xff]
      %v2417 = vld [vmem:[%s2355 + $0x3a0] sm:$0xff]
      %v2418 = vld [vmem:[%s2355 + $0x3d8] sm:$0xff]
      %v2419 = vld [vmem:[%s2355 + $0x3e0] sm:$0xff]
      %v2420 = vld [vmem:[%s2355 + $0x24] sm:$0xff]
      %v2421 = vld [vmem:[%s2355 + $0x2c] sm:$0xff]
      %v2422 = vld [vmem:[%s2355 + $0x64] sm:$0xff]
      %v2423 = vld [vmem:[%s2355 + $0x6c] sm:$0xff]
      %v2424 = vld [vmem:[%s2355 + $0xa4] sm:$0xff]
      %v2425 = vld [vmem:[%s2355 + $0xac] sm:$0xff]
      %v2426 = vld [vmem:[%s2355 + $0xe4] sm:$0xff]
      %v2427 = vld [vmem:[%s2355 + $0xec] sm:$0xff]
      %v2428 = vld [vmem:[%s2355 + $0x124] sm:$0xff]
      %v2429 = vld [vmem:[%s2355 + $0x12c] sm:$0xff]
      %v2430 = vld [vmem:[%s2355 + $0x164] sm:$0xff]
      %v2431 = vld [vmem:[%s2355 + $0x16c] sm:$0xff]
      %v2432 = vld [vmem:[%s2355 + $0x1a4] sm:$0xff]
      %v2433 = vld [vmem:[%s2355 + $0x1ac] sm:$0xff]
      %v2434 = vld [vmem:[%s2355 + $0x1e4] sm:$0xff]
      %v2435 = vld [vmem:[%s2355 + $0x1ec] sm:$0xff]
      %v2436 = vld [vmem:[%s2355 + $0x224] sm:$0xff]
      %v2437 = vld [vmem:[%s2355 + $0x22c] sm:$0xff]
      %v2438 = vld [vmem:[%s2355 + $0x264] sm:$0xff]
      %v2439 = vld [vmem:[%s2355 + $0x26c] sm:$0xff]
      %v2440 = vld [vmem:[%s2355 + $0x2a4] sm:$0xff]
      %v2441 = vld [vmem:[%s2355 + $0x2ac] sm:$0xff]
      %v2442 = vld [vmem:[%s2355 + $0x2e4] sm:$0xff]
      %v2443 = vld [vmem:[%s2355 + $0x2ec] sm:$0xff]
      %v2444 = vld [vmem:[%s2355 + $0x324] sm:$0xff]
      %v2445 = vld [vmem:[%s2355 + $0x32c] sm:$0xff]
      %v2446 = vld [vmem:[%s2355 + $0x364] sm:$0xff]
      %v2447 = vld [vmem:[%s2355 + $0x36c] sm:$0xff]
      %v2448 = vld [vmem:[%s2355 + $0x3a4] sm:$0xff]
      %v2449 = vld [vmem:[%s2355 + $0x3ac] sm:$0xff]
      %v2450 = vld [vmem:[%s2355 + $0x3e4] sm:$0xff]
      %v2451 = vld [vmem:[%s2355 + $0x3ec] sm:$0xff]
      %v2452 = vld [vmem:[%s244 + $0xc] sm:$0xff]
      %v2453 = vld [vmem:[%s244 + $0x14] sm:$0xff]
      %v2454 = vld [vmem:[%s244 + $0x4c] sm:$0xff]
      %v2455 = vld [vmem:[%s244 + $0x54] sm:$0xff]
      %v2456 = vld [vmem:[%s244 + $0x8c] sm:$0xff]
      %v2457 = vld [vmem:[%s244 + $0x94] sm:$0xff]
      %v2458 = vld [vmem:[%s244 + $0xcc] sm:$0xff]
      %v2459 = vld [vmem:[%s244 + $0xd4] sm:$0xff]
      %v2460 = vld [vmem:[%s244 + $0x10c] sm:$0xff]
      %v2461 = vld [vmem:[%s244 + $0x114] sm:$0xff]
      %v2462 = vld [vmem:[%s244 + $0x14c] sm:$0xff]
      %v2463 = vld [vmem:[%s244 + $0x154] sm:$0xff]
      %v2464 = vld [vmem:[%s244 + $0x18c] sm:$0xff]
      %v2465 = vld [vmem:[%s244 + $0x194] sm:$0xff]
      %v2466 = vld [vmem:[%s244 + $0x1cc] sm:$0xff]
      %v2467 = vld [vmem:[%s244 + $0x1d4] sm:$0xff]
      %v2468 = vld [vmem:[%s244 + $0x20c] sm:$0xff]
      %v2469 = vld [vmem:[%s244 + $0x214] sm:$0xff]
      %v2470 = vld [vmem:[%s244 + $0x24c] sm:$0xff]
      %v2471 = vld [vmem:[%s244 + $0x254] sm:$0xff]
      %v2472 = vld [vmem:[%s244 + $0x28c] sm:$0xff]
      %v2473 = vld [vmem:[%s244 + $0x294] sm:$0xff]
      %v2474 = vld [vmem:[%s244 + $0x2cc] sm:$0xff]
      %v2475 = vld [vmem:[%s244 + $0x2d4] sm:$0xff]
      %v2476 = vld [vmem:[%s244 + $0x30c] sm:$0xff]
      %v2477 = vld [vmem:[%s244 + $0x314] sm:$0xff]
      %v2478 = vld [vmem:[%s244 + $0x34c] sm:$0xff]
      %v2479 = vld [vmem:[%s244 + $0x354] sm:$0xff]
      %v2480 = vld [vmem:[%s244 + $0x38c] sm:$0xff]
      %v2481 = vld [vmem:[%s244 + $0x394] sm:$0xff]
      %v2482 = vld [vmem:[%s244 + $0x3cc] sm:$0xff]
      %v2483 = vld [vmem:[%s244 + $0x3d4] sm:$0xff]
      %v2484 = vld [vmem:[%s244 + $0x24] sm:$0xff]
      %v2485 = vld [vmem:[%s244 + $0x2c] sm:$0xff]
      %v2486 = vld [vmem:[%s244 + $0x64] sm:$0xff]
      %v2487 = vld [vmem:[%s244 + $0x6c] sm:$0xff]
      %v2488 = vld [vmem:[%s244 + $0xa4] sm:$0xff]
      %v2489 = vld [vmem:[%s244 + $0xac] sm:$0xff]
      %v2490 = vld [vmem:[%s244 + $0xe4] sm:$0xff]
      %v2491 = vld [vmem:[%s244 + $0xec] sm:$0xff]
      %v2492 = vld [vmem:[%s244 + $0x124] sm:$0xff]
      %v2493 = vld [vmem:[%s244 + $0x12c] sm:$0xff]
      %v2494 = vld [vmem:[%s244 + $0x164] sm:$0xff]
      %v2495 = vld [vmem:[%s244 + $0x16c] sm:$0xff]
      %v2496 = vld [vmem:[%s244 + $0x1a4] sm:$0xff]
      %v2497 = vld [vmem:[%s244 + $0x1ac] sm:$0xff]
      %v2498 = vld [vmem:[%s244 + $0x1e4] sm:$0xff]
      %v2499 = vld [vmem:[%s244 + $0x1ec] sm:$0xff]
      %v2500 = vld [vmem:[%s244 + $0x224] sm:$0xff]
      %v2501 = vld [vmem:[%s244 + $0x22c] sm:$0xff]
      %v2502 = vld [vmem:[%s244 + $0x264] sm:$0xff]
      %v2503 = vld [vmem:[%s244 + $0x26c] sm:$0xff]
      %v2504 = vld [vmem:[%s244 + $0x2a4] sm:$0xff]
      %v2505 = vld [vmem:[%s244 + $0x2ac] sm:$0xff]
      %v2506 = vld [vmem:[%s244 + $0x2e4] sm:$0xff]
      %v2507 = vld [vmem:[%s244 + $0x2ec] sm:$0xff]
      %v2508 = vld [vmem:[%s244 + $0x324] sm:$0xff]
      %v2509 = vld [vmem:[%s244 + $0x32c] sm:$0xff]
      %v2510 = vld [vmem:[%s244 + $0x364] sm:$0xff]
      %v2511 = vld [vmem:[%s244 + $0x36c] sm:$0xff]
      %v2512 = vld [vmem:[%s244 + $0x3a4] sm:$0xff]
      %v2513 = vld [vmem:[%s244 + $0x3ac] sm:$0xff]
      %v2514 = vld [vmem:[%s244 + $0x3e4] sm:$0xff]
      %v2515 = vld [vmem:[%s244 + $0x3ec] sm:$0xff]
      %s2516 = scalar_lea.vmem %s231, 2304
      %v2517 = vld [vmem:[%s2516 + $0xc] sm:$0xff]
      %v2518 = vld [vmem:[%s2516 + $0x14] sm:$0xff]
      %v2519 = vld [vmem:[%s2516 + $0x4c] sm:$0xff]
      %v2520 = vld [vmem:[%s2516 + $0x54] sm:$0xff]
      %v2521 = vld [vmem:[%s2516 + $0x8c] sm:$0xff]
      %v2522 = vld [vmem:[%s2516 + $0x94] sm:$0xff]
      %v2523 = vld [vmem:[%s2516 + $0xcc] sm:$0xff]
      %v2524 = vld [vmem:[%s2516 + $0xd4] sm:$0xff]
      %v2525 = vld [vmem:[%s2516 + $0x10c] sm:$0xff]
      %v2526 = vld [vmem:[%s2516 + $0x114] sm:$0xff]
      %v2527 = vld [vmem:[%s2516 + $0x14c] sm:$0xff]
      %v2528 = vld [vmem:[%s2516 + $0x154] sm:$0xff]
      %v2529 = vld [vmem:[%s2516 + $0x18c] sm:$0xff]
      %v2530 = vld [vmem:[%s2516 + $0x194] sm:$0xff]
      %v2531 = vld [vmem:[%s2516 + $0x1cc] sm:$0xff]
      %v2532 = vld [vmem:[%s2516 + $0x1d4] sm:$0xff]
      %v2533 = vld [vmem:[%s2516 + $0x20c] sm:$0xff]
      %v2534 = vld [vmem:[%s2516 + $0x214] sm:$0xff]
      %v2535 = vld [vmem:[%s2516 + $0x24c] sm:$0xff]
      %v2536 = vld [vmem:[%s2516 + $0x254] sm:$0xff]
      %v2537 = vld [vmem:[%s2516 + $0x28c] sm:$0xff]
      %v2538 = vld [vmem:[%s2516 + $0x294] sm:$0xff]
      %v2539 = vld [vmem:[%s2516 + $0x2cc] sm:$0xff]
      %v2540 = vld [vmem:[%s2516 + $0x2d4] sm:$0xff]
      %v2541 = vld [vmem:[%s2516 + $0x30c] sm:$0xff]
      %v2542 = vld [vmem:[%s2516 + $0x314] sm:$0xff]
      %v2543 = vld [vmem:[%s2516 + $0x34c] sm:$0xff]
      %v2544 = vld [vmem:[%s2516 + $0x354] sm:$0xff]
      %v2545 = vld [vmem:[%s2516 + $0x38c] sm:$0xff]
      %v2546 = vld [vmem:[%s2516 + $0x394] sm:$0xff]
      %v2547 = vld [vmem:[%s2516 + $0x3cc] sm:$0xff]
      %v2548 = vld [vmem:[%s2516 + $0x3d4] sm:$0xff]
      %v2549 = vld [vmem:[%s2516 + $0x18] sm:$0xff]
      %v2550 = vld [vmem:[%s2516 + $0x20] sm:$0xff]
      %v2551 = vld [vmem:[%s2516 + $0x58] sm:$0xff]
      %v2552 = vld [vmem:[%s2516 + $0x60] sm:$0xff]
      %v2553 = vld [vmem:[%s2516 + $0x98] sm:$0xff]
      %v2554 = vld [vmem:[%s2516 + $0xa0] sm:$0xff]
      %v2555 = vld [vmem:[%s2516 + $0xd8] sm:$0xff]
      %v2556 = vld [vmem:[%s2516 + $0xe0] sm:$0xff]
      %v2557 = vld [vmem:[%s2516 + $0x118] sm:$0xff]
      %v2558 = vld [vmem:[%s2516 + $0x120] sm:$0xff]
      %v2559 = vld [vmem:[%s2516 + $0x158] sm:$0xff]
      %v2560 = vld [vmem:[%s2516 + $0x160] sm:$0xff]
      %v2561 = vld [vmem:[%s2516 + $0x198] sm:$0xff]
      %v2562 = vld [vmem:[%s2516 + $0x1a0] sm:$0xff]
      %v2563 = vld [vmem:[%s2516 + $0x1d8] sm:$0xff]
      %v2564 = vld [vmem:[%s2516 + $0x1e0] sm:$0xff]
      %v2565 = vld [vmem:[%s2516 + $0x218] sm:$0xff]
      %v2566 = vld [vmem:[%s2516 + $0x220] sm:$0xff]
      %v2567 = vld [vmem:[%s2516 + $0x258] sm:$0xff]
      %v2568 = vld [vmem:[%s2516 + $0x260] sm:$0xff]
      %v2569 = vld [vmem:[%s2516 + $0x298] sm:$0xff]
      %v2570 = vld [vmem:[%s2516 + $0x2a0] sm:$0xff]
      %v2571 = vld [vmem:[%s2516 + $0x2d8] sm:$0xff]
      %v2572 = vld [vmem:[%s2516 + $0x2e0] sm:$0xff]
      %v2573 = vld [vmem:[%s2516 + $0x318] sm:$0xff]
      %v2574 = vld [vmem:[%s2516 + $0x320] sm:$0xff]
      %v2575 = vld [vmem:[%s2516 + $0x358] sm:$0xff]
      %v2576 = vld [vmem:[%s2516 + $0x360] sm:$0xff]
      %v2577 = vld [vmem:[%s2516 + $0x398] sm:$0xff]
      %v2578 = vld [vmem:[%s2516 + $0x3a0] sm:$0xff]
      %v2579 = vld [vmem:[%s2516 + $0x3d8] sm:$0xff]
      %v2580 = vld [vmem:[%s2516 + $0x3e0] sm:$0xff]
      %v2581 = vld [vmem:[%s2516 + $0x24] sm:$0xff]
      %v2582 = vld [vmem:[%s2516 + $0x2c] sm:$0xff]
      %v2583 = vld [vmem:[%s2516 + $0x64] sm:$0xff]
      %v2584 = vld [vmem:[%s2516 + $0x6c] sm:$0xff]
      %v2585 = vld [vmem:[%s2516 + $0xa4] sm:$0xff]
      %v2586 = vld [vmem:[%s2516 + $0xac] sm:$0xff]
      %v2587 = vld [vmem:[%s2516 + $0xe4] sm:$0xff]
      %v2588 = vld [vmem:[%s2516 + $0xec] sm:$0xff]
      %v2589 = vld [vmem:[%s2516 + $0x124] sm:$0xff]
      %v2590 = vld [vmem:[%s2516 + $0x12c] sm:$0xff]
      %v2591 = vld [vmem:[%s2516 + $0x164] sm:$0xff]
      %v2592 = vld [vmem:[%s2516 + $0x16c] sm:$0xff]
      %v2593 = vld [vmem:[%s2516 + $0x1a4] sm:$0xff]
      %v2594 = vld [vmem:[%s2516 + $0x1ac] sm:$0xff]
      %v2595 = vld [vmem:[%s2516 + $0x1e4] sm:$0xff]
      %v2596 = vld [vmem:[%s2516 + $0x1ec] sm:$0xff]
      %v2597 = vld [vmem:[%s2516 + $0x224] sm:$0xff]
      %v2598 = vld [vmem:[%s2516 + $0x22c] sm:$0xff]
      %v2599 = vld [vmem:[%s2516 + $0x264] sm:$0xff]
      %v2600 = vld [vmem:[%s2516 + $0x26c] sm:$0xff]
      %v2601 = vld [vmem:[%s2516 + $0x2a4] sm:$0xff]
      %v2602 = vld [vmem:[%s2516 + $0x2ac] sm:$0xff]
      %v2603 = vld [vmem:[%s2516 + $0x2e4] sm:$0xff]
      %v2604 = vld [vmem:[%s2516 + $0x2ec] sm:$0xff]
      %v2605 = vld [vmem:[%s2516 + $0x324] sm:$0xff]
      %v2606 = vld [vmem:[%s2516 + $0x32c] sm:$0xff]
      %v2607 = vld [vmem:[%s2516 + $0x364] sm:$0xff]
      %v2608 = vld [vmem:[%s2516 + $0x36c] sm:$0xff]
      %v2609 = vld [vmem:[%s2516 + $0x3a4] sm:$0xff]
      %v2610 = vld [vmem:[%s2516 + $0x3ac] sm:$0xff]
      %v2611 = vld [vmem:[%s2516 + $0x3e4] sm:$0xff]
      %v2612 = vld [vmem:[%s2516 + $0x3ec] sm:$0xff]
      %2645 = vrot.lane.b32.xlu0 %v2388, 8
      %v2646 = vpop.permute.xlu0 %2645
      %2647 = vrot.lane.b32.xlu0 %v2389, 8
      %v2648 = vpop.permute.xlu0 %2647
      %2649 = vrot.lane.b32.xlu0 %v2390, 8
      %v2650 = vpop.permute.xlu0 %2649
      %2651 = vrot.lane.b32.xlu0 %v2391, 8
      %v2652 = vpop.permute.xlu0 %2651
      %2653 = vrot.lane.b32.xlu0 %v2392, 8
      %v2654 = vpop.permute.xlu0 %2653
      %2655 = vrot.lane.b32.xlu0 %v2393, 8
      %v2656 = vpop.permute.xlu0 %2655
      %2657 = vrot.lane.b32.xlu0 %v2394, 8
      %v2658 = vpop.permute.xlu0 %2657
      %2659 = vrot.lane.b32.xlu0 %v2395, 8
      %v2660 = vpop.permute.xlu0 %2659
      %2661 = vrot.lane.b32.xlu0 %v2396, 8
      %v2662 = vpop.permute.xlu0 %2661
      %2663 = vrot.lane.b32.xlu0 %v2397, 8
      %v2664 = vpop.permute.xlu0 %2663
      %2665 = vrot.lane.b32.xlu0 %v2398, 8
      %v2666 = vpop.permute.xlu0 %2665
      %2667 = vrot.lane.b32.xlu0 %v2399, 8
      %v2668 = vpop.permute.xlu0 %2667
      %2669 = vrot.lane.b32.xlu0 %v2400, 8
      %v2670 = vpop.permute.xlu0 %2669
      %2671 = vrot.lane.b32.xlu0 %v2401, 8
      %v2672 = vpop.permute.xlu0 %2671
      %2673 = vrot.lane.b32.xlu0 %v2402, 8
      %v2674 = vpop.permute.xlu0 %2673
      %2675 = vrot.lane.b32.xlu0 %v2403, 8
      %v2676 = vpop.permute.xlu0 %2675
      %2677 = vrot.lane.b32.xlu0 %v2404, 8
      %v2678 = vpop.permute.xlu0 %2677
      %2679 = vrot.lane.b32.xlu0 %v2405, 8
      %v2680 = vpop.permute.xlu0 %2679
      %2681 = vrot.lane.b32.xlu0 %v2406, 8
      %v2682 = vpop.permute.xlu0 %2681
      %2683 = vrot.lane.b32.xlu0 %v2407, 8
      %v2684 = vpop.permute.xlu0 %2683
      %2685 = vrot.lane.b32.xlu0 %v2408, 8
      %v2686 = vpop.permute.xlu0 %2685
      %2687 = vrot.lane.b32.xlu0 %v2409, 8
      %v2688 = vpop.permute.xlu0 %2687
      %2689 = vrot.lane.b32.xlu0 %v2410, 8
      %v2690 = vpop.permute.xlu0 %2689
      %2691 = vrot.lane.b32.xlu0 %v2411, 8
      %v2692 = vpop.permute.xlu0 %2691
      %2693 = vrot.lane.b32.xlu0 %v2412, 8
      %v2694 = vpop.permute.xlu0 %2693
      %2695 = vrot.lane.b32.xlu0 %v2413, 8
      %v2696 = vpop.permute.xlu0 %2695
      %2697 = vrot.lane.b32.xlu0 %v2414, 8
      %v2698 = vpop.permute.xlu0 %2697
      %2699 = vrot.lane.b32.xlu0 %v2415, 8
      %v2700 = vpop.permute.xlu0 %2699
      %2701 = vrot.lane.b32.xlu0 %v2416, 8
      %v2702 = vpop.permute.xlu0 %2701
      %2703 = vrot.lane.b32.xlu0 %v2417, 8
      %v2704 = vpop.permute.xlu0 %2703
      %2705 = vrot.lane.b32.xlu0 %v2418, 8
      %v2706 = vpop.permute.xlu0 %2705
      %2707 = vrot.lane.b32.xlu0 %v2419, 8
      %v2708 = vpop.permute.xlu0 %2707
      %2773 = vrot.lane.b32.xlu0 %v2420, 16
      %v2774 = vpop.permute.xlu0 %2773
      %2775 = vrot.lane.b32.xlu0 %v2421, 16
      %v2776 = vpop.permute.xlu0 %2775
      %2777 = vrot.lane.b32.xlu0 %v2422, 16
      %v2778 = vpop.permute.xlu0 %2777
      %2779 = vrot.lane.b32.xlu0 %v2423, 16
      %v2780 = vpop.permute.xlu0 %2779
      %2781 = vrot.lane.b32.xlu0 %v2424, 16
      %v2782 = vpop.permute.xlu0 %2781
      %2783 = vrot.lane.b32.xlu0 %v2425, 16
      %v2784 = vpop.permute.xlu0 %2783
      %2785 = vrot.lane.b32.xlu0 %v2426, 16
      %v2786 = vpop.permute.xlu0 %2785
      %2787 = vrot.lane.b32.xlu0 %v2427, 16
      %v2788 = vpop.permute.xlu0 %2787
      %2789 = vrot.lane.b32.xlu0 %v2428, 16
      %v2790 = vpop.permute.xlu0 %2789
      %2791 = vrot.lane.b32.xlu0 %v2429, 16
      %v2792 = vpop.permute.xlu0 %2791
      %2793 = vrot.lane.b32.xlu0 %v2430, 16
      %v2794 = vpop.permute.xlu0 %2793
      %2795 = vrot.lane.b32.xlu0 %v2431, 16
      %v2796 = vpop.permute.xlu0 %2795
      %2797 = vrot.lane.b32.xlu0 %v2432, 16
      %v2798 = vpop.permute.xlu0 %2797
      %2799 = vrot.lane.b32.xlu0 %v2433, 16
      %v2800 = vpop.permute.xlu0 %2799
      %2801 = vrot.lane.b32.xlu0 %v2434, 16
      %v2802 = vpop.permute.xlu0 %2801
      %2803 = vrot.lane.b32.xlu0 %v2435, 16
      %v2804 = vpop.permute.xlu0 %2803
      %2805 = vrot.lane.b32.xlu0 %v2436, 16
      %v2806 = vpop.permute.xlu0 %2805
      %2807 = vrot.lane.b32.xlu0 %v2437, 16
      %v2808 = vpop.permute.xlu0 %2807
      %2809 = vrot.lane.b32.xlu0 %v2438, 16
      %v2810 = vpop.permute.xlu0 %2809
      %2811 = vrot.lane.b32.xlu0 %v2439, 16
      %v2812 = vpop.permute.xlu0 %2811
      %2813 = vrot.lane.b32.xlu0 %v2440, 16
      %v2814 = vpop.permute.xlu0 %2813
      %2815 = vrot.lane.b32.xlu0 %v2441, 16
      %v2816 = vpop.permute.xlu0 %2815
      %2817 = vrot.lane.b32.xlu0 %v2442, 16
      %v2818 = vpop.permute.xlu0 %2817
      %2819 = vrot.lane.b32.xlu0 %v2443, 16
      %v2820 = vpop.permute.xlu0 %2819
      %2821 = vrot.lane.b32.xlu0 %v2444, 16
      %v2822 = vpop.permute.xlu0 %2821
      %2823 = vrot.lane.b32.xlu0 %v2445, 16
      %v2824 = vpop.permute.xlu0 %2823
      %2825 = vrot.lane.b32.xlu0 %v2446, 16
      %v2826 = vpop.permute.xlu0 %2825
      %2827 = vrot.lane.b32.xlu0 %v2447, 16
      %v2828 = vpop.permute.xlu0 %2827
      %2829 = vrot.lane.b32.xlu0 %v2448, 16
      %v2830 = vpop.permute.xlu0 %2829
      %2831 = vrot.lane.b32.xlu0 %v2449, 16
      %v2832 = vpop.permute.xlu0 %2831
      %2833 = vrot.lane.b32.xlu0 %v2450, 16
      %v2834 = vpop.permute.xlu0 %2833
      %2835 = vrot.lane.b32.xlu0 %v2451, 16
      %v2836 = vpop.permute.xlu0 %2835
      %2901 = vrot.lane.b32.xlu0 %v2452, 24
      %v2902 = vpop.permute.xlu0 %2901
      %2903 = vrot.lane.b32.xlu0 %v2453, 24
      %v2904 = vpop.permute.xlu0 %2903
      %2905 = vrot.lane.b32.xlu0 %v2454, 24
      %v2906 = vpop.permute.xlu0 %2905
      %2907 = vrot.lane.b32.xlu0 %v2455, 24
      %v2908 = vpop.permute.xlu0 %2907
      %2909 = vrot.lane.b32.xlu0 %v2456, 24
      %v2910 = vpop.permute.xlu0 %2909
      %2911 = vrot.lane.b32.xlu0 %v2457, 24
      %v2912 = vpop.permute.xlu0 %2911
      %2913 = vrot.lane.b32.xlu0 %v2458, 24
      %v2914 = vpop.permute.xlu0 %2913
      %2915 = vrot.lane.b32.xlu0 %v2459, 24
      %v2916 = vpop.permute.xlu0 %2915
      %2917 = vrot.lane.b32.xlu0 %v2460, 24
      %v2918 = vpop.permute.xlu0 %2917
      %2919 = vrot.lane.b32.xlu0 %v2461, 24
      %v2920 = vpop.permute.xlu0 %2919
      %2921 = vrot.lane.b32.xlu0 %v2462, 24
      %v2922 = vpop.permute.xlu0 %2921
      %2923 = vrot.lane.b32.xlu0 %v2463, 24
      %v2924 = vpop.permute.xlu0 %2923
      %2925 = vrot.lane.b32.xlu0 %v2464, 24
      %v2926 = vpop.permute.xlu0 %2925
      %2927 = vrot.lane.b32.xlu0 %v2465, 24
      %v2928 = vpop.permute.xlu0 %2927
      %2929 = vrot.lane.b32.xlu0 %v2466, 24
      %v2930 = vpop.permute.xlu0 %2929
      %2931 = vrot.lane.b32.xlu0 %v2467, 24
      %v2932 = vpop.permute.xlu0 %2931
      %2933 = vrot.lane.b32.xlu0 %v2468, 24
      %v2934 = vpop.permute.xlu0 %2933
      %2935 = vrot.lane.b32.xlu0 %v2469, 24
      %v2936 = vpop.permute.xlu0 %2935
      %2937 = vrot.lane.b32.xlu0 %v2470, 24
      %v2938 = vpop.permute.xlu0 %2937
      %2939 = vrot.lane.b32.xlu0 %v2471, 24
      %v2940 = vpop.permute.xlu0 %2939
      %2941 = vrot.lane.b32.xlu0 %v2472, 24
      %v2942 = vpop.permute.xlu0 %2941
      %2943 = vrot.lane.b32.xlu0 %v2473, 24
      %v2944 = vpop.permute.xlu0 %2943
      %2945 = vrot.lane.b32.xlu0 %v2474, 24
      %v2946 = vpop.permute.xlu0 %2945
      %2947 = vrot.lane.b32.xlu0 %v2475, 24
      %v2948 = vpop.permute.xlu0 %2947
      %2949 = vrot.lane.b32.xlu0 %v2476, 24
      %v2950 = vpop.permute.xlu0 %2949
      %2951 = vrot.lane.b32.xlu0 %v2477, 24
      %v2952 = vpop.permute.xlu0 %2951
      %2953 = vrot.lane.b32.xlu0 %v2478, 24
      %v2954 = vpop.permute.xlu0 %2953
      %2955 = vrot.lane.b32.xlu0 %v2479, 24
      %v2956 = vpop.permute.xlu0 %2955
      %2957 = vrot.lane.b32.xlu0 %v2480, 24
      %v2958 = vpop.permute.xlu0 %2957
      %2959 = vrot.lane.b32.xlu0 %v2481, 24
      %v2960 = vpop.permute.xlu0 %2959
      %2961 = vrot.lane.b32.xlu0 %v2482, 24
      %v2962 = vpop.permute.xlu0 %2961
      %2963 = vrot.lane.b32.xlu0 %v2483, 24
      %v2964 = vpop.permute.xlu0 %2963
      %3029 = vrot.lane.b32.xlu0 %v2484, 40
      %v3030 = vpop.permute.xlu0 %3029
      %3031 = vrot.lane.b32.xlu0 %v2485, 40
      %v3032 = vpop.permute.xlu0 %3031
      %3033 = vrot.lane.b32.xlu0 %v2486, 40
      %v3034 = vpop.permute.xlu0 %3033
      %3035 = vrot.lane.b32.xlu0 %v2487, 40
      %v3036 = vpop.permute.xlu0 %3035
      %3037 = vrot.lane.b32.xlu0 %v2488, 40
      %v3038 = vpop.permute.xlu0 %3037
      %3039 = vrot.lane.b32.xlu0 %v2489, 40
      %v3040 = vpop.permute.xlu0 %3039
      %3041 = vrot.lane.b32.xlu0 %v2490, 40
      %v3042 = vpop.permute.xlu0 %3041
      %3043 = vrot.lane.b32.xlu0 %v2491, 40
      %v3044 = vpop.permute.xlu0 %3043
      %3045 = vrot.lane.b32.xlu0 %v2492, 40
      %v3046 = vpop.permute.xlu0 %3045
      %3047 = vrot.lane.b32.xlu0 %v2493, 40
      %v3048 = vpop.permute.xlu0 %3047
      %3049 = vrot.lane.b32.xlu0 %v2494, 40
      %v3050 = vpop.permute.xlu0 %3049
      %3051 = vrot.lane.b32.xlu0 %v2495, 40
      %v3052 = vpop.permute.xlu0 %3051
      %3053 = vrot.lane.b32.xlu0 %v2496, 40
      %v3054 = vpop.permute.xlu0 %3053
      %3055 = vrot.lane.b32.xlu0 %v2497, 40
      %v3056 = vpop.permute.xlu0 %3055
      %3057 = vrot.lane.b32.xlu0 %v2498, 40
      %v3058 = vpop.permute.xlu0 %3057
      %3059 = vrot.lane.b32.xlu0 %v2499, 40
      %v3060 = vpop.permute.xlu0 %3059
      %3061 = vrot.lane.b32.xlu0 %v2500, 40
      %v3062 = vpop.permute.xlu0 %3061
      %3063 = vrot.lane.b32.xlu0 %v2501, 40
      %v3064 = vpop.permute.xlu0 %3063
      %3065 = vrot.lane.b32.xlu0 %v2502, 40
      %v3066 = vpop.permute.xlu0 %3065
      %3067 = vrot.lane.b32.xlu0 %v2503, 40
      %v3068 = vpop.permute.xlu0 %3067
      %3069 = vrot.lane.b32.xlu0 %v2504, 40
      %v3070 = vpop.permute.xlu0 %3069
      %3071 = vrot.lane.b32.xlu0 %v2505, 40
      %v3072 = vpop.permute.xlu0 %3071
      %3073 = vrot.lane.b32.xlu0 %v2506, 40
      %v3074 = vpop.permute.xlu0 %3073
      %3075 = vrot.lane.b32.xlu0 %v2507, 40
      %v3076 = vpop.permute.xlu0 %3075
      %3077 = vrot.lane.b32.xlu0 %v2508, 40
      %v3078 = vpop.permute.xlu0 %3077
      %3079 = vrot.lane.b32.xlu0 %v2509, 40
      %v3080 = vpop.permute.xlu0 %3079
      %3081 = vrot.lane.b32.xlu0 %v2510, 40
      %v3082 = vpop.permute.xlu0 %3081
      %3083 = vrot.lane.b32.xlu0 %v2511, 40
      %v3084 = vpop.permute.xlu0 %3083
      %3085 = vrot.lane.b32.xlu0 %v2512, 40
      %v3086 = vpop.permute.xlu0 %3085
      %3087 = vrot.lane.b32.xlu0 %v2513, 40
      %v3088 = vpop.permute.xlu0 %3087
      %3089 = vrot.lane.b32.xlu0 %v2514, 40
      %v3090 = vpop.permute.xlu0 %3089
      %3091 = vrot.lane.b32.xlu0 %v2515, 40
      %v3092 = vpop.permute.xlu0 %3091
      %3157 = vrot.lane.b32.xlu0 %v2517, 48
      %v3158 = vpop.permute.xlu0 %3157
      %3159 = vrot.lane.b32.xlu0 %v2518, 48
      %v3160 = vpop.permute.xlu0 %3159
      %3161 = vrot.lane.b32.xlu0 %v2519, 48
      %v3162 = vpop.permute.xlu0 %3161
      %3163 = vrot.lane.b32.xlu0 %v2520, 48
      %v3164 = vpop.permute.xlu0 %3163
      %3165 = vrot.lane.b32.xlu0 %v2521, 48
      %v3166 = vpop.permute.xlu0 %3165
      %3167 = vrot.lane.b32.xlu0 %v2522, 48
      %v3168 = vpop.permute.xlu0 %3167
      %3169 = vrot.lane.b32.xlu0 %v2523, 48
      %v3170 = vpop.permute.xlu0 %3169
      %3171 = vrot.lane.b32.xlu0 %v2524, 48
      %v3172 = vpop.permute.xlu0 %3171
      %3173 = vrot.lane.b32.xlu0 %v2525, 48
      %v3174 = vpop.permute.xlu0 %3173
      %3175 = vrot.lane.b32.xlu0 %v2526, 48
      %v3176 = vpop.permute.xlu0 %3175
      %3177 = vrot.lane.b32.xlu0 %v2527, 48
      %v3178 = vpop.permute.xlu0 %3177
      %3179 = vrot.lane.b32.xlu0 %v2528, 48
      %v3180 = vpop.permute.xlu0 %3179
      %3181 = vrot.lane.b32.xlu0 %v2529, 48
      %v3182 = vpop.permute.xlu0 %3181
      %3183 = vrot.lane.b32.xlu0 %v2530, 48
      %v3184 = vpop.permute.xlu0 %3183
      %3185 = vrot.lane.b32.xlu0 %v2531, 48
      %v3186 = vpop.permute.xlu0 %3185
      %3187 = vrot.lane.b32.xlu0 %v2532, 48
      %v3188 = vpop.permute.xlu0 %3187
      %3189 = vrot.lane.b32.xlu0 %v2533, 48
      %v3190 = vpop.permute.xlu0 %3189
      %3191 = vrot.lane.b32.xlu0 %v2534, 48
      %v3192 = vpop.permute.xlu0 %3191
      %3193 = vrot.lane.b32.xlu0 %v2535, 48
      %v3194 = vpop.permute.xlu0 %3193
      %3195 = vrot.lane.b32.xlu0 %v2536, 48
      %v3196 = vpop.permute.xlu0 %3195
      %3197 = vrot.lane.b32.xlu0 %v2537, 48
      %v3198 = vpop.permute.xlu0 %3197
      %3199 = vrot.lane.b32.xlu0 %v2538, 48
      %v3200 = vpop.permute.xlu0 %3199
      %3201 = vrot.lane.b32.xlu0 %v2539, 48
      %v3202 = vpop.permute.xlu0 %3201
      %3203 = vrot.lane.b32.xlu0 %v2540, 48
      %v3204 = vpop.permute.xlu0 %3203
      %3205 = vrot.lane.b32.xlu0 %v2541, 48
      %v3206 = vpop.permute.xlu0 %3205
      %3207 = vrot.lane.b32.xlu0 %v2542, 48
      %v3208 = vpop.permute.xlu0 %3207
      %3209 = vrot.lane.b32.xlu0 %v2543, 48
      %v3210 = vpop.permute.xlu0 %3209
      %3211 = vrot.lane.b32.xlu0 %v2544, 48
      %v3212 = vpop.permute.xlu0 %3211
      %3213 = vrot.lane.b32.xlu0 %v2545, 48
      %v3214 = vpop.permute.xlu0 %3213
      %3215 = vrot.lane.b32.xlu0 %v2546, 48
      %v3216 = vpop.permute.xlu0 %3215
      %3217 = vrot.lane.b32.xlu0 %v2547, 48
      %v3218 = vpop.permute.xlu0 %3217
      %3219 = vrot.lane.b32.xlu0 %v2548, 48
      %v3220 = vpop.permute.xlu0 %3219
      %3285 = vrot.lane.b32.xlu0 %v2549, 56
      %v3286 = vpop.permute.xlu0 %3285
      %3287 = vrot.lane.b32.xlu0 %v2550, 56
      %v3288 = vpop.permute.xlu0 %3287
      %3289 = vrot.lane.b32.xlu0 %v2551, 56
      %v3290 = vpop.permute.xlu0 %3289
      %3291 = vrot.lane.b32.xlu0 %v2552, 56
      %v3292 = vpop.permute.xlu0 %3291
      %3293 = vrot.lane.b32.xlu0 %v2553, 56
      %v3294 = vpop.permute.xlu0 %3293
      %3295 = vrot.lane.b32.xlu0 %v2554, 56
      %v3296 = vpop.permute.xlu0 %3295
      %3297 = vrot.lane.b32.xlu0 %v2555, 56
      %v3298 = vpop.permute.xlu0 %3297
      %3299 = vrot.lane.b32.xlu0 %v2556, 56
      %v3300 = vpop.permute.xlu0 %3299
      %3301 = vrot.lane.b32.xlu0 %v2557, 56
      %v3302 = vpop.permute.xlu0 %3301
      %3303 = vrot.lane.b32.xlu0 %v2558, 56
      %v3304 = vpop.permute.xlu0 %3303
      %3305 = vrot.lane.b32.xlu0 %v2559, 56
      %v3306 = vpop.permute.xlu0 %3305
      %3307 = vrot.lane.b32.xlu0 %v2560, 56
      %v3308 = vpop.permute.xlu0 %3307
      %3309 = vrot.lane.b32.xlu0 %v2561, 56
      %v3310 = vpop.permute.xlu0 %3309
      %3311 = vrot.lane.b32.xlu0 %v2562, 56
      %v3312 = vpop.permute.xlu0 %3311
      %3313 = vrot.lane.b32.xlu0 %v2563, 56
      %v3314 = vpop.permute.xlu0 %3313
      %3315 = vrot.lane.b32.xlu0 %v2564, 56
      %v3316 = vpop.permute.xlu0 %3315
      %3317 = vrot.lane.b32.xlu0 %v2565, 56
      %v3318 = vpop.permute.xlu0 %3317
      %3319 = vrot.lane.b32.xlu0 %v2566, 56
      %v3320 = vpop.permute.xlu0 %3319
      %3321 = vrot.lane.b32.xlu0 %v2567, 56
      %v3322 = vpop.permute.xlu0 %3321
      %3323 = vrot.lane.b32.xlu0 %v2568, 56
      %v3324 = vpop.permute.xlu0 %3323
      %3325 = vrot.lane.b32.xlu0 %v2569, 56
      %v3326 = vpop.permute.xlu0 %3325
      %3327 = vrot.lane.b32.xlu0 %v2570, 56
      %v3328 = vpop.permute.xlu0 %3327
      %3329 = vrot.lane.b32.xlu0 %v2571, 56
      %v3330 = vpop.permute.xlu0 %3329
      %3331 = vrot.lane.b32.xlu0 %v2572, 56
      %v3332 = vpop.permute.xlu0 %3331
      %3333 = vrot.lane.b32.xlu0 %v2573, 56
      %v3334 = vpop.permute.xlu0 %3333
      %3335 = vrot.lane.b32.xlu0 %v2574, 56
      %v3336 = vpop.permute.xlu0 %3335
      %3337 = vrot.lane.b32.xlu0 %v2575, 56
      %v3338 = vpop.permute.xlu0 %3337
      %3339 = vrot.lane.b32.xlu0 %v2576, 56
      %v3340 = vpop.permute.xlu0 %3339
      %3341 = vrot.lane.b32.xlu0 %v2577, 56
      %v3342 = vpop.permute.xlu0 %3341
      %3343 = vrot.lane.b32.xlu0 %v2578, 56
      %v3344 = vpop.permute.xlu0 %3343
      %3345 = vrot.lane.b32.xlu0 %v2579, 56
      %v3346 = vpop.permute.xlu0 %3345
      %3347 = vrot.lane.b32.xlu0 %v2580, 56
      %v3348 = vpop.permute.xlu0 %3347
      %3413 = vrot.lane.b32.xlu0 %v2581, 64
      %v3414 = vpop.permute.xlu0 %3413
      %3415 = vrot.lane.b32.xlu0 %v2582, 64
      %v3416 = vpop.permute.xlu0 %3415
      %3417 = vrot.lane.b32.xlu0 %v2583, 64
      %v3418 = vpop.permute.xlu0 %3417
      %3419 = vrot.lane.b32.xlu0 %v2584, 64
      %v3420 = vpop.permute.xlu0 %3419
      %3421 = vrot.lane.b32.xlu0 %v2585, 64
      %v3422 = vpop.permute.xlu0 %3421
      %3423 = vrot.lane.b32.xlu0 %v2586, 64
      %v3424 = vpop.permute.xlu0 %3423
      %3425 = vrot.lane.b32.xlu0 %v2587, 64
      %v3426 = vpop.permute.xlu0 %3425
      %3427 = vrot.lane.b32.xlu0 %v2588, 64
      %v3428 = vpop.permute.xlu0 %3427
      %3429 = vrot.lane.b32.xlu0 %v2589, 64
      %v3430 = vpop.permute.xlu0 %3429
      %3431 = vrot.lane.b32.xlu0 %v2590, 64
      %v3432 = vpop.permute.xlu0 %3431
      %3433 = vrot.lane.b32.xlu0 %v2591, 64
      %v3434 = vpop.permute.xlu0 %3433
      %3435 = vrot.lane.b32.xlu0 %v2592, 64
      %v3436 = vpop.permute.xlu0 %3435
      %3437 = vrot.lane.b32.xlu0 %v2593, 64
      %v3438 = vpop.permute.xlu0 %3437
      %3439 = vrot.lane.b32.xlu0 %v2594, 64
      %v3440 = vpop.permute.xlu0 %3439
      %3441 = vrot.lane.b32.xlu0 %v2595, 64
      %v3442 = vpop.permute.xlu0 %3441
      %3443 = vrot.lane.b32.xlu0 %v2596, 64
      %v3444 = vpop.permute.xlu0 %3443
      %3445 = vrot.lane.b32.xlu0 %v2597, 64
      %v3446 = vpop.permute.xlu0 %3445
      %3447 = vrot.lane.b32.xlu0 %v2598, 64
      %v3448 = vpop.permute.xlu0 %3447
      %3449 = vrot.lane.b32.xlu0 %v2599, 64
      %v3450 = vpop.permute.xlu0 %3449
      %3451 = vrot.lane.b32.xlu0 %v2600, 64
      %v3452 = vpop.permute.xlu0 %3451
      %3453 = vrot.lane.b32.xlu0 %v2601, 64
      %v3454 = vpop.permute.xlu0 %3453
      %3455 = vrot.lane.b32.xlu0 %v2602, 64
      %v3456 = vpop.permute.xlu0 %3455
      %3457 = vrot.lane.b32.xlu0 %v2603, 64
      %v3458 = vpop.permute.xlu0 %3457
      %3459 = vrot.lane.b32.xlu0 %v2604, 64
      %v3460 = vpop.permute.xlu0 %3459
      %3461 = vrot.lane.b32.xlu0 %v2605, 64
      %v3462 = vpop.permute.xlu0 %3461
      %3463 = vrot.lane.b32.xlu0 %v2606, 64
      %v3464 = vpop.permute.xlu0 %3463
      %3465 = vrot.lane.b32.xlu0 %v2607, 64
      %v3466 = vpop.permute.xlu0 %3465
      %3467 = vrot.lane.b32.xlu0 %v2608, 64
      %v3468 = vpop.permute.xlu0 %3467
      %3469 = vrot.lane.b32.xlu0 %v2609, 64
      %v3470 = vpop.permute.xlu0 %3469
      %3471 = vrot.lane.b32.xlu0 %v2610, 64
      %v3472 = vpop.permute.xlu0 %3471
      %3473 = vrot.lane.b32.xlu0 %v2611, 64
      %v3474 = vpop.permute.xlu0 %3473
      %3475 = vrot.lane.b32.xlu0 %v2612, 64
      %v3476 = vpop.permute.xlu0 %3475
      %v3509 = vsel %vm277, %v2356, %v2646
      %v3510 = vsel %vm277, %v2357, %v2648
      %v3511 = vsel %vm277, %v2358, %v2650
      %v3512 = vsel %vm277, %v2359, %v2652
      %v3513 = vsel %vm277, %v2360, %v2654
      %v3514 = vsel %vm277, %v2361, %v2656
      %v3515 = vsel %vm277, %v2362, %v2658
      %v3516 = vsel %vm277, %v2363, %v2660
      %v3517 = vsel %vm277, %v2364, %v2662
      %v3518 = vsel %vm277, %v2365, %v2664
      %v3519 = vsel %vm277, %v2366, %v2666
      %v3520 = vsel %vm277, %v2367, %v2668
      %v3521 = vsel %vm277, %v2368, %v2670
      %v3522 = vsel %vm277, %v2369, %v2672
      %v3523 = vsel %vm277, %v2370, %v2674
      %v3524 = vsel %vm277, %v2371, %v2676
      %v3525 = vsel %vm277, %v2372, %v2678
      %v3526 = vsel %vm277, %v2373, %v2680
      %v3527 = vsel %vm277, %v2374, %v2682
      %v3528 = vsel %vm277, %v2375, %v2684
      %v3529 = vsel %vm277, %v2376, %v2686
      %v3530 = vsel %vm277, %v2377, %v2688
      %v3531 = vsel %vm277, %v2378, %v2690
      %v3532 = vsel %vm277, %v2379, %v2692
      %v3533 = vsel %vm277, %v2380, %v2694
      %v3534 = vsel %vm277, %v2381, %v2696
      %v3535 = vsel %vm277, %v2382, %v2698
      %v3536 = vsel %vm277, %v2383, %v2700
      %v3537 = vsel %vm277, %v2384, %v2702
      %v3538 = vsel %vm277, %v2385, %v2704
      %v3539 = vsel %vm277, %v2386, %v2706
      %v3540 = vsel %vm277, %v2387, %v2708
      %v3541 = vsel %vm1905, %v3509, %v2774
      %v3542 = vsel %vm1905, %v3510, %v2776
      %v3543 = vsel %vm1905, %v3511, %v2778
      %v3544 = vsel %vm1905, %v3512, %v2780
      %v3545 = vsel %vm1905, %v3513, %v2782
      %v3546 = vsel %vm1905, %v3514, %v2784
      %v3547 = vsel %vm1905, %v3515, %v2786
      %v3548 = vsel %vm1905, %v3516, %v2788
      %v3549 = vsel %vm1905, %v3517, %v2790
      %v3550 = vsel %vm1905, %v3518, %v2792
      %v3551 = vsel %vm1905, %v3519, %v2794
      %v3552 = vsel %vm1905, %v3520, %v2796
      %v3553 = vsel %vm1905, %v3521, %v2798
      %v3554 = vsel %vm1905, %v3522, %v2800
      %v3555 = vsel %vm1905, %v3523, %v2802
      %v3556 = vsel %vm1905, %v3524, %v2804
      %v3557 = vsel %vm1905, %v3525, %v2806
      %v3558 = vsel %vm1905, %v3526, %v2808
      %v3559 = vsel %vm1905, %v3527, %v2810
      %v3560 = vsel %vm1905, %v3528, %v2812
      %v3561 = vsel %vm1905, %v3529, %v2814
      %v3562 = vsel %vm1905, %v3530, %v2816
      %v3563 = vsel %vm1905, %v3531, %v2818
      %v3564 = vsel %vm1905, %v3532, %v2820
      %v3565 = vsel %vm1905, %v3533, %v2822
      %v3566 = vsel %vm1905, %v3534, %v2824
      %v3567 = vsel %vm1905, %v3535, %v2826
      %v3568 = vsel %vm1905, %v3536, %v2828
      %v3569 = vsel %vm1905, %v3537, %v2830
      %v3570 = vsel %vm1905, %v3538, %v2832
      %v3571 = vsel %vm1905, %v3539, %v2834
      %v3572 = vsel %vm1905, %v3540, %v2836
      %v3573 = vsel %vm1938, %v3541, %v2902
      %v3574 = vsel %vm1938, %v3542, %v2904
      %v3575 = vsel %vm1938, %v3543, %v2906
      %v3576 = vsel %vm1938, %v3544, %v2908
      %v3577 = vsel %vm1938, %v3545, %v2910
      %v3578 = vsel %vm1938, %v3546, %v2912
      %v3579 = vsel %vm1938, %v3547, %v2914
      %v3580 = vsel %vm1938, %v3548, %v2916
      %v3581 = vsel %vm1938, %v3549, %v2918
      %v3582 = vsel %vm1938, %v3550, %v2920
      %v3583 = vsel %vm1938, %v3551, %v2922
      %v3584 = vsel %vm1938, %v3552, %v2924
      %v3585 = vsel %vm1938, %v3553, %v2926
      %v3586 = vsel %vm1938, %v3554, %v2928
      %v3587 = vsel %vm1938, %v3555, %v2930
      %v3588 = vsel %vm1938, %v3556, %v2932
      %v3589 = vsel %vm1938, %v3557, %v2934
      %v3590 = vsel %vm1938, %v3558, %v2936
      %v3591 = vsel %vm1938, %v3559, %v2938
      %v3592 = vsel %vm1938, %v3560, %v2940
      %v3593 = vsel %vm1938, %v3561, %v2942
      %v3594 = vsel %vm1938, %v3562, %v2944
      %v3595 = vsel %vm1938, %v3563, %v2946
      %v3596 = vsel %vm1938, %v3564, %v2948
      %v3597 = vsel %vm1938, %v3565, %v2950
      %v3598 = vsel %vm1938, %v3566, %v2952
      %v3599 = vsel %vm1938, %v3567, %v2954
      %v3600 = vsel %vm1938, %v3568, %v2956
      %v3601 = vsel %vm1938, %v3569, %v2958
      %v3602 = vsel %vm1938, %v3570, %v2960
      %v3603 = vsel %vm1938, %v3571, %v2962
      %v3604 = vsel %vm1938, %v3572, %v2964
      %v3605 = vsel %vm1971, %v3573, %v1266
      %v3606 = vsel %vm1971, %v3574, %v1268
      %v3607 = vsel %vm1971, %v3575, %v1270
      %v3608 = vsel %vm1971, %v3576, %v1272
      %v3609 = vsel %vm1971, %v3577, %v1274
      %v3610 = vsel %vm1971, %v3578, %v1276
      %v3611 = vsel %vm1971, %v3579, %v1278
      %v3612 = vsel %vm1971, %v3580, %v1280
      %v3613 = vsel %vm1971, %v3581, %v1282
      %v3614 = vsel %vm1971, %v3582, %v1284
      %v3615 = vsel %vm1971, %v3583, %v1286
      %v3616 = vsel %vm1971, %v3584, %v1288
      %v3617 = vsel %vm1971, %v3585, %v1290
      %v3618 = vsel %vm1971, %v3586, %v1292
      %v3619 = vsel %vm1971, %v3587, %v1294
      %v3620 = vsel %vm1971, %v3588, %v1296
      %v3621 = vsel %vm1971, %v3589, %v1298
      %v3622 = vsel %vm1971, %v3590, %v1300
      %v3623 = vsel %vm1971, %v3591, %v1302
      %v3624 = vsel %vm1971, %v3592, %v1304
      %v3625 = vsel %vm1971, %v3593, %v1306
      %v3626 = vsel %vm1971, %v3594, %v1308
      %v3627 = vsel %vm1971, %v3595, %v1310
      %v3628 = vsel %vm1971, %v3596, %v1312
      %v3629 = vsel %vm1971, %v3597, %v1314
      %v3630 = vsel %vm1971, %v3598, %v1316
      %v3631 = vsel %vm1971, %v3599, %v1318
      %v3632 = vsel %vm1971, %v3600, %v1320
      %v3633 = vsel %vm1971, %v3601, %v1322
      %v3634 = vsel %vm1971, %v3602, %v1324
      %v3635 = vsel %vm1971, %v3603, %v1326
      %v3636 = vsel %vm1971, %v3604, %v1328
      %v3637 = vsel %vm2004, %v3605, %v3030
      %v3638 = vsel %vm2004, %v3606, %v3032
      %v3639 = vsel %vm2004, %v3607, %v3034
      %v3640 = vsel %vm2004, %v3608, %v3036
      %v3641 = vsel %vm2004, %v3609, %v3038
      %v3642 = vsel %vm2004, %v3610, %v3040
      %v3643 = vsel %vm2004, %v3611, %v3042
      %v3644 = vsel %vm2004, %v3612, %v3044
      %v3645 = vsel %vm2004, %v3613, %v3046
      %v3646 = vsel %vm2004, %v3614, %v3048
      %v3647 = vsel %vm2004, %v3615, %v3050
      %v3648 = vsel %vm2004, %v3616, %v3052
      %v3649 = vsel %vm2004, %v3617, %v3054
      %v3650 = vsel %vm2004, %v3618, %v3056
      %v3651 = vsel %vm2004, %v3619, %v3058
      %v3652 = vsel %vm2004, %v3620, %v3060
      %v3653 = vsel %vm2004, %v3621, %v3062
      %v3654 = vsel %vm2004, %v3622, %v3064
      %v3655 = vsel %vm2004, %v3623, %v3066
      %v3656 = vsel %vm2004, %v3624, %v3068
      %v3657 = vsel %vm2004, %v3625, %v3070
      %v3658 = vsel %vm2004, %v3626, %v3072
      %v3659 = vsel %vm2004, %v3627, %v3074
      %v3660 = vsel %vm2004, %v3628, %v3076
      %v3661 = vsel %vm2004, %v3629, %v3078
      %v3662 = vsel %vm2004, %v3630, %v3080
      %v3663 = vsel %vm2004, %v3631, %v3082
      %v3664 = vsel %vm2004, %v3632, %v3084
      %v3665 = vsel %vm2004, %v3633, %v3086
      %v3666 = vsel %vm2004, %v3634, %v3088
      %v3667 = vsel %vm2004, %v3635, %v3090
      %v3668 = vsel %vm2004, %v3636, %v3092
      %v3669 = vsel %vm2037, %v3637, %v3158
      %v3670 = vsel %vm2037, %v3638, %v3160
      %v3671 = vsel %vm2037, %v3639, %v3162
      %v3672 = vsel %vm2037, %v3640, %v3164
      %v3673 = vsel %vm2037, %v3641, %v3166
      %v3674 = vsel %vm2037, %v3642, %v3168
      %v3675 = vsel %vm2037, %v3643, %v3170
      %v3676 = vsel %vm2037, %v3644, %v3172
      %v3677 = vsel %vm2037, %v3645, %v3174
      %v3678 = vsel %vm2037, %v3646, %v3176
      %v3679 = vsel %vm2037, %v3647, %v3178
      %v3680 = vsel %vm2037, %v3648, %v3180
      %v3681 = vsel %vm2037, %v3649, %v3182
      %v3682 = vsel %vm2037, %v3650, %v3184
      %v3683 = vsel %vm2037, %v3651, %v3186
      %v3684 = vsel %vm2037, %v3652, %v3188
      %v3685 = vsel %vm2037, %v3653, %v3190
      %v3686 = vsel %vm2037, %v3654, %v3192
      %v3687 = vsel %vm2037, %v3655, %v3194
      %v3688 = vsel %vm2037, %v3656, %v3196
      %v3689 = vsel %vm2037, %v3657, %v3198
      %v3690 = vsel %vm2037, %v3658, %v3200
      %v3691 = vsel %vm2037, %v3659, %v3202
      %v3692 = vsel %vm2037, %v3660, %v3204
      %v3693 = vsel %vm2037, %v3661, %v3206
      %v3694 = vsel %vm2037, %v3662, %v3208
      %v3695 = vsel %vm2037, %v3663, %v3210
      %v3696 = vsel %vm2037, %v3664, %v3212
      %v3697 = vsel %vm2037, %v3665, %v3214
      %v3698 = vsel %vm2037, %v3666, %v3216
      %v3699 = vsel %vm2037, %v3667, %v3218
      %v3700 = vsel %vm2037, %v3668, %v3220
      %v3701 = vsel %vm2070, %v3669, %v3286
      %v3702 = vsel %vm2070, %v3670, %v3288
      %v3703 = vsel %vm2070, %v3671, %v3290
      %v3704 = vsel %vm2070, %v3672, %v3292
      %v3705 = vsel %vm2070, %v3673, %v3294
      %v3706 = vsel %vm2070, %v3674, %v3296
      %v3707 = vsel %vm2070, %v3675, %v3298
      %v3708 = vsel %vm2070, %v3676, %v3300
      %v3709 = vsel %vm2070, %v3677, %v3302
      %v3710 = vsel %vm2070, %v3678, %v3304
      %v3711 = vsel %vm2070, %v3679, %v3306
      %v3712 = vsel %vm2070, %v3680, %v3308
      %v3713 = vsel %vm2070, %v3681, %v3310
      %v3714 = vsel %vm2070, %v3682, %v3312
      %v3715 = vsel %vm2070, %v3683, %v3314
      %v3716 = vsel %vm2070, %v3684, %v3316
      %v3717 = vsel %vm2070, %v3685, %v3318
      %v3718 = vsel %vm2070, %v3686, %v3320
      %v3719 = vsel %vm2070, %v3687, %v3322
      %v3720 = vsel %vm2070, %v3688, %v3324
      %v3721 = vsel %vm2070, %v3689, %v3326
      %v3722 = vsel %vm2070, %v3690, %v3328
      %v3723 = vsel %vm2070, %v3691, %v3330
      %v3724 = vsel %vm2070, %v3692, %v3332
      %v3725 = vsel %vm2070, %v3693, %v3334
      %v3726 = vsel %vm2070, %v3694, %v3336
      %v3727 = vsel %vm2070, %v3695, %v3338
      %v3728 = vsel %vm2070, %v3696, %v3340
      %v3729 = vsel %vm2070, %v3697, %v3342
      %v3730 = vsel %vm2070, %v3698, %v3344
      %v3731 = vsel %vm2070, %v3699, %v3346
      %v3732 = vsel %vm2070, %v3700, %v3348
      %v3733 = vsel %vm2103, %v3701, %v3414
      %v3734 = vsel %vm2103, %v3702, %v3416
      %v3735 = vsel %vm2103, %v3703, %v3418
      %v3736 = vsel %vm2103, %v3704, %v3420
      %v3737 = vsel %vm2103, %v3705, %v3422
      %v3738 = vsel %vm2103, %v3706, %v3424
      %v3739 = vsel %vm2103, %v3707, %v3426
      %v3740 = vsel %vm2103, %v3708, %v3428
      %v3741 = vsel %vm2103, %v3709, %v3430
      %v3742 = vsel %vm2103, %v3710, %v3432
      %v3743 = vsel %vm2103, %v3711, %v3434
      %v3744 = vsel %vm2103, %v3712, %v3436
      %v3745 = vsel %vm2103, %v3713, %v3438
      %v3746 = vsel %vm2103, %v3714, %v3440
      %v3747 = vsel %vm2103, %v3715, %v3442
      %v3748 = vsel %vm2103, %v3716, %v3444
      %v3749 = vsel %vm2103, %v3717, %v3446
      %v3750 = vsel %vm2103, %v3718, %v3448
      %v3751 = vsel %vm2103, %v3719, %v3450
      %v3752 = vsel %vm2103, %v3720, %v3452
      %v3753 = vsel %vm2103, %v3721, %v3454
      %v3754 = vsel %vm2103, %v3722, %v3456
      %v3755 = vsel %vm2103, %v3723, %v3458
      %v3756 = vsel %vm2103, %v3724, %v3460
      %v3757 = vsel %vm2103, %v3725, %v3462
      %v3758 = vsel %vm2103, %v3726, %v3464
      %v3759 = vsel %vm2103, %v3727, %v3466
      %v3760 = vsel %vm2103, %v3728, %v3468
      %v3761 = vsel %vm2103, %v3729, %v3470
      %v3762 = vsel %vm2103, %v3730, %v3472
      %v3763 = vsel %vm2103, %v3731, %v3474
      %v3764 = vsel %vm2103, %v3732, %v3476
      %s3765 = scalar_lea.vmem %s2, 72
      %v3766 = vld [vmem:[%s3765] sm:$0xff]
      %v3767 = vld [vmem:[%s3765 + $0x8] sm:$0xff]
      %v3768 = vld [vmem:[%s3765 + $0x10] sm:$0xff]
      %v3769 = vld [vmem:[%s3765 + $0x18] sm:$0xff]
      %v3770 = vld [vmem:[%s3765 + $0x20] sm:$0xff]
      %v3771 = vld [vmem:[%s3765 + $0x28] sm:$0xff]
      %v3772 = vld [vmem:[%s3765 + $0x30] sm:$0xff]
      %v3773 = vld [vmem:[%s3765 + $0x38] sm:$0xff]
      %v3774 = vld [vmem:[%s3765 + $0x40] sm:$0xff]
      %v3776 = vsel %vm2145, %v3733, 0
      %v3779 = vsel %vm2145, %v3734, 0
      %v3782 = vsel %vm2145, %v3735, 0
      %v3785 = vsel %vm2145, %v3736, 0
      %v3788 = vsel %vm2145, %v3737, 0
      %v3791 = vsel %vm2145, %v3738, 0
      %v3794 = vsel %vm2145, %v3739, 0
      %v3797 = vsel %vm2145, %v3740, 0
      %v3800 = vsel %vm2145, %v3741, 0
      %v3803 = vsel %vm2145, %v3742, 0
      %v3806 = vsel %vm2145, %v3743, 0
      %v3809 = vsel %vm2145, %v3744, 0
      %v3812 = vsel %vm2145, %v3745, 0
      %v3815 = vsel %vm2145, %v3746, 0
      %v3818 = vsel %vm2145, %v3747, 0
      %v3821 = vsel %vm2145, %v3748, 0
      %v3824 = vsel %vm2145, %v3749, 0
      %v3827 = vsel %vm2145, %v3750, 0
      %v3830 = vsel %vm2145, %v3751, 0
      %v3833 = vsel %vm2145, %v3752, 0
      %v3836 = vsel %vm2145, %v3753, 0
      %v3839 = vsel %vm2145, %v3754, 0
      %v3842 = vsel %vm2145, %v3755, 0
      %v3845 = vsel %vm2145, %v3756, 0
      %v3848 = vsel %vm2145, %v3757, 0
      %v3851 = vsel %vm2145, %v3758, 0
      %v3854 = vsel %vm2145, %v3759, 0
      %v3857 = vsel %vm2145, %v3760, 0
      %v3860 = vsel %vm2145, %v3761, 0
      %v3863 = vsel %vm2145, %v3762, 0
      %v3866 = vsel %vm2145, %v3763, 0
      %v3869 = vsel %vm2145, %v3764, 0
      %3871 = vmatpush.msra.mxu0 0.0
      %3872 = vmatpush.msra.mxu0 0.0
      %3873 = vmatpush.msra.mxu0 0.0
      %3874 = vmatpush.msra.mxu0 0.0
      %3875 = vmatpush.msra.mxu0 0.0
      %3876 = vmatpush.msra.mxu0 0.0
      %3877 = vmatpush.msra.mxu0 0.0
      %3878 = vmatpush.msra.mxu0 %v3774
      %3879 = vmatpush.msra.mxu0 %v3773
      %3880 = vmatpush.msra.mxu0 %v3772
      %3881 = vmatpush.msra.mxu0 %v3771
      %3882 = vmatpush.msra.mxu0 %v3770
      %3883 = vmatpush.msra.mxu0 %v3769
      %3884 = vmatpush.msra.mxu0 %v3768
      %3885 = vmatpush.msra.mxu0 %v3767
      %3886 = vmatpush.msra.mxu0 %v3766
      %3887 = vmatmul.f32.gmra.mxu0 %v3776
      %v3888 = vpop.f32.mrf.mxu0
      %v3889 = vadd.f32 0.0, %v3888
      %3890 = vmatmul.f32.gmra.mxu0 %v3779
      %v3891 = vpop.f32.mrf.mxu0
      %v3892 = vadd.f32 0.0, %v3891
      %3893 = vmatmul.f32.gmra.mxu0 %v3782
      %v3894 = vpop.f32.mrf.mxu0
      %v3895 = vadd.f32 0.0, %v3894
      %3896 = vmatmul.f32.gmra.mxu0 %v3785
      %v3897 = vpop.f32.mrf.mxu0
      %v3898 = vadd.f32 0.0, %v3897
      %3899 = vmatmul.f32.gmra.mxu0 %v3788
      %v3900 = vpop.f32.mrf.mxu0
      %v3901 = vadd.f32 0.0, %v3900
      %3902 = vmatmul.f32.gmra.mxu0 %v3791
      %v3903 = vpop.f32.mrf.mxu0
      %v3904 = vadd.f32 0.0, %v3903
      %3905 = vmatmul.f32.gmra.mxu0 %v3794
      %v3906 = vpop.f32.mrf.mxu0
      %v3907 = vadd.f32 0.0, %v3906
      %3908 = vmatmul.f32.gmra.mxu0 %v3797
      %v3909 = vpop.f32.mrf.mxu0
      %v3910 = vadd.f32 0.0, %v3909
      %3911 = vmatmul.f32.gmra.mxu0 %v3800
      %v3912 = vpop.f32.mrf.mxu0
      %v3913 = vadd.f32 0.0, %v3912
      %3914 = vmatmul.f32.gmra.mxu0 %v3803
      %v3915 = vpop.f32.mrf.mxu0
      %v3916 = vadd.f32 0.0, %v3915
      %3917 = vmatmul.f32.gmra.mxu0 %v3806
      %v3918 = vpop.f32.mrf.mxu0
      %v3919 = vadd.f32 0.0, %v3918
      %3920 = vmatmul.f32.gmra.mxu0 %v3809
      %v3921 = vpop.f32.mrf.mxu0
      %v3922 = vadd.f32 0.0, %v3921
      %3923 = vmatmul.f32.gmra.mxu0 %v3812
      %v3924 = vpop.f32.mrf.mxu0
      %v3925 = vadd.f32 0.0, %v3924
      %3926 = vmatmul.f32.gmra.mxu0 %v3815
      %v3927 = vpop.f32.mrf.mxu0
      %v3928 = vadd.f32 0.0, %v3927
      %3929 = vmatmul.f32.gmra.mxu0 %v3818
      %v3930 = vpop.f32.mrf.mxu0
      %v3931 = vadd.f32 0.0, %v3930
      %3932 = vmatmul.f32.gmra.mxu0 %v3821
      %v3933 = vpop.f32.mrf.mxu0
      %v3934 = vadd.f32 0.0, %v3933
      %3935 = vmatmul.f32.gmra.mxu0 %v3824
      %v3936 = vpop.f32.mrf.mxu0
      %v3937 = vadd.f32 0.0, %v3936
      %3938 = vmatmul.f32.gmra.mxu0 %v3827
      %v3939 = vpop.f32.mrf.mxu0
      %v3940 = vadd.f32 0.0, %v3939
      %3941 = vmatmul.f32.gmra.mxu0 %v3830
      %v3942 = vpop.f32.mrf.mxu0
      %v3943 = vadd.f32 0.0, %v3942
      %3944 = vmatmul.f32.gmra.mxu0 %v3833
      %v3945 = vpop.f32.mrf.mxu0
      %v3946 = vadd.f32 0.0, %v3945
      %3947 = vmatmul.f32.gmra.mxu0 %v3836
      %v3948 = vpop.f32.mrf.mxu0
      %v3949 = vadd.f32 0.0, %v3948
      %3950 = vmatmul.f32.gmra.mxu0 %v3839
      %v3951 = vpop.f32.mrf.mxu0
      %v3952 = vadd.f32 0.0, %v3951
      %3953 = vmatmul.f32.gmra.mxu0 %v3842
      %v3954 = vpop.f32.mrf.mxu0
      %v3955 = vadd.f32 0.0, %v3954
      %3956 = vmatmul.f32.gmra.mxu0 %v3845
      %v3957 = vpop.f32.mrf.mxu0
      %v3958 = vadd.f32 0.0, %v3957
      %3959 = vmatmul.f32.gmra.mxu0 %v3848
      %v3960 = vpop.f32.mrf.mxu0
      %v3961 = vadd.f32 0.0, %v3960
      %3962 = vmatmul.f32.gmra.mxu0 %v3851
      %v3963 = vpop.f32.mrf.mxu0
      %v3964 = vadd.f32 0.0, %v3963
      %3965 = vmatmul.f32.gmra.mxu0 %v3854
      %v3966 = vpop.f32.mrf.mxu0
      %v3967 = vadd.f32 0.0, %v3966
      %3968 = vmatmul.f32.gmra.mxu0 %v3857
      %v3969 = vpop.f32.mrf.mxu0
      %v3970 = vadd.f32 0.0, %v3969
      %3971 = vmatmul.f32.gmra.mxu0 %v3860
      %v3972 = vpop.f32.mrf.mxu0
      %v3973 = vadd.f32 0.0, %v3972
      %3974 = vmatmul.f32.gmra.mxu0 %v3863
      %v3975 = vpop.f32.mrf.mxu0
      %v3976 = vadd.f32 0.0, %v3975
      %3977 = vmatmul.f32.gmra.mxu0 %v3866
      %v3978 = vpop.f32.mrf.mxu0
      %v3979 = vadd.f32 0.0, %v3978
      %3980 = vmatmul.f32.gmra.mxu0 %v3869
      %v3981 = vpop.f32.mrf.mxu0
      %v3982 = vadd.f32 0.0, %v3981
      %3983 = vdwg.mxu0
      %s3984 = scalar_lea.vmem %s231, 384
      %v3985 = vld [vmem:[%s3984 + $0x6] sm:$0xff]
      %v3986 = vld [vmem:[%s3984 + $0xe] sm:$0xff]
      %v3987 = vld [vmem:[%s3984 + $0x46] sm:$0xff]
      %v3988 = vld [vmem:[%s3984 + $0x4e] sm:$0xff]
      %v3989 = vld [vmem:[%s3984 + $0x86] sm:$0xff]
      %v3990 = vld [vmem:[%s3984 + $0x8e] sm:$0xff]
      %v3991 = vld [vmem:[%s3984 + $0xc6] sm:$0xff]
      %v3992 = vld [vmem:[%s3984 + $0xce] sm:$0xff]
      %v3993 = vld [vmem:[%s3984 + $0x106] sm:$0xff]
      %v3994 = vld [vmem:[%s3984 + $0x10e] sm:$0xff]
      %v3995 = vld [vmem:[%s3984 + $0x146] sm:$0xff]
      %v3996 = vld [vmem:[%s3984 + $0x14e] sm:$0xff]
      %v3997 = vld [vmem:[%s3984 + $0x186] sm:$0xff]
      %v3998 = vld [vmem:[%s3984 + $0x18e] sm:$0xff]
      %v3999 = vld [vmem:[%s3984 + $0x1c6] sm:$0xff]
      %v4000 = vld [vmem:[%s3984 + $0x1ce] sm:$0xff]
      %v4001 = vld [vmem:[%s3984 + $0x206] sm:$0xff]
      %v4002 = vld [vmem:[%s3984 + $0x20e] sm:$0xff]
      %v4003 = vld [vmem:[%s3984 + $0x246] sm:$0xff]
      %v4004 = vld [vmem:[%s3984 + $0x24e] sm:$0xff]
      %v4005 = vld [vmem:[%s3984 + $0x286] sm:$0xff]
      %v4006 = vld [vmem:[%s3984 + $0x28e] sm:$0xff]
      %v4007 = vld [vmem:[%s3984 + $0x2c6] sm:$0xff]
      %v4008 = vld [vmem:[%s3984 + $0x2ce] sm:$0xff]
      %v4009 = vld [vmem:[%s3984 + $0x306] sm:$0xff]
      %v4010 = vld [vmem:[%s3984 + $0x30e] sm:$0xff]
      %v4011 = vld [vmem:[%s3984 + $0x346] sm:$0xff]
      %v4012 = vld [vmem:[%s3984 + $0x34e] sm:$0xff]
      %v4013 = vld [vmem:[%s3984 + $0x386] sm:$0xff]
      %v4014 = vld [vmem:[%s3984 + $0x38e] sm:$0xff]
      %v4015 = vld [vmem:[%s3984 + $0x3c6] sm:$0xff]
      %v4016 = vld [vmem:[%s3984 + $0x3ce] sm:$0xff]
      %v4017 = vld [vmem:[%s3984 + $0x18] sm:$0xff]
      %v4018 = vld [vmem:[%s3984 + $0x20] sm:$0xff]
      %v4019 = vld [vmem:[%s3984 + $0x58] sm:$0xff]
      %v4020 = vld [vmem:[%s3984 + $0x60] sm:$0xff]
      %v4021 = vld [vmem:[%s3984 + $0x98] sm:$0xff]
      %v4022 = vld [vmem:[%s3984 + $0xa0] sm:$0xff]
      %v4023 = vld [vmem:[%s3984 + $0xd8] sm:$0xff]
      %v4024 = vld [vmem:[%s3984 + $0xe0] sm:$0xff]
      %v4025 = vld [vmem:[%s3984 + $0x118] sm:$0xff]
      %v4026 = vld [vmem:[%s3984 + $0x120] sm:$0xff]
      %v4027 = vld [vmem:[%s3984 + $0x158] sm:$0xff]
      %v4028 = vld [vmem:[%s3984 + $0x160] sm:$0xff]
      %v4029 = vld [vmem:[%s3984 + $0x198] sm:$0xff]
      %v4030 = vld [vmem:[%s3984 + $0x1a0] sm:$0xff]
      %v4031 = vld [vmem:[%s3984 + $0x1d8] sm:$0xff]
      %v4032 = vld [vmem:[%s3984 + $0x1e0] sm:$0xff]
      %v4033 = vld [vmem:[%s3984 + $0x218] sm:$0xff]
      %v4034 = vld [vmem:[%s3984 + $0x220] sm:$0xff]
      %v4035 = vld [vmem:[%s3984 + $0x258] sm:$0xff]
      %v4036 = vld [vmem:[%s3984 + $0x260] sm:$0xff]
      %v4037 = vld [vmem:[%s3984 + $0x298] sm:$0xff]
      %v4038 = vld [vmem:[%s3984 + $0x2a0] sm:$0xff]
      %v4039 = vld [vmem:[%s3984 + $0x2d8] sm:$0xff]
      %v4040 = vld [vmem:[%s3984 + $0x2e0] sm:$0xff]
      %v4041 = vld [vmem:[%s3984 + $0x318] sm:$0xff]
      %v4042 = vld [vmem:[%s3984 + $0x320] sm:$0xff]
      %v4043 = vld [vmem:[%s3984 + $0x358] sm:$0xff]
      %v4044 = vld [vmem:[%s3984 + $0x360] sm:$0xff]
      %v4045 = vld [vmem:[%s3984 + $0x398] sm:$0xff]
      %v4046 = vld [vmem:[%s3984 + $0x3a0] sm:$0xff]
      %v4047 = vld [vmem:[%s3984 + $0x3d8] sm:$0xff]
      %v4048 = vld [vmem:[%s3984 + $0x3e0] sm:$0xff]
      %v4049 = vld [vmem:[%s3984 + $0x2a] sm:$0xff]
      %v4050 = vld [vmem:[%s3984 + $0x32] sm:$0xff]
      %v4051 = vld [vmem:[%s3984 + $0x6a] sm:$0xff]
      %v4052 = vld [vmem:[%s3984 + $0x72] sm:$0xff]
      %v4053 = vld [vmem:[%s3984 + $0xaa] sm:$0xff]
      %v4054 = vld [vmem:[%s3984 + $0xb2] sm:$0xff]
      %v4055 = vld [vmem:[%s3984 + $0xea] sm:$0xff]
      %v4056 = vld [vmem:[%s3984 + $0xf2] sm:$0xff]
      %v4057 = vld [vmem:[%s3984 + $0x12a] sm:$0xff]
      %v4058 = vld [vmem:[%s3984 + $0x132] sm:$0xff]
      %v4059 = vld [vmem:[%s3984 + $0x16a] sm:$0xff]
      %v4060 = vld [vmem:[%s3984 + $0x172] sm:$0xff]
      %v4061 = vld [vmem:[%s3984 + $0x1aa] sm:$0xff]
      %v4062 = vld [vmem:[%s3984 + $0x1b2] sm:$0xff]
      %v4063 = vld [vmem:[%s3984 + $0x1ea] sm:$0xff]
      %v4064 = vld [vmem:[%s3984 + $0x1f2] sm:$0xff]
      %v4065 = vld [vmem:[%s3984 + $0x22a] sm:$0xff]
      %v4066 = vld [vmem:[%s3984 + $0x232] sm:$0xff]
      %v4067 = vld [vmem:[%s3984 + $0x26a] sm:$0xff]
      %v4068 = vld [vmem:[%s3984 + $0x272] sm:$0xff]
      %v4069 = vld [vmem:[%s3984 + $0x2aa] sm:$0xff]
      %v4070 = vld [vmem:[%s3984 + $0x2b2] sm:$0xff]
      %v4071 = vld [vmem:[%s3984 + $0x2ea] sm:$0xff]
      %v4072 = vld [vmem:[%s3984 + $0x2f2] sm:$0xff]
      %v4073 = vld [vmem:[%s3984 + $0x32a] sm:$0xff]
      %v4074 = vld [vmem:[%s3984 + $0x332] sm:$0xff]
      %v4075 = vld [vmem:[%s3984 + $0x36a] sm:$0xff]
      %v4076 = vld [vmem:[%s3984 + $0x372] sm:$0xff]
      %v4077 = vld [vmem:[%s3984 + $0x3aa] sm:$0xff]
      %v4078 = vld [vmem:[%s3984 + $0x3b2] sm:$0xff]
      %v4079 = vld [vmem:[%s3984 + $0x3ea] sm:$0xff]
      %v4080 = vld [vmem:[%s3984 + $0x3f2] sm:$0xff]
      %v4081 = vld [vmem:[%s244 + $0x6] sm:$0xff]
      %v4082 = vld [vmem:[%s244 + $0xe] sm:$0xff]
      %v4083 = vld [vmem:[%s244 + $0x46] sm:$0xff]
      %v4084 = vld [vmem:[%s244 + $0x4e] sm:$0xff]
      %v4085 = vld [vmem:[%s244 + $0x86] sm:$0xff]
      %v4086 = vld [vmem:[%s244 + $0x8e] sm:$0xff]
      %v4087 = vld [vmem:[%s244 + $0xc6] sm:$0xff]
      %v4088 = vld [vmem:[%s244 + $0xce] sm:$0xff]
      %v4089 = vld [vmem:[%s244 + $0x106] sm:$0xff]
      %v4090 = vld [vmem:[%s244 + $0x10e] sm:$0xff]
      %v4091 = vld [vmem:[%s244 + $0x146] sm:$0xff]
      %v4092 = vld [vmem:[%s244 + $0x14e] sm:$0xff]
      %v4093 = vld [vmem:[%s244 + $0x186] sm:$0xff]
      %v4094 = vld [vmem:[%s244 + $0x18e] sm:$0xff]
      %v4095 = vld [vmem:[%s244 + $0x1c6] sm:$0xff]
      %v4096 = vld [vmem:[%s244 + $0x1ce] sm:$0xff]
      %v4097 = vld [vmem:[%s244 + $0x206] sm:$0xff]
      %v4098 = vld [vmem:[%s244 + $0x20e] sm:$0xff]
      %v4099 = vld [vmem:[%s244 + $0x246] sm:$0xff]
      %v4100 = vld [vmem:[%s244 + $0x24e] sm:$0xff]
      %v4101 = vld [vmem:[%s244 + $0x286] sm:$0xff]
      %v4102 = vld [vmem:[%s244 + $0x28e] sm:$0xff]
      %v4103 = vld [vmem:[%s244 + $0x2c6] sm:$0xff]
      %v4104 = vld [vmem:[%s244 + $0x2ce] sm:$0xff]
      %v4105 = vld [vmem:[%s244 + $0x306] sm:$0xff]
      %v4106 = vld [vmem:[%s244 + $0x30e] sm:$0xff]
      %v4107 = vld [vmem:[%s244 + $0x346] sm:$0xff]
      %v4108 = vld [vmem:[%s244 + $0x34e] sm:$0xff]
      %v4109 = vld [vmem:[%s244 + $0x386] sm:$0xff]
      %v4110 = vld [vmem:[%s244 + $0x38e] sm:$0xff]
      %v4111 = vld [vmem:[%s244 + $0x3c6] sm:$0xff]
      %v4112 = vld [vmem:[%s244 + $0x3ce] sm:$0xff]
      %v4113 = vld [vmem:[%s244 + $0x2a] sm:$0xff]
      %v4114 = vld [vmem:[%s244 + $0x32] sm:$0xff]
      %v4115 = vld [vmem:[%s244 + $0x6a] sm:$0xff]
      %v4116 = vld [vmem:[%s244 + $0x72] sm:$0xff]
      %v4117 = vld [vmem:[%s244 + $0xaa] sm:$0xff]
      %v4118 = vld [vmem:[%s244 + $0xb2] sm:$0xff]
      %v4119 = vld [vmem:[%s244 + $0xea] sm:$0xff]
      %v4120 = vld [vmem:[%s244 + $0xf2] sm:$0xff]
      %v4121 = vld [vmem:[%s244 + $0x12a] sm:$0xff]
      %v4122 = vld [vmem:[%s244 + $0x132] sm:$0xff]
      %v4123 = vld [vmem:[%s244 + $0x16a] sm:$0xff]
      %v4124 = vld [vmem:[%s244 + $0x172] sm:$0xff]
      %v4125 = vld [vmem:[%s244 + $0x1aa] sm:$0xff]
      %v4126 = vld [vmem:[%s244 + $0x1b2] sm:$0xff]
      %v4127 = vld [vmem:[%s244 + $0x1ea] sm:$0xff]
      %v4128 = vld [vmem:[%s244 + $0x1f2] sm:$0xff]
      %v4129 = vld [vmem:[%s244 + $0x22a] sm:$0xff]
      %v4130 = vld [vmem:[%s244 + $0x232] sm:$0xff]
      %v4131 = vld [vmem:[%s244 + $0x26a] sm:$0xff]
      %v4132 = vld [vmem:[%s244 + $0x272] sm:$0xff]
      %v4133 = vld [vmem:[%s244 + $0x2aa] sm:$0xff]
      %v4134 = vld [vmem:[%s244 + $0x2b2] sm:$0xff]
      %v4135 = vld [vmem:[%s244 + $0x2ea] sm:$0xff]
      %v4136 = vld [vmem:[%s244 + $0x2f2] sm:$0xff]
      %v4137 = vld [vmem:[%s244 + $0x32a] sm:$0xff]
      %v4138 = vld [vmem:[%s244 + $0x332] sm:$0xff]
      %v4139 = vld [vmem:[%s244 + $0x36a] sm:$0xff]
      %v4140 = vld [vmem:[%s244 + $0x372] sm:$0xff]
      %v4141 = vld [vmem:[%s244 + $0x3aa] sm:$0xff]
      %v4142 = vld [vmem:[%s244 + $0x3b2] sm:$0xff]
      %v4143 = vld [vmem:[%s244 + $0x3ea] sm:$0xff]
      %v4144 = vld [vmem:[%s244 + $0x3f2] sm:$0xff]
      %s4145 = scalar_lea.vmem %s231, 2688
      %v4146 = vld [vmem:[%s4145 + $0x6] sm:$0xff]
      %v4147 = vld [vmem:[%s4145 + $0xe] sm:$0xff]
      %v4148 = vld [vmem:[%s4145 + $0x46] sm:$0xff]
      %v4149 = vld [vmem:[%s4145 + $0x4e] sm:$0xff]
      %v4150 = vld [vmem:[%s4145 + $0x86] sm:$0xff]
      %v4151 = vld [vmem:[%s4145 + $0x8e] sm:$0xff]
      %v4152 = vld [vmem:[%s4145 + $0xc6] sm:$0xff]
      %v4153 = vld [vmem:[%s4145 + $0xce] sm:$0xff]
      %v4154 = vld [vmem:[%s4145 + $0x106] sm:$0xff]
      %v4155 = vld [vmem:[%s4145 + $0x10e] sm:$0xff]
      %v4156 = vld [vmem:[%s4145 + $0x146] sm:$0xff]
      %v4157 = vld [vmem:[%s4145 + $0x14e] sm:$0xff]
      %v4158 = vld [vmem:[%s4145 + $0x186] sm:$0xff]
      %v4159 = vld [vmem:[%s4145 + $0x18e] sm:$0xff]
      %v4160 = vld [vmem:[%s4145 + $0x1c6] sm:$0xff]
      %v4161 = vld [vmem:[%s4145 + $0x1ce] sm:$0xff]
      %v4162 = vld [vmem:[%s4145 + $0x206] sm:$0xff]
      %v4163 = vld [vmem:[%s4145 + $0x20e] sm:$0xff]
      %v4164 = vld [vmem:[%s4145 + $0x246] sm:$0xff]
      %v4165 = vld [vmem:[%s4145 + $0x24e] sm:$0xff]
      %v4166 = vld [vmem:[%s4145 + $0x286] sm:$0xff]
      %v4167 = vld [vmem:[%s4145 + $0x28e] sm:$0xff]
      %v4168 = vld [vmem:[%s4145 + $0x2c6] sm:$0xff]
      %v4169 = vld [vmem:[%s4145 + $0x2ce] sm:$0xff]
      %v4170 = vld [vmem:[%s4145 + $0x306] sm:$0xff]
      %v4171 = vld [vmem:[%s4145 + $0x30e] sm:$0xff]
      %v4172 = vld [vmem:[%s4145 + $0x346] sm:$0xff]
      %v4173 = vld [vmem:[%s4145 + $0x34e] sm:$0xff]
      %v4174 = vld [vmem:[%s4145 + $0x386] sm:$0xff]
      %v4175 = vld [vmem:[%s4145 + $0x38e] sm:$0xff]
      %v4176 = vld [vmem:[%s4145 + $0x3c6] sm:$0xff]
      %v4177 = vld [vmem:[%s4145 + $0x3ce] sm:$0xff]
      %v4178 = vld [vmem:[%s4145 + $0x18] sm:$0xff]
      %v4179 = vld [vmem:[%s4145 + $0x20] sm:$0xff]
      %v4180 = vld [vmem:[%s4145 + $0x58] sm:$0xff]
      %v4181 = vld [vmem:[%s4145 + $0x60] sm:$0xff]
      %v4182 = vld [vmem:[%s4145 + $0x98] sm:$0xff]
      %v4183 = vld [vmem:[%s4145 + $0xa0] sm:$0xff]
      %v4184 = vld [vmem:[%s4145 + $0xd8] sm:$0xff]
      %v4185 = vld [vmem:[%s4145 + $0xe0] sm:$0xff]
      %v4186 = vld [vmem:[%s4145 + $0x118] sm:$0xff]
      %v4187 = vld [vmem:[%s4145 + $0x120] sm:$0xff]
      %v4188 = vld [vmem:[%s4145 + $0x158] sm:$0xff]
      %v4189 = vld [vmem:[%s4145 + $0x160] sm:$0xff]
      %v4190 = vld [vmem:[%s4145 + $0x198] sm:$0xff]
      %v4191 = vld [vmem:[%s4145 + $0x1a0] sm:$0xff]
      %v4192 = vld [vmem:[%s4145 + $0x1d8] sm:$0xff]
      %v4193 = vld [vmem:[%s4145 + $0x1e0] sm:$0xff]
      %v4194 = vld [vmem:[%s4145 + $0x218] sm:$0xff]
      %v4195 = vld [vmem:[%s4145 + $0x220] sm:$0xff]
      %v4196 = vld [vmem:[%s4145 + $0x258] sm:$0xff]
      %v4197 = vld [vmem:[%s4145 + $0x260] sm:$0xff]
      %v4198 = vld [vmem:[%s4145 + $0x298] sm:$0xff]
      %v4199 = vld [vmem:[%s4145 + $0x2a0] sm:$0xff]
      %v4200 = vld [vmem:[%s4145 + $0x2d8] sm:$0xff]
      %v4201 = vld [vmem:[%s4145 + $0x2e0] sm:$0xff]
      %v4202 = vld [vmem:[%s4145 + $0x318] sm:$0xff]
      %v4203 = vld [vmem:[%s4145 + $0x320] sm:$0xff]
      %v4204 = vld [vmem:[%s4145 + $0x358] sm:$0xff]
      %v4205 = vld [vmem:[%s4145 + $0x360] sm:$0xff]
      %v4206 = vld [vmem:[%s4145 + $0x398] sm:$0xff]
      %v4207 = vld [vmem:[%s4145 + $0x3a0] sm:$0xff]
      %v4208 = vld [vmem:[%s4145 + $0x3d8] sm:$0xff]
      %v4209 = vld [vmem:[%s4145 + $0x3e0] sm:$0xff]
      %v4210 = vld [vmem:[%s4145 + $0x2a] sm:$0xff]
      %v4211 = vld [vmem:[%s4145 + $0x32] sm:$0xff]
      %v4212 = vld [vmem:[%s4145 + $0x6a] sm:$0xff]
      %v4213 = vld [vmem:[%s4145 + $0x72] sm:$0xff]
      %v4214 = vld [vmem:[%s4145 + $0xaa] sm:$0xff]
      %v4215 = vld [vmem:[%s4145 + $0xb2] sm:$0xff]
      %v4216 = vld [vmem:[%s4145 + $0xea] sm:$0xff]
      %v4217 = vld [vmem:[%s4145 + $0xf2] sm:$0xff]
      %v4218 = vld [vmem:[%s4145 + $0x12a] sm:$0xff]
      %v4219 = vld [vmem:[%s4145 + $0x132] sm:$0xff]
      %v4220 = vld [vmem:[%s4145 + $0x16a] sm:$0xff]
      %v4221 = vld [vmem:[%s4145 + $0x172] sm:$0xff]
      %v4222 = vld [vmem:[%s4145 + $0x1aa] sm:$0xff]
      %v4223 = vld [vmem:[%s4145 + $0x1b2] sm:$0xff]
      %v4224 = vld [vmem:[%s4145 + $0x1ea] sm:$0xff]
      %v4225 = vld [vmem:[%s4145 + $0x1f2] sm:$0xff]
      %v4226 = vld [vmem:[%s4145 + $0x22a] sm:$0xff]
      %v4227 = vld [vmem:[%s4145 + $0x232] sm:$0xff]
      %v4228 = vld [vmem:[%s4145 + $0x26a] sm:$0xff]
      %v4229 = vld [vmem:[%s4145 + $0x272] sm:$0xff]
      %v4230 = vld [vmem:[%s4145 + $0x2aa] sm:$0xff]
      %v4231 = vld [vmem:[%s4145 + $0x2b2] sm:$0xff]
      %v4232 = vld [vmem:[%s4145 + $0x2ea] sm:$0xff]
      %v4233 = vld [vmem:[%s4145 + $0x2f2] sm:$0xff]
      %v4234 = vld [vmem:[%s4145 + $0x32a] sm:$0xff]
      %v4235 = vld [vmem:[%s4145 + $0x332] sm:$0xff]
      %v4236 = vld [vmem:[%s4145 + $0x36a] sm:$0xff]
      %v4237 = vld [vmem:[%s4145 + $0x372] sm:$0xff]
      %v4238 = vld [vmem:[%s4145 + $0x3aa] sm:$0xff]
      %v4239 = vld [vmem:[%s4145 + $0x3b2] sm:$0xff]
      %v4240 = vld [vmem:[%s4145 + $0x3ea] sm:$0xff]
      %v4241 = vld [vmem:[%s4145 + $0x3f2] sm:$0xff]
      %4274 = vrot.lane.b32.xlu0 %v4017, 8
      %v4275 = vpop.permute.xlu0 %4274
      %4276 = vrot.lane.b32.xlu0 %v4018, 8
      %v4277 = vpop.permute.xlu0 %4276
      %4278 = vrot.lane.b32.xlu0 %v4019, 8
      %v4279 = vpop.permute.xlu0 %4278
      %4280 = vrot.lane.b32.xlu0 %v4020, 8
      %v4281 = vpop.permute.xlu0 %4280
      %4282 = vrot.lane.b32.xlu0 %v4021, 8
      %v4283 = vpop.permute.xlu0 %4282
      %4284 = vrot.lane.b32.xlu0 %v4022, 8
      %v4285 = vpop.permute.xlu0 %4284
      %4286 = vrot.lane.b32.xlu0 %v4023, 8
      %v4287 = vpop.permute.xlu0 %4286
      %4288 = vrot.lane.b32.xlu0 %v4024, 8
      %v4289 = vpop.permute.xlu0 %4288
      %4290 = vrot.lane.b32.xlu0 %v4025, 8
      %v4291 = vpop.permute.xlu0 %4290
      %4292 = vrot.lane.b32.xlu0 %v4026, 8
      %v4293 = vpop.permute.xlu0 %4292
      %4294 = vrot.lane.b32.xlu0 %v4027, 8
      %v4295 = vpop.permute.xlu0 %4294
      %4296 = vrot.lane.b32.xlu0 %v4028, 8
      %v4297 = vpop.permute.xlu0 %4296
      %4298 = vrot.lane.b32.xlu0 %v4029, 8
      %v4299 = vpop.permute.xlu0 %4298
      %4300 = vrot.lane.b32.xlu0 %v4030, 8
      %v4301 = vpop.permute.xlu0 %4300
      %4302 = vrot.lane.b32.xlu0 %v4031, 8
      %v4303 = vpop.permute.xlu0 %4302
      %4304 = vrot.lane.b32.xlu0 %v4032, 8
      %v4305 = vpop.permute.xlu0 %4304
      %4306 = vrot.lane.b32.xlu0 %v4033, 8
      %v4307 = vpop.permute.xlu0 %4306
      %4308 = vrot.lane.b32.xlu0 %v4034, 8
      %v4309 = vpop.permute.xlu0 %4308
      %4310 = vrot.lane.b32.xlu0 %v4035, 8
      %v4311 = vpop.permute.xlu0 %4310
      %4312 = vrot.lane.b32.xlu0 %v4036, 8
      %v4313 = vpop.permute.xlu0 %4312
      %4314 = vrot.lane.b32.xlu0 %v4037, 8
      %v4315 = vpop.permute.xlu0 %4314
      %4316 = vrot.lane.b32.xlu0 %v4038, 8
      %v4317 = vpop.permute.xlu0 %4316
      %4318 = vrot.lane.b32.xlu0 %v4039, 8
      %v4319 = vpop.permute.xlu0 %4318
      %4320 = vrot.lane.b32.xlu0 %v4040, 8
      %v4321 = vpop.permute.xlu0 %4320
      %4322 = vrot.lane.b32.xlu0 %v4041, 8
      %v4323 = vpop.permute.xlu0 %4322
      %4324 = vrot.lane.b32.xlu0 %v4042, 8
      %v4325 = vpop.permute.xlu0 %4324
      %4326 = vrot.lane.b32.xlu0 %v4043, 8
      %v4327 = vpop.permute.xlu0 %4326
      %4328 = vrot.lane.b32.xlu0 %v4044, 8
      %v4329 = vpop.permute.xlu0 %4328
      %4330 = vrot.lane.b32.xlu0 %v4045, 8
      %v4331 = vpop.permute.xlu0 %4330
      %4332 = vrot.lane.b32.xlu0 %v4046, 8
      %v4333 = vpop.permute.xlu0 %4332
      %4334 = vrot.lane.b32.xlu0 %v4047, 8
      %v4335 = vpop.permute.xlu0 %4334
      %4336 = vrot.lane.b32.xlu0 %v4048, 8
      %v4337 = vpop.permute.xlu0 %4336
      %4402 = vrot.lane.b32.xlu0 %v4049, 16
      %v4403 = vpop.permute.xlu0 %4402
      %4404 = vrot.lane.b32.xlu0 %v4050, 16
      %v4405 = vpop.permute.xlu0 %4404
      %4406 = vrot.lane.b32.xlu0 %v4051, 16
      %v4407 = vpop.permute.xlu0 %4406
      %4408 = vrot.lane.b32.xlu0 %v4052, 16
      %v4409 = vpop.permute.xlu0 %4408
      %4410 = vrot.lane.b32.xlu0 %v4053, 16
      %v4411 = vpop.permute.xlu0 %4410
      %4412 = vrot.lane.b32.xlu0 %v4054, 16
      %v4413 = vpop.permute.xlu0 %4412
      %4414 = vrot.lane.b32.xlu0 %v4055, 16
      %v4415 = vpop.permute.xlu0 %4414
      %4416 = vrot.lane.b32.xlu0 %v4056, 16
      %v4417 = vpop.permute.xlu0 %4416
      %4418 = vrot.lane.b32.xlu0 %v4057, 16
      %v4419 = vpop.permute.xlu0 %4418
      %4420 = vrot.lane.b32.xlu0 %v4058, 16
      %v4421 = vpop.permute.xlu0 %4420
      %4422 = vrot.lane.b32.xlu0 %v4059, 16
      %v4423 = vpop.permute.xlu0 %4422
      %4424 = vrot.lane.b32.xlu0 %v4060, 16
      %v4425 = vpop.permute.xlu0 %4424
      %4426 = vrot.lane.b32.xlu0 %v4061, 16
      %v4427 = vpop.permute.xlu0 %4426
      %4428 = vrot.lane.b32.xlu0 %v4062, 16
      %v4429 = vpop.permute.xlu0 %4428
      %4430 = vrot.lane.b32.xlu0 %v4063, 16
      %v4431 = vpop.permute.xlu0 %4430
      %4432 = vrot.lane.b32.xlu0 %v4064, 16
      %v4433 = vpop.permute.xlu0 %4432
      %4434 = vrot.lane.b32.xlu0 %v4065, 16
      %v4435 = vpop.permute.xlu0 %4434
      %4436 = vrot.lane.b32.xlu0 %v4066, 16
      %v4437 = vpop.permute.xlu0 %4436
      %4438 = vrot.lane.b32.xlu0 %v4067, 16
      %v4439 = vpop.permute.xlu0 %4438
      %4440 = vrot.lane.b32.xlu0 %v4068, 16
      %v4441 = vpop.permute.xlu0 %4440
      %4442 = vrot.lane.b32.xlu0 %v4069, 16
      %v4443 = vpop.permute.xlu0 %4442
      %4444 = vrot.lane.b32.xlu0 %v4070, 16
      %v4445 = vpop.permute.xlu0 %4444
      %4446 = vrot.lane.b32.xlu0 %v4071, 16
      %v4447 = vpop.permute.xlu0 %4446
      %4448 = vrot.lane.b32.xlu0 %v4072, 16
      %v4449 = vpop.permute.xlu0 %4448
      %4450 = vrot.lane.b32.xlu0 %v4073, 16
      %v4451 = vpop.permute.xlu0 %4450
      %4452 = vrot.lane.b32.xlu0 %v4074, 16
      %v4453 = vpop.permute.xlu0 %4452
      %4454 = vrot.lane.b32.xlu0 %v4075, 16
      %v4455 = vpop.permute.xlu0 %4454
      %4456 = vrot.lane.b32.xlu0 %v4076, 16
      %v4457 = vpop.permute.xlu0 %4456
      %4458 = vrot.lane.b32.xlu0 %v4077, 16
      %v4459 = vpop.permute.xlu0 %4458
      %4460 = vrot.lane.b32.xlu0 %v4078, 16
      %v4461 = vpop.permute.xlu0 %4460
      %4462 = vrot.lane.b32.xlu0 %v4079, 16
      %v4463 = vpop.permute.xlu0 %4462
      %4464 = vrot.lane.b32.xlu0 %v4080, 16
      %v4465 = vpop.permute.xlu0 %4464
      %4530 = vrot.lane.b32.xlu0 %v4081, 24
      %v4531 = vpop.permute.xlu0 %4530
      %4532 = vrot.lane.b32.xlu0 %v4082, 24
      %v4533 = vpop.permute.xlu0 %4532
      %4534 = vrot.lane.b32.xlu0 %v4083, 24
      %v4535 = vpop.permute.xlu0 %4534
      %4536 = vrot.lane.b32.xlu0 %v4084, 24
      %v4537 = vpop.permute.xlu0 %4536
      %4538 = vrot.lane.b32.xlu0 %v4085, 24
      %v4539 = vpop.permute.xlu0 %4538
      %4540 = vrot.lane.b32.xlu0 %v4086, 24
      %v4541 = vpop.permute.xlu0 %4540
      %4542 = vrot.lane.b32.xlu0 %v4087, 24
      %v4543 = vpop.permute.xlu0 %4542
      %4544 = vrot.lane.b32.xlu0 %v4088, 24
      %v4545 = vpop.permute.xlu0 %4544
      %4546 = vrot.lane.b32.xlu0 %v4089, 24
      %v4547 = vpop.permute.xlu0 %4546
      %4548 = vrot.lane.b32.xlu0 %v4090, 24
      %v4549 = vpop.permute.xlu0 %4548
      %4550 = vrot.lane.b32.xlu0 %v4091, 24
      %v4551 = vpop.permute.xlu0 %4550
      %4552 = vrot.lane.b32.xlu0 %v4092, 24
      %v4553 = vpop.permute.xlu0 %4552
      %4554 = vrot.lane.b32.xlu0 %v4093, 24
      %v4555 = vpop.permute.xlu0 %4554
      %4556 = vrot.lane.b32.xlu0 %v4094, 24
      %v4557 = vpop.permute.xlu0 %4556
      %4558 = vrot.lane.b32.xlu0 %v4095, 24
      %v4559 = vpop.permute.xlu0 %4558
      %4560 = vrot.lane.b32.xlu0 %v4096, 24
      %v4561 = vpop.permute.xlu0 %4560
      %4562 = vrot.lane.b32.xlu0 %v4097, 24
      %v4563 = vpop.permute.xlu0 %4562
      %4564 = vrot.lane.b32.xlu0 %v4098, 24
      %v4565 = vpop.permute.xlu0 %4564
      %4566 = vrot.lane.b32.xlu0 %v4099, 24
      %v4567 = vpop.permute.xlu0 %4566
      %4568 = vrot.lane.b32.xlu0 %v4100, 24
      %v4569 = vpop.permute.xlu0 %4568
      %4570 = vrot.lane.b32.xlu0 %v4101, 24
      %v4571 = vpop.permute.xlu0 %4570
      %4572 = vrot.lane.b32.xlu0 %v4102, 24
      %v4573 = vpop.permute.xlu0 %4572
      %4574 = vrot.lane.b32.xlu0 %v4103, 24
      %v4575 = vpop.permute.xlu0 %4574
      %4576 = vrot.lane.b32.xlu0 %v4104, 24
      %v4577 = vpop.permute.xlu0 %4576
      %4578 = vrot.lane.b32.xlu0 %v4105, 24
      %v4579 = vpop.permute.xlu0 %4578
      %4580 = vrot.lane.b32.xlu0 %v4106, 24
      %v4581 = vpop.permute.xlu0 %4580
      %4582 = vrot.lane.b32.xlu0 %v4107, 24
      %v4583 = vpop.permute.xlu0 %4582
      %4584 = vrot.lane.b32.xlu0 %v4108, 24
      %v4585 = vpop.permute.xlu0 %4584
      %4586 = vrot.lane.b32.xlu0 %v4109, 24
      %v4587 = vpop.permute.xlu0 %4586
      %4588 = vrot.lane.b32.xlu0 %v4110, 24
      %v4589 = vpop.permute.xlu0 %4588
      %4590 = vrot.lane.b32.xlu0 %v4111, 24
      %v4591 = vpop.permute.xlu0 %4590
      %4592 = vrot.lane.b32.xlu0 %v4112, 24
      %v4593 = vpop.permute.xlu0 %4592
      %4658 = vrot.lane.b32.xlu0 %v4113, 40
      %v4659 = vpop.permute.xlu0 %4658
      %4660 = vrot.lane.b32.xlu0 %v4114, 40
      %v4661 = vpop.permute.xlu0 %4660
      %4662 = vrot.lane.b32.xlu0 %v4115, 40
      %v4663 = vpop.permute.xlu0 %4662
      %4664 = vrot.lane.b32.xlu0 %v4116, 40
      %v4665 = vpop.permute.xlu0 %4664
      %4666 = vrot.lane.b32.xlu0 %v4117, 40
      %v4667 = vpop.permute.xlu0 %4666
      %4668 = vrot.lane.b32.xlu0 %v4118, 40
      %v4669 = vpop.permute.xlu0 %4668
      %4670 = vrot.lane.b32.xlu0 %v4119, 40
      %v4671 = vpop.permute.xlu0 %4670
      %4672 = vrot.lane.b32.xlu0 %v4120, 40
      %v4673 = vpop.permute.xlu0 %4672
      %4674 = vrot.lane.b32.xlu0 %v4121, 40
      %v4675 = vpop.permute.xlu0 %4674
      %4676 = vrot.lane.b32.xlu0 %v4122, 40
      %v4677 = vpop.permute.xlu0 %4676
      %4678 = vrot.lane.b32.xlu0 %v4123, 40
      %v4679 = vpop.permute.xlu0 %4678
      %4680 = vrot.lane.b32.xlu0 %v4124, 40
      %v4681 = vpop.permute.xlu0 %4680
      %4682 = vrot.lane.b32.xlu0 %v4125, 40
      %v4683 = vpop.permute.xlu0 %4682
      %4684 = vrot.lane.b32.xlu0 %v4126, 40
      %v4685 = vpop.permute.xlu0 %4684
      %4686 = vrot.lane.b32.xlu0 %v4127, 40
      %v4687 = vpop.permute.xlu0 %4686
      %4688 = vrot.lane.b32.xlu0 %v4128, 40
      %v4689 = vpop.permute.xlu0 %4688
      %4690 = vrot.lane.b32.xlu0 %v4129, 40
      %v4691 = vpop.permute.xlu0 %4690
      %4692 = vrot.lane.b32.xlu0 %v4130, 40
      %v4693 = vpop.permute.xlu0 %4692
      %4694 = vrot.lane.b32.xlu0 %v4131, 40
      %v4695 = vpop.permute.xlu0 %4694
      %4696 = vrot.lane.b32.xlu0 %v4132, 40
      %v4697 = vpop.permute.xlu0 %4696
      %4698 = vrot.lane.b32.xlu0 %v4133, 40
      %v4699 = vpop.permute.xlu0 %4698
      %4700 = vrot.lane.b32.xlu0 %v4134, 40
      %v4701 = vpop.permute.xlu0 %4700
      %4702 = vrot.lane.b32.xlu0 %v4135, 40
      %v4703 = vpop.permute.xlu0 %4702
      %4704 = vrot.lane.b32.xlu0 %v4136, 40
      %v4705 = vpop.permute.xlu0 %4704
      %4706 = vrot.lane.b32.xlu0 %v4137, 40
      %v4707 = vpop.permute.xlu0 %4706
      %4708 = vrot.lane.b32.xlu0 %v4138, 40
      %v4709 = vpop.permute.xlu0 %4708
      %4710 = vrot.lane.b32.xlu0 %v4139, 40
      %v4711 = vpop.permute.xlu0 %4710
      %4712 = vrot.lane.b32.xlu0 %v4140, 40
      %v4713 = vpop.permute.xlu0 %4712
      %4714 = vrot.lane.b32.xlu0 %v4141, 40
      %v4715 = vpop.permute.xlu0 %4714
      %4716 = vrot.lane.b32.xlu0 %v4142, 40
      %v4717 = vpop.permute.xlu0 %4716
      %4718 = vrot.lane.b32.xlu0 %v4143, 40
      %v4719 = vpop.permute.xlu0 %4718
      %4720 = vrot.lane.b32.xlu0 %v4144, 40
      %v4721 = vpop.permute.xlu0 %4720
      %4786 = vrot.lane.b32.xlu0 %v4146, 48
      %v4787 = vpop.permute.xlu0 %4786
      %4788 = vrot.lane.b32.xlu0 %v4147, 48
      %v4789 = vpop.permute.xlu0 %4788
      %4790 = vrot.lane.b32.xlu0 %v4148, 48
      %v4791 = vpop.permute.xlu0 %4790
      %4792 = vrot.lane.b32.xlu0 %v4149, 48
      %v4793 = vpop.permute.xlu0 %4792
      %4794 = vrot.lane.b32.xlu0 %v4150, 48
      %v4795 = vpop.permute.xlu0 %4794
      %4796 = vrot.lane.b32.xlu0 %v4151, 48
      %v4797 = vpop.permute.xlu0 %4796
      %4798 = vrot.lane.b32.xlu0 %v4152, 48
      %v4799 = vpop.permute.xlu0 %4798
      %4800 = vrot.lane.b32.xlu0 %v4153, 48
      %v4801 = vpop.permute.xlu0 %4800
      %4802 = vrot.lane.b32.xlu0 %v4154, 48
      %v4803 = vpop.permute.xlu0 %4802
      %4804 = vrot.lane.b32.xlu0 %v4155, 48
      %v4805 = vpop.permute.xlu0 %4804
      %4806 = vrot.lane.b32.xlu0 %v4156, 48
      %v4807 = vpop.permute.xlu0 %4806
      %4808 = vrot.lane.b32.xlu0 %v4157, 48
      %v4809 = vpop.permute.xlu0 %4808
      %4810 = vrot.lane.b32.xlu0 %v4158, 48
      %v4811 = vpop.permute.xlu0 %4810
      %4812 = vrot.lane.b32.xlu0 %v4159, 48
      %v4813 = vpop.permute.xlu0 %4812
      %4814 = vrot.lane.b32.xlu0 %v4160, 48
      %v4815 = vpop.permute.xlu0 %4814
      %4816 = vrot.lane.b32.xlu0 %v4161, 48
      %v4817 = vpop.permute.xlu0 %4816
      %4818 = vrot.lane.b32.xlu0 %v4162, 48
      %v4819 = vpop.permute.xlu0 %4818
      %4820 = vrot.lane.b32.xlu0 %v4163, 48
      %v4821 = vpop.permute.xlu0 %4820
      %4822 = vrot.lane.b32.xlu0 %v4164, 48
      %v4823 = vpop.permute.xlu0 %4822
      %4824 = vrot.lane.b32.xlu0 %v4165, 48
      %v4825 = vpop.permute.xlu0 %4824
      %4826 = vrot.lane.b32.xlu0 %v4166, 48
      %v4827 = vpop.permute.xlu0 %4826
      %4828 = vrot.lane.b32.xlu0 %v4167, 48
      %v4829 = vpop.permute.xlu0 %4828
      %4830 = vrot.lane.b32.xlu0 %v4168, 48
      %v4831 = vpop.permute.xlu0 %4830
      %4832 = vrot.lane.b32.xlu0 %v4169, 48
      %v4833 = vpop.permute.xlu0 %4832
      %4834 = vrot.lane.b32.xlu0 %v4170, 48
      %v4835 = vpop.permute.xlu0 %4834
      %4836 = vrot.lane.b32.xlu0 %v4171, 48
      %v4837 = vpop.permute.xlu0 %4836
      %4838 = vrot.lane.b32.xlu0 %v4172, 48
      %v4839 = vpop.permute.xlu0 %4838
      %4840 = vrot.lane.b32.xlu0 %v4173, 48
      %v4841 = vpop.permute.xlu0 %4840
      %4842 = vrot.lane.b32.xlu0 %v4174, 48
      %v4843 = vpop.permute.xlu0 %4842
      %4844 = vrot.lane.b32.xlu0 %v4175, 48
      %v4845 = vpop.permute.xlu0 %4844
      %4846 = vrot.lane.b32.xlu0 %v4176, 48
      %v4847 = vpop.permute.xlu0 %4846
      %4848 = vrot.lane.b32.xlu0 %v4177, 48
      %v4849 = vpop.permute.xlu0 %4848
      %4914 = vrot.lane.b32.xlu0 %v4178, 56
      %v4915 = vpop.permute.xlu0 %4914
      %4916 = vrot.lane.b32.xlu0 %v4179, 56
      %v4917 = vpop.permute.xlu0 %4916
      %4918 = vrot.lane.b32.xlu0 %v4180, 56
      %v4919 = vpop.permute.xlu0 %4918
      %4920 = vrot.lane.b32.xlu0 %v4181, 56
      %v4921 = vpop.permute.xlu0 %4920
      %4922 = vrot.lane.b32.xlu0 %v4182, 56
      %v4923 = vpop.permute.xlu0 %4922
      %4924 = vrot.lane.b32.xlu0 %v4183, 56
      %v4925 = vpop.permute.xlu0 %4924
      %4926 = vrot.lane.b32.xlu0 %v4184, 56
      %v4927 = vpop.permute.xlu0 %4926
      %4928 = vrot.lane.b32.xlu0 %v4185, 56
      %v4929 = vpop.permute.xlu0 %4928
      %4930 = vrot.lane.b32.xlu0 %v4186, 56
      %v4931 = vpop.permute.xlu0 %4930
      %4932 = vrot.lane.b32.xlu0 %v4187, 56
      %v4933 = vpop.permute.xlu0 %4932
      %4934 = vrot.lane.b32.xlu0 %v4188, 56
      %v4935 = vpop.permute.xlu0 %4934
      %4936 = vrot.lane.b32.xlu0 %v4189, 56
      %v4937 = vpop.permute.xlu0 %4936
      %4938 = vrot.lane.b32.xlu0 %v4190, 56
      %v4939 = vpop.permute.xlu0 %4938
      %4940 = vrot.lane.b32.xlu0 %v4191, 56
      %v4941 = vpop.permute.xlu0 %4940
      %4942 = vrot.lane.b32.xlu0 %v4192, 56
      %v4943 = vpop.permute.xlu0 %4942
      %4944 = vrot.lane.b32.xlu0 %v4193, 56
      %v4945 = vpop.permute.xlu0 %4944
      %4946 = vrot.lane.b32.xlu0 %v4194, 56
      %v4947 = vpop.permute.xlu0 %4946
      %4948 = vrot.lane.b32.xlu0 %v4195, 56
      %v4949 = vpop.permute.xlu0 %4948
      %4950 = vrot.lane.b32.xlu0 %v4196, 56
      %v4951 = vpop.permute.xlu0 %4950
      %4952 = vrot.lane.b32.xlu0 %v4197, 56
      %v4953 = vpop.permute.xlu0 %4952
      %4954 = vrot.lane.b32.xlu0 %v4198, 56
      %v4955 = vpop.permute.xlu0 %4954
      %4956 = vrot.lane.b32.xlu0 %v4199, 56
      %v4957 = vpop.permute.xlu0 %4956
      %4958 = vrot.lane.b32.xlu0 %v4200, 56
      %v4959 = vpop.permute.xlu0 %4958
      %4960 = vrot.lane.b32.xlu0 %v4201, 56
      %v4961 = vpop.permute.xlu0 %4960
      %4962 = vrot.lane.b32.xlu0 %v4202, 56
      %v4963 = vpop.permute.xlu0 %4962
      %4964 = vrot.lane.b32.xlu0 %v4203, 56
      %v4965 = vpop.permute.xlu0 %4964
      %4966 = vrot.lane.b32.xlu0 %v4204, 56
      %v4967 = vpop.permute.xlu0 %4966
      %4968 = vrot.lane.b32.xlu0 %v4205, 56
      %v4969 = vpop.permute.xlu0 %4968
      %4970 = vrot.lane.b32.xlu0 %v4206, 56
      %v4971 = vpop.permute.xlu0 %4970
      %4972 = vrot.lane.b32.xlu0 %v4207, 56
      %v4973 = vpop.permute.xlu0 %4972
      %4974 = vrot.lane.b32.xlu0 %v4208, 56
      %v4975 = vpop.permute.xlu0 %4974
      %4976 = vrot.lane.b32.xlu0 %v4209, 56
      %v4977 = vpop.permute.xlu0 %4976
      %5042 = vrot.lane.b32.xlu0 %v4210, 64
      %v5043 = vpop.permute.xlu0 %5042
      %5044 = vrot.lane.b32.xlu0 %v4211, 64
      %v5045 = vpop.permute.xlu0 %5044
      %5046 = vrot.lane.b32.xlu0 %v4212, 64
      %v5047 = vpop.permute.xlu0 %5046
      %5048 = vrot.lane.b32.xlu0 %v4213, 64
      %v5049 = vpop.permute.xlu0 %5048
      %5050 = vrot.lane.b32.xlu0 %v4214, 64
      %v5051 = vpop.permute.xlu0 %5050
      %5052 = vrot.lane.b32.xlu0 %v4215, 64
      %v5053 = vpop.permute.xlu0 %5052
      %5054 = vrot.lane.b32.xlu0 %v4216, 64
      %v5055 = vpop.permute.xlu0 %5054
      %5056 = vrot.lane.b32.xlu0 %v4217, 64
      %v5057 = vpop.permute.xlu0 %5056
      %5058 = vrot.lane.b32.xlu0 %v4218, 64
      %v5059 = vpop.permute.xlu0 %5058
      %5060 = vrot.lane.b32.xlu0 %v4219, 64
      %v5061 = vpop.permute.xlu0 %5060
      %5062 = vrot.lane.b32.xlu0 %v4220, 64
      %v5063 = vpop.permute.xlu0 %5062
      %5064 = vrot.lane.b32.xlu0 %v4221, 64
      %v5065 = vpop.permute.xlu0 %5064
      %5066 = vrot.lane.b32.xlu0 %v4222, 64
      %v5067 = vpop.permute.xlu0 %5066
      %5068 = vrot.lane.b32.xlu0 %v4223, 64
      %v5069 = vpop.permute.xlu0 %5068
      %5070 = vrot.lane.b32.xlu0 %v4224, 64
      %v5071 = vpop.permute.xlu0 %5070
      %5072 = vrot.lane.b32.xlu0 %v4225, 64
      %v5073 = vpop.permute.xlu0 %5072
      %5074 = vrot.lane.b32.xlu0 %v4226, 64
      %v5075 = vpop.permute.xlu0 %5074
      %5076 = vrot.lane.b32.xlu0 %v4227, 64
      %v5077 = vpop.permute.xlu0 %5076
      %5078 = vrot.lane.b32.xlu0 %v4228, 64
      %v5079 = vpop.permute.xlu0 %5078
      %5080 = vrot.lane.b32.xlu0 %v4229, 64
      %v5081 = vpop.permute.xlu0 %5080
      %5082 = vrot.lane.b32.xlu0 %v4230, 64
      %v5083 = vpop.permute.xlu0 %5082
      %5084 = vrot.lane.b32.xlu0 %v4231, 64
      %v5085 = vpop.permute.xlu0 %5084
      %5086 = vrot.lane.b32.xlu0 %v4232, 64
      %v5087 = vpop.permute.xlu0 %5086
      %5088 = vrot.lane.b32.xlu0 %v4233, 64
      %v5089 = vpop.permute.xlu0 %5088
      %5090 = vrot.lane.b32.xlu0 %v4234, 64
      %v5091 = vpop.permute.xlu0 %5090
      %5092 = vrot.lane.b32.xlu0 %v4235, 64
      %v5093 = vpop.permute.xlu0 %5092
      %5094 = vrot.lane.b32.xlu0 %v4236, 64
      %v5095 = vpop.permute.xlu0 %5094
      %5096 = vrot.lane.b32.xlu0 %v4237, 64
      %v5097 = vpop.permute.xlu0 %5096
      %5098 = vrot.lane.b32.xlu0 %v4238, 64
      %v5099 = vpop.permute.xlu0 %5098
      %5100 = vrot.lane.b32.xlu0 %v4239, 64
      %v5101 = vpop.permute.xlu0 %5100
      %5102 = vrot.lane.b32.xlu0 %v4240, 64
      %v5103 = vpop.permute.xlu0 %5102
      %5104 = vrot.lane.b32.xlu0 %v4241, 64
      %v5105 = vpop.permute.xlu0 %5104
      %v5138 = vsel %vm277, %v3985, %v4275
      %v5139 = vsel %vm277, %v3986, %v4277
      %v5140 = vsel %vm277, %v3987, %v4279
      %v5141 = vsel %vm277, %v3988, %v4281
      %v5142 = vsel %vm277, %v3989, %v4283
      %v5143 = vsel %vm277, %v3990, %v4285
      %v5144 = vsel %vm277, %v3991, %v4287
      %v5145 = vsel %vm277, %v3992, %v4289
      %v5146 = vsel %vm277, %v3993, %v4291
      %v5147 = vsel %vm277, %v3994, %v4293
      %v5148 = vsel %vm277, %v3995, %v4295
      %v5149 = vsel %vm277, %v3996, %v4297
      %v5150 = vsel %vm277, %v3997, %v4299
      %v5151 = vsel %vm277, %v3998, %v4301
      %v5152 = vsel %vm277, %v3999, %v4303
      %v5153 = vsel %vm277, %v4000, %v4305
      %v5154 = vsel %vm277, %v4001, %v4307
      %v5155 = vsel %vm277, %v4002, %v4309
      %v5156 = vsel %vm277, %v4003, %v4311
      %v5157 = vsel %vm277, %v4004, %v4313
      %v5158 = vsel %vm277, %v4005, %v4315
      %v5159 = vsel %vm277, %v4006, %v4317
      %v5160 = vsel %vm277, %v4007, %v4319
      %v5161 = vsel %vm277, %v4008, %v4321
      %v5162 = vsel %vm277, %v4009, %v4323
      %v5163 = vsel %vm277, %v4010, %v4325
      %v5164 = vsel %vm277, %v4011, %v4327
      %v5165 = vsel %vm277, %v4012, %v4329
      %v5166 = vsel %vm277, %v4013, %v4331
      %v5167 = vsel %vm277, %v4014, %v4333
      %v5168 = vsel %vm277, %v4015, %v4335
      %v5169 = vsel %vm277, %v4016, %v4337
      %v5170 = vsel %vm1905, %v5138, %v4403
      %v5171 = vsel %vm1905, %v5139, %v4405
      %v5172 = vsel %vm1905, %v5140, %v4407
      %v5173 = vsel %vm1905, %v5141, %v4409
      %v5174 = vsel %vm1905, %v5142, %v4411
      %v5175 = vsel %vm1905, %v5143, %v4413
      %v5176 = vsel %vm1905, %v5144, %v4415
      %v5177 = vsel %vm1905, %v5145, %v4417
      %v5178 = vsel %vm1905, %v5146, %v4419
      %v5179 = vsel %vm1905, %v5147, %v4421
      %v5180 = vsel %vm1905, %v5148, %v4423
      %v5181 = vsel %vm1905, %v5149, %v4425
      %v5182 = vsel %vm1905, %v5150, %v4427
      %v5183 = vsel %vm1905, %v5151, %v4429
      %v5184 = vsel %vm1905, %v5152, %v4431
      %v5185 = vsel %vm1905, %v5153, %v4433
      %v5186 = vsel %vm1905, %v5154, %v4435
      %v5187 = vsel %vm1905, %v5155, %v4437
      %v5188 = vsel %vm1905, %v5156, %v4439
      %v5189 = vsel %vm1905, %v5157, %v4441
      %v5190 = vsel %vm1905, %v5158, %v4443
      %v5191 = vsel %vm1905, %v5159, %v4445
      %v5192 = vsel %vm1905, %v5160, %v4447
      %v5193 = vsel %vm1905, %v5161, %v4449
      %v5194 = vsel %vm1905, %v5162, %v4451
      %v5195 = vsel %vm1905, %v5163, %v4453
      %v5196 = vsel %vm1905, %v5164, %v4455
      %v5197 = vsel %vm1905, %v5165, %v4457
      %v5198 = vsel %vm1905, %v5166, %v4459
      %v5199 = vsel %vm1905, %v5167, %v4461
      %v5200 = vsel %vm1905, %v5168, %v4463
      %v5201 = vsel %vm1905, %v5169, %v4465
      %v5202 = vsel %vm1938, %v5170, %v4531
      %v5203 = vsel %vm1938, %v5171, %v4533
      %v5204 = vsel %vm1938, %v5172, %v4535
      %v5205 = vsel %vm1938, %v5173, %v4537
      %v5206 = vsel %vm1938, %v5174, %v4539
      %v5207 = vsel %vm1938, %v5175, %v4541
      %v5208 = vsel %vm1938, %v5176, %v4543
      %v5209 = vsel %vm1938, %v5177, %v4545
      %v5210 = vsel %vm1938, %v5178, %v4547
      %v5211 = vsel %vm1938, %v5179, %v4549
      %v5212 = vsel %vm1938, %v5180, %v4551
      %v5213 = vsel %vm1938, %v5181, %v4553
      %v5214 = vsel %vm1938, %v5182, %v4555
      %v5215 = vsel %vm1938, %v5183, %v4557
      %v5216 = vsel %vm1938, %v5184, %v4559
      %v5217 = vsel %vm1938, %v5185, %v4561
      %v5218 = vsel %vm1938, %v5186, %v4563
      %v5219 = vsel %vm1938, %v5187, %v4565
      %v5220 = vsel %vm1938, %v5188, %v4567
      %v5221 = vsel %vm1938, %v5189, %v4569
      %v5222 = vsel %vm1938, %v5190, %v4571
      %v5223 = vsel %vm1938, %v5191, %v4573
      %v5224 = vsel %vm1938, %v5192, %v4575
      %v5225 = vsel %vm1938, %v5193, %v4577
      %v5226 = vsel %vm1938, %v5194, %v4579
      %v5227 = vsel %vm1938, %v5195, %v4581
      %v5228 = vsel %vm1938, %v5196, %v4583
      %v5229 = vsel %vm1938, %v5197, %v4585
      %v5230 = vsel %vm1938, %v5198, %v4587
      %v5231 = vsel %vm1938, %v5199, %v4589
      %v5232 = vsel %vm1938, %v5200, %v4591
      %v5233 = vsel %vm1938, %v5201, %v4593
      %v5234 = vsel %vm1971, %v5202, %v1266
      %v5235 = vsel %vm1971, %v5203, %v1268
      %v5236 = vsel %vm1971, %v5204, %v1270
      %v5237 = vsel %vm1971, %v5205, %v1272
      %v5238 = vsel %vm1971, %v5206, %v1274
      %v5239 = vsel %vm1971, %v5207, %v1276
      %v5240 = vsel %vm1971, %v5208, %v1278
      %v5241 = vsel %vm1971, %v5209, %v1280
      %v5242 = vsel %vm1971, %v5210, %v1282
      %v5243 = vsel %vm1971, %v5211, %v1284
      %v5244 = vsel %vm1971, %v5212, %v1286
      %v5245 = vsel %vm1971, %v5213, %v1288
      %v5246 = vsel %vm1971, %v5214, %v1290
      %v5247 = vsel %vm1971, %v5215, %v1292
      %v5248 = vsel %vm1971, %v5216, %v1294
      %v5249 = vsel %vm1971, %v5217, %v1296
      %v5250 = vsel %vm1971, %v5218, %v1298
      %v5251 = vsel %vm1971, %v5219, %v1300
      %v5252 = vsel %vm1971, %v5220, %v1302
      %v5253 = vsel %vm1971, %v5221, %v1304
      %v5254 = vsel %vm1971, %v5222, %v1306
      %v5255 = vsel %vm1971, %v5223, %v1308
      %v5256 = vsel %vm1971, %v5224, %v1310
      %v5257 = vsel %vm1971, %v5225, %v1312
      %v5258 = vsel %vm1971, %v5226, %v1314
      %v5259 = vsel %vm1971, %v5227, %v1316
      %v5260 = vsel %vm1971, %v5228, %v1318
      %v5261 = vsel %vm1971, %v5229, %v1320
      %v5262 = vsel %vm1971, %v5230, %v1322
      %v5263 = vsel %vm1971, %v5231, %v1324
      %v5264 = vsel %vm1971, %v5232, %v1326
      %v5265 = vsel %vm1971, %v5233, %v1328
      %v5266 = vsel %vm2004, %v5234, %v4659
      %v5267 = vsel %vm2004, %v5235, %v4661
      %v5268 = vsel %vm2004, %v5236, %v4663
      %v5269 = vsel %vm2004, %v5237, %v4665
      %v5270 = vsel %vm2004, %v5238, %v4667
      %v5271 = vsel %vm2004, %v5239, %v4669
      %v5272 = vsel %vm2004, %v5240, %v4671
      %v5273 = vsel %vm2004, %v5241, %v4673
      %v5274 = vsel %vm2004, %v5242, %v4675
      %v5275 = vsel %vm2004, %v5243, %v4677
      %v5276 = vsel %vm2004, %v5244, %v4679
      %v5277 = vsel %vm2004, %v5245, %v4681
      %v5278 = vsel %vm2004, %v5246, %v4683
      %v5279 = vsel %vm2004, %v5247, %v4685
      %v5280 = vsel %vm2004, %v5248, %v4687
      %v5281 = vsel %vm2004, %v5249, %v4689
      %v5282 = vsel %vm2004, %v5250, %v4691
      %v5283 = vsel %vm2004, %v5251, %v4693
      %v5284 = vsel %vm2004, %v5252, %v4695
      %v5285 = vsel %vm2004, %v5253, %v4697
      %v5286 = vsel %vm2004, %v5254, %v4699
      %v5287 = vsel %vm2004, %v5255, %v4701
      %v5288 = vsel %vm2004, %v5256, %v4703
      %v5289 = vsel %vm2004, %v5257, %v4705
      %v5290 = vsel %vm2004, %v5258, %v4707
      %v5291 = vsel %vm2004, %v5259, %v4709
      %v5292 = vsel %vm2004, %v5260, %v4711
      %v5293 = vsel %vm2004, %v5261, %v4713
      %v5294 = vsel %vm2004, %v5262, %v4715
      %v5295 = vsel %vm2004, %v5263, %v4717
      %v5296 = vsel %vm2004, %v5264, %v4719
      %v5297 = vsel %vm2004, %v5265, %v4721
      %v5298 = vsel %vm2037, %v5266, %v4787
      %v5299 = vsel %vm2037, %v5267, %v4789
      %v5300 = vsel %vm2037, %v5268, %v4791
      %v5301 = vsel %vm2037, %v5269, %v4793
      %v5302 = vsel %vm2037, %v5270, %v4795
      %v5303 = vsel %vm2037, %v5271, %v4797
      %v5304 = vsel %vm2037, %v5272, %v4799
      %v5305 = vsel %vm2037, %v5273, %v4801
      %v5306 = vsel %vm2037, %v5274, %v4803
      %v5307 = vsel %vm2037, %v5275, %v4805
      %v5308 = vsel %vm2037, %v5276, %v4807
      %v5309 = vsel %vm2037, %v5277, %v4809
      %v5310 = vsel %vm2037, %v5278, %v4811
      %v5311 = vsel %vm2037, %v5279, %v4813
      %v5312 = vsel %vm2037, %v5280, %v4815
      %v5313 = vsel %vm2037, %v5281, %v4817
      %v5314 = vsel %vm2037, %v5282, %v4819
      %v5315 = vsel %vm2037, %v5283, %v4821
      %v5316 = vsel %vm2037, %v5284, %v4823
      %v5317 = vsel %vm2037, %v5285, %v4825
      %v5318 = vsel %vm2037, %v5286, %v4827
      %v5319 = vsel %vm2037, %v5287, %v4829
      %v5320 = vsel %vm2037, %v5288, %v4831
      %v5321 = vsel %vm2037, %v5289, %v4833
      %v5322 = vsel %vm2037, %v5290, %v4835
      %v5323 = vsel %vm2037, %v5291, %v4837
      %v5324 = vsel %vm2037, %v5292, %v4839
      %v5325 = vsel %vm2037, %v5293, %v4841
      %v5326 = vsel %vm2037, %v5294, %v4843
      %v5327 = vsel %vm2037, %v5295, %v4845
      %v5328 = vsel %vm2037, %v5296, %v4847
      %v5329 = vsel %vm2037, %v5297, %v4849
      %v5330 = vsel %vm2070, %v5298, %v4915
      %v5331 = vsel %vm2070, %v5299, %v4917
      %v5332 = vsel %vm2070, %v5300, %v4919
      %v5333 = vsel %vm2070, %v5301, %v4921
      %v5334 = vsel %vm2070, %v5302, %v4923
      %v5335 = vsel %vm2070, %v5303, %v4925
      %v5336 = vsel %vm2070, %v5304, %v4927
      %v5337 = vsel %vm2070, %v5305, %v4929
      %v5338 = vsel %vm2070, %v5306, %v4931
      %v5339 = vsel %vm2070, %v5307, %v4933
      %v5340 = vsel %vm2070, %v5308, %v4935
      %v5341 = vsel %vm2070, %v5309, %v4937
      %v5342 = vsel %vm2070, %v5310, %v4939
      %v5343 = vsel %vm2070, %v5311, %v4941
      %v5344 = vsel %vm2070, %v5312, %v4943
      %v5345 = vsel %vm2070, %v5313, %v4945
      %v5346 = vsel %vm2070, %v5314, %v4947
      %v5347 = vsel %vm2070, %v5315, %v4949
      %v5348 = vsel %vm2070, %v5316, %v4951
      %v5349 = vsel %vm2070, %v5317, %v4953
      %v5350 = vsel %vm2070, %v5318, %v4955
      %v5351 = vsel %vm2070, %v5319, %v4957
      %v5352 = vsel %vm2070, %v5320, %v4959
      %v5353 = vsel %vm2070, %v5321, %v4961
      %v5354 = vsel %vm2070, %v5322, %v4963
      %v5355 = vsel %vm2070, %v5323, %v4965
      %v5356 = vsel %vm2070, %v5324, %v4967
      %v5357 = vsel %vm2070, %v5325, %v4969
      %v5358 = vsel %vm2070, %v5326, %v4971
      %v5359 = vsel %vm2070, %v5327, %v4973
      %v5360 = vsel %vm2070, %v5328, %v4975
      %v5361 = vsel %vm2070, %v5329, %v4977
      %v5362 = vsel %vm2103, %v5330, %v5043
      %v5363 = vsel %vm2103, %v5331, %v5045
      %v5364 = vsel %vm2103, %v5332, %v5047
      %v5365 = vsel %vm2103, %v5333, %v5049
      %v5366 = vsel %vm2103, %v5334, %v5051
      %v5367 = vsel %vm2103, %v5335, %v5053
      %v5368 = vsel %vm2103, %v5336, %v5055
      %v5369 = vsel %vm2103, %v5337, %v5057
      %v5370 = vsel %vm2103, %v5338, %v5059
      %v5371 = vsel %vm2103, %v5339, %v5061
      %v5372 = vsel %vm2103, %v5340, %v5063
      %v5373 = vsel %vm2103, %v5341, %v5065
      %v5374 = vsel %vm2103, %v5342, %v5067
      %v5375 = vsel %vm2103, %v5343, %v5069
      %v5376 = vsel %vm2103, %v5344, %v5071
      %v5377 = vsel %vm2103, %v5345, %v5073
      %v5378 = vsel %vm2103, %v5346, %v5075
      %v5379 = vsel %vm2103, %v5347, %v5077
      %v5380 = vsel %vm2103, %v5348, %v5079
      %v5381 = vsel %vm2103, %v5349, %v5081
      %v5382 = vsel %vm2103, %v5350, %v5083
      %v5383 = vsel %vm2103, %v5351, %v5085
      %v5384 = vsel %vm2103, %v5352, %v5087
      %v5385 = vsel %vm2103, %v5353, %v5089
      %v5386 = vsel %vm2103, %v5354, %v5091
      %v5387 = vsel %vm2103, %v5355, %v5093
      %v5388 = vsel %vm2103, %v5356, %v5095
      %v5389 = vsel %vm2103, %v5357, %v5097
      %v5390 = vsel %vm2103, %v5358, %v5099
      %v5391 = vsel %vm2103, %v5359, %v5101
      %v5392 = vsel %vm2103, %v5360, %v5103
      %v5393 = vsel %vm2103, %v5361, %v5105
      %s5394 = scalar_lea.vmem %s2, 144
      %v5395 = vld [vmem:[%s5394] sm:$0xff]
      %v5396 = vld [vmem:[%s5394 + $0x8] sm:$0xff]
      %v5397 = vld [vmem:[%s5394 + $0x10] sm:$0xff]
      %v5398 = vld [vmem:[%s5394 + $0x18] sm:$0xff]
      %v5399 = vld [vmem:[%s5394 + $0x20] sm:$0xff]
      %v5400 = vld [vmem:[%s5394 + $0x28] sm:$0xff]
      %v5401 = vld [vmem:[%s5394 + $0x30] sm:$0xff]
      %v5402 = vld [vmem:[%s5394 + $0x38] sm:$0xff]
      %v5403 = vld [vmem:[%s5394 + $0x40] sm:$0xff]
      %v5405 = vsel %vm2145, %v5362, 0
      %v5408 = vsel %vm2145, %v5363, 0
      %v5411 = vsel %vm2145, %v5364, 0
      %v5414 = vsel %vm2145, %v5365, 0
      %v5417 = vsel %vm2145, %v5366, 0
      %v5420 = vsel %vm2145, %v5367, 0
      %v5423 = vsel %vm2145, %v5368, 0
      %v5426 = vsel %vm2145, %v5369, 0
      %v5429 = vsel %vm2145, %v5370, 0
      %v5432 = vsel %vm2145, %v5371, 0
      %v5435 = vsel %vm2145, %v5372, 0
      %v5438 = vsel %vm2145, %v5373, 0
      %v5441 = vsel %vm2145, %v5374, 0
      %v5444 = vsel %vm2145, %v5375, 0
      %v5447 = vsel %vm2145, %v5376, 0
      %v5450 = vsel %vm2145, %v5377, 0
      %v5453 = vsel %vm2145, %v5378, 0
      %v5456 = vsel %vm2145, %v5379, 0
      %v5459 = vsel %vm2145, %v5380, 0
      %v5462 = vsel %vm2145, %v5381, 0
      %v5465 = vsel %vm2145, %v5382, 0
      %v5468 = vsel %vm2145, %v5383, 0
      %v5471 = vsel %vm2145, %v5384, 0
      %v5474 = vsel %vm2145, %v5385, 0
      %v5477 = vsel %vm2145, %v5386, 0
      %v5480 = vsel %vm2145, %v5387, 0
      %v5483 = vsel %vm2145, %v5388, 0
      %v5486 = vsel %vm2145, %v5389, 0
      %v5489 = vsel %vm2145, %v5390, 0
      %v5492 = vsel %vm2145, %v5391, 0
      %v5495 = vsel %vm2145, %v5392, 0
      %v5498 = vsel %vm2145, %v5393, 0
      %5500 = vmatpush.msra.mxu0 0.0
      %5501 = vmatpush.msra.mxu0 0.0
      %5502 = vmatpush.msra.mxu0 0.0
      %5503 = vmatpush.msra.mxu0 0.0
      %5504 = vmatpush.msra.mxu0 0.0
      %5505 = vmatpush.msra.mxu0 0.0
      %5506 = vmatpush.msra.mxu0 0.0
      %5507 = vmatpush.msra.mxu0 %v5403
      %5508 = vmatpush.msra.mxu0 %v5402
      %5509 = vmatpush.msra.mxu0 %v5401
      %5510 = vmatpush.msra.mxu0 %v5400
      %5511 = vmatpush.msra.mxu0 %v5399
      %5512 = vmatpush.msra.mxu0 %v5398
      %5513 = vmatpush.msra.mxu0 %v5397
      %5514 = vmatpush.msra.mxu0 %v5396
      %5515 = vmatpush.msra.mxu0 %v5395
      %5516 = vmatmul.f32.gmra.mxu0 %v5405
      %v5517 = vpop.f32.mrf.mxu0
      %v5518 = vadd.f32 0.0, %v5517
      %5519 = vmatmul.f32.gmra.mxu0 %v5408
      %v5520 = vpop.f32.mrf.mxu0
      %v5521 = vadd.f32 0.0, %v5520
      %5522 = vmatmul.f32.gmra.mxu0 %v5411
      %v5523 = vpop.f32.mrf.mxu0
      %v5524 = vadd.f32 0.0, %v5523
      %5525 = vmatmul.f32.gmra.mxu0 %v5414
      %v5526 = vpop.f32.mrf.mxu0
      %v5527 = vadd.f32 0.0, %v5526
      %5528 = vmatmul.f32.gmra.mxu0 %v5417
      %v5529 = vpop.f32.mrf.mxu0
      %v5530 = vadd.f32 0.0, %v5529
      %5531 = vmatmul.f32.gmra.mxu0 %v5420
      %v5532 = vpop.f32.mrf.mxu0
      %v5533 = vadd.f32 0.0, %v5532
      %5534 = vmatmul.f32.gmra.mxu0 %v5423
      %v5535 = vpop.f32.mrf.mxu0
      %v5536 = vadd.f32 0.0, %v5535
      %5537 = vmatmul.f32.gmra.mxu0 %v5426
      %v5538 = vpop.f32.mrf.mxu0
      %v5539 = vadd.f32 0.0, %v5538
      %5540 = vmatmul.f32.gmra.mxu0 %v5429
      %v5541 = vpop.f32.mrf.mxu0
      %v5542 = vadd.f32 0.0, %v5541
      %5543 = vmatmul.f32.gmra.mxu0 %v5432
      %v5544 = vpop.f32.mrf.mxu0
      %v5545 = vadd.f32 0.0, %v5544
      %5546 = vmatmul.f32.gmra.mxu0 %v5435
      %v5547 = vpop.f32.mrf.mxu0
      %v5548 = vadd.f32 0.0, %v5547
      %5549 = vmatmul.f32.gmra.mxu0 %v5438
      %v5550 = vpop.f32.mrf.mxu0
      %v5551 = vadd.f32 0.0, %v5550
      %5552 = vmatmul.f32.gmra.mxu0 %v5441
      %v5553 = vpop.f32.mrf.mxu0
      %v5554 = vadd.f32 0.0, %v5553
      %5555 = vmatmul.f32.gmra.mxu0 %v5444
      %v5556 = vpop.f32.mrf.mxu0
      %v5557 = vadd.f32 0.0, %v5556
      %5558 = vmatmul.f32.gmra.mxu0 %v5447
      %v5559 = vpop.f32.mrf.mxu0
      %v5560 = vadd.f32 0.0, %v5559
      %5561 = vmatmul.f32.gmra.mxu0 %v5450
      %v5562 = vpop.f32.mrf.mxu0
      %v5563 = vadd.f32 0.0, %v5562
      %5564 = vmatmul.f32.gmra.mxu0 %v5453
      %v5565 = vpop.f32.mrf.mxu0
      %v5566 = vadd.f32 0.0, %v5565
      %5567 = vmatmul.f32.gmra.mxu0 %v5456
      %v5568 = vpop.f32.mrf.mxu0
      %v5569 = vadd.f32 0.0, %v5568
      %5570 = vmatmul.f32.gmra.mxu0 %v5459
      %v5571 = vpop.f32.mrf.mxu0
      %v5572 = vadd.f32 0.0, %v5571
      %5573 = vmatmul.f32.gmra.mxu0 %v5462
      %v5574 = vpop.f32.mrf.mxu0
      %v5575 = vadd.f32 0.0, %v5574
      %5576 = vmatmul.f32.gmra.mxu0 %v5465
      %v5577 = vpop.f32.mrf.mxu0
      %v5578 = vadd.f32 0.0, %v5577
      %5579 = vmatmul.f32.gmra.mxu0 %v5468
      %v5580 = vpop.f32.mrf.mxu0
      %v5581 = vadd.f32 0.0, %v5580
      %5582 = vmatmul.f32.gmra.mxu0 %v5471
      %v5583 = vpop.f32.mrf.mxu0
      %v5584 = vadd.f32 0.0, %v5583
      %5585 = vmatmul.f32.gmra.mxu0 %v5474
      %v5586 = vpop.f32.mrf.mxu0
      %v5587 = vadd.f32 0.0, %v5586
      %5588 = vmatmul.f32.gmra.mxu0 %v5477
      %v5589 = vpop.f32.mrf.mxu0
      %v5590 = vadd.f32 0.0, %v5589
      %5591 = vmatmul.f32.gmra.mxu0 %v5480
      %v5592 = vpop.f32.mrf.mxu0
      %v5593 = vadd.f32 0.0, %v5592
      %5594 = vmatmul.f32.gmra.mxu0 %v5483
      %v5595 = vpop.f32.mrf.mxu0
      %v5596 = vadd.f32 0.0, %v5595
      %5597 = vmatmul.f32.gmra.mxu0 %v5486
      %v5598 = vpop.f32.mrf.mxu0
      %v5599 = vadd.f32 0.0, %v5598
      %5600 = vmatmul.f32.gmra.mxu0 %v5489
      %v5601 = vpop.f32.mrf.mxu0
      %v5602 = vadd.f32 0.0, %v5601
      %5603 = vmatmul.f32.gmra.mxu0 %v5492
      %v5604 = vpop.f32.mrf.mxu0
      %v5605 = vadd.f32 0.0, %v5604
      %5606 = vmatmul.f32.gmra.mxu0 %v5495
      %v5607 = vpop.f32.mrf.mxu0
      %v5608 = vadd.f32 0.0, %v5607
      %5609 = vmatmul.f32.gmra.mxu0 %v5498
      %v5610 = vpop.f32.mrf.mxu0
      %v5611 = vadd.f32 0.0, %v5610
      %5612 = vdwg.mxu0
      %v5613 = vld [vmem:[%s231] sm:$0xff]
      %v5614 = vld [vmem:[%s231 + $0x8] sm:$0xff]
      %v5615 = vld [vmem:[%s231 + $0x40] sm:$0xff]
      %v5616 = vld [vmem:[%s231 + $0x48] sm:$0xff]
      %v5617 = vld [vmem:[%s231 + $0x80] sm:$0xff]
      %v5618 = vld [vmem:[%s231 + $0x88] sm:$0xff]
      %v5619 = vld [vmem:[%s231 + $0xc0] sm:$0xff]
      %v5620 = vld [vmem:[%s231 + $0xc8] sm:$0xff]
      %v5621 = vld [vmem:[%s231 + $0x100] sm:$0xff]
      %v5622 = vld [vmem:[%s231 + $0x108] sm:$0xff]
      %v5623 = vld [vmem:[%s231 + $0x140] sm:$0xff]
      %v5624 = vld [vmem:[%s231 + $0x148] sm:$0xff]
      %v5625 = vld [vmem:[%s231 + $0x180] sm:$0xff]
      %v5626 = vld [vmem:[%s231 + $0x188] sm:$0xff]
      %v5627 = vld [vmem:[%s231 + $0x1c0] sm:$0xff]
      %v5628 = vld [vmem:[%s231 + $0x1c8] sm:$0xff]
      %v5629 = vld [vmem:[%s231 + $0x200] sm:$0xff]
      %v5630 = vld [vmem:[%s231 + $0x208] sm:$0xff]
      %v5631 = vld [vmem:[%s231 + $0x240] sm:$0xff]
      %v5632 = vld [vmem:[%s231 + $0x248] sm:$0xff]
      %v5633 = vld [vmem:[%s231 + $0x280] sm:$0xff]
      %v5634 = vld [vmem:[%s231 + $0x288] sm:$0xff]
      %v5635 = vld [vmem:[%s231 + $0x2c0] sm:$0xff]
      %v5636 = vld [vmem:[%s231 + $0x2c8] sm:$0xff]
      %v5637 = vld [vmem:[%s231 + $0x300] sm:$0xff]
      %v5638 = vld [vmem:[%s231 + $0x308] sm:$0xff]
      %v5639 = vld [vmem:[%s231 + $0x340] sm:$0xff]
      %v5640 = vld [vmem:[%s231 + $0x348] sm:$0xff]
      %v5641 = vld [vmem:[%s231 + $0x380] sm:$0xff]
      %v5642 = vld [vmem:[%s231 + $0x388] sm:$0xff]
      %v5643 = vld [vmem:[%s231 + $0x3c0] sm:$0xff]
      %v5644 = vld [vmem:[%s231 + $0x3c8] sm:$0xff]
      %v5645 = vld [vmem:[%s231 + $0x18] sm:$0xff]
      %v5646 = vld [vmem:[%s231 + $0x20] sm:$0xff]
      %v5647 = vld [vmem:[%s231 + $0x58] sm:$0xff]
      %v5648 = vld [vmem:[%s231 + $0x60] sm:$0xff]
      %v5649 = vld [vmem:[%s231 + $0x98] sm:$0xff]
      %v5650 = vld [vmem:[%s231 + $0xa0] sm:$0xff]
      %v5651 = vld [vmem:[%s231 + $0xd8] sm:$0xff]
      %v5652 = vld [vmem:[%s231 + $0xe0] sm:$0xff]
      %v5653 = vld [vmem:[%s231 + $0x118] sm:$0xff]
      %v5654 = vld [vmem:[%s231 + $0x120] sm:$0xff]
      %v5655 = vld [vmem:[%s231 + $0x158] sm:$0xff]
      %v5656 = vld [vmem:[%s231 + $0x160] sm:$0xff]
      %v5657 = vld [vmem:[%s231 + $0x198] sm:$0xff]
      %v5658 = vld [vmem:[%s231 + $0x1a0] sm:$0xff]
      %v5659 = vld [vmem:[%s231 + $0x1d8] sm:$0xff]
      %v5660 = vld [vmem:[%s231 + $0x1e0] sm:$0xff]
      %v5661 = vld [vmem:[%s231 + $0x218] sm:$0xff]
      %v5662 = vld [vmem:[%s231 + $0x220] sm:$0xff]
      %v5663 = vld [vmem:[%s231 + $0x258] sm:$0xff]
      %v5664 = vld [vmem:[%s231 + $0x260] sm:$0xff]
      %v5665 = vld [vmem:[%s231 + $0x298] sm:$0xff]
      %v5666 = vld [vmem:[%s231 + $0x2a0] sm:$0xff]
      %v5667 = vld [vmem:[%s231 + $0x2d8] sm:$0xff]
      %v5668 = vld [vmem:[%s231 + $0x2e0] sm:$0xff]
      %v5669 = vld [vmem:[%s231 + $0x318] sm:$0xff]
      %v5670 = vld [vmem:[%s231 + $0x320] sm:$0xff]
      %v5671 = vld [vmem:[%s231 + $0x358] sm:$0xff]
      %v5672 = vld [vmem:[%s231 + $0x360] sm:$0xff]
      %v5673 = vld [vmem:[%s231 + $0x398] sm:$0xff]
      %v5674 = vld [vmem:[%s231 + $0x3a0] sm:$0xff]
      %v5675 = vld [vmem:[%s231 + $0x3d8] sm:$0xff]
      %v5676 = vld [vmem:[%s231 + $0x3e0] sm:$0xff]
      %v5677 = vld [vmem:[%s231 + $0x30] sm:$0xff]
      %v5678 = vld [vmem:[%s231 + $0x38] sm:$0xff]
      %v5679 = vld [vmem:[%s231 + $0x70] sm:$0xff]
      %v5680 = vld [vmem:[%s231 + $0x78] sm:$0xff]
      %v5681 = vld [vmem:[%s231 + $0xb0] sm:$0xff]
      %v5682 = vld [vmem:[%s231 + $0xb8] sm:$0xff]
      %v5683 = vld [vmem:[%s231 + $0xf0] sm:$0xff]
      %v5684 = vld [vmem:[%s231 + $0xf8] sm:$0xff]
      %v5685 = vld [vmem:[%s231 + $0x130] sm:$0xff]
      %v5686 = vld [vmem:[%s231 + $0x138] sm:$0xff]
      %v5687 = vld [vmem:[%s231 + $0x170] sm:$0xff]
      %v5688 = vld [vmem:[%s231 + $0x178] sm:$0xff]
      %v5689 = vld [vmem:[%s231 + $0x1b0] sm:$0xff]
      %v5690 = vld [vmem:[%s231 + $0x1b8] sm:$0xff]
      %v5691 = vld [vmem:[%s231 + $0x1f0] sm:$0xff]
      %v5692 = vld [vmem:[%s231 + $0x1f8] sm:$0xff]
      %v5693 = vld [vmem:[%s231 + $0x230] sm:$0xff]
      %v5694 = vld [vmem:[%s231 + $0x238] sm:$0xff]
      %v5695 = vld [vmem:[%s231 + $0x270] sm:$0xff]
      %v5696 = vld [vmem:[%s231 + $0x278] sm:$0xff]
      %v5697 = vld [vmem:[%s231 + $0x2b0] sm:$0xff]
      %v5698 = vld [vmem:[%s231 + $0x2b8] sm:$0xff]
      %v5699 = vld [vmem:[%s231 + $0x2f0] sm:$0xff]
      %v5700 = vld [vmem:[%s231 + $0x2f8] sm:$0xff]
      %v5701 = vld [vmem:[%s231 + $0x330] sm:$0xff]
      %v5702 = vld [vmem:[%s231 + $0x338] sm:$0xff]
      %v5703 = vld [vmem:[%s231 + $0x370] sm:$0xff]
      %v5704 = vld [vmem:[%s231 + $0x378] sm:$0xff]
      %v5705 = vld [vmem:[%s231 + $0x3b0] sm:$0xff]
      %v5706 = vld [vmem:[%s231 + $0x3b8] sm:$0xff]
      %v5707 = vld [vmem:[%s231 + $0x3f0] sm:$0xff]
      %v5708 = vld [vmem:[%s231 + $0x3f8] sm:$0xff]
      %v5709 = vld [vmem:[%s244] sm:$0xff]
      %v5710 = vld [vmem:[%s244 + $0x8] sm:$0xff]
      %v5711 = vld [vmem:[%s244 + $0x40] sm:$0xff]
      %v5712 = vld [vmem:[%s244 + $0x48] sm:$0xff]
      %v5713 = vld [vmem:[%s244 + $0x80] sm:$0xff]
      %v5714 = vld [vmem:[%s244 + $0x88] sm:$0xff]
      %v5715 = vld [vmem:[%s244 + $0xc0] sm:$0xff]
      %v5716 = vld [vmem:[%s244 + $0xc8] sm:$0xff]
      %v5717 = vld [vmem:[%s244 + $0x100] sm:$0xff]
      %v5718 = vld [vmem:[%s244 + $0x108] sm:$0xff]
      %v5719 = vld [vmem:[%s244 + $0x140] sm:$0xff]
      %v5720 = vld [vmem:[%s244 + $0x148] sm:$0xff]
      %v5721 = vld [vmem:[%s244 + $0x180] sm:$0xff]
      %v5722 = vld [vmem:[%s244 + $0x188] sm:$0xff]
      %v5723 = vld [vmem:[%s244 + $0x1c0] sm:$0xff]
      %v5724 = vld [vmem:[%s244 + $0x1c8] sm:$0xff]
      %v5725 = vld [vmem:[%s244 + $0x200] sm:$0xff]
      %v5726 = vld [vmem:[%s244 + $0x208] sm:$0xff]
      %v5727 = vld [vmem:[%s244 + $0x240] sm:$0xff]
      %v5728 = vld [vmem:[%s244 + $0x248] sm:$0xff]
      %v5729 = vld [vmem:[%s244 + $0x280] sm:$0xff]
      %v5730 = vld [vmem:[%s244 + $0x288] sm:$0xff]
      %v5731 = vld [vmem:[%s244 + $0x2c0] sm:$0xff]
      %v5732 = vld [vmem:[%s244 + $0x2c8] sm:$0xff]
      %v5733 = vld [vmem:[%s244 + $0x300] sm:$0xff]
      %v5734 = vld [vmem:[%s244 + $0x308] sm:$0xff]
      %v5735 = vld [vmem:[%s244 + $0x340] sm:$0xff]
      %v5736 = vld [vmem:[%s244 + $0x348] sm:$0xff]
      %v5737 = vld [vmem:[%s244 + $0x380] sm:$0xff]
      %v5738 = vld [vmem:[%s244 + $0x388] sm:$0xff]
      %v5739 = vld [vmem:[%s244 + $0x3c0] sm:$0xff]
      %v5740 = vld [vmem:[%s244 + $0x3c8] sm:$0xff]
      %v5741 = vld [vmem:[%s244 + $0x30] sm:$0xff]
      %v5742 = vld [vmem:[%s244 + $0x38] sm:$0xff]
      %v5743 = vld [vmem:[%s244 + $0x70] sm:$0xff]
      %v5744 = vld [vmem:[%s244 + $0x78] sm:$0xff]
      %v5745 = vld [vmem:[%s244 + $0xb0] sm:$0xff]
      %v5746 = vld [vmem:[%s244 + $0xb8] sm:$0xff]
      %v5747 = vld [vmem:[%s244 + $0xf0] sm:$0xff]
      %v5748 = vld [vmem:[%s244 + $0xf8] sm:$0xff]
      %v5749 = vld [vmem:[%s244 + $0x130] sm:$0xff]
      %v5750 = vld [vmem:[%s244 + $0x138] sm:$0xff]
      %v5751 = vld [vmem:[%s244 + $0x170] sm:$0xff]
      %v5752 = vld [vmem:[%s244 + $0x178] sm:$0xff]
      %v5753 = vld [vmem:[%s244 + $0x1b0] sm:$0xff]
      %v5754 = vld [vmem:[%s244 + $0x1b8] sm:$0xff]
      %v5755 = vld [vmem:[%s244 + $0x1f0] sm:$0xff]
      %v5756 = vld [vmem:[%s244 + $0x1f8] sm:$0xff]
      %v5757 = vld [vmem:[%s244 + $0x230] sm:$0xff]
      %v5758 = vld [vmem:[%s244 + $0x238] sm:$0xff]
      %v5759 = vld [vmem:[%s244 + $0x270] sm:$0xff]
      %v5760 = vld [vmem:[%s244 + $0x278] sm:$0xff]
      %v5761 = vld [vmem:[%s244 + $0x2b0] sm:$0xff]
      %v5762 = vld [vmem:[%s244 + $0x2b8] sm:$0xff]
      %v5763 = vld [vmem:[%s244 + $0x2f0] sm:$0xff]
      %v5764 = vld [vmem:[%s244 + $0x2f8] sm:$0xff]
      %v5765 = vld [vmem:[%s244 + $0x330] sm:$0xff]
      %v5766 = vld [vmem:[%s244 + $0x338] sm:$0xff]
      %v5767 = vld [vmem:[%s244 + $0x370] sm:$0xff]
      %v5768 = vld [vmem:[%s244 + $0x378] sm:$0xff]
      %v5769 = vld [vmem:[%s244 + $0x3b0] sm:$0xff]
      %v5770 = vld [vmem:[%s244 + $0x3b8] sm:$0xff]
      %v5771 = vld [vmem:[%s244 + $0x3f0] sm:$0xff]
      %v5772 = vld [vmem:[%s244 + $0x3f8] sm:$0xff]
      %s5773 = scalar_lea.vmem %s231, 3072
      %v5774 = vld [vmem:[%s5773] sm:$0xff]
      %v5775 = vld [vmem:[%s5773 + $0x8] sm:$0xff]
      %v5776 = vld [vmem:[%s5773 + $0x40] sm:$0xff]
      %v5777 = vld [vmem:[%s5773 + $0x48] sm:$0xff]
      %v5778 = vld [vmem:[%s5773 + $0x80] sm:$0xff]
      %v5779 = vld [vmem:[%s5773 + $0x88] sm:$0xff]
      %v5780 = vld [vmem:[%s5773 + $0xc0] sm:$0xff]
      %v5781 = vld [vmem:[%s5773 + $0xc8] sm:$0xff]
      %v5782 = vld [vmem:[%s5773 + $0x100] sm:$0xff]
      %v5783 = vld [vmem:[%s5773 + $0x108] sm:$0xff]
      %v5784 = vld [vmem:[%s5773 + $0x140] sm:$0xff]
      %v5785 = vld [vmem:[%s5773 + $0x148] sm:$0xff]
      %v5786 = vld [vmem:[%s5773 + $0x180] sm:$0xff]
      %v5787 = vld [vmem:[%s5773 + $0x188] sm:$0xff]
      %v5788 = vld [vmem:[%s5773 + $0x1c0] sm:$0xff]
      %v5789 = vld [vmem:[%s5773 + $0x1c8] sm:$0xff]
      %v5790 = vld [vmem:[%s5773 + $0x200] sm:$0xff]
      %v5791 = vld [vmem:[%s5773 + $0x208] sm:$0xff]
      %v5792 = vld [vmem:[%s5773 + $0x240] sm:$0xff]
      %v5793 = vld [vmem:[%s5773 + $0x248] sm:$0xff]
      %v5794 = vld [vmem:[%s5773 + $0x280] sm:$0xff]
      %v5795 = vld [vmem:[%s5773 + $0x288] sm:$0xff]
      %v5796 = vld [vmem:[%s5773 + $0x2c0] sm:$0xff]
      %v5797 = vld [vmem:[%s5773 + $0x2c8] sm:$0xff]
      %v5798 = vld [vmem:[%s5773 + $0x300] sm:$0xff]
      %v5799 = vld [vmem:[%s5773 + $0x308] sm:$0xff]
      %v5800 = vld [vmem:[%s5773 + $0x340] sm:$0xff]
      %v5801 = vld [vmem:[%s5773 + $0x348] sm:$0xff]
      %v5802 = vld [vmem:[%s5773 + $0x380] sm:$0xff]
      %v5803 = vld [vmem:[%s5773 + $0x388] sm:$0xff]
      %v5804 = vld [vmem:[%s5773 + $0x3c0] sm:$0xff]
      %v5805 = vld [vmem:[%s5773 + $0x3c8] sm:$0xff]
      %v5806 = vld [vmem:[%s5773 + $0x18] sm:$0xff]
      %v5807 = vld [vmem:[%s5773 + $0x20] sm:$0xff]
      %v5808 = vld [vmem:[%s5773 + $0x58] sm:$0xff]
      %v5809 = vld [vmem:[%s5773 + $0x60] sm:$0xff]
      %v5810 = vld [vmem:[%s5773 + $0x98] sm:$0xff]
      %v5811 = vld [vmem:[%s5773 + $0xa0] sm:$0xff]
      %v5812 = vld [vmem:[%s5773 + $0xd8] sm:$0xff]
      %v5813 = vld [vmem:[%s5773 + $0xe0] sm:$0xff]
      %v5814 = vld [vmem:[%s5773 + $0x118] sm:$0xff]
      %v5815 = vld [vmem:[%s5773 + $0x120] sm:$0xff]
      %v5816 = vld [vmem:[%s5773 + $0x158] sm:$0xff]
      %v5817 = vld [vmem:[%s5773 + $0x160] sm:$0xff]
      %v5818 = vld [vmem:[%s5773 + $0x198] sm:$0xff]
      %v5819 = vld [vmem:[%s5773 + $0x1a0] sm:$0xff]
      %v5820 = vld [vmem:[%s5773 + $0x1d8] sm:$0xff]
      %v5821 = vld [vmem:[%s5773 + $0x1e0] sm:$0xff]
      %v5822 = vld [vmem:[%s5773 + $0x218] sm:$0xff]
      %v5823 = vld [vmem:[%s5773 + $0x220] sm:$0xff]
      %v5824 = vld [vmem:[%s5773 + $0x258] sm:$0xff]
      %v5825 = vld [vmem:[%s5773 + $0x260] sm:$0xff]
      %v5826 = vld [vmem:[%s5773 + $0x298] sm:$0xff]
      %v5827 = vld [vmem:[%s5773 + $0x2a0] sm:$0xff]
      %v5828 = vld [vmem:[%s5773 + $0x2d8] sm:$0xff]
      %v5829 = vld [vmem:[%s5773 + $0x2e0] sm:$0xff]
      %v5830 = vld [vmem:[%s5773 + $0x318] sm:$0xff]
      %v5831 = vld [vmem:[%s5773 + $0x320] sm:$0xff]
      %v5832 = vld [vmem:[%s5773 + $0x358] sm:$0xff]
      %v5833 = vld [vmem:[%s5773 + $0x360] sm:$0xff]
      %v5834 = vld [vmem:[%s5773 + $0x398] sm:$0xff]
      %v5835 = vld [vmem:[%s5773 + $0x3a0] sm:$0xff]
      %v5836 = vld [vmem:[%s5773 + $0x3d8] sm:$0xff]
      %v5837 = vld [vmem:[%s5773 + $0x3e0] sm:$0xff]
      %v5838 = vld [vmem:[%s5773 + $0x30] sm:$0xff]
      %v5839 = vld [vmem:[%s5773 + $0x38] sm:$0xff]
      %v5840 = vld [vmem:[%s5773 + $0x70] sm:$0xff]
      %v5841 = vld [vmem:[%s5773 + $0x78] sm:$0xff]
      %v5842 = vld [vmem:[%s5773 + $0xb0] sm:$0xff]
      %v5843 = vld [vmem:[%s5773 + $0xb8] sm:$0xff]
      %v5844 = vld [vmem:[%s5773 + $0xf0] sm:$0xff]
      %v5845 = vld [vmem:[%s5773 + $0xf8] sm:$0xff]
      %v5846 = vld [vmem:[%s5773 + $0x130] sm:$0xff]
      %v5847 = vld [vmem:[%s5773 + $0x138] sm:$0xff]
      %v5848 = vld [vmem:[%s5773 + $0x170] sm:$0xff]
      %v5849 = vld [vmem:[%s5773 + $0x178] sm:$0xff]
      %v5850 = vld [vmem:[%s5773 + $0x1b0] sm:$0xff]
      %v5851 = vld [vmem:[%s5773 + $0x1b8] sm:$0xff]
      %v5852 = vld [vmem:[%s5773 + $0x1f0] sm:$0xff]
      %v5853 = vld [vmem:[%s5773 + $0x1f8] sm:$0xff]
      %v5854 = vld [vmem:[%s5773 + $0x230] sm:$0xff]
      %v5855 = vld [vmem:[%s5773 + $0x238] sm:$0xff]
      %v5856 = vld [vmem:[%s5773 + $0x270] sm:$0xff]
      %v5857 = vld [vmem:[%s5773 + $0x278] sm:$0xff]
      %v5858 = vld [vmem:[%s5773 + $0x2b0] sm:$0xff]
      %v5859 = vld [vmem:[%s5773 + $0x2b8] sm:$0xff]
      %v5860 = vld [vmem:[%s5773 + $0x2f0] sm:$0xff]
      %v5861 = vld [vmem:[%s5773 + $0x2f8] sm:$0xff]
      %v5862 = vld [vmem:[%s5773 + $0x330] sm:$0xff]
      %v5863 = vld [vmem:[%s5773 + $0x338] sm:$0xff]
      %v5864 = vld [vmem:[%s5773 + $0x370] sm:$0xff]
      %v5865 = vld [vmem:[%s5773 + $0x378] sm:$0xff]
      %v5866 = vld [vmem:[%s5773 + $0x3b0] sm:$0xff]
      %v5867 = vld [vmem:[%s5773 + $0x3b8] sm:$0xff]
      %v5868 = vld [vmem:[%s5773 + $0x3f0] sm:$0xff]
      %v5869 = vld [vmem:[%s5773 + $0x3f8] sm:$0xff]
      %5902 = vrot.lane.b32.xlu0 %v5645, 8
      %v5903 = vpop.permute.xlu0 %5902
      %5904 = vrot.lane.b32.xlu0 %v5646, 8
      %v5905 = vpop.permute.xlu0 %5904
      %5906 = vrot.lane.b32.xlu0 %v5647, 8
      %v5907 = vpop.permute.xlu0 %5906
      %5908 = vrot.lane.b32.xlu0 %v5648, 8
      %v5909 = vpop.permute.xlu0 %5908
      %5910 = vrot.lane.b32.xlu0 %v5649, 8
      %v5911 = vpop.permute.xlu0 %5910
      %5912 = vrot.lane.b32.xlu0 %v5650, 8
      %v5913 = vpop.permute.xlu0 %5912
      %5914 = vrot.lane.b32.xlu0 %v5651, 8
      %v5915 = vpop.permute.xlu0 %5914
      %5916 = vrot.lane.b32.xlu0 %v5652, 8
      %v5917 = vpop.permute.xlu0 %5916
      %5918 = vrot.lane.b32.xlu0 %v5653, 8
      %v5919 = vpop.permute.xlu0 %5918
      %5920 = vrot.lane.b32.xlu0 %v5654, 8
      %v5921 = vpop.permute.xlu0 %5920
      %5922 = vrot.lane.b32.xlu0 %v5655, 8
      %v5923 = vpop.permute.xlu0 %5922
      %5924 = vrot.lane.b32.xlu0 %v5656, 8
      %v5925 = vpop.permute.xlu0 %5924
      %5926 = vrot.lane.b32.xlu0 %v5657, 8
      %v5927 = vpop.permute.xlu0 %5926
      %5928 = vrot.lane.b32.xlu0 %v5658, 8
      %v5929 = vpop.permute.xlu0 %5928
      %5930 = vrot.lane.b32.xlu0 %v5659, 8
      %v5931 = vpop.permute.xlu0 %5930
      %5932 = vrot.lane.b32.xlu0 %v5660, 8
      %v5933 = vpop.permute.xlu0 %5932
      %5934 = vrot.lane.b32.xlu0 %v5661, 8
      %v5935 = vpop.permute.xlu0 %5934
      %5936 = vrot.lane.b32.xlu0 %v5662, 8
      %v5937 = vpop.permute.xlu0 %5936
      %5938 = vrot.lane.b32.xlu0 %v5663, 8
      %v5939 = vpop.permute.xlu0 %5938
      %5940 = vrot.lane.b32.xlu0 %v5664, 8
      %v5941 = vpop.permute.xlu0 %5940
      %5942 = vrot.lane.b32.xlu0 %v5665, 8
      %v5943 = vpop.permute.xlu0 %5942
      %5944 = vrot.lane.b32.xlu0 %v5666, 8
      %v5945 = vpop.permute.xlu0 %5944
      %5946 = vrot.lane.b32.xlu0 %v5667, 8
      %v5947 = vpop.permute.xlu0 %5946
      %5948 = vrot.lane.b32.xlu0 %v5668, 8
      %v5949 = vpop.permute.xlu0 %5948
      %5950 = vrot.lane.b32.xlu0 %v5669, 8
      %v5951 = vpop.permute.xlu0 %5950
      %5952 = vrot.lane.b32.xlu0 %v5670, 8
      %v5953 = vpop.permute.xlu0 %5952
      %5954 = vrot.lane.b32.xlu0 %v5671, 8
      %v5955 = vpop.permute.xlu0 %5954
      %5956 = vrot.lane.b32.xlu0 %v5672, 8
      %v5957 = vpop.permute.xlu0 %5956
      %5958 = vrot.lane.b32.xlu0 %v5673, 8
      %v5959 = vpop.permute.xlu0 %5958
      %5960 = vrot.lane.b32.xlu0 %v5674, 8
      %v5961 = vpop.permute.xlu0 %5960
      %5962 = vrot.lane.b32.xlu0 %v5675, 8
      %v5963 = vpop.permute.xlu0 %5962
      %5964 = vrot.lane.b32.xlu0 %v5676, 8
      %v5965 = vpop.permute.xlu0 %5964
      %6030 = vrot.lane.b32.xlu0 %v5677, 16
      %v6031 = vpop.permute.xlu0 %6030
      %6032 = vrot.lane.b32.xlu0 %v5678, 16
      %v6033 = vpop.permute.xlu0 %6032
      %6034 = vrot.lane.b32.xlu0 %v5679, 16
      %v6035 = vpop.permute.xlu0 %6034
      %6036 = vrot.lane.b32.xlu0 %v5680, 16
      %v6037 = vpop.permute.xlu0 %6036
      %6038 = vrot.lane.b32.xlu0 %v5681, 16
      %v6039 = vpop.permute.xlu0 %6038
      %6040 = vrot.lane.b32.xlu0 %v5682, 16
      %v6041 = vpop.permute.xlu0 %6040
      %6042 = vrot.lane.b32.xlu0 %v5683, 16
      %v6043 = vpop.permute.xlu0 %6042
      %6044 = vrot.lane.b32.xlu0 %v5684, 16
      %v6045 = vpop.permute.xlu0 %6044
      %6046 = vrot.lane.b32.xlu0 %v5685, 16
      %v6047 = vpop.permute.xlu0 %6046
      %6048 = vrot.lane.b32.xlu0 %v5686, 16
      %v6049 = vpop.permute.xlu0 %6048
      %6050 = vrot.lane.b32.xlu0 %v5687, 16
      %v6051 = vpop.permute.xlu0 %6050
      %6052 = vrot.lane.b32.xlu0 %v5688, 16
      %v6053 = vpop.permute.xlu0 %6052
      %6054 = vrot.lane.b32.xlu0 %v5689, 16
      %v6055 = vpop.permute.xlu0 %6054
      %6056 = vrot.lane.b32.xlu0 %v5690, 16
      %v6057 = vpop.permute.xlu0 %6056
      %6058 = vrot.lane.b32.xlu0 %v5691, 16
      %v6059 = vpop.permute.xlu0 %6058
      %6060 = vrot.lane.b32.xlu0 %v5692, 16
      %v6061 = vpop.permute.xlu0 %6060
      %6062 = vrot.lane.b32.xlu0 %v5693, 16
      %v6063 = vpop.permute.xlu0 %6062
      %6064 = vrot.lane.b32.xlu0 %v5694, 16
      %v6065 = vpop.permute.xlu0 %6064
      %6066 = vrot.lane.b32.xlu0 %v5695, 16
      %v6067 = vpop.permute.xlu0 %6066
      %6068 = vrot.lane.b32.xlu0 %v5696, 16
      %v6069 = vpop.permute.xlu0 %6068
      %6070 = vrot.lane.b32.xlu0 %v5697, 16
      %v6071 = vpop.permute.xlu0 %6070
      %6072 = vrot.lane.b32.xlu0 %v5698, 16
      %v6073 = vpop.permute.xlu0 %6072
      %6074 = vrot.lane.b32.xlu0 %v5699, 16
      %v6075 = vpop.permute.xlu0 %6074
      %6076 = vrot.lane.b32.xlu0 %v5700, 16
      %v6077 = vpop.permute.xlu0 %6076
      %6078 = vrot.lane.b32.xlu0 %v5701, 16
      %v6079 = vpop.permute.xlu0 %6078
      %6080 = vrot.lane.b32.xlu0 %v5702, 16
      %v6081 = vpop.permute.xlu0 %6080
      %6082 = vrot.lane.b32.xlu0 %v5703, 16
      %v6083 = vpop.permute.xlu0 %6082
      %6084 = vrot.lane.b32.xlu0 %v5704, 16
      %v6085 = vpop.permute.xlu0 %6084
      %6086 = vrot.lane.b32.xlu0 %v5705, 16
      %v6087 = vpop.permute.xlu0 %6086
      %6088 = vrot.lane.b32.xlu0 %v5706, 16
      %v6089 = vpop.permute.xlu0 %6088
      %6090 = vrot.lane.b32.xlu0 %v5707, 16
      %v6091 = vpop.permute.xlu0 %6090
      %6092 = vrot.lane.b32.xlu0 %v5708, 16
      %v6093 = vpop.permute.xlu0 %6092
      %6158 = vrot.lane.b32.xlu0 %v5709, 24
      %v6159 = vpop.permute.xlu0 %6158
      %6160 = vrot.lane.b32.xlu0 %v5710, 24
      %v6161 = vpop.permute.xlu0 %6160
      %6162 = vrot.lane.b32.xlu0 %v5711, 24
      %v6163 = vpop.permute.xlu0 %6162
      %6164 = vrot.lane.b32.xlu0 %v5712, 24
      %v6165 = vpop.permute.xlu0 %6164
      %6166 = vrot.lane.b32.xlu0 %v5713, 24
      %v6167 = vpop.permute.xlu0 %6166
      %6168 = vrot.lane.b32.xlu0 %v5714, 24
      %v6169 = vpop.permute.xlu0 %6168
      %6170 = vrot.lane.b32.xlu0 %v5715, 24
      %v6171 = vpop.permute.xlu0 %6170
      %6172 = vrot.lane.b32.xlu0 %v5716, 24
      %v6173 = vpop.permute.xlu0 %6172
      %6174 = vrot.lane.b32.xlu0 %v5717, 24
      %v6175 = vpop.permute.xlu0 %6174
      %6176 = vrot.lane.b32.xlu0 %v5718, 24
      %v6177 = vpop.permute.xlu0 %6176
      %6178 = vrot.lane.b32.xlu0 %v5719, 24
      %v6179 = vpop.permute.xlu0 %6178
      %6180 = vrot.lane.b32.xlu0 %v5720, 24
      %v6181 = vpop.permute.xlu0 %6180
      %6182 = vrot.lane.b32.xlu0 %v5721, 24
      %v6183 = vpop.permute.xlu0 %6182
      %6184 = vrot.lane.b32.xlu0 %v5722, 24
      %v6185 = vpop.permute.xlu0 %6184
      %6186 = vrot.lane.b32.xlu0 %v5723, 24
      %v6187 = vpop.permute.xlu0 %6186
      %6188 = vrot.lane.b32.xlu0 %v5724, 24
      %v6189 = vpop.permute.xlu0 %6188
      %6190 = vrot.lane.b32.xlu0 %v5725, 24
      %v6191 = vpop.permute.xlu0 %6190
      %6192 = vrot.lane.b32.xlu0 %v5726, 24
      %v6193 = vpop.permute.xlu0 %6192
      %6194 = vrot.lane.b32.xlu0 %v5727, 24
      %v6195 = vpop.permute.xlu0 %6194
      %6196 = vrot.lane.b32.xlu0 %v5728, 24
      %v6197 = vpop.permute.xlu0 %6196
      %6198 = vrot.lane.b32.xlu0 %v5729, 24
      %v6199 = vpop.permute.xlu0 %6198
      %6200 = vrot.lane.b32.xlu0 %v5730, 24
      %v6201 = vpop.permute.xlu0 %6200
      %6202 = vrot.lane.b32.xlu0 %v5731, 24
      %v6203 = vpop.permute.xlu0 %6202
      %6204 = vrot.lane.b32.xlu0 %v5732, 24
      %v6205 = vpop.permute.xlu0 %6204
      %6206 = vrot.lane.b32.xlu0 %v5733, 24
      %v6207 = vpop.permute.xlu0 %6206
      %6208 = vrot.lane.b32.xlu0 %v5734, 24
      %v6209 = vpop.permute.xlu0 %6208
      %6210 = vrot.lane.b32.xlu0 %v5735, 24
      %v6211 = vpop.permute.xlu0 %6210
      %6212 = vrot.lane.b32.xlu0 %v5736, 24
      %v6213 = vpop.permute.xlu0 %6212
      %6214 = vrot.lane.b32.xlu0 %v5737, 24
      %v6215 = vpop.permute.xlu0 %6214
      %6216 = vrot.lane.b32.xlu0 %v5738, 24
      %v6217 = vpop.permute.xlu0 %6216
      %6218 = vrot.lane.b32.xlu0 %v5739, 24
      %v6219 = vpop.permute.xlu0 %6218
      %6220 = vrot.lane.b32.xlu0 %v5740, 24
      %v6221 = vpop.permute.xlu0 %6220
      %6286 = vrot.lane.b32.xlu0 %v5741, 40
      %v6287 = vpop.permute.xlu0 %6286
      %6288 = vrot.lane.b32.xlu0 %v5742, 40
      %v6289 = vpop.permute.xlu0 %6288
      %6290 = vrot.lane.b32.xlu0 %v5743, 40
      %v6291 = vpop.permute.xlu0 %6290
      %6292 = vrot.lane.b32.xlu0 %v5744, 40
      %v6293 = vpop.permute.xlu0 %6292
      %6294 = vrot.lane.b32.xlu0 %v5745, 40
      %v6295 = vpop.permute.xlu0 %6294
      %6296 = vrot.lane.b32.xlu0 %v5746, 40
      %v6297 = vpop.permute.xlu0 %6296
      %6298 = vrot.lane.b32.xlu0 %v5747, 40
      %v6299 = vpop.permute.xlu0 %6298
      %6300 = vrot.lane.b32.xlu0 %v5748, 40
      %v6301 = vpop.permute.xlu0 %6300
      %6302 = vrot.lane.b32.xlu0 %v5749, 40
      %v6303 = vpop.permute.xlu0 %6302
      %6304 = vrot.lane.b32.xlu0 %v5750, 40
      %v6305 = vpop.permute.xlu0 %6304
      %6306 = vrot.lane.b32.xlu0 %v5751, 40
      %v6307 = vpop.permute.xlu0 %6306
      %6308 = vrot.lane.b32.xlu0 %v5752, 40
      %v6309 = vpop.permute.xlu0 %6308
      %6310 = vrot.lane.b32.xlu0 %v5753, 40
      %v6311 = vpop.permute.xlu0 %6310
      %6312 = vrot.lane.b32.xlu0 %v5754, 40
      %v6313 = vpop.permute.xlu0 %6312
      %6314 = vrot.lane.b32.xlu0 %v5755, 40
      %v6315 = vpop.permute.xlu0 %6314
      %6316 = vrot.lane.b32.xlu0 %v5756, 40
      %v6317 = vpop.permute.xlu0 %6316
      %6318 = vrot.lane.b32.xlu0 %v5757, 40
      %v6319 = vpop.permute.xlu0 %6318
      %6320 = vrot.lane.b32.xlu0 %v5758, 40
      %v6321 = vpop.permute.xlu0 %6320
      %6322 = vrot.lane.b32.xlu0 %v5759, 40
      %v6323 = vpop.permute.xlu0 %6322
      %6324 = vrot.lane.b32.xlu0 %v5760, 40
      %v6325 = vpop.permute.xlu0 %6324
      %6326 = vrot.lane.b32.xlu0 %v5761, 40
      %v6327 = vpop.permute.xlu0 %6326
      %6328 = vrot.lane.b32.xlu0 %v5762, 40
      %v6329 = vpop.permute.xlu0 %6328
      %6330 = vrot.lane.b32.xlu0 %v5763, 40
      %v6331 = vpop.permute.xlu0 %6330
      %6332 = vrot.lane.b32.xlu0 %v5764, 40
      %v6333 = vpop.permute.xlu0 %6332
      %6334 = vrot.lane.b32.xlu0 %v5765, 40
      %v6335 = vpop.permute.xlu0 %6334
      %6336 = vrot.lane.b32.xlu0 %v5766, 40
      %v6337 = vpop.permute.xlu0 %6336
      %6338 = vrot.lane.b32.xlu0 %v5767, 40
      %v6339 = vpop.permute.xlu0 %6338
      %6340 = vrot.lane.b32.xlu0 %v5768, 40
      %v6341 = vpop.permute.xlu0 %6340
      %6342 = vrot.lane.b32.xlu0 %v5769, 40
      %v6343 = vpop.permute.xlu0 %6342
      %6344 = vrot.lane.b32.xlu0 %v5770, 40
      %v6345 = vpop.permute.xlu0 %6344
      %6346 = vrot.lane.b32.xlu0 %v5771, 40
      %v6347 = vpop.permute.xlu0 %6346
      %6348 = vrot.lane.b32.xlu0 %v5772, 40
      %v6349 = vpop.permute.xlu0 %6348
      %6414 = vrot.lane.b32.xlu0 %v5774, 48
      %v6415 = vpop.permute.xlu0 %6414
      %6416 = vrot.lane.b32.xlu0 %v5775, 48
      %v6417 = vpop.permute.xlu0 %6416
      %6418 = vrot.lane.b32.xlu0 %v5776, 48
      %v6419 = vpop.permute.xlu0 %6418
      %6420 = vrot.lane.b32.xlu0 %v5777, 48
      %v6421 = vpop.permute.xlu0 %6420
      %6422 = vrot.lane.b32.xlu0 %v5778, 48
      %v6423 = vpop.permute.xlu0 %6422
      %6424 = vrot.lane.b32.xlu0 %v5779, 48
      %v6425 = vpop.permute.xlu0 %6424
      %6426 = vrot.lane.b32.xlu0 %v5780, 48
      %v6427 = vpop.permute.xlu0 %6426
      %6428 = vrot.lane.b32.xlu0 %v5781, 48
      %v6429 = vpop.permute.xlu0 %6428
      %6430 = vrot.lane.b32.xlu0 %v5782, 48
      %v6431 = vpop.permute.xlu0 %6430
      %6432 = vrot.lane.b32.xlu0 %v5783, 48
      %v6433 = vpop.permute.xlu0 %6432
      %6434 = vrot.lane.b32.xlu0 %v5784, 48
      %v6435 = vpop.permute.xlu0 %6434
      %6436 = vrot.lane.b32.xlu0 %v5785, 48
      %v6437 = vpop.permute.xlu0 %6436
      %6438 = vrot.lane.b32.xlu0 %v5786, 48
      %v6439 = vpop.permute.xlu0 %6438
      %6440 = vrot.lane.b32.xlu0 %v5787, 48
      %v6441 = vpop.permute.xlu0 %6440
      %6442 = vrot.lane.b32.xlu0 %v5788, 48
      %v6443 = vpop.permute.xlu0 %6442
      %6444 = vrot.lane.b32.xlu0 %v5789, 48
      %v6445 = vpop.permute.xlu0 %6444
      %6446 = vrot.lane.b32.xlu0 %v5790, 48
      %v6447 = vpop.permute.xlu0 %6446
      %6448 = vrot.lane.b32.xlu0 %v5791, 48
      %v6449 = vpop.permute.xlu0 %6448
      %6450 = vrot.lane.b32.xlu0 %v5792, 48
      %v6451 = vpop.permute.xlu0 %6450
      %6452 = vrot.lane.b32.xlu0 %v5793, 48
      %v6453 = vpop.permute.xlu0 %6452
      %6454 = vrot.lane.b32.xlu0 %v5794, 48
      %v6455 = vpop.permute.xlu0 %6454
      %6456 = vrot.lane.b32.xlu0 %v5795, 48
      %v6457 = vpop.permute.xlu0 %6456
      %6458 = vrot.lane.b32.xlu0 %v5796, 48
      %v6459 = vpop.permute.xlu0 %6458
      %6460 = vrot.lane.b32.xlu0 %v5797, 48
      %v6461 = vpop.permute.xlu0 %6460
      %6462 = vrot.lane.b32.xlu0 %v5798, 48
      %v6463 = vpop.permute.xlu0 %6462
      %6464 = vrot.lane.b32.xlu0 %v5799, 48
      %v6465 = vpop.permute.xlu0 %6464
      %6466 = vrot.lane.b32.xlu0 %v5800, 48
      %v6467 = vpop.permute.xlu0 %6466
      %6468 = vrot.lane.b32.xlu0 %v5801, 48
      %v6469 = vpop.permute.xlu0 %6468
      %6470 = vrot.lane.b32.xlu0 %v5802, 48
      %v6471 = vpop.permute.xlu0 %6470
      %6472 = vrot.lane.b32.xlu0 %v5803, 48
      %v6473 = vpop.permute.xlu0 %6472
      %6474 = vrot.lane.b32.xlu0 %v5804, 48
      %v6475 = vpop.permute.xlu0 %6474
      %6476 = vrot.lane.b32.xlu0 %v5805, 48
      %v6477 = vpop.permute.xlu0 %6476
      %6542 = vrot.lane.b32.xlu0 %v5806, 56
      %v6543 = vpop.permute.xlu0 %6542
      %6544 = vrot.lane.b32.xlu0 %v5807, 56
      %v6545 = vpop.permute.xlu0 %6544
      %6546 = vrot.lane.b32.xlu0 %v5808, 56
      %v6547 = vpop.permute.xlu0 %6546
      %6548 = vrot.lane.b32.xlu0 %v5809, 56
      %v6549 = vpop.permute.xlu0 %6548
      %6550 = vrot.lane.b32.xlu0 %v5810, 56
      %v6551 = vpop.permute.xlu0 %6550
      %6552 = vrot.lane.b32.xlu0 %v5811, 56
      %v6553 = vpop.permute.xlu0 %6552
      %6554 = vrot.lane.b32.xlu0 %v5812, 56
      %v6555 = vpop.permute.xlu0 %6554
      %6556 = vrot.lane.b32.xlu0 %v5813, 56
      %v6557 = vpop.permute.xlu0 %6556
      %6558 = vrot.lane.b32.xlu0 %v5814, 56
      %v6559 = vpop.permute.xlu0 %6558
      %6560 = vrot.lane.b32.xlu0 %v5815, 56
      %v6561 = vpop.permute.xlu0 %6560
      %6562 = vrot.lane.b32.xlu0 %v5816, 56
      %v6563 = vpop.permute.xlu0 %6562
      %6564 = vrot.lane.b32.xlu0 %v5817, 56
      %v6565 = vpop.permute.xlu0 %6564
      %6566 = vrot.lane.b32.xlu0 %v5818, 56
      %v6567 = vpop.permute.xlu0 %6566
      %6568 = vrot.lane.b32.xlu0 %v5819, 56
      %v6569 = vpop.permute.xlu0 %6568
      %6570 = vrot.lane.b32.xlu0 %v5820, 56
      %v6571 = vpop.permute.xlu0 %6570
      %6572 = vrot.lane.b32.xlu0 %v5821, 56
      %v6573 = vpop.permute.xlu0 %6572
      %6574 = vrot.lane.b32.xlu0 %v5822, 56
      %v6575 = vpop.permute.xlu0 %6574
      %6576 = vrot.lane.b32.xlu0 %v5823, 56
      %v6577 = vpop.permute.xlu0 %6576
      %6578 = vrot.lane.b32.xlu0 %v5824, 56
      %v6579 = vpop.permute.xlu0 %6578
      %6580 = vrot.lane.b32.xlu0 %v5825, 56
      %v6581 = vpop.permute.xlu0 %6580
      %6582 = vrot.lane.b32.xlu0 %v5826, 56
      %v6583 = vpop.permute.xlu0 %6582
      %6584 = vrot.lane.b32.xlu0 %v5827, 56
      %v6585 = vpop.permute.xlu0 %6584
      %6586 = vrot.lane.b32.xlu0 %v5828, 56
      %v6587 = vpop.permute.xlu0 %6586
      %6588 = vrot.lane.b32.xlu0 %v5829, 56
      %v6589 = vpop.permute.xlu0 %6588
      %6590 = vrot.lane.b32.xlu0 %v5830, 56
      %v6591 = vpop.permute.xlu0 %6590
      %6592 = vrot.lane.b32.xlu0 %v5831, 56
      %v6593 = vpop.permute.xlu0 %6592
      %6594 = vrot.lane.b32.xlu0 %v5832, 56
      %v6595 = vpop.permute.xlu0 %6594
      %6596 = vrot.lane.b32.xlu0 %v5833, 56
      %v6597 = vpop.permute.xlu0 %6596
      %6598 = vrot.lane.b32.xlu0 %v5834, 56
      %v6599 = vpop.permute.xlu0 %6598
      %6600 = vrot.lane.b32.xlu0 %v5835, 56
      %v6601 = vpop.permute.xlu0 %6600
      %6602 = vrot.lane.b32.xlu0 %v5836, 56
      %v6603 = vpop.permute.xlu0 %6602
      %6604 = vrot.lane.b32.xlu0 %v5837, 56
      %v6605 = vpop.permute.xlu0 %6604
      %6670 = vrot.lane.b32.xlu0 %v5838, 64
      %v6671 = vpop.permute.xlu0 %6670
      %6672 = vrot.lane.b32.xlu0 %v5839, 64
      %v6673 = vpop.permute.xlu0 %6672
      %6674 = vrot.lane.b32.xlu0 %v5840, 64
      %v6675 = vpop.permute.xlu0 %6674
      %6676 = vrot.lane.b32.xlu0 %v5841, 64
      %v6677 = vpop.permute.xlu0 %6676
      %6678 = vrot.lane.b32.xlu0 %v5842, 64
      %v6679 = vpop.permute.xlu0 %6678
      %6680 = vrot.lane.b32.xlu0 %v5843, 64
      %v6681 = vpop.permute.xlu0 %6680
      %6682 = vrot.lane.b32.xlu0 %v5844, 64
      %v6683 = vpop.permute.xlu0 %6682
      %6684 = vrot.lane.b32.xlu0 %v5845, 64
      %v6685 = vpop.permute.xlu0 %6684
      %6686 = vrot.lane.b32.xlu0 %v5846, 64
      %v6687 = vpop.permute.xlu0 %6686
      %6688 = vrot.lane.b32.xlu0 %v5847, 64
      %v6689 = vpop.permute.xlu0 %6688
      %6690 = vrot.lane.b32.xlu0 %v5848, 64
      %v6691 = vpop.permute.xlu0 %6690
      %6692 = vrot.lane.b32.xlu0 %v5849, 64
      %v6693 = vpop.permute.xlu0 %6692
      %6694 = vrot.lane.b32.xlu0 %v5850, 64
      %v6695 = vpop.permute.xlu0 %6694
      %6696 = vrot.lane.b32.xlu0 %v5851, 64
      %v6697 = vpop.permute.xlu0 %6696
      %6698 = vrot.lane.b32.xlu0 %v5852, 64
      %v6699 = vpop.permute.xlu0 %6698
      %6700 = vrot.lane.b32.xlu0 %v5853, 64
      %v6701 = vpop.permute.xlu0 %6700
      %6702 = vrot.lane.b32.xlu0 %v5854, 64
      %v6703 = vpop.permute.xlu0 %6702
      %6704 = vrot.lane.b32.xlu0 %v5855, 64
      %v6705 = vpop.permute.xlu0 %6704
      %6706 = vrot.lane.b32.xlu0 %v5856, 64
      %v6707 = vpop.permute.xlu0 %6706
      %6708 = vrot.lane.b32.xlu0 %v5857, 64
      %v6709 = vpop.permute.xlu0 %6708
      %6710 = vrot.lane.b32.xlu0 %v5858, 64
      %v6711 = vpop.permute.xlu0 %6710
      %6712 = vrot.lane.b32.xlu0 %v5859, 64
      %v6713 = vpop.permute.xlu0 %6712
      %6714 = vrot.lane.b32.xlu0 %v5860, 64
      %v6715 = vpop.permute.xlu0 %6714
      %6716 = vrot.lane.b32.xlu0 %v5861, 64
      %v6717 = vpop.permute.xlu0 %6716
      %6718 = vrot.lane.b32.xlu0 %v5862, 64
      %v6719 = vpop.permute.xlu0 %6718
      %6720 = vrot.lane.b32.xlu0 %v5863, 64
      %v6721 = vpop.permute.xlu0 %6720
      %6722 = vrot.lane.b32.xlu0 %v5864, 64
      %v6723 = vpop.permute.xlu0 %6722
      %6724 = vrot.lane.b32.xlu0 %v5865, 64
      %v6725 = vpop.permute.xlu0 %6724
      %6726 = vrot.lane.b32.xlu0 %v5866, 64
      %v6727 = vpop.permute.xlu0 %6726
      %6728 = vrot.lane.b32.xlu0 %v5867, 64
      %v6729 = vpop.permute.xlu0 %6728
      %6730 = vrot.lane.b32.xlu0 %v5868, 64
      %v6731 = vpop.permute.xlu0 %6730
      %6732 = vrot.lane.b32.xlu0 %v5869, 64
      %v6733 = vpop.permute.xlu0 %6732
      %v6766 = vsel %vm277, %v5613, %v5903
      %v6767 = vsel %vm277, %v5614, %v5905
      %v6768 = vsel %vm277, %v5615, %v5907
      %v6769 = vsel %vm277, %v5616, %v5909
      %v6770 = vsel %vm277, %v5617, %v5911
      %v6771 = vsel %vm277, %v5618, %v5913
      %v6772 = vsel %vm277, %v5619, %v5915
      %v6773 = vsel %vm277, %v5620, %v5917
      %v6774 = vsel %vm277, %v5621, %v5919
      %v6775 = vsel %vm277, %v5622, %v5921
      %v6776 = vsel %vm277, %v5623, %v5923
      %v6777 = vsel %vm277, %v5624, %v5925
      %v6778 = vsel %vm277, %v5625, %v5927
      %v6779 = vsel %vm277, %v5626, %v5929
      %v6780 = vsel %vm277, %v5627, %v5931
      %v6781 = vsel %vm277, %v5628, %v5933
      %v6782 = vsel %vm277, %v5629, %v5935
      %v6783 = vsel %vm277, %v5630, %v5937
      %v6784 = vsel %vm277, %v5631, %v5939
      %v6785 = vsel %vm277, %v5632, %v5941
      %v6786 = vsel %vm277, %v5633, %v5943
      %v6787 = vsel %vm277, %v5634, %v5945
      %v6788 = vsel %vm277, %v5635, %v5947
      %v6789 = vsel %vm277, %v5636, %v5949
      %v6790 = vsel %vm277, %v5637, %v5951
      %v6791 = vsel %vm277, %v5638, %v5953
      %v6792 = vsel %vm277, %v5639, %v5955
      %v6793 = vsel %vm277, %v5640, %v5957
      %v6794 = vsel %vm277, %v5641, %v5959
      %v6795 = vsel %vm277, %v5642, %v5961
      %v6796 = vsel %vm277, %v5643, %v5963
      %v6797 = vsel %vm277, %v5644, %v5965
      %v6798 = vsel %vm1905, %v6766, %v6031
      %v6799 = vsel %vm1905, %v6767, %v6033
      %v6800 = vsel %vm1905, %v6768, %v6035
      %v6801 = vsel %vm1905, %v6769, %v6037
      %v6802 = vsel %vm1905, %v6770, %v6039
      %v6803 = vsel %vm1905, %v6771, %v6041
      %v6804 = vsel %vm1905, %v6772, %v6043
      %v6805 = vsel %vm1905, %v6773, %v6045
      %v6806 = vsel %vm1905, %v6774, %v6047
      %v6807 = vsel %vm1905, %v6775, %v6049
      %v6808 = vsel %vm1905, %v6776, %v6051
      %v6809 = vsel %vm1905, %v6777, %v6053
      %v6810 = vsel %vm1905, %v6778, %v6055
      %v6811 = vsel %vm1905, %v6779, %v6057
      %v6812 = vsel %vm1905, %v6780, %v6059
      %v6813 = vsel %vm1905, %v6781, %v6061
      %v6814 = vsel %vm1905, %v6782, %v6063
      %v6815 = vsel %vm1905, %v6783, %v6065
      %v6816 = vsel %vm1905, %v6784, %v6067
      %v6817 = vsel %vm1905, %v6785, %v6069
      %v6818 = vsel %vm1905, %v6786, %v6071
      %v6819 = vsel %vm1905, %v6787, %v6073
      %v6820 = vsel %vm1905, %v6788, %v6075
      %v6821 = vsel %vm1905, %v6789, %v6077
      %v6822 = vsel %vm1905, %v6790, %v6079
      %v6823 = vsel %vm1905, %v6791, %v6081
      %v6824 = vsel %vm1905, %v6792, %v6083
      %v6825 = vsel %vm1905, %v6793, %v6085
      %v6826 = vsel %vm1905, %v6794, %v6087
      %v6827 = vsel %vm1905, %v6795, %v6089
      %v6828 = vsel %vm1905, %v6796, %v6091
      %v6829 = vsel %vm1905, %v6797, %v6093
      %v6830 = vsel %vm1938, %v6798, %v6159
      %v6831 = vsel %vm1938, %v6799, %v6161
      %v6832 = vsel %vm1938, %v6800, %v6163
      %v6833 = vsel %vm1938, %v6801, %v6165
      %v6834 = vsel %vm1938, %v6802, %v6167
      %v6835 = vsel %vm1938, %v6803, %v6169
      %v6836 = vsel %vm1938, %v6804, %v6171
      %v6837 = vsel %vm1938, %v6805, %v6173
      %v6838 = vsel %vm1938, %v6806, %v6175
      %v6839 = vsel %vm1938, %v6807, %v6177
      %v6840 = vsel %vm1938, %v6808, %v6179
      %v6841 = vsel %vm1938, %v6809, %v6181
      %v6842 = vsel %vm1938, %v6810, %v6183
      %v6843 = vsel %vm1938, %v6811, %v6185
      %v6844 = vsel %vm1938, %v6812, %v6187
      %v6845 = vsel %vm1938, %v6813, %v6189
      %v6846 = vsel %vm1938, %v6814, %v6191
      %v6847 = vsel %vm1938, %v6815, %v6193
      %v6848 = vsel %vm1938, %v6816, %v6195
      %v6849 = vsel %vm1938, %v6817, %v6197
      %v6850 = vsel %vm1938, %v6818, %v6199
      %v6851 = vsel %vm1938, %v6819, %v6201
      %v6852 = vsel %vm1938, %v6820, %v6203
      %v6853 = vsel %vm1938, %v6821, %v6205
      %v6854 = vsel %vm1938, %v6822, %v6207
      %v6855 = vsel %vm1938, %v6823, %v6209
      %v6856 = vsel %vm1938, %v6824, %v6211
      %v6857 = vsel %vm1938, %v6825, %v6213
      %v6858 = vsel %vm1938, %v6826, %v6215
      %v6859 = vsel %vm1938, %v6827, %v6217
      %v6860 = vsel %vm1938, %v6828, %v6219
      %v6861 = vsel %vm1938, %v6829, %v6221
      %v6862 = vsel %vm1971, %v6830, %v1266
      %v6863 = vsel %vm1971, %v6831, %v1268
      %v6864 = vsel %vm1971, %v6832, %v1270
      %v6865 = vsel %vm1971, %v6833, %v1272
      %v6866 = vsel %vm1971, %v6834, %v1274
      %v6867 = vsel %vm1971, %v6835, %v1276
      %v6868 = vsel %vm1971, %v6836, %v1278
      %v6869 = vsel %vm1971, %v6837, %v1280
      %v6870 = vsel %vm1971, %v6838, %v1282
      %v6871 = vsel %vm1971, %v6839, %v1284
      %v6872 = vsel %vm1971, %v6840, %v1286
      %v6873 = vsel %vm1971, %v6841, %v1288
      %v6874 = vsel %vm1971, %v6842, %v1290
      %v6875 = vsel %vm1971, %v6843, %v1292
      %v6876 = vsel %vm1971, %v6844, %v1294
      %v6877 = vsel %vm1971, %v6845, %v1296
      %v6878 = vsel %vm1971, %v6846, %v1298
      %v6879 = vsel %vm1971, %v6847, %v1300
      %v6880 = vsel %vm1971, %v6848, %v1302
      %v6881 = vsel %vm1971, %v6849, %v1304
      %v6882 = vsel %vm1971, %v6850, %v1306
      %v6883 = vsel %vm1971, %v6851, %v1308
      %v6884 = vsel %vm1971, %v6852, %v1310
      %v6885 = vsel %vm1971, %v6853, %v1312
      %v6886 = vsel %vm1971, %v6854, %v1314
      %v6887 = vsel %vm1971, %v6855, %v1316
      %v6888 = vsel %vm1971, %v6856, %v1318
      %v6889 = vsel %vm1971, %v6857, %v1320
      %v6890 = vsel %vm1971, %v6858, %v1322
      %v6891 = vsel %vm1971, %v6859, %v1324
      %v6892 = vsel %vm1971, %v6860, %v1326
      %v6893 = vsel %vm1971, %v6861, %v1328
      %v6894 = vsel %vm2004, %v6862, %v6287
      %v6895 = vsel %vm2004, %v6863, %v6289
      %v6896 = vsel %vm2004, %v6864, %v6291
      %v6897 = vsel %vm2004, %v6865, %v6293
      %v6898 = vsel %vm2004, %v6866, %v6295
      %v6899 = vsel %vm2004, %v6867, %v6297
      %v6900 = vsel %vm2004, %v6868, %v6299
      %v6901 = vsel %vm2004, %v6869, %v6301
      %v6902 = vsel %vm2004, %v6870, %v6303
      %v6903 = vsel %vm2004, %v6871, %v6305
      %v6904 = vsel %vm2004, %v6872, %v6307
      %v6905 = vsel %vm2004, %v6873, %v6309
      %v6906 = vsel %vm2004, %v6874, %v6311
      %v6907 = vsel %vm2004, %v6875, %v6313
      %v6908 = vsel %vm2004, %v6876, %v6315
      %v6909 = vsel %vm2004, %v6877, %v6317
      %v6910 = vsel %vm2004, %v6878, %v6319
      %v6911 = vsel %vm2004, %v6879, %v6321
      %v6912 = vsel %vm2004, %v6880, %v6323
      %v6913 = vsel %vm2004, %v6881, %v6325
      %v6914 = vsel %vm2004, %v6882, %v6327
      %v6915 = vsel %vm2004, %v6883, %v6329
      %v6916 = vsel %vm2004, %v6884, %v6331
      %v6917 = vsel %vm2004, %v6885, %v6333
      %v6918 = vsel %vm2004, %v6886, %v6335
      %v6919 = vsel %vm2004, %v6887, %v6337
      %v6920 = vsel %vm2004, %v6888, %v6339
      %v6921 = vsel %vm2004, %v6889, %v6341
      %v6922 = vsel %vm2004, %v6890, %v6343
      %v6923 = vsel %vm2004, %v6891, %v6345
      %v6924 = vsel %vm2004, %v6892, %v6347
      %v6925 = vsel %vm2004, %v6893, %v6349
      %v6926 = vsel %vm2037, %v6894, %v6415
      %v6927 = vsel %vm2037, %v6895, %v6417
      %v6928 = vsel %vm2037, %v6896, %v6419
      %v6929 = vsel %vm2037, %v6897, %v6421
      %v6930 = vsel %vm2037, %v6898, %v6423
      %v6931 = vsel %vm2037, %v6899, %v6425
      %v6932 = vsel %vm2037, %v6900, %v6427
      %v6933 = vsel %vm2037, %v6901, %v6429
      %v6934 = vsel %vm2037, %v6902, %v6431
      %v6935 = vsel %vm2037, %v6903, %v6433
      %v6936 = vsel %vm2037, %v6904, %v6435
      %v6937 = vsel %vm2037, %v6905, %v6437
      %v6938 = vsel %vm2037, %v6906, %v6439
      %v6939 = vsel %vm2037, %v6907, %v6441
      %v6940 = vsel %vm2037, %v6908, %v6443
      %v6941 = vsel %vm2037, %v6909, %v6445
      %v6942 = vsel %vm2037, %v6910, %v6447
      %v6943 = vsel %vm2037, %v6911, %v6449
      %v6944 = vsel %vm2037, %v6912, %v6451
      %v6945 = vsel %vm2037, %v6913, %v6453
      %v6946 = vsel %vm2037, %v6914, %v6455
      %v6947 = vsel %vm2037, %v6915, %v6457
      %v6948 = vsel %vm2037, %v6916, %v6459
      %v6949 = vsel %vm2037, %v6917, %v6461
      %v6950 = vsel %vm2037, %v6918, %v6463
      %v6951 = vsel %vm2037, %v6919, %v6465
      %v6952 = vsel %vm2037, %v6920, %v6467
      %v6953 = vsel %vm2037, %v6921, %v6469
      %v6954 = vsel %vm2037, %v6922, %v6471
      %v6955 = vsel %vm2037, %v6923, %v6473
      %v6956 = vsel %vm2037, %v6924, %v6475
      %v6957 = vsel %vm2037, %v6925, %v6477
      %v6958 = vsel %vm2070, %v6926, %v6543
      %v6959 = vsel %vm2070, %v6927, %v6545
      %v6960 = vsel %vm2070, %v6928, %v6547
      %v6961 = vsel %vm2070, %v6929, %v6549
      %v6962 = vsel %vm2070, %v6930, %v6551
      %v6963 = vsel %vm2070, %v6931, %v6553
      %v6964 = vsel %vm2070, %v6932, %v6555
      %v6965 = vsel %vm2070, %v6933, %v6557
      %v6966 = vsel %vm2070, %v6934, %v6559
      %v6967 = vsel %vm2070, %v6935, %v6561
      %v6968 = vsel %vm2070, %v6936, %v6563
      %v6969 = vsel %vm2070, %v6937, %v6565
      %v6970 = vsel %vm2070, %v6938, %v6567
      %v6971 = vsel %vm2070, %v6939, %v6569
      %v6972 = vsel %vm2070, %v6940, %v6571
      %v6973 = vsel %vm2070, %v6941, %v6573
      %v6974 = vsel %vm2070, %v6942, %v6575
      %v6975 = vsel %vm2070, %v6943, %v6577
      %v6976 = vsel %vm2070, %v6944, %v6579
      %v6977 = vsel %vm2070, %v6945, %v6581
      %v6978 = vsel %vm2070, %v6946, %v6583
      %v6979 = vsel %vm2070, %v6947, %v6585
      %v6980 = vsel %vm2070, %v6948, %v6587
      %v6981 = vsel %vm2070, %v6949, %v6589
      %v6982 = vsel %vm2070, %v6950, %v6591
      %v6983 = vsel %vm2070, %v6951, %v6593
      %v6984 = vsel %vm2070, %v6952, %v6595
      %v6985 = vsel %vm2070, %v6953, %v6597
      %v6986 = vsel %vm2070, %v6954, %v6599
      %v6987 = vsel %vm2070, %v6955, %v6601
      %v6988 = vsel %vm2070, %v6956, %v6603
      %v6989 = vsel %vm2070, %v6957, %v6605
      %v6990 = vsel %vm2103, %v6958, %v6671
      %v6991 = vsel %vm2103, %v6959, %v6673
      %v6992 = vsel %vm2103, %v6960, %v6675
      %v6993 = vsel %vm2103, %v6961, %v6677
      %v6994 = vsel %vm2103, %v6962, %v6679
      %v6995 = vsel %vm2103, %v6963, %v6681
      %v6996 = vsel %vm2103, %v6964, %v6683
      %v6997 = vsel %vm2103, %v6965, %v6685
      %v6998 = vsel %vm2103, %v6966, %v6687
      %v6999 = vsel %vm2103, %v6967, %v6689
      %v7000 = vsel %vm2103, %v6968, %v6691
      %v7001 = vsel %vm2103, %v6969, %v6693
      %v7002 = vsel %vm2103, %v6970, %v6695
      %v7003 = vsel %vm2103, %v6971, %v6697
      %v7004 = vsel %vm2103, %v6972, %v6699
      %v7005 = vsel %vm2103, %v6973, %v6701
      %v7006 = vsel %vm2103, %v6974, %v6703
      %v7007 = vsel %vm2103, %v6975, %v6705
      %v7008 = vsel %vm2103, %v6976, %v6707
      %v7009 = vsel %vm2103, %v6977, %v6709
      %v7010 = vsel %vm2103, %v6978, %v6711
      %v7011 = vsel %vm2103, %v6979, %v6713
      %v7012 = vsel %vm2103, %v6980, %v6715
      %v7013 = vsel %vm2103, %v6981, %v6717
      %v7014 = vsel %vm2103, %v6982, %v6719
      %v7015 = vsel %vm2103, %v6983, %v6721
      %v7016 = vsel %vm2103, %v6984, %v6723
      %v7017 = vsel %vm2103, %v6985, %v6725
      %v7018 = vsel %vm2103, %v6986, %v6727
      %v7019 = vsel %vm2103, %v6987, %v6729
      %v7020 = vsel %vm2103, %v6988, %v6731
      %v7021 = vsel %vm2103, %v6989, %v6733
      %s7022 = scalar_lea.vmem %s2, 216
      %v7023 = vld [vmem:[%s7022] sm:$0xff]
      %v7024 = vld [vmem:[%s7022 + $0x8] sm:$0xff]
      %v7025 = vld [vmem:[%s7022 + $0x10] sm:$0xff]
      %v7026 = vld [vmem:[%s7022 + $0x18] sm:$0xff]
      %v7027 = vld [vmem:[%s7022 + $0x20] sm:$0xff]
      %v7028 = vld [vmem:[%s7022 + $0x28] sm:$0xff]
      %v7029 = vld [vmem:[%s7022 + $0x30] sm:$0xff]
      %v7030 = vld [vmem:[%s7022 + $0x38] sm:$0xff]
      %v7031 = vld [vmem:[%s7022 + $0x40] sm:$0xff]
      %v7033 = vsel %vm2145, %v6990, 0
      %v7036 = vsel %vm2145, %v6991, 0
      %v7039 = vsel %vm2145, %v6992, 0
      %v7042 = vsel %vm2145, %v6993, 0
      %v7045 = vsel %vm2145, %v6994, 0
      %v7048 = vsel %vm2145, %v6995, 0
      %v7051 = vsel %vm2145, %v6996, 0
      %v7054 = vsel %vm2145, %v6997, 0
      %v7057 = vsel %vm2145, %v6998, 0
      %v7060 = vsel %vm2145, %v6999, 0
      %v7063 = vsel %vm2145, %v7000, 0
      %v7066 = vsel %vm2145, %v7001, 0
      %v7069 = vsel %vm2145, %v7002, 0
      %v7072 = vsel %vm2145, %v7003, 0
      %v7075 = vsel %vm2145, %v7004, 0
      %v7078 = vsel %vm2145, %v7005, 0
      %v7081 = vsel %vm2145, %v7006, 0
      %v7084 = vsel %vm2145, %v7007, 0
      %v7087 = vsel %vm2145, %v7008, 0
      %v7090 = vsel %vm2145, %v7009, 0
      %v7093 = vsel %vm2145, %v7010, 0
      %v7096 = vsel %vm2145, %v7011, 0
      %v7099 = vsel %vm2145, %v7012, 0
      %v7102 = vsel %vm2145, %v7013, 0
      %v7105 = vsel %vm2145, %v7014, 0
      %v7108 = vsel %vm2145, %v7015, 0
      %v7111 = vsel %vm2145, %v7016, 0
      %v7114 = vsel %vm2145, %v7017, 0
      %v7117 = vsel %vm2145, %v7018, 0
      %v7120 = vsel %vm2145, %v7019, 0
      %v7123 = vsel %vm2145, %v7020, 0
      %v7126 = vsel %vm2145, %v7021, 0
      %7128 = vmatpush.msra.mxu0 0.0
      %7129 = vmatpush.msra.mxu0 0.0
      %7130 = vmatpush.msra.mxu0 0.0
      %7131 = vmatpush.msra.mxu0 0.0
      %7132 = vmatpush.msra.mxu0 0.0
      %7133 = vmatpush.msra.mxu0 0.0
      %7134 = vmatpush.msra.mxu0 0.0
      %7135 = vmatpush.msra.mxu0 %v7031
      %7136 = vmatpush.msra.mxu0 %v7030
      %7137 = vmatpush.msra.mxu0 %v7029
      %7138 = vmatpush.msra.mxu0 %v7028
      %7139 = vmatpush.msra.mxu0 %v7027
      %7140 = vmatpush.msra.mxu0 %v7026
      %7141 = vmatpush.msra.mxu0 %v7025
      %7142 = vmatpush.msra.mxu0 %v7024
      %7143 = vmatpush.msra.mxu0 %v7023
      %7144 = vmatmul.f32.gmra.mxu0 %v7033
      %v7145 = vpop.f32.mrf.mxu0
      %v7146 = vadd.f32 0.0, %v7145
      %7147 = vmatmul.f32.gmra.mxu0 %v7036
      %v7148 = vpop.f32.mrf.mxu0
      %v7149 = vadd.f32 0.0, %v7148
      %7150 = vmatmul.f32.gmra.mxu0 %v7039
      %v7151 = vpop.f32.mrf.mxu0
      %v7152 = vadd.f32 0.0, %v7151
      %7153 = vmatmul.f32.gmra.mxu0 %v7042
      %v7154 = vpop.f32.mrf.mxu0
      %v7155 = vadd.f32 0.0, %v7154
      %7156 = vmatmul.f32.gmra.mxu0 %v7045
      %v7157 = vpop.f32.mrf.mxu0
      %v7158 = vadd.f32 0.0, %v7157
      %7159 = vmatmul.f32.gmra.mxu0 %v7048
      %v7160 = vpop.f32.mrf.mxu0
      %v7161 = vadd.f32 0.0, %v7160
      %7162 = vmatmul.f32.gmra.mxu0 %v7051
      %v7163 = vpop.f32.mrf.mxu0
      %v7164 = vadd.f32 0.0, %v7163
      %7165 = vmatmul.f32.gmra.mxu0 %v7054
      %v7166 = vpop.f32.mrf.mxu0
      %v7167 = vadd.f32 0.0, %v7166
      %7168 = vmatmul.f32.gmra.mxu0 %v7057
      %v7169 = vpop.f32.mrf.mxu0
      %v7170 = vadd.f32 0.0, %v7169
      %7171 = vmatmul.f32.gmra.mxu0 %v7060
      %v7172 = vpop.f32.mrf.mxu0
      %v7173 = vadd.f32 0.0, %v7172
      %7174 = vmatmul.f32.gmra.mxu0 %v7063
      %v7175 = vpop.f32.mrf.mxu0
      %v7176 = vadd.f32 0.0, %v7175
      %7177 = vmatmul.f32.gmra.mxu0 %v7066
      %v7178 = vpop.f32.mrf.mxu0
      %v7179 = vadd.f32 0.0, %v7178
      %7180 = vmatmul.f32.gmra.mxu0 %v7069
      %v7181 = vpop.f32.mrf.mxu0
      %v7182 = vadd.f32 0.0, %v7181
      %7183 = vmatmul.f32.gmra.mxu0 %v7072
      %v7184 = vpop.f32.mrf.mxu0
      %v7185 = vadd.f32 0.0, %v7184
      %7186 = vmatmul.f32.gmra.mxu0 %v7075
      %v7187 = vpop.f32.mrf.mxu0
      %v7188 = vadd.f32 0.0, %v7187
      %7189 = vmatmul.f32.gmra.mxu0 %v7078
      %v7190 = vpop.f32.mrf.mxu0
      %v7191 = vadd.f32 0.0, %v7190
      %7192 = vmatmul.f32.gmra.mxu0 %v7081
      %v7193 = vpop.f32.mrf.mxu0
      %v7194 = vadd.f32 0.0, %v7193
      %7195 = vmatmul.f32.gmra.mxu0 %v7084
      %v7196 = vpop.f32.mrf.mxu0
      %v7197 = vadd.f32 0.0, %v7196
      %7198 = vmatmul.f32.gmra.mxu0 %v7087
      %v7199 = vpop.f32.mrf.mxu0
      %v7200 = vadd.f32 0.0, %v7199
      %7201 = vmatmul.f32.gmra.mxu0 %v7090
      %v7202 = vpop.f32.mrf.mxu0
      %v7203 = vadd.f32 0.0, %v7202
      %7204 = vmatmul.f32.gmra.mxu0 %v7093
      %v7205 = vpop.f32.mrf.mxu0
      %v7206 = vadd.f32 0.0, %v7205
      %7207 = vmatmul.f32.gmra.mxu0 %v7096
      %v7208 = vpop.f32.mrf.mxu0
      %v7209 = vadd.f32 0.0, %v7208
      %7210 = vmatmul.f32.gmra.mxu0 %v7099
      %v7211 = vpop.f32.mrf.mxu0
      %v7212 = vadd.f32 0.0, %v7211
      %7213 = vmatmul.f32.gmra.mxu0 %v7102
      %v7214 = vpop.f32.mrf.mxu0
      %v7215 = vadd.f32 0.0, %v7214
      %7216 = vmatmul.f32.gmra.mxu0 %v7105
      %v7217 = vpop.f32.mrf.mxu0
      %v7218 = vadd.f32 0.0, %v7217
      %7219 = vmatmul.f32.gmra.mxu0 %v7108
      %v7220 = vpop.f32.mrf.mxu0
      %v7221 = vadd.f32 0.0, %v7220
      %7222 = vmatmul.f32.gmra.mxu0 %v7111
      %v7223 = vpop.f32.mrf.mxu0
      %v7224 = vadd.f32 0.0, %v7223
      %7225 = vmatmul.f32.gmra.mxu0 %v7114
      %v7226 = vpop.f32.mrf.mxu0
      %v7227 = vadd.f32 0.0, %v7226
      %7228 = vmatmul.f32.gmra.mxu0 %v7117
      %v7229 = vpop.f32.mrf.mxu0
      %v7230 = vadd.f32 0.0, %v7229
      %7231 = vmatmul.f32.gmra.mxu0 %v7120
      %v7232 = vpop.f32.mrf.mxu0
      %v7233 = vadd.f32 0.0, %v7232
      %7234 = vmatmul.f32.gmra.mxu0 %v7123
      %v7235 = vpop.f32.mrf.mxu0
      %v7236 = vadd.f32 0.0, %v7235
      %7237 = vmatmul.f32.gmra.mxu0 %v7126
      %v7238 = vpop.f32.mrf.mxu0
      %v7239 = vadd.f32 0.0, %v7238
      %7240 = vdwg.mxu0
      %7273 = vrot.lane.b32.xlu0 %v2260, 8
      %v7274 = vpop.permute.xlu0 %7273
      %7275 = vrot.lane.b32.xlu0 %v2263, 8
      %v7276 = vpop.permute.xlu0 %7275
      %7277 = vrot.lane.b32.xlu0 %v2266, 8
      %v7278 = vpop.permute.xlu0 %7277
      %7279 = vrot.lane.b32.xlu0 %v2269, 8
      %v7280 = vpop.permute.xlu0 %7279
      %7281 = vrot.lane.b32.xlu0 %v2272, 8
      %v7282 = vpop.permute.xlu0 %7281
      %7283 = vrot.lane.b32.xlu0 %v2275, 8
      %v7284 = vpop.permute.xlu0 %7283
      %7285 = vrot.lane.b32.xlu0 %v2278, 8
      %v7286 = vpop.permute.xlu0 %7285
      %7287 = vrot.lane.b32.xlu0 %v2281, 8
      %v7288 = vpop.permute.xlu0 %7287
      %7289 = vrot.lane.b32.xlu0 %v2284, 8
      %v7290 = vpop.permute.xlu0 %7289
      %7291 = vrot.lane.b32.xlu0 %v2287, 8
      %v7292 = vpop.permute.xlu0 %7291
      %7293 = vrot.lane.b32.xlu0 %v2290, 8
      %v7294 = vpop.permute.xlu0 %7293
      %7295 = vrot.lane.b32.xlu0 %v2293, 8
      %v7296 = vpop.permute.xlu0 %7295
      %7297 = vrot.lane.b32.xlu0 %v2296, 8
      %v7298 = vpop.permute.xlu0 %7297
      %7299 = vrot.lane.b32.xlu0 %v2299, 8
      %v7300 = vpop.permute.xlu0 %7299
      %7301 = vrot.lane.b32.xlu0 %v2302, 8
      %v7302 = vpop.permute.xlu0 %7301
      %7303 = vrot.lane.b32.xlu0 %v2305, 8
      %v7304 = vpop.permute.xlu0 %7303
      %7305 = vrot.lane.b32.xlu0 %v2308, 8
      %v7306 = vpop.permute.xlu0 %7305
      %7307 = vrot.lane.b32.xlu0 %v2311, 8
      %v7308 = vpop.permute.xlu0 %7307
      %7309 = vrot.lane.b32.xlu0 %v2314, 8
      %v7310 = vpop.permute.xlu0 %7309
      %7311 = vrot.lane.b32.xlu0 %v2317, 8
      %v7312 = vpop.permute.xlu0 %7311
      %7313 = vrot.lane.b32.xlu0 %v2320, 8
      %v7314 = vpop.permute.xlu0 %7313
      %7315 = vrot.lane.b32.xlu0 %v2323, 8
      %v7316 = vpop.permute.xlu0 %7315
      %7317 = vrot.lane.b32.xlu0 %v2326, 8
      %v7318 = vpop.permute.xlu0 %7317
      %7319 = vrot.lane.b32.xlu0 %v2329, 8
      %v7320 = vpop.permute.xlu0 %7319
      %7321 = vrot.lane.b32.xlu0 %v2332, 8
      %v7322 = vpop.permute.xlu0 %7321
      %7323 = vrot.lane.b32.xlu0 %v2335, 8
      %v7324 = vpop.permute.xlu0 %7323
      %7325 = vrot.lane.b32.xlu0 %v2338, 8
      %v7326 = vpop.permute.xlu0 %7325
      %7327 = vrot.lane.b32.xlu0 %v2341, 8
      %v7328 = vpop.permute.xlu0 %7327
      %7329 = vrot.lane.b32.xlu0 %v2344, 8
      %v7330 = vpop.permute.xlu0 %7329
      %7331 = vrot.lane.b32.xlu0 %v2347, 8
      %v7332 = vpop.permute.xlu0 %7331
      %7333 = vrot.lane.b32.xlu0 %v2350, 8
      %v7334 = vpop.permute.xlu0 %7333
      %7335 = vrot.lane.b32.xlu0 %v2353, 8
      %v7336 = vpop.permute.xlu0 %7335
      %7401 = vrot.lane.b32.xlu0 %v3889, 16
      %v7402 = vpop.permute.xlu0 %7401
      %7403 = vrot.lane.b32.xlu0 %v3892, 16
      %v7404 = vpop.permute.xlu0 %7403
      %7405 = vrot.lane.b32.xlu0 %v3895, 16
      %v7406 = vpop.permute.xlu0 %7405
      %7407 = vrot.lane.b32.xlu0 %v3898, 16
      %v7408 = vpop.permute.xlu0 %7407
      %7409 = vrot.lane.b32.xlu0 %v3901, 16
      %v7410 = vpop.permute.xlu0 %7409
      %7411 = vrot.lane.b32.xlu0 %v3904, 16
      %v7412 = vpop.permute.xlu0 %7411
      %7413 = vrot.lane.b32.xlu0 %v3907, 16
      %v7414 = vpop.permute.xlu0 %7413
      %7415 = vrot.lane.b32.xlu0 %v3910, 16
      %v7416 = vpop.permute.xlu0 %7415
      %7417 = vrot.lane.b32.xlu0 %v3913, 16
      %v7418 = vpop.permute.xlu0 %7417
      %7419 = vrot.lane.b32.xlu0 %v3916, 16
      %v7420 = vpop.permute.xlu0 %7419
      %7421 = vrot.lane.b32.xlu0 %v3919, 16
      %v7422 = vpop.permute.xlu0 %7421
      %7423 = vrot.lane.b32.xlu0 %v3922, 16
      %v7424 = vpop.permute.xlu0 %7423
      %7425 = vrot.lane.b32.xlu0 %v3925, 16
      %v7426 = vpop.permute.xlu0 %7425
      %7427 = vrot.lane.b32.xlu0 %v3928, 16
      %v7428 = vpop.permute.xlu0 %7427
      %7429 = vrot.lane.b32.xlu0 %v3931, 16
      %v7430 = vpop.permute.xlu0 %7429
      %7431 = vrot.lane.b32.xlu0 %v3934, 16
      %v7432 = vpop.permute.xlu0 %7431
      %7433 = vrot.lane.b32.xlu0 %v3937, 16
      %v7434 = vpop.permute.xlu0 %7433
      %7435 = vrot.lane.b32.xlu0 %v3940, 16
      %v7436 = vpop.permute.xlu0 %7435
      %7437 = vrot.lane.b32.xlu0 %v3943, 16
      %v7438 = vpop.permute.xlu0 %7437
      %7439 = vrot.lane.b32.xlu0 %v3946, 16
      %v7440 = vpop.permute.xlu0 %7439
      %7441 = vrot.lane.b32.xlu0 %v3949, 16
      %v7442 = vpop.permute.xlu0 %7441
      %7443 = vrot.lane.b32.xlu0 %v3952, 16
      %v7444 = vpop.permute.xlu0 %7443
      %7445 = vrot.lane.b32.xlu0 %v3955, 16
      %v7446 = vpop.permute.xlu0 %7445
      %7447 = vrot.lane.b32.xlu0 %v3958, 16
      %v7448 = vpop.permute.xlu0 %7447
      %7449 = vrot.lane.b32.xlu0 %v3961, 16
      %v7450 = vpop.permute.xlu0 %7449
      %7451 = vrot.lane.b32.xlu0 %v3964, 16
      %v7452 = vpop.permute.xlu0 %7451
      %7453 = vrot.lane.b32.xlu0 %v3967, 16
      %v7454 = vpop.permute.xlu0 %7453
      %7455 = vrot.lane.b32.xlu0 %v3970, 16
      %v7456 = vpop.permute.xlu0 %7455
      %7457 = vrot.lane.b32.xlu0 %v3973, 16
      %v7458 = vpop.permute.xlu0 %7457
      %7459 = vrot.lane.b32.xlu0 %v3976, 16
      %v7460 = vpop.permute.xlu0 %7459
      %7461 = vrot.lane.b32.xlu0 %v3979, 16
      %v7462 = vpop.permute.xlu0 %7461
      %7463 = vrot.lane.b32.xlu0 %v3982, 16
      %v7464 = vpop.permute.xlu0 %7463
      %7529 = vrot.lane.b32.xlu0 %v5518, 24
      %v7530 = vpop.permute.xlu0 %7529
      %7531 = vrot.lane.b32.xlu0 %v5521, 24
      %v7532 = vpop.permute.xlu0 %7531
      %7533 = vrot.lane.b32.xlu0 %v5524, 24
      %v7534 = vpop.permute.xlu0 %7533
      %7535 = vrot.lane.b32.xlu0 %v5527, 24
      %v7536 = vpop.permute.xlu0 %7535
      %7537 = vrot.lane.b32.xlu0 %v5530, 24
      %v7538 = vpop.permute.xlu0 %7537
      %7539 = vrot.lane.b32.xlu0 %v5533, 24
      %v7540 = vpop.permute.xlu0 %7539
      %7541 = vrot.lane.b32.xlu0 %v5536, 24
      %v7542 = vpop.permute.xlu0 %7541
      %7543 = vrot.lane.b32.xlu0 %v5539, 24
      %v7544 = vpop.permute.xlu0 %7543
      %7545 = vrot.lane.b32.xlu0 %v5542, 24
      %v7546 = vpop.permute.xlu0 %7545
      %7547 = vrot.lane.b32.xlu0 %v5545, 24
      %v7548 = vpop.permute.xlu0 %7547
      %7549 = vrot.lane.b32.xlu0 %v5548, 24
      %v7550 = vpop.permute.xlu0 %7549
      %7551 = vrot.lane.b32.xlu0 %v5551, 24
      %v7552 = vpop.permute.xlu0 %7551
      %7553 = vrot.lane.b32.xlu0 %v5554, 24
      %v7554 = vpop.permute.xlu0 %7553
      %7555 = vrot.lane.b32.xlu0 %v5557, 24
      %v7556 = vpop.permute.xlu0 %7555
      %7557 = vrot.lane.b32.xlu0 %v5560, 24
      %v7558 = vpop.permute.xlu0 %7557
      %7559 = vrot.lane.b32.xlu0 %v5563, 24
      %v7560 = vpop.permute.xlu0 %7559
      %7561 = vrot.lane.b32.xlu0 %v5566, 24
      %v7562 = vpop.permute.xlu0 %7561
      %7563 = vrot.lane.b32.xlu0 %v5569, 24
      %v7564 = vpop.permute.xlu0 %7563
      %7565 = vrot.lane.b32.xlu0 %v5572, 24
      %v7566 = vpop.permute.xlu0 %7565
      %7567 = vrot.lane.b32.xlu0 %v5575, 24
      %v7568 = vpop.permute.xlu0 %7567
      %7569 = vrot.lane.b32.xlu0 %v5578, 24
      %v7570 = vpop.permute.xlu0 %7569
      %7571 = vrot.lane.b32.xlu0 %v5581, 24
      %v7572 = vpop.permute.xlu0 %7571
      %7573 = vrot.lane.b32.xlu0 %v5584, 24
      %v7574 = vpop.permute.xlu0 %7573
      %7575 = vrot.lane.b32.xlu0 %v5587, 24
      %v7576 = vpop.permute.xlu0 %7575
      %7577 = vrot.lane.b32.xlu0 %v5590, 24
      %v7578 = vpop.permute.xlu0 %7577
      %7579 = vrot.lane.b32.xlu0 %v5593, 24
      %v7580 = vpop.permute.xlu0 %7579
      %7581 = vrot.lane.b32.xlu0 %v5596, 24
      %v7582 = vpop.permute.xlu0 %7581
      %7583 = vrot.lane.b32.xlu0 %v5599, 24
      %v7584 = vpop.permute.xlu0 %7583
      %7585 = vrot.lane.b32.xlu0 %v5602, 24
      %v7586 = vpop.permute.xlu0 %7585
      %7587 = vrot.lane.b32.xlu0 %v5605, 24
      %v7588 = vpop.permute.xlu0 %7587
      %7589 = vrot.lane.b32.xlu0 %v5608, 24
      %v7590 = vpop.permute.xlu0 %7589
      %7591 = vrot.lane.b32.xlu0 %v5611, 24
      %v7592 = vpop.permute.xlu0 %7591
      %7657 = vrot.lane.b32.xlu0 %v7146, 32
      %v7658 = vpop.permute.xlu0 %7657
      %7659 = vrot.lane.b32.xlu0 %v7149, 32
      %v7660 = vpop.permute.xlu0 %7659
      %7661 = vrot.lane.b32.xlu0 %v7152, 32
      %v7662 = vpop.permute.xlu0 %7661
      %7663 = vrot.lane.b32.xlu0 %v7155, 32
      %v7664 = vpop.permute.xlu0 %7663
      %7665 = vrot.lane.b32.xlu0 %v7158, 32
      %v7666 = vpop.permute.xlu0 %7665
      %7667 = vrot.lane.b32.xlu0 %v7161, 32
      %v7668 = vpop.permute.xlu0 %7667
      %7669 = vrot.lane.b32.xlu0 %v7164, 32
      %v7670 = vpop.permute.xlu0 %7669
      %7671 = vrot.lane.b32.xlu0 %v7167, 32
      %v7672 = vpop.permute.xlu0 %7671
      %7673 = vrot.lane.b32.xlu0 %v7170, 32
      %v7674 = vpop.permute.xlu0 %7673
      %7675 = vrot.lane.b32.xlu0 %v7173, 32
      %v7676 = vpop.permute.xlu0 %7675
      %7677 = vrot.lane.b32.xlu0 %v7176, 32
      %v7678 = vpop.permute.xlu0 %7677
      %7679 = vrot.lane.b32.xlu0 %v7179, 32
      %v7680 = vpop.permute.xlu0 %7679
      %7681 = vrot.lane.b32.xlu0 %v7182, 32
      %v7682 = vpop.permute.xlu0 %7681
      %7683 = vrot.lane.b32.xlu0 %v7185, 32
      %v7684 = vpop.permute.xlu0 %7683
      %7685 = vrot.lane.b32.xlu0 %v7188, 32
      %v7686 = vpop.permute.xlu0 %7685
      %7687 = vrot.lane.b32.xlu0 %v7191, 32
      %v7688 = vpop.permute.xlu0 %7687
      %7689 = vrot.lane.b32.xlu0 %v7194, 32
      %v7690 = vpop.permute.xlu0 %7689
      %7691 = vrot.lane.b32.xlu0 %v7197, 32
      %v7692 = vpop.permute.xlu0 %7691
      %7693 = vrot.lane.b32.xlu0 %v7200, 32
      %v7694 = vpop.permute.xlu0 %7693
      %7695 = vrot.lane.b32.xlu0 %v7203, 32
      %v7696 = vpop.permute.xlu0 %7695
      %7697 = vrot.lane.b32.xlu0 %v7206, 32
      %v7698 = vpop.permute.xlu0 %7697
      %7699 = vrot.lane.b32.xlu0 %v7209, 32
      %v7700 = vpop.permute.xlu0 %7699
      %7701 = vrot.lane.b32.xlu0 %v7212, 32
      %v7702 = vpop.permute.xlu0 %7701
      %7703 = vrot.lane.b32.xlu0 %v7215, 32
      %v7704 = vpop.permute.xlu0 %7703
      %7705 = vrot.lane.b32.xlu0 %v7218, 32
      %v7706 = vpop.permute.xlu0 %7705
      %7707 = vrot.lane.b32.xlu0 %v7221, 32
      %v7708 = vpop.permute.xlu0 %7707
      %7709 = vrot.lane.b32.xlu0 %v7224, 32
      %v7710 = vpop.permute.xlu0 %7709
      %7711 = vrot.lane.b32.xlu0 %v7227, 32
      %v7712 = vpop.permute.xlu0 %7711
      %7713 = vrot.lane.b32.xlu0 %v7230, 32
      %v7714 = vpop.permute.xlu0 %7713
      %7715 = vrot.lane.b32.xlu0 %v7233, 32
      %v7716 = vpop.permute.xlu0 %7715
      %7717 = vrot.lane.b32.xlu0 %v7236, 32
      %v7718 = vpop.permute.xlu0 %7717
      %7719 = vrot.lane.b32.xlu0 %v7239, 32
      %v7720 = vpop.permute.xlu0 %7719
      %v7753 = vsel %vm277, %v464, %v7274
      %v7754 = vsel %vm277, %v467, %v7276
      %v7755 = vsel %vm277, %v470, %v7278
      %v7756 = vsel %vm277, %v473, %v7280
      %v7757 = vsel %vm277, %v476, %v7282
      %v7758 = vsel %vm277, %v479, %v7284
      %v7759 = vsel %vm277, %v482, %v7286
      %v7760 = vsel %vm277, %v485, %v7288
      %v7761 = vsel %vm277, %v488, %v7290
      %v7762 = vsel %vm277, %v491, %v7292
      %v7763 = vsel %vm277, %v494, %v7294
      %v7764 = vsel %vm277, %v497, %v7296
      %v7765 = vsel %vm277, %v500, %v7298
      %v7766 = vsel %vm277, %v503, %v7300
      %v7767 = vsel %vm277, %v506, %v7302
      %v7768 = vsel %vm277, %v509, %v7304
      %v7769 = vsel %vm277, %v512, %v7306
      %v7770 = vsel %vm277, %v515, %v7308
      %v7771 = vsel %vm277, %v518, %v7310
      %v7772 = vsel %vm277, %v521, %v7312
      %v7773 = vsel %vm277, %v524, %v7314
      %v7774 = vsel %vm277, %v527, %v7316
      %v7775 = vsel %vm277, %v530, %v7318
      %v7776 = vsel %vm277, %v533, %v7320
      %v7777 = vsel %vm277, %v536, %v7322
      %v7778 = vsel %vm277, %v539, %v7324
      %v7779 = vsel %vm277, %v542, %v7326
      %v7780 = vsel %vm277, %v545, %v7328
      %v7781 = vsel %vm277, %v548, %v7330
      %v7782 = vsel %vm277, %v551, %v7332
      %v7783 = vsel %vm277, %v554, %v7334
      %v7784 = vsel %vm277, %v557, %v7336
      %v7785 = vsel %vm1905, %v7753, %v7402
      %v7786 = vsel %vm1905, %v7754, %v7404
      %v7787 = vsel %vm1905, %v7755, %v7406
      %v7788 = vsel %vm1905, %v7756, %v7408
      %v7789 = vsel %vm1905, %v7757, %v7410
      %v7790 = vsel %vm1905, %v7758, %v7412
      %v7791 = vsel %vm1905, %v7759, %v7414
      %v7792 = vsel %vm1905, %v7760, %v7416
      %v7793 = vsel %vm1905, %v7761, %v7418
      %v7794 = vsel %vm1905, %v7762, %v7420
      %v7795 = vsel %vm1905, %v7763, %v7422
      %v7796 = vsel %vm1905, %v7764, %v7424
      %v7797 = vsel %vm1905, %v7765, %v7426
      %v7798 = vsel %vm1905, %v7766, %v7428
      %v7799 = vsel %vm1905, %v7767, %v7430
      %v7800 = vsel %vm1905, %v7768, %v7432
      %v7801 = vsel %vm1905, %v7769, %v7434
      %v7802 = vsel %vm1905, %v7770, %v7436
      %v7803 = vsel %vm1905, %v7771, %v7438
      %v7804 = vsel %vm1905, %v7772, %v7440
      %v7805 = vsel %vm1905, %v7773, %v7442
      %v7806 = vsel %vm1905, %v7774, %v7444
      %v7807 = vsel %vm1905, %v7775, %v7446
      %v7808 = vsel %vm1905, %v7776, %v7448
      %v7809 = vsel %vm1905, %v7777, %v7450
      %v7810 = vsel %vm1905, %v7778, %v7452
      %v7811 = vsel %vm1905, %v7779, %v7454
      %v7812 = vsel %vm1905, %v7780, %v7456
      %v7813 = vsel %vm1905, %v7781, %v7458
      %v7814 = vsel %vm1905, %v7782, %v7460
      %v7815 = vsel %vm1905, %v7783, %v7462
      %v7816 = vsel %vm1905, %v7784, %v7464
      %v7817 = vsel %vm1938, %v7785, %v7530
      %v7818 = vsel %vm1938, %v7786, %v7532
      %v7819 = vsel %vm1938, %v7787, %v7534
      %v7820 = vsel %vm1938, %v7788, %v7536
      %v7821 = vsel %vm1938, %v7789, %v7538
      %v7822 = vsel %vm1938, %v7790, %v7540
      %v7823 = vsel %vm1938, %v7791, %v7542
      %v7824 = vsel %vm1938, %v7792, %v7544
      %v7825 = vsel %vm1938, %v7793, %v7546
      %v7826 = vsel %vm1938, %v7794, %v7548
      %v7827 = vsel %vm1938, %v7795, %v7550
      %v7828 = vsel %vm1938, %v7796, %v7552
      %v7829 = vsel %vm1938, %v7797, %v7554
      %v7830 = vsel %vm1938, %v7798, %v7556
      %v7831 = vsel %vm1938, %v7799, %v7558
      %v7832 = vsel %vm1938, %v7800, %v7560
      %v7833 = vsel %vm1938, %v7801, %v7562
      %v7834 = vsel %vm1938, %v7802, %v7564
      %v7835 = vsel %vm1938, %v7803, %v7566
      %v7836 = vsel %vm1938, %v7804, %v7568
      %v7837 = vsel %vm1938, %v7805, %v7570
      %v7838 = vsel %vm1938, %v7806, %v7572
      %v7839 = vsel %vm1938, %v7807, %v7574
      %v7840 = vsel %vm1938, %v7808, %v7576
      %v7841 = vsel %vm1938, %v7809, %v7578
      %v7842 = vsel %vm1938, %v7810, %v7580
      %v7843 = vsel %vm1938, %v7811, %v7582
      %v7844 = vsel %vm1938, %v7812, %v7584
      %v7845 = vsel %vm1938, %v7813, %v7586
      %v7846 = vsel %vm1938, %v7814, %v7588
      %v7847 = vsel %vm1938, %v7815, %v7590
      %v7848 = vsel %vm1938, %v7816, %v7592
      %v7849 = vsel %vm1971, %v7817, %v7658
      %v7850 = vsel %vm1971, %v7818, %v7660
      %v7851 = vsel %vm1971, %v7819, %v7662
      %v7852 = vsel %vm1971, %v7820, %v7664
      %v7853 = vsel %vm1971, %v7821, %v7666
      %v7854 = vsel %vm1971, %v7822, %v7668
      %v7855 = vsel %vm1971, %v7823, %v7670
      %v7856 = vsel %vm1971, %v7824, %v7672
      %v7857 = vsel %vm1971, %v7825, %v7674
      %v7858 = vsel %vm1971, %v7826, %v7676
      %v7859 = vsel %vm1971, %v7827, %v7678
      %v7860 = vsel %vm1971, %v7828, %v7680
      %v7861 = vsel %vm1971, %v7829, %v7682
      %v7862 = vsel %vm1971, %v7830, %v7684
      %v7863 = vsel %vm1971, %v7831, %v7686
      %v7864 = vsel %vm1971, %v7832, %v7688
      %v7865 = vsel %vm1971, %v7833, %v7690
      %v7866 = vsel %vm1971, %v7834, %v7692
      %v7867 = vsel %vm1971, %v7835, %v7694
      %v7868 = vsel %vm1971, %v7836, %v7696
      %v7869 = vsel %vm1971, %v7837, %v7698
      %v7870 = vsel %vm1971, %v7838, %v7700
      %v7871 = vsel %vm1971, %v7839, %v7702
      %v7872 = vsel %vm1971, %v7840, %v7704
      %v7873 = vsel %vm1971, %v7841, %v7706
      %v7874 = vsel %vm1971, %v7842, %v7708
      %v7875 = vsel %vm1971, %v7843, %v7710
      %v7876 = vsel %vm1971, %v7844, %v7712
      %v7877 = vsel %vm1971, %v7845, %v7714
      %v7878 = vsel %vm1971, %v7846, %v7716
      %v7879 = vsel %vm1971, %v7847, %v7718
      %v7880 = vsel %vm1971, %v7848, %v7720
      %7881 = vst.msk [vmem:[%s236] sm:$0xff] %vm2004, %v7849
      %7882 = vst.msk [vmem:[%s236 + $0x8] sm:$0xff] %vm2004, %v7850
      %7883 = vst.msk [vmem:[%s236 + $0x10] sm:$0xff] %vm2004, %v7851
      %7884 = vst.msk [vmem:[%s236 + $0x18] sm:$0xff] %vm2004, %v7852
      %7885 = vst.msk [vmem:[%s236 + $0x20] sm:$0xff] %vm2004, %v7853
      %7886 = vst.msk [vmem:[%s236 + $0x28] sm:$0xff] %vm2004, %v7854
      %7887 = vst.msk [vmem:[%s236 + $0x30] sm:$0xff] %vm2004, %v7855
      %7888 = vst.msk [vmem:[%s236 + $0x38] sm:$0xff] %vm2004, %v7856
      %7889 = vst.msk [vmem:[%s236 + $0x40] sm:$0xff] %vm2004, %v7857
      %7890 = vst.msk [vmem:[%s236 + $0x48] sm:$0xff] %vm2004, %v7858
      %7891 = vst.msk [vmem:[%s236 + $0x50] sm:$0xff] %vm2004, %v7859
      %7892 = vst.msk [vmem:[%s236 + $0x58] sm:$0xff] %vm2004, %v7860
      %7893 = vst.msk [vmem:[%s236 + $0x60] sm:$0xff] %vm2004, %v7861
      %7894 = vst.msk [vmem:[%s236 + $0x68] sm:$0xff] %vm2004, %v7862
      %7895 = vst.msk [vmem:[%s236 + $0x70] sm:$0xff] %vm2004, %v7863
      %7896 = vst.msk [vmem:[%s236 + $0x78] sm:$0xff] %vm2004, %v7864
      %7897 = vst.msk [vmem:[%s236 + $0x80] sm:$0xff] %vm2004, %v7865
      %7898 = vst.msk [vmem:[%s236 + $0x88] sm:$0xff] %vm2004, %v7866
      %7899 = vst.msk [vmem:[%s236 + $0x90] sm:$0xff] %vm2004, %v7867
      %7900 = vst.msk [vmem:[%s236 + $0x98] sm:$0xff] %vm2004, %v7868
      %7901 = vst.msk [vmem:[%s236 + $0xa0] sm:$0xff] %vm2004, %v7869
      %7902 = vst.msk [vmem:[%s236 + $0xa8] sm:$0xff] %vm2004, %v7870
      %7903 = vst.msk [vmem:[%s236 + $0xb0] sm:$0xff] %vm2004, %v7871
      %7904 = vst.msk [vmem:[%s236 + $0xb8] sm:$0xff] %vm2004, %v7872
      %7905 = vst.msk [vmem:[%s236 + $0xc0] sm:$0xff] %vm2004, %v7873
      %7906 = vst.msk [vmem:[%s236 + $0xc8] sm:$0xff] %vm2004, %v7874
      %7907 = vst.msk [vmem:[%s236 + $0xd0] sm:$0xff] %vm2004, %v7875
      %7908 = vst.msk [vmem:[%s236 + $0xd8] sm:$0xff] %vm2004, %v7876
      %7909 = vst.msk [vmem:[%s236 + $0xe0] sm:$0xff] %vm2004, %v7877
      %7910 = vst.msk [vmem:[%s236 + $0xe8] sm:$0xff] %vm2004, %v7878
      %7911 = vst.msk [vmem:[%s236 + $0xf0] sm:$0xff] %vm2004, %v7879
      %7912 = vst.msk [vmem:[%s236 + $0xf8] sm:$0xff] %vm2004, %v7880
      %v7913 = vsel %vm2004, %v7849, 0.0
      %v7914 = vsel %vm2004, %v7850, 0.0
      %v7915 = vadd.f32 %v7913, %v7914
      %v7916 = vsel %vm2004, %v7851, 0.0
      %v7917 = vadd.f32 %v7915, %v7916
      %v7918 = vsel %vm2004, %v7852, 0.0
      %v7919 = vadd.f32 %v7917, %v7918
      %v7920 = vsel %vm2004, %v7853, 0.0
      %v7921 = vadd.f32 %v7919, %v7920
      %v7922 = vsel %vm2004, %v7854, 0.0
      %v7923 = vadd.f32 %v7921, %v7922
      %v7924 = vsel %vm2004, %v7855, 0.0
      %v7925 = vadd.f32 %v7923, %v7924
      %v7926 = vsel %vm2004, %v7856, 0.0
      %v7927 = vadd.f32 %v7925, %v7926
      %v7928 = vsel %vm2004, %v7857, 0.0
      %v7929 = vadd.f32 %v7927, %v7928
      %v7930 = vsel %vm2004, %v7858, 0.0
      %v7931 = vadd.f32 %v7929, %v7930
      %v7932 = vsel %vm2004, %v7859, 0.0
      %v7933 = vadd.f32 %v7931, %v7932
      %v7934 = vsel %vm2004, %v7860, 0.0
      %v7935 = vadd.f32 %v7933, %v7934
      %v7936 = vsel %vm2004, %v7861, 0.0
      %v7937 = vadd.f32 %v7935, %v7936
      %v7938 = vsel %vm2004, %v7862, 0.0
      %v7939 = vadd.f32 %v7937, %v7938
      %v7940 = vsel %vm2004, %v7863, 0.0
      %v7941 = vadd.f32 %v7939, %v7940
      %v7942 = vsel %vm2004, %v7864, 0.0
      %v7943 = vadd.f32 %v7941, %v7942
      %v7944 = vsel %vm2004, %v7865, 0.0
      %v7945 = vadd.f32 %v7943, %v7944
      %v7946 = vsel %vm2004, %v7866, 0.0
      %v7947 = vadd.f32 %v7945, %v7946
      %v7948 = vsel %vm2004, %v7867, 0.0
      %v7949 = vadd.f32 %v7947, %v7948
      %v7950 = vsel %vm2004, %v7868, 0.0
      %v7951 = vadd.f32 %v7949, %v7950
      %v7952 = vsel %vm2004, %v7869, 0.0
      %v7953 = vadd.f32 %v7951, %v7952
      %v7954 = vsel %vm2004, %v7870, 0.0
      %v7955 = vadd.f32 %v7953, %v7954
      %v7956 = vsel %vm2004, %v7871, 0.0
      %v7957 = vadd.f32 %v7955, %v7956
      %v7958 = vsel %vm2004, %v7872, 0.0
      %v7959 = vadd.f32 %v7957, %v7958
      %v7960 = vsel %vm2004, %v7873, 0.0
      %v7961 = vadd.f32 %v7959, %v7960
      %v7962 = vsel %vm2004, %v7874, 0.0
      %v7963 = vadd.f32 %v7961, %v7962
      %v7964 = vsel %vm2004, %v7875, 0.0
      %v7965 = vadd.f32 %v7963, %v7964
      %v7966 = vsel %vm2004, %v7876, 0.0
      %v7967 = vadd.f32 %v7965, %v7966
      %v7968 = vsel %vm2004, %v7877, 0.0
      %v7969 = vadd.f32 %v7967, %v7968
      %v7970 = vsel %vm2004, %v7878, 0.0
      %v7971 = vadd.f32 %v7969, %v7970
      %v7972 = vsel %vm2004, %v7879, 0.0
      %v7973 = vadd.f32 %v7971, %v7972
      %v7974 = vsel %vm2004, %v7880, 0.0
      %v7975 = vadd.f32 %v7973, %v7974
      %v7976 = vrot.slane %v7975, 4
      %v7977 = vadd.f32 %v7975, %v7976
      %v7978 = vrot.slane %v7977, 2
      %v7979 = vadd.f32 %v7977, %v7978
      %v7980 = vrot.slane %v7979, 1
      %v7981 = vadd.f32 %v7979, %v7980
      %v7982 = vmul.f32 %v7849, %v7849
      %v7983 = vmul.f32 %v7850, %v7850
      %v7984 = vmul.f32 %v7851, %v7851
      %v7985 = vmul.f32 %v7852, %v7852
      %v7986 = vmul.f32 %v7853, %v7853
      %v7987 = vmul.f32 %v7854, %v7854
      %v7988 = vmul.f32 %v7855, %v7855
      %v7989 = vmul.f32 %v7856, %v7856
      %v7990 = vmul.f32 %v7857, %v7857
      %v7991 = vmul.f32 %v7858, %v7858
      %v7992 = vmul.f32 %v7859, %v7859
      %v7993 = vmul.f32 %v7860, %v7860
      %v7994 = vmul.f32 %v7861, %v7861
      %v7995 = vmul.f32 %v7862, %v7862
      %v7996 = vmul.f32 %v7863, %v7863
      %v7997 = vmul.f32 %v7864, %v7864
      %v7998 = vmul.f32 %v7865, %v7865
      %v7999 = vmul.f32 %v7866, %v7866
      %v8000 = vmul.f32 %v7867, %v7867
      %v8001 = vmul.f32 %v7868, %v7868
      %v8002 = vmul.f32 %v7869, %v7869
      %v8003 = vmul.f32 %v7870, %v7870
      %v8004 = vmul.f32 %v7871, %v7871
      %v8005 = vmul.f32 %v7872, %v7872
      %v8006 = vmul.f32 %v7873, %v7873
      %v8007 = vmul.f32 %v7874, %v7874
      %v8008 = vmul.f32 %v7875, %v7875
      %v8009 = vmul.f32 %v7876, %v7876
      %v8010 = vmul.f32 %v7877, %v7877
      %v8011 = vmul.f32 %v7878, %v7878
      %v8012 = vmul.f32 %v7879, %v7879
      %v8013 = vmul.f32 %v7880, %v7880
      %v8014 = vsel %vm2004, %v7982, 0.0
      %v8015 = vsel %vm2004, %v7983, 0.0
      %v8016 = vadd.f32 %v8014, %v8015
      %v8017 = vsel %vm2004, %v7984, 0.0
      %v8018 = vadd.f32 %v8016, %v8017
      %v8019 = vsel %vm2004, %v7985, 0.0
      %v8020 = vadd.f32 %v8018, %v8019
      %v8021 = vsel %vm2004, %v7986, 0.0
      %v8022 = vadd.f32 %v8020, %v8021
      %v8023 = vsel %vm2004, %v7987, 0.0
      %v8024 = vadd.f32 %v8022, %v8023
      %v8025 = vsel %vm2004, %v7988, 0.0
      %v8026 = vadd.f32 %v8024, %v8025
      %v8027 = vsel %vm2004, %v7989, 0.0
      %v8028 = vadd.f32 %v8026, %v8027
      %v8029 = vsel %vm2004, %v7990, 0.0
      %v8030 = vadd.f32 %v8028, %v8029
      %v8031 = vsel %vm2004, %v7991, 0.0
      %v8032 = vadd.f32 %v8030, %v8031
      %v8033 = vsel %vm2004, %v7992, 0.0
      %v8034 = vadd.f32 %v8032, %v8033
      %v8035 = vsel %vm2004, %v7993, 0.0
      %v8036 = vadd.f32 %v8034, %v8035
      %v8037 = vsel %vm2004, %v7994, 0.0
      %v8038 = vadd.f32 %v8036, %v8037
      %v8039 = vsel %vm2004, %v7995, 0.0
      %v8040 = vadd.f32 %v8038, %v8039
      %v8041 = vsel %vm2004, %v7996, 0.0
      %v8042 = vadd.f32 %v8040, %v8041
      %v8043 = vsel %vm2004, %v7997, 0.0
      %v8044 = vadd.f32 %v8042, %v8043
      %v8045 = vsel %vm2004, %v7998, 0.0
      %v8046 = vadd.f32 %v8044, %v8045
      %v8047 = vsel %vm2004, %v7999, 0.0
      %v8048 = vadd.f32 %v8046, %v8047
      %v8049 = vsel %vm2004, %v8000, 0.0
      %v8050 = vadd.f32 %v8048, %v8049
      %v8051 = vsel %vm2004, %v8001, 0.0
      %v8052 = vadd.f32 %v8050, %v8051
      %v8053 = vsel %vm2004, %v8002, 0.0
      %v8054 = vadd.f32 %v8052, %v8053
      %v8055 = vsel %vm2004, %v8003, 0.0
      %v8056 = vadd.f32 %v8054, %v8055
      %v8057 = vsel %vm2004, %v8004, 0.0
      %v8058 = vadd.f32 %v8056, %v8057
      %v8059 = vsel %vm2004, %v8005, 0.0
      %v8060 = vadd.f32 %v8058, %v8059
      %v8061 = vsel %vm2004, %v8006, 0.0
      %v8062 = vadd.f32 %v8060, %v8061
      %v8063 = vsel %vm2004, %v8007, 0.0
      %v8064 = vadd.f32 %v8062, %v8063
      %v8065 = vsel %vm2004, %v8008, 0.0
      %v8066 = vadd.f32 %v8064, %v8065
      %v8067 = vsel %vm2004, %v8009, 0.0
      %v8068 = vadd.f32 %v8066, %v8067
      %v8069 = vsel %vm2004, %v8010, 0.0
      %v8070 = vadd.f32 %v8068, %v8069
      %v8071 = vsel %vm2004, %v8011, 0.0
      %v8072 = vadd.f32 %v8070, %v8071
      %v8073 = vsel %vm2004, %v8012, 0.0
      %v8074 = vadd.f32 %v8072, %v8073
      %v8075 = vsel %vm2004, %v8013, 0.0
      %v8076 = vadd.f32 %v8074, %v8075
      %v8077 = vrot.slane %v8076, 4
      %v8078 = vadd.f32 %v8076, %v8077
      %v8079 = vrot.slane %v8078, 2
      %v8080 = vadd.f32 %v8078, %v8079
      %v8081 = vrot.slane %v8080, 1
      %v8082 = vadd.f32 %v8080, %v8081
      %vm8083 = vcmask 1040384
      %v8084 = vsel %vm8083, %v7981, %v8082
      %vm8085 = vcmask 320512
      %8086 = vst.msk [vmem:[%s240] sm:$0x3] %vm8085, %v8084
      %p8087 = scmp.lt.s32.totalorder %s17, 1
      %s8088 = scalar_select %p8087, %s17, 1
      %s8089 = smul.addr %s8088, 32
      %s8090 = smul.addr %s8089, 8
      %s8091 = scalar_lea.vmem %s3, %s8090
      %p8092 = scmp.lt.s32.totalorder %s17, 1
      %s8093 = scalar_select %p8092, %s17, 1
      %s8094 = smul.addr %s8093, 2
      %s8095 = scalar_lea.vmem %s4, %s8094
      %p8096 = scmp.lt.s32.totalorder %s17, 1
      %s8097 = scalar_select %p8096, %s17, 1
      %s8098 = scalar_lea.vmem %s5, %s8097
      // Predicated region
      $region33: #{aspp_forward.4} parent=31 // pred_check
        %p8099 = pneg %p103
      $region34: #{aspp_forward.4} parent=31 // pred_check_branch
        %8101 = sbr.rel (%p8099) target = $region36
      $region35: #{aspp_forward.4} parent=31 // pred_region
        _
      $region36: #{aspp_forward.4} parent=31 // pred_fallthru
        _
      // Predicated region
      $region37: #{aspp_forward.4} parent=31 // pred_check
        %p8102 = pneg %p129
      $region38: #{aspp_forward.4} parent=31 // pred_check_branch
        %8104 = sbr.rel (%p8102) target = $region40
      $region39: #{aspp_forward.4} parent=31 // pred_region
        _
      $region40: #{aspp_forward.4} parent=31 // pred_fallthru
        _
      // Predicated region
      $region41: #{aspp_forward.4} parent=31 // pred_check
        %p8105 = pneg %p155
      $region42: #{aspp_forward.4} parent=31 // pred_check_branch
        %8107 = sbr.rel (%p8105) target = $region44
      $region43: #{aspp_forward.4} parent=31 // pred_region
        _
      $region44: #{aspp_forward.4} parent=31 // pred_fallthru
        _
    $region32: #{aspp_forward.4} parent=5 // pred_fallthru
      _
    %p8108 = scmp.le.s32.totalorder 2, %s12
    // Predicated region
    $region45: #{aspp_forward.4} parent=5 // pred_check
      %p8109 = pneg %p8108
    $region46: #{aspp_forward.4} parent=5 // pred_check_branch
      %8111 = sbr.rel (%p8109) target = $region48
    $region47: #{aspp_forward.4} parent=5 // pred_region
      %s8112 = ssub.s32 %s12, 2
      // Predicated region
      $region49: #{aspp_forward.4} parent=47 // pred_check
        %p8113 = pneg %p109
      $region50: #{aspp_forward.4} parent=47 // pred_check_branch
        %8115 = sbr.rel (%p8113) target = $region52
      $region51: #{aspp_forward.4} parent=47 // pred_region
        %p8116 = scmp.lt.s32.totalorder %s18, 1
        %s8117 = scalar_select %p8116, %s18, 1
        %s8118 = smul.addr %s8117, 32
        %s8119 = smul.addr %s8118, 8
        %s8120 = scalar_lea.vmem %s3, %s8119
      $region52: #{aspp_forward.4} parent=47 // pred_fallthru
        _
      // Predicated region
      $region53: #{aspp_forward.4} parent=47 // pred_check
        %p8121 = pneg %p135
      $region54: #{aspp_forward.4} parent=47 // pred_check_branch
        %8123 = sbr.rel (%p8121) target = $region56
      $region55: #{aspp_forward.4} parent=47 // pred_region
        %p8124 = scmp.lt.s32.totalorder %s18, 1
        %s8125 = scalar_select %p8124, %s18, 1
        %s8126 = smul.addr %s8125, 2
        %s8127 = scalar_lea.vmem %s4, %s8126
      $region56: #{aspp_forward.4} parent=47 // pred_fallthru
        _
      // Predicated region
      $region57: #{aspp_forward.4} parent=47 // pred_check
        %p8128 = pneg %p161
      $region58: #{aspp_forward.4} parent=47 // pred_check_branch
        %8130 = sbr.rel (%p8128) target = $region60
      $region59: #{aspp_forward.4} parent=47 // pred_region
        %p8131 = scmp.lt.s32.totalorder %s18, 1
        %s8132 = scalar_select %p8131, %s18, 1
        %s8133 = scalar_lea.vmem %s5, %s8132
      $region60: #{aspp_forward.4} parent=47 // pred_fallthru
        _
    $region48: #{aspp_forward.4} parent=5 // pred_fallthru
      _
  $region6: #{aspp_forward.4} parent=0 // loop_footer
    %s16 = sadd.s32 1, %s12
  $region7: #{aspp_forward.4} parent=0 // loop_footer_branch
    %11 = sbr.rel target = $region3
  $region8: #{aspp_forward.4} parent=0 // loop_exit
    _

</llo_original>
